<compile_context>
chip_gen: v5e
topology: v5e:2x2
jax: 0.10.0
libtpu: 0.0.40
codegen_flags: <defaults>
</compile_context>

<pallas_src>
import functools

import jax
import jax.numpy as jnp
from jax.experimental import pallas as pl
from jax.experimental.pallas import tpu as pltpu

NDF = 16            # small but structure-identical to the ndf=64 default
NC = 1
BN_EPS = 1e-5
LRELU_SLOPE = 0.2
COMPUTE_DTYPE = jnp.bfloat16   # GEMM operands / inter-layer activations
_VMEM_LIMIT = 32 * 1024 * 1024
_VMEM_BUDGET = 24 * 1024 * 1024


# ----------------------------------------------------------------------------
# Pallas kernels
# ----------------------------------------------------------------------------
def _conv_bn_lrelu_kernel(w_ref, p_ref, gamma_ref, beta_ref, o_ref, *,
                          inv_m, eps, slope):
    """Fused conv-as-GEMM + BatchNorm(batch stats) + LeakyReLU, per Cout tile.

    w_ref:     (tc, K)  bf16  folded conv weight tile
    p_ref:     (K, M)   bf16  im2col patches, M = N*Do*Ho*Wo (lane axis)
    gamma_ref: (tc, 1)  f32   BN weight tile
    beta_ref:  (tc, 1)  f32   BN bias tile
    o_ref:     (tc, M)  bf16  activated output tile (channel-major)
    """
    acc = jnp.dot(w_ref[...], p_ref[...],
                  preferred_element_type=jnp.float32)             # (tc, M) f32
    mean = jnp.sum(acc, axis=1, keepdims=True) * inv_m            # (tc, 1)
    centered = acc - mean                                         # variance pass only
    var = jnp.sum(centered * centered, axis=1, keepdims=True) * inv_m
    scale = gamma_ref[...] * jax.lax.rsqrt(var + eps)
    shift = beta_ref[...] - mean * scale
    y = acc * scale + shift                                       # folded affine
    o_ref[...] = jnp.where(y >= 0.0, y, slope * y).astype(o_ref.dtype)


def _conv_bn_lrelu_head_kernel(w_ref, p_ref, gamma_ref, beta_ref, w4_ref, o_ref,
                               *, inv_m, eps, slope, n_batch, spatial):
    """Third conv block fused with the final 4x4x4 valid conv + Sigmoid.

    w4_ref: (Cout, spatial) f32  final conv weight (NOT batch-tiled)
    o_ref:  (R, 1)          f32  R >= n_batch; rows >= n_batch are padding.
    """
    acc = jnp.dot(w_ref[...], p_ref[...],
                  preferred_element_type=jnp.float32)             # (Cout, M) f32
    mean = jnp.sum(acc, axis=1, keepdims=True) * inv_m
    centered = acc - mean
    var = jnp.sum(centered * centered, axis=1, keepdims=True) * inv_m
    scale = gamma_ref[...] * jax.lax.rsqrt(var + eps)
    shift = beta_ref[...] - mean * scale
    y = acc * scale + shift
    y = jnp.where(y >= 0.0, y, slope * y)                         # (Cout, M) f32

    # Final Conv3d(Cout -> 1, k=4, s=1, p=0): per-sample weighted reduction of
    # a static lane slice (no one-hot selector, no batch-tiled weight).
    w4 = w4_ref[...]                                              # (Cout, spatial)
    row = jax.lax.broadcasted_iota(jnp.int32, o_ref.shape, 0)     # (R, 1)
    logits = jnp.zeros(o_ref.shape, jnp.float32)
    for s in range(n_batch):                                      # static, tiny
        ys = y[:, s * spatial:(s + 1) * spatial]                  # (Cout, spatial)
        ln = jnp.sum(jnp.sum(ys * w4, axis=1, keepdims=True),
                     axis=0, keepdims=True)                       # (1, 1)
        logits = logits + jnp.where(row == s, ln, 0.0)
    o_ref[...] = 1.0 / (1.0 + jnp.exp(-logits))                   # pad rows -> 0.5


# ----------------------------------------------------------------------------
# XLA glue: channel-major im2col (no large transposes) + weight folding
# ----------------------------------------------------------------------------
def _im2col_t(h, k, stride, pad):
    """h: (C, N, D, H, W) channel-major -> patches (K = k^3*C, M = N*Do*Ho*Wo).

    Row order is (kd, kh, kw, c) with c fastest; column order is (n, od, oh, ow).
    """
    C, N, D, H, W = h.shape
    hp = jnp.pad(h, ((0, 0), (0, 0), (pad, pad), (pad, pad), (pad, pad)))
    Do = (D + 2 * pad - k) // stride + 1
    Ho = (H + 2 * pad - k) // stride + 1
    Wo = (W + 2 * pad - k) // stride + 1
    m = N * Do * Ho * Wo
    blocks = []
    for kd in range(k):
        for kh in range(k):
            for kw in range(k):
                sl = hp[:, :,
                        kd:kd + stride * (Do - 1) + 1:stride,
                        kh:kh + stride * (Ho - 1) + 1:stride,
                        kw:kw + stride * (Wo - 1) + 1:stride]
                blocks.append(sl.reshape(C, m))
    # TODO(synk): patch extraction stays in XLA (strided slices + one concat);
    # an in-kernel DMA gather / per-tap GEMM would remove this HBM blowup.
    return jnp.concatenate(blocks, axis=0), (N, Do, Ho, Wo)


def _fold_weight(w):
    """(Cout, Cin, k, k, k) -> (Cout, k^3*Cin), matching _im2col_t row order."""
    cout = w.shape[0]
    return jnp.transpose(w, (0, 2, 3, 4, 1)).reshape(cout, -1)


def _check_vmem(nbytes, where):
    if nbytes > _VMEM_BUDGET:
        raise ValueError(
            f"{where}: estimated per-step VMEM working set "
            f"{nbytes / 2**20:.1f} MiB exceeds {_VMEM_BUDGET / 2**20:.1f} MiB; "
            f"add M-axis tiling with cross-step BN accumulators.")


_VMEM_SPEC = pl.BlockSpec(memory_space=pltpu.MemorySpace.VMEM)


# ----------------------------------------------------------------------------
# Layers
# ----------------------------------------------------------------------------
def conv_bn_lrelu(h, w, gamma, beta, *, stride, pad):
    """Conv3d (no bias) -> BatchNorm3d (batch stats) -> LeakyReLU(0.2).

    h: (Cin, N, D, H, W) channel-major bf16 -> (Cout, N, Do, Ho, Wo) bf16.
    """
    patches, (n, do, ho, wo) = _im2col_t(h, 4, stride, pad)
    m = n * do * ho * wo
    w_r = _fold_weight(w).astype(COMPUTE_DTYPE)
    cout, k = w_r.shape
    tc = max(8, cout // 2)            # 2 'parallel' Cout steps per layer
    assert cout % tc == 0 and m % 128 == 0 and k % 8 == 0
    n_steps = cout // tc

    # VMEM guard: patches fetched once, weight/output tiles double-buffered,
    # plus the per-tile f32 accumulator/temporaries.
    vmem = (2 * k * m * 2 + 2 * tc * k * 2 + 2 * tc * m * 2
            + 2 * tc * m * 4 + 4 * tc * 4 * 2)
    _check_vmem(vmem, "conv_bn_lrelu")

    cost = pl.CostEstimate(
        flops=2 * cout * k * m + 8 * cout * m,
        transcendentals=cout,
        bytes_accessed=2 * (cout * k + k * m + cout * m) + 8 * cout)

    out = pl.pallas_call(
        functools.partial(_conv_bn_lrelu_kernel, inv_m=1.0 / m,
                          eps=BN_EPS, slope=LRELU_SLOPE),
        grid=(n_steps,),
        in_specs=[
            pl.BlockSpec((tc, k), lambda i: (i, 0)),
            pl.BlockSpec((k, m), lambda i: (0, 0)),   # constant -> fetched once
            pl.BlockSpec((tc, 1), lambda i: (i, 0)),
            pl.BlockSpec((tc, 1), lambda i: (i, 0)),
        ],
        out_specs=pl.BlockSpec((tc, m), lambda i: (i, 0)),
        out_shape=jax.ShapeDtypeStruct((cout, m), COMPUTE_DTYPE),
        compiler_params=pltpu.CompilerParams(
            dimension_semantics=("parallel",),        # v7x: both TensorCores
            vmem_limit_bytes=_VMEM_LIMIT),
        cost_estimate=cost,
    )(w_r, patches,
      gamma.astype(jnp.float32).reshape(cout, 1),
      beta.astype(jnp.float32).reshape(cout, 1))
    return out.reshape(cout, n, do, ho, wo)


def conv_bn_lrelu_final(h, w, gamma, beta, w_last):
    """Third conv block + folded final Conv3d(4ndf->1, 4, 1, 0) + Sigmoid."""
    patches, (n, do, ho, wo) = _im2col_t(h, 4, 2, 1)
    spatial = do * ho * wo
    m = n * spatial
    w_r = _fold_weight(w).astype(COMPUTE_DTYPE)
    cout, k = w_r.shape
    w4 = w_last[0].reshape(cout, spatial).astype(jnp.float32)
    rows = max(8, ((n + 7) // 8) * 8)                 # sublane-aligned output

    vmem = (k * m * 2 + cout * k * 2 + 2 * cout * m * 4
            + cout * spatial * 4 + rows * 4) * 2
    _check_vmem(vmem, "conv_bn_lrelu_final")

    cost = pl.CostEstimate(
        flops=2 * cout * k * m + 8 * cout * m + 2 * cout * m,
        transcendentals=cout + rows,
        bytes_accessed=2 * (cout * k + k * m) + 4 * cout * spatial
                       + 8 * cout + 4 * rows)

    out = pl.pallas_call(
        functools.partial(_conv_bn_lrelu_head_kernel, inv_m=1.0 / m,
                          eps=BN_EPS, slope=LRELU_SLOPE,
                          n_batch=n, spatial=spatial),
        out_shape=jax.ShapeDtypeStruct((rows, 1), jnp.float32),
        in_specs=[_VMEM_SPEC] * 5,
        out_specs=_VMEM_SPEC,
        compiler_params=pltpu.CompilerParams(vmem_limit_bytes=_VMEM_LIMIT),
        cost_estimate=cost,
    )(w_r, patches,
      gamma.astype(jnp.float32).reshape(cout, 1),
      beta.astype(jnp.float32).reshape(cout, 1),
      w4)
    return out[:n, :].reshape(n, 1, 1, 1, 1)


# ----------------------------------------------------------------------------
# Model
# ----------------------------------------------------------------------------
def init_params(key, ndf=NDF, nc=NC):
    k1, k2, k3, k4 = jax.random.split(key, 4)

    def conv_w(k, cout, cin):
        # DCGAN-style init (N(0, 0.02)), PyTorch Conv3d weight layout.
        return 0.02 * jax.random.normal(k, (cout, cin, 4, 4, 4), jnp.float32)

    def bn_p(c):
        # PyTorch BatchNorm3d default init: weight=1, bias=0.
        return (jnp.ones((c,), jnp.float32), jnp.zeros((c,), jnp.float32))

    return {
        "w": [conv_w(k1, ndf, nc),
              conv_w(k2, ndf * 2, ndf),
              conv_w(k3, ndf * 4, ndf * 2),
              conv_w(k4, 1, ndf * 4)],
        "bn": [bn_p(ndf), bn_p(ndf * 2), bn_p(ndf * 4)],
    }


def discriminator_forward(x, params):
    """x: (N, nc, 32, 32, 32) float32 NCDHW -> (N, 1, 1, 1, 1) float32 in [0, 1]."""
    w, bn = params["w"], params["bn"]
    # Single layout conversion at the model boundary: channel-major, bf16.
    h = jnp.transpose(x, (1, 0, 2, 3, 4)).astype(COMPUTE_DTYPE)
    h = conv_bn_lrelu(h, w[0], bn[0][0], bn[0][1], stride=2, pad=1)
    h = conv_bn_lrelu(h, w[1], bn[1][0], bn[1][1], stride=2, pad=1)
    return conv_bn_lrelu_final(h, w[2], bn[2][0], bn[2][1], w[3])


if __name__ == "__main__":
    key = jax.random.PRNGKey(0)
    kx, kp = jax.random.split(key)

    N = 2
    x = jax.random.normal(kx, (N, NC, 32, 32, 32), jnp.float32)
    params = init_params(kp)

    fwd = jax.jit(discriminator_forward)
    out = fwd(x, params)
    jax.block_until_ready(out)

    assert out.shape == (N, 1, 1, 1, 1), out.shape
    assert out.dtype == jnp.float32
    assert bool(jnp.all(jnp.isfinite(out)))
    assert bool(jnp.all((out >= 0.0) & (out <= 1.0)))
    print("KERNEL_OK")
</pallas_src>

<mosaic_0001>
module attributes {stable_mosaic.version = 11 : i64} {
  func.func @_conv_bn_lrelu_kernel(%arg0: i32, %arg1: memref<8x64xbf16, #tpu.memory_space<vmem>>, %arg2: memref<64x8192xbf16, #tpu.memory_space<vmem>>, %arg3: memref<8x1xf32, #tpu.memory_space<vmem>>, %arg4: memref<8x1xf32, #tpu.memory_space<vmem>>, %arg5: memref<8x8192xbf16, #tpu.memory_space<vmem>>) attributes {dimension_semantics = [#tpu.dimension_semantics<parallel>], iteration_bounds = array<i64: 2>, scalar_prefetch = 0 : i64, scratch_operands = 0 : i64, tpu.core_type = #tpu.core_type<tc>, window_params = [{transform_indices = @transform_0, window_bounds = array<i64: 8, 64>}, {pipeline_mode = #tpu.pipeline_mode<synchronous>, transform_indices = @transform_1, window_bounds = array<i64: 64, 8192>}, {transform_indices = @transform_2, window_bounds = array<i64: 8, 1>}, {transform_indices = @transform_3, window_bounds = array<i64: 8, 1>}, {transform_indices = @transform_4, window_bounds = array<i64: 8, 8192>}]} {
    %c0 = arith.constant 0 : index
    %c0_0 = arith.constant 0 : index
    %0 = vector.load %arg1[%c0, %c0_0] : memref<8x64xbf16, #tpu.memory_space<vmem>>, vector<8x64xbf16>
    %c0_1 = arith.constant 0 : index
    %c0_2 = arith.constant 0 : index
    %1 = vector.load %arg2[%c0_1, %c0_2] : memref<64x8192xbf16, #tpu.memory_space<vmem>>, vector<64x8192xbf16>
    %cst = arith.constant dense<0.000000e+00> : vector<8x8192xf32>
    %2 = tpu.matmul %0, %1, %cst {dimension_numbers = #tpu.dot_dimension_numbers<[1], [0], [0], [1], [0, 0, 1, 1], [], []>} : vector<8x64xbf16>, vector<64x8192xbf16>, vector<8x8192xf32> -> vector<8x8192xf32>
    %cst_3 = arith.constant dense<0.000000e+00> : vector<8xf32>
    %3 = vector.multi_reduction <add>, %2, %cst_3 [1] : vector<8x8192xf32> to vector<8xf32>
    %4 = vector.shape_cast %3 : vector<8xf32> to vector<8x1xf32>
    %cst_4 = arith.constant 1.22070313E-4 : f32
    %5 = vector.broadcast %cst_4 : f32 to vector<8x1xf32>
    %6 = arith.mulf %4, %5 : vector<8x1xf32>
    %7 = vector.broadcast %6 : vector<8x1xf32> to vector<8x8192xf32>
    %8 = arith.subf %2, %7 : vector<8x8192xf32>
    %9 = arith.mulf %8, %8 : vector<8x8192xf32>
    %cst_5 = arith.constant dense<0.000000e+00> : vector<8xf32>
    %10 = vector.multi_reduction <add>, %9, %cst_5 [1] : vector<8x8192xf32> to vector<8xf32>
    %11 = vector.shape_cast %10 : vector<8xf32> to vector<8x1xf32>
    %cst_6 = arith.constant 1.22070313E-4 : f32
    %12 = vector.broadcast %cst_6 : f32 to vector<8x1xf32>
    %13 = arith.mulf %11, %12 : vector<8x1xf32>
    %c0_7 = arith.constant 0 : index
    %c0_8 = arith.constant 0 : index
    %14 = vector.load %arg3[%c0_7, %c0_8] : memref<8x1xf32, #tpu.memory_space<vmem>>, vector<8x1xf32>
    %cst_9 = arith.constant 9.99999974E-6 : f32
    %15 = vector.broadcast %cst_9 : f32 to vector<8x1xf32>
    %16 = arith.addf %13, %15 : vector<8x1xf32>
    %17 = math.rsqrt %16 : vector<8x1xf32>
    %18 = arith.mulf %14, %17 : vector<8x1xf32>
    %c0_10 = arith.constant 0 : index
    %c0_11 = arith.constant 0 : index
    %19 = vector.load %arg4[%c0_10, %c0_11] : memref<8x1xf32, #tpu.memory_space<vmem>>, vector<8x1xf32>
    %20 = arith.mulf %6, %18 : vector<8x1xf32>
    %21 = arith.subf %19, %20 : vector<8x1xf32>
    %22 = vector.broadcast %18 : vector<8x1xf32> to vector<8x8192xf32>
    %23 = arith.mulf %2, %22 : vector<8x8192xf32>
    %24 = vector.broadcast %21 : vector<8x1xf32> to vector<8x8192xf32>
    %25 = arith.addf %23, %24 : vector<8x8192xf32>
    %cst_12 = arith.constant 0.000000e+00 : f32
    %26 = vector.broadcast %cst_12 : f32 to vector<8x8192xf32>
    %27 = arith.cmpf oge, %25, %26 : vector<8x8192xf32>
    %cst_13 = arith.constant 2.000000e-01 : f32
    %28 = vector.broadcast %cst_13 : f32 to vector<8x8192xf32>
    %29 = arith.mulf %28, %25 : vector<8x8192xf32>
    %30 = arith.select %27, %25, %29 : vector<8x8192xi1>, vector<8x8192xf32>
    %31 = arith.truncf %30 : vector<8x8192xf32> to vector<8x8192xbf16>
    %c0_14 = arith.constant 0 : index
    %c0_15 = arith.constant 0 : index
    %32 = vector.load %arg5[%c0_14, %c0_15] : memref<8x8192xbf16, #tpu.memory_space<vmem>>, vector<8x8192xbf16>
    tpu.vector_store %arg5[%c0_14, %c0_15], %31 {strides = array<i32>} : memref<8x8192xbf16, #tpu.memory_space<vmem>>, vector<8x8192xbf16>,
    return
  }
  func.func @transform_0(%arg0: i32) -> (i32, i32) {
    %c0_i32 = arith.constant 0 : i32
    %c0_i32_0 = arith.constant 0 : i32
    return %arg0, %c0_i32 : i32, i32
  }
  func.func @transform_1(%arg0: i32) -> (i32, i32) {
    %c0_i32 = arith.constant 0 : i32
    %c0_i32_0 = arith.constant 0 : i32
    %c0_i32_1 = arith.constant 0 : i32
    return %c0_i32, %c0_i32_0 : i32, i32
  }
  func.func @transform_2(%arg0: i32) -> (i32, i32) {
    %c0_i32 = arith.constant 0 : i32
    %c0_i32_0 = arith.constant 0 : i32
    return %arg0, %c0_i32 : i32, i32
  }
  func.func @transform_3(%arg0: i32) -> (i32, i32) {
    %c0_i32 = arith.constant 0 : i32
    %c0_i32_0 = arith.constant 0 : i32
    return %arg0, %c0_i32 : i32, i32
  }
  func.func @transform_4(%arg0: i32) -> (i32, i32) {
    %c0_i32 = arith.constant 0 : i32
    %c0_i32_0 = arith.constant 0 : i32
    return %arg0, %c0_i32 : i32, i32
  }
}

module attributes {stable_mosaic.version = 11 : i64} {
  func.func @_conv_bn_lrelu_kernel(%arg0: i32, %arg1: memref<16x1024xbf16, #tpu.memory_space<vmem>>, %arg2: memref<1024x1024xbf16, #tpu.memory_space<vmem>>, %arg3: memref<16x1xf32, #tpu.memory_space<vmem>>, %arg4: memref<16x1xf32, #tpu.memory_space<vmem>>, %arg5: memref<16x1024xbf16, #tpu.memory_space<vmem>>) attributes {dimension_semantics = [#tpu.dimension_semantics<parallel>], iteration_bounds = array<i64: 2>, scalar_prefetch = 0 : i64, scratch_operands = 0 : i64, tpu.core_type = #tpu.core_type<tc>, window_params = [{transform_indices = @transform_0, window_bounds = array<i64: 16, 1024>}, {pipeline_mode = #tpu.pipeline_mode<synchronous>, transform_indices = @transform_1, window_bounds = array<i64: 1024, 1024>}, {transform_indices = @transform_2, window_bounds = array<i64: 16, 1>}, {transform_indices = @transform_3, window_bounds = array<i64: 16, 1>}, {transform_indices = @transform_4, window_bounds = array<i64: 16, 1024>}]} {
    %c0 = arith.constant 0 : index
    %c0_0 = arith.constant 0 : index
    %0 = vector.load %arg1[%c0, %c0_0] : memref<16x1024xbf16, #tpu.memory_space<vmem>>, vector<16x1024xbf16>
    %c0_1 = arith.constant 0 : index
    %c0_2 = arith.constant 0 : index
    %1 = vector.load %arg2[%c0_1, %c0_2] : memref<1024x1024xbf16, #tpu.memory_space<vmem>>, vector<1024x1024xbf16>
    %cst = arith.constant dense<0.000000e+00> : vector<16x1024xf32>
    %2 = tpu.matmul %0, %1, %cst {dimension_numbers = #tpu.dot_dimension_numbers<[1], [0], [0], [1], [0, 0, 1, 1], [], []>} : vector<16x1024xbf16>, vector<1024x1024xbf16>, vector<16x1024xf32> -> vector<16x1024xf32>
    %cst_3 = arith.constant dense<0.000000e+00> : vector<16xf32>
    %3 = vector.multi_reduction <add>, %2, %cst_3 [1] : vector<16x1024xf32> to vector<16xf32>
    %4 = vector.shape_cast %3 : vector<16xf32> to vector<16x1xf32>
    %cst_4 = arith.constant 9.765625E-4 : f32
    %5 = vector.broadcast %cst_4 : f32 to vector<16x1xf32>
    %6 = arith.mulf %4, %5 : vector<16x1xf32>
    %7 = vector.broadcast %6 : vector<16x1xf32> to vector<16x1024xf32>
    %8 = arith.subf %2, %7 : vector<16x1024xf32>
    %9 = arith.mulf %8, %8 : vector<16x1024xf32>
    %cst_5 = arith.constant dense<0.000000e+00> : vector<16xf32>
    %10 = vector.multi_reduction <add>, %9, %cst_5 [1] : vector<16x1024xf32> to vector<16xf32>
    %11 = vector.shape_cast %10 : vector<16xf32> to vector<16x1xf32>
    %cst_6 = arith.constant 9.765625E-4 : f32
    %12 = vector.broadcast %cst_6 : f32 to vector<16x1xf32>
    %13 = arith.mulf %11, %12 : vector<16x1xf32>
    %c0_7 = arith.constant 0 : index
    %c0_8 = arith.constant 0 : index
    %14 = vector.load %arg3[%c0_7, %c0_8] : memref<16x1xf32, #tpu.memory_space<vmem>>, vector<16x1xf32>
    %cst_9 = arith.constant 9.99999974E-6 : f32
    %15 = vector.broadcast %cst_9 : f32 to vector<16x1xf32>
    %16 = arith.addf %13, %15 : vector<16x1xf32>
    %17 = math.rsqrt %16 : vector<16x1xf32>
    %18 = arith.mulf %14, %17 : vector<16x1xf32>
    %c0_10 = arith.constant 0 : index
    %c0_11 = arith.constant 0 : index
    %19 = vector.load %arg4[%c0_10, %c0_11] : memref<16x1xf32, #tpu.memory_space<vmem>>, vector<16x1xf32>
    %20 = arith.mulf %6, %18 : vector<16x1xf32>
    %21 = arith.subf %19, %20 : vector<16x1xf32>
    %22 = vector.broadcast %18 : vector<16x1xf32> to vector<16x1024xf32>
    %23 = arith.mulf %2, %22 : vector<16x1024xf32>
    %24 = vector.broadcast %21 : vector<16x1xf32> to vector<16x1024xf32>
    %25 = arith.addf %23, %24 : vector<16x1024xf32>
    %cst_12 = arith.constant 0.000000e+00 : f32
    %26 = vector.broadcast %cst_12 : f32 to vector<16x1024xf32>
    %27 = arith.cmpf oge, %25, %26 : vector<16x1024xf32>
    %cst_13 = arith.constant 2.000000e-01 : f32
    %28 = vector.broadcast %cst_13 : f32 to vector<16x1024xf32>
    %29 = arith.mulf %28, %25 : vector<16x1024xf32>
    %30 = arith.select %27, %25, %29 : vector<16x1024xi1>, vector<16x1024xf32>
    %31 = arith.truncf %30 : vector<16x1024xf32> to vector<16x1024xbf16>
    %c0_14 = arith.constant 0 : index
    %c0_15 = arith.constant 0 : index
    %32 = vector.load %arg5[%c0_14, %c0_15] : memref<16x1024xbf16, #tpu.memory_space<vmem>>, vector<16x1024xbf16>
    tpu.vector_store %arg5[%c0_14, %c0_15], %31 {strides = array<i32>} : memref<16x1024xbf16, #tpu.memory_space<vmem>>, vector<16x1024xbf16>,
    return
  }
  func.func @transform_0(%arg0: i32) -> (i32, i32) {
    %c0_i32 = arith.constant 0 : i32
    %c0_i32_0 = arith.constant 0 : i32
    return %arg0, %c0_i32 : i32, i32
  }
  func.func @transform_1(%arg0: i32) -> (i32, i32) {
    %c0_i32 = arith.constant 0 : i32
    %c0_i32_0 = arith.constant 0 : i32
    %c0_i32_1 = arith.constant 0 : i32
    return %c0_i32, %c0_i32_0 : i32, i32
  }
  func.func @transform_2(%arg0: i32) -> (i32, i32) {
    %c0_i32 = arith.constant 0 : i32
    %c0_i32_0 = arith.constant 0 : i32
    return %arg0, %c0_i32 : i32, i32
  }
  func.func @transform_3(%arg0: i32) -> (i32, i32) {
    %c0_i32 = arith.constant 0 : i32
    %c0_i32_0 = arith.constant 0 : i32
    return %arg0, %c0_i32 : i32, i32
  }
  func.func @transform_4(%arg0: i32) -> (i32, i32) {
    %c0_i32 = arith.constant 0 : i32
    %c0_i32_0 = arith.constant 0 : i32
    return %arg0, %c0_i32 : i32, i32
  }
}

module attributes {stable_mosaic.version = 11 : i64} {
  func.func @_conv_bn_lrelu_head_kernel(%arg0: memref<64x2048xbf16, #tpu.memory_space<vmem>>, %arg1: memref<2048x128xbf16, #tpu.memory_space<vmem>>, %arg2: memref<64x1xf32, #tpu.memory_space<vmem>>, %arg3: memref<64x1xf32, #tpu.memory_space<vmem>>, %arg4: memref<64x64xf32, #tpu.memory_space<vmem>>, %arg5: memref<8x1xf32, #tpu.memory_space<vmem>>) attributes {dimension_semantics = [], scalar_prefetch = 0 : i64, scratch_operands = 0 : i64, tpu.core_type = #tpu.core_type<tc>} {
    %c0 = arith.constant 0 : index
    %c0_0 = arith.constant 0 : index
    %0 = vector.load %arg0[%c0, %c0_0] : memref<64x2048xbf16, #tpu.memory_space<vmem>>, vector<64x2048xbf16>
    %c0_1 = arith.constant 0 : index
    %c0_2 = arith.constant 0 : index
    %1 = vector.load %arg1[%c0_1, %c0_2] : memref<2048x128xbf16, #tpu.memory_space<vmem>>, vector<2048x128xbf16>
    %cst = arith.constant dense<0.000000e+00> : vector<64x128xf32>
    %2 = tpu.matmul %0, %1, %cst {dimension_numbers = #tpu.dot_dimension_numbers<[1], [0], [0], [1], [0, 0, 1, 1], [], []>} : vector<64x2048xbf16>, vector<2048x128xbf16>, vector<64x128xf32> -> vector<64x128xf32>
    %cst_3 = arith.constant dense<0.000000e+00> : vector<64xf32>
    %3 = vector.multi_reduction <add>, %2, %cst_3 [1] : vector<64x128xf32> to vector<64xf32>
    %4 = vector.shape_cast %3 : vector<64xf32> to vector<64x1xf32>
    %cst_4 = arith.constant 7.812500e-03 : f32
    %5 = vector.broadcast %cst_4 : f32 to vector<64x1xf32>
    %6 = arith.mulf %4, %5 : vector<64x1xf32>
    %7 = vector.broadcast %6 : vector<64x1xf32> to vector<64x128xf32>
    %8 = arith.subf %2, %7 : vector<64x128xf32>
    %9 = arith.mulf %8, %8 : vector<64x128xf32>
    %cst_5 = arith.constant dense<0.000000e+00> : vector<64xf32>
    %10 = vector.multi_reduction <add>, %9, %cst_5 [1] : vector<64x128xf32> to vector<64xf32>
    %11 = vector.shape_cast %10 : vector<64xf32> to vector<64x1xf32>
    %cst_6 = arith.constant 7.812500e-03 : f32
    %12 = vector.broadcast %cst_6 : f32 to vector<64x1xf32>
    %13 = arith.mulf %11, %12 : vector<64x1xf32>
    %c0_7 = arith.constant 0 : index
    %c0_8 = arith.constant 0 : index
    %14 = vector.load %arg2[%c0_7, %c0_8] : memref<64x1xf32, #tpu.memory_space<vmem>>, vector<64x1xf32>
    %cst_9 = arith.constant 9.99999974E-6 : f32
    %15 = vector.broadcast %cst_9 : f32 to vector<64x1xf32>
    %16 = arith.addf %13, %15 : vector<64x1xf32>
    %17 = math.rsqrt %16 : vector<64x1xf32>
    %18 = arith.mulf %14, %17 : vector<64x1xf32>
    %c0_10 = arith.constant 0 : index
    %c0_11 = arith.constant 0 : index
    %19 = vector.load %arg3[%c0_10, %c0_11] : memref<64x1xf32, #tpu.memory_space<vmem>>, vector<64x1xf32>
    %20 = arith.mulf %6, %18 : vector<64x1xf32>
    %21 = arith.subf %19, %20 : vector<64x1xf32>
    %22 = vector.broadcast %18 : vector<64x1xf32> to vector<64x128xf32>
    %23 = arith.mulf %2, %22 : vector<64x128xf32>
    %24 = vector.broadcast %21 : vector<64x1xf32> to vector<64x128xf32>
    %25 = arith.addf %23, %24 : vector<64x128xf32>
    %cst_12 = arith.constant 0.000000e+00 : f32
    %26 = vector.broadcast %cst_12 : f32 to vector<64x128xf32>
    %27 = arith.cmpf oge, %25, %26 : vector<64x128xf32>
    %cst_13 = arith.constant 2.000000e-01 : f32
    %28 = vector.broadcast %cst_13 : f32 to vector<64x128xf32>
    %29 = arith.mulf %28, %25 : vector<64x128xf32>
    %30 = arith.select %27, %25, %29 : vector<64x128xi1>, vector<64x128xf32>
    %c0_14 = arith.constant 0 : index
    %c0_15 = arith.constant 0 : index
    %31 = vector.load %arg4[%c0_14, %c0_15] : memref<64x64xf32, #tpu.memory_space<vmem>>, vector<64x64xf32>
    %32 = tpu.iota {dimensions = array<i32: 0>} : vector<8x1xi32>
    %cst_16 = arith.constant 0.000000e+00 : f32
    %33 = vector.broadcast %cst_16 : f32 to vector<8x1xf32>
    %34 = vector.extract_strided_slice %30 {offsets = [0, 0], sizes = [64, 64], strides = [1, 1]} : vector<64x128xf32> to vector<64x64xf32>
    %35 = arith.mulf %34, %31 : vector<64x64xf32>
    %cst_17 = arith.constant dense<0.000000e+00> : vector<64xf32>
    %36 = vector.multi_reduction <add>, %35, %cst_17 [1] : vector<64x64xf32> to vector<64xf32>
    %37 = vector.shape_cast %36 : vector<64xf32> to vector<64x1xf32>
    %cst_18 = arith.constant dense<0.000000e+00> : vector<1xf32>
    %38 = vector.multi_reduction <add>, %37, %cst_18 [0] : vector<64x1xf32> to vector<1xf32>
    %39 = vector.shape_cast %38 : vector<1xf32> to vector<1x1xf32>
    %c0_i32 = arith.constant 0 : i32
    %40 = vector.broadcast %c0_i32 : i32 to vector<8x1xi32>
    %41 = arith.cmpi eq, %32, %40 : vector<8x1xi32>
    %cst_19 = arith.constant 0.000000e+00 : f32
    %42 = vector.shape_cast %39 : vector<1x1xf32> to vector<1x1xf32>
    %43 = vector.broadcast %42 : vector<1x1xf32> to vector<8x1xf32>
    %44 = vector.broadcast %cst_19 : f32 to vector<8x1xf32>
    %45 = arith.select %41, %43, %44 : vector<8x1xi1>, vector<8x1xf32>
    %46 = arith.addf %33, %45 : vector<8x1xf32>
    %47 = vector.extract_strided_slice %30 {offsets = [0, 64], sizes = [64, 64], strides = [1, 1]} : vector<64x128xf32> to vector<64x64xf32>
    %48 = arith.mulf %47, %31 : vector<64x64xf32>
    %cst_20 = arith.constant dense<0.000000e+00> : vector<64xf32>
    %49 = vector.multi_reduction <add>, %48, %cst_20 [1] : vector<64x64xf32> to vector<64xf32>
    %50 = vector.shape_cast %49 : vector<64xf32> to vector<64x1xf32>
    %cst_21 = arith.constant dense<0.000000e+00> : vector<1xf32>
    %51 = vector.multi_reduction <add>, %50, %cst_21 [0] : vector<64x1xf32> to vector<1xf32>
    %52 = vector.shape_cast %51 : vector<1xf32> to vector<1x1xf32>
    %c1_i32 = arith.constant 1 : i32
    %53 = vector.broadcast %c1_i32 : i32 to vector<8x1xi32>
    %54 = arith.cmpi eq, %32, %53 : vector<8x1xi32>
    %cst_22 = arith.constant 0.000000e+00 : f32
    %55 = vector.shape_cast %52 : vector<1x1xf32> to vector<1x1xf32>
    %56 = vector.broadcast %55 : vector<1x1xf32> to vector<8x1xf32>
    %57 = vector.broadcast %cst_22 : f32 to vector<8x1xf32>
    %58 = arith.select %54, %56, %57 : vector<8x1xi1>, vector<8x1xf32>
    %59 = arith.addf %46, %58 : vector<8x1xf32>
    %cst_23 = arith.constant 0.000000e+00 : f32
    %60 = vector.broadcast %cst_23 : f32 to vector<8x1xf32>
    %61 = arith.subf %60, %59 : vector<8x1xf32>
    %62 = math.exp %61 : vector<8x1xf32>
    %cst_24 = arith.constant 1.000000e+00 : f32
    %63 = vector.broadcast %cst_24 : f32 to vector<8x1xf32>
    %64 = arith.addf %63, %62 : vector<8x1xf32>
    %cst_25 = arith.constant 1.000000e+00 : f32
    %65 = vector.broadcast %cst_25 : f32 to vector<8x1xf32>
    %66 = arith.divf %65, %64 : vector<8x1xf32>
    %c0_26 = arith.constant 0 : index
    %c0_27 = arith.constant 0 : index
    %67 = vector.load %arg5[%c0_26, %c0_27] : memref<8x1xf32, #tpu.memory_space<vmem>>, vector<8x1xf32>
    tpu.vector_store %arg5[%c0_26, %c0_27], %66 {strides = array<i32>} : memref<8x1xf32, #tpu.memory_space<vmem>>, vector<8x1xf32>,
    return
  }
}

</mosaic_0001>

<llo_original>
// kernel: discriminator_forward.3
$region0: #{discriminator_forward.3}
  #allocation0 [shape = 'u32[]', space=smem, size = 0x4, offset = 0x4, fixed_abs, tag = 'smem constant byte address 0x4 - core index']
  #allocation1 [shape = 'u32[72,128]{1,0:T(1,128)}', space=vmem, size = 0x9000, scoped, tag = 'internal scratch']
  %s0 = inlined_call_operand.vmem [shape: bf16[16,64], index: 0, kind: input, shape index: {}]
  %s1 = inlined_call_operand.vmem [shape: bf16[64,8192], index: 1, kind: input, shape index: {}]
  %s2 = inlined_call_operand.vmem [shape: f32[16,1], index: 2, kind: input, shape index: {}]
  %s3 = inlined_call_operand.vmem [shape: f32[16,1], index: 3, kind: input, shape index: {}]
  %s4 = inlined_call_operand.vmem [shape: bf16[16,8192], index: 4, kind: output, shape index: {}]
  %s5 = sld [smem:[#allocation0]]
  $region49: #{discriminator_forward.3} parent=0
    _
  %s7 = ssub.s32 1, %s5
  %s8 = scalar_select 0, %s7, %s5
  loop: start=0, step=1, limit=4
  $region2: #{discriminator_forward.3} parent=0 // loop_pre_header
    _
  $region3: #{discriminator_forward.3} parent=0 // loop_header
    %s10 = sphi 0, %s14
    %p11 = scmp.ge.s32.totalorder %s10, 4
    %s20 = sphi 0, %s22
    %s23 = sphi 0, %s20
    %s24 = sphi 0, %s23
    %s40 = sphi 0, %s24
    %s44 = sphi 0, %s44
    %s46 = sphi 0, %s44
    %s47 = sphi 0, %s46
    %s61 = sphi 0, %s47
    %s67 = sphi 0, %s69
    %s70 = sphi 0, %s67
    %s71 = sphi 0, %s70
    %s87 = sphi 0, %s71
    %s93 = sphi 0, %s95
    %s96 = sphi 0, %s93
    %s97 = sphi 0, %s96
    %s113 = sphi 0, %s97
    %s119 = sphi 0, %s121
    %s122 = sphi 0, %s119
    %s123 = sphi 0, %s122
    %s139 = sphi 0, %s123
  $region4: #{discriminator_forward.3} parent=0 // loop_header_branch
    %13 = sbr.rel (%p11) target = $region8
  $region5: #{discriminator_forward.3} parent=0 // loop_body
    %s15 = ssub.s32 %s10, 1
    %s16 = ssub.s32 %s10, 2
    %s17 = sadd.s32 %s10, 1
    %s18 = ssub.s32 %s10, %s17
    %p19 = scmp.eq.s32.totalorder %s18, 0
    %s21 = sadd.s32 %s20, 1
    %s22 = scalar_select %p19, %s20, %s21
    %p25 = pneg %p19
    %p26 = scmp.eq.s32.totalorder %s10, 1
    %p27 = por %p25, %p26
    %p28 = scmp.ne.s32.totalorder %s20, %s23
    %p29 = scmp.eq.s32.totalorder %s10, 0
    %p30 = por %p28, %p29
    %p31 = scmp.ne.s32.totalorder %s20, %s23
    %p32 = scmp.eq.s32.totalorder %s15, 1
    %p33 = por %p31, %p32
    %p34 = scmp.ne.s32.totalorder %s23, %s24
    %p35 = scmp.eq.s32.totalorder %s15, 0
    %p36 = por %p34, %p35
    %p37 = scmp.ne.s32.totalorder %s23, %s24
    %p38 = scmp.eq.s32.totalorder %s16, 1
    %p39 = por %p37, %p38
    %p41 = scmp.ne.s32.totalorder %s24, %s40
    %p42 = scmp.eq.s32.totalorder %s16, 0
    %p43 = por %p41, %p42
    %s45 = sadd.s32 %s44, 1
    %p48 = scmp.eq.s32.totalorder %s10, 1
    %p49 = scmp.ne.s32.totalorder %s44, %s46
    %p50 = scmp.eq.s32.totalorder %s10, 0
    %p51 = por %p49, %p50
    %p52 = scmp.ne.s32.totalorder %s44, %s46
    %p53 = scmp.eq.s32.totalorder %s15, 1
    %p54 = por %p52, %p53
    %p55 = scmp.ne.s32.totalorder %s46, %s47
    %p56 = scmp.eq.s32.totalorder %s15, 0
    %p57 = por %p55, %p56
    %p58 = scmp.ne.s32.totalorder %s46, %s47
    %p59 = scmp.eq.s32.totalorder %s16, 1
    %p60 = por %p58, %p59
    %p62 = scmp.ne.s32.totalorder %s47, %s61
    %p63 = scmp.eq.s32.totalorder %s16, 0
    %p64 = por %p62, %p63
    %s65 = ssub.s32 %s10, %s17
    %p66 = scmp.eq.s32.totalorder %s65, 0
    %s68 = sadd.s32 %s67, 1
    %s69 = scalar_select %p66, %s67, %s68
    %p72 = pneg %p66
    %p73 = scmp.eq.s32.totalorder %s10, 1
    %p74 = por %p72, %p73
    %p75 = scmp.ne.s32.totalorder %s67, %s70
    %p76 = scmp.eq.s32.totalorder %s10, 0
    %p77 = por %p75, %p76
    %p78 = scmp.ne.s32.totalorder %s67, %s70
    %p79 = scmp.eq.s32.totalorder %s15, 1
    %p80 = por %p78, %p79
    %p81 = scmp.ne.s32.totalorder %s70, %s71
    %p82 = scmp.eq.s32.totalorder %s15, 0
    %p83 = por %p81, %p82
    %p84 = scmp.ne.s32.totalorder %s70, %s71
    %p85 = scmp.eq.s32.totalorder %s16, 1
    %p86 = por %p84, %p85
    %p88 = scmp.ne.s32.totalorder %s71, %s87
    %p89 = scmp.eq.s32.totalorder %s16, 0
    %p90 = por %p88, %p89
    %s91 = ssub.s32 %s10, %s17
    %p92 = scmp.eq.s32.totalorder %s91, 0
    %s94 = sadd.s32 %s93, 1
    %s95 = scalar_select %p92, %s93, %s94
    %p98 = pneg %p92
    %p99 = scmp.eq.s32.totalorder %s10, 1
    %p100 = por %p98, %p99
    %p101 = scmp.ne.s32.totalorder %s93, %s96
    %p102 = scmp.eq.s32.totalorder %s10, 0
    %p103 = por %p101, %p102
    %p104 = scmp.ne.s32.totalorder %s93, %s96
    %p105 = scmp.eq.s32.totalorder %s15, 1
    %p106 = por %p104, %p105
    %p107 = scmp.ne.s32.totalorder %s96, %s97
    %p108 = scmp.eq.s32.totalorder %s15, 0
    %p109 = por %p107, %p108
    %p110 = scmp.ne.s32.totalorder %s96, %s97
    %p111 = scmp.eq.s32.totalorder %s16, 1
    %p112 = por %p110, %p111
    %p114 = scmp.ne.s32.totalorder %s97, %s113
    %p115 = scmp.eq.s32.totalorder %s16, 0
    %p116 = por %p114, %p115
    %s117 = ssub.s32 %s10, %s17
    %p118 = scmp.eq.s32.totalorder %s117, 0
    %s120 = sadd.s32 %s119, 1
    %s121 = scalar_select %p118, %s119, %s120
    %p124 = pneg %p118
    %p125 = scmp.eq.s32.totalorder %s10, 1
    %p126 = por %p124, %p125
    %p127 = scmp.ne.s32.totalorder %s119, %s122
    %p128 = scmp.eq.s32.totalorder %s10, 0
    %p129 = por %p127, %p128
    %p130 = scmp.ne.s32.totalorder %s119, %s122
    %p131 = scmp.eq.s32.totalorder %s15, 1
    %p132 = por %p130, %p131
    %p133 = scmp.ne.s32.totalorder %s122, %s123
    %p134 = scmp.eq.s32.totalorder %s15, 0
    %p135 = por %p133, %p134
    %p136 = scmp.ne.s32.totalorder %s122, %s123
    %p137 = scmp.eq.s32.totalorder %s16, 1
    %p138 = por %p136, %p137
    %p140 = scmp.ne.s32.totalorder %s123, %s139
    %p141 = scmp.eq.s32.totalorder %s16, 0
    %p142 = por %p140, %p141
    %p143 = scmp.le.s32.totalorder 1, %s10
    %p144 = scmp.lt.s32.totalorder %s10, 3
    %p145 = pnand %p143, %p144
    %p146 = pneg %p145
    // Predicated region
    $region9: #{discriminator_forward.3} parent=5 // pred_check
      _
    $region10: #{discriminator_forward.3} parent=5 // pred_check_branch
      %148 = sbr.rel (%p145) target = $region12
    $region11: #{discriminator_forward.3} parent=5 // pred_region
      %s149 = ssub.s32 %s10, 1
      // Predicated region
      $region13: #{discriminator_forward.3} parent=11 // pred_check
        %p150 = pneg %p57
      $region14: #{discriminator_forward.3} parent=11 // pred_check_branch
        %152 = sbr.rel (%p150) target = $region16
      $region15: #{discriminator_forward.3} parent=11 // pred_region
        _
      $region16: #{discriminator_forward.3} parent=11 // pred_fallthru
        _
    $region12: #{discriminator_forward.3} parent=5 // pred_fallthru
      _
    %p153 = scmp.lt.s32.totalorder %s10, 2
    // Predicated region
    $region17: #{discriminator_forward.3} parent=5 // pred_check
      %p154 = pneg %p153
    $region18: #{discriminator_forward.3} parent=5 // pred_check_branch
      %156 = sbr.rel (%p154) target = $region20
    $region19: #{discriminator_forward.3} parent=5 // pred_region
      // Predicated region
      $region21: #{discriminator_forward.3} parent=19 // pred_check
        %p157 = pneg %p30
      $region22: #{discriminator_forward.3} parent=19 // pred_check_branch
        %159 = sbr.rel (%p157) target = $region24
      $region23: #{discriminator_forward.3} parent=19 // pred_region
        %p160 = scmp.lt.s32.totalorder %s10, 1
        %s161 = scalar_select %p160, %s10, 1
        %s162 = smul.addr %s161, 4
        %s163 = scalar_lea.vmem %s0, %s162
      $region24: #{discriminator_forward.3} parent=19 // pred_fallthru
        _
      // Predicated region
      $region25: #{discriminator_forward.3} parent=19 // pred_check
        %p164 = pneg %p77
      $region26: #{discriminator_forward.3} parent=19 // pred_check_branch
        %166 = sbr.rel (%p164) target = $region28
      $region27: #{discriminator_forward.3} parent=19 // pred_region
        %p167 = scmp.lt.s32.totalorder %s10, 1
        %s168 = scalar_select %p167, %s10, 1
        %s169 = smul.addr %s168, 8
        %s170 = scalar_lea.vmem %s2, %s169
      $region28: #{discriminator_forward.3} parent=19 // pred_fallthru
        _
      // Predicated region
      $region29: #{discriminator_forward.3} parent=19 // pred_check
        %p171 = pneg %p103
      $region30: #{discriminator_forward.3} parent=19 // pred_check_branch
        %173 = sbr.rel (%p171) target = $region32
      $region31: #{discriminator_forward.3} parent=19 // pred_region
        %p174 = scmp.lt.s32.totalorder %s10, 1
        %s175 = scalar_select %p174, %s10, 1
        %s176 = smul.addr %s175, 8
        %s177 = scalar_lea.vmem %s3, %s176
      $region32: #{discriminator_forward.3} parent=19 // pred_fallthru
        _
    $region20: #{discriminator_forward.3} parent=5 // pred_fallthru
      _
    %p178 = scmp.le.s32.totalorder 1, %s10
    %p179 = scmp.lt.s32.totalorder %s10, 3
    %p180 = pnand %p178, %p179
    %p181 = pneg %p180
    // Predicated region
    $region33: #{discriminator_forward.3} parent=5 // pred_check
      _
    $region34: #{discriminator_forward.3} parent=5 // pred_check_branch
      %183 = sbr.rel (%p180) target = $region36
    $region35: #{discriminator_forward.3} parent=5 // pred_region
      %s184 = ssub.s32 %s10, 1
      %p185 = scmp.lt.s32.totalorder %s15, 1
      %s186 = scalar_select %p185, %s15, 1
      %s187 = smul.addr %s186, 4
      %s188 = scalar_lea.vmem %s0, %s187
      %p189 = pneg %p36
      %p190 = pneg %p33
      %p191 = pneg %p57
      %p192 = pneg %p54
      %p193 = scmp.lt.s32.totalorder %s15, 1
      %s194 = scalar_select %p193, %s15, 1
      %s195 = smul.addr %s194, 8
      %s196 = scalar_lea.vmem %s2, %s195
      %p197 = pneg %p83
      %p198 = pneg %p80
      %p199 = scmp.lt.s32.totalorder %s15, 1
      %s200 = scalar_select %p199, %s15, 1
      %s201 = smul.addr %s200, 8
      %s202 = scalar_lea.vmem %s3, %s201
      %p203 = pneg %p109
      %p204 = pneg %p106
      %p205 = pneg %p135
      %p206 = pneg %p132
      %p207 = scmp.lt.s32.totalorder %s15, 1
      %s208 = scalar_select %p207, %s15, 1
      %s209 = smul.addr %s208, 64
      %s210 = smul.addr %s209, 4
      %s211 = scalar_lea.vmem %s4, %s210
      %p212 = scmp.lt.s32.totalorder %s15, 1
      %s213 = scalar_select %p212, %s15, 1
      %s214 = smul.addr %s213, 4
      %s215 = scalar_lea.vmem %s0, %s214
      %p216 = scmp.lt.s32.totalorder %s15, 1
      %s217 = scalar_select %p216, %s15, 1
      %s218 = smul.addr %s217, 8
      %s219 = scalar_lea.vmem %s2, %s218
      %p220 = scmp.lt.s32.totalorder %s15, 1
      %s221 = scalar_select %p220, %s15, 1
      %s222 = smul.addr %s221, 8
      %s223 = scalar_lea.vmem %s3, %s222
      %p224 = scmp.lt.s32.totalorder %s15, 1
      %s225 = scalar_select %p224, %s15, 1
      %s226 = smul.addr %s225, 64
      %s227 = smul.addr %s226, 4
      %s228 = scalar_lea.vmem %s4, %s227
      %v230 = vld [vmem:[%s215] sm:$0xf]
      %v231 = vld [vmem:[%s1] sm:$0xff]
      %v232 = vld [vmem:[%s1 + $0x8] sm:$0xff]
      %v233 = vld [vmem:[%s1 + $0x10] sm:$0xff]
      %v234 = vld [vmem:[%s1 + $0x18] sm:$0xff]
      %v235 = vld [vmem:[%s1 + $0x20] sm:$0xff]
      %v236 = vld [vmem:[%s1 + $0x28] sm:$0xff]
      %v237 = vld [vmem:[%s1 + $0x30] sm:$0xff]
      %v238 = vld [vmem:[%s1 + $0x38] sm:$0xff]
      %v239 = vld [vmem:[%s1 + $0x40] sm:$0xff]
      %v240 = vld [vmem:[%s1 + $0x48] sm:$0xff]
      %v241 = vld [vmem:[%s1 + $0x50] sm:$0xff]
      %v242 = vld [vmem:[%s1 + $0x58] sm:$0xff]
      %v243 = vld [vmem:[%s1 + $0x60] sm:$0xff]
      %v244 = vld [vmem:[%s1 + $0x68] sm:$0xff]
      %v245 = vld [vmem:[%s1 + $0x70] sm:$0xff]
      %v246 = vld [vmem:[%s1 + $0x78] sm:$0xff]
      %v247 = vld [vmem:[%s1 + $0x80] sm:$0xff]
      %v248 = vld [vmem:[%s1 + $0x88] sm:$0xff]
      %v249 = vld [vmem:[%s1 + $0x90] sm:$0xff]
      %v250 = vld [vmem:[%s1 + $0x98] sm:$0xff]
      %v251 = vld [vmem:[%s1 + $0xa0] sm:$0xff]
      %v252 = vld [vmem:[%s1 + $0xa8] sm:$0xff]
      %v253 = vld [vmem:[%s1 + $0xb0] sm:$0xff]
      %v254 = vld [vmem:[%s1 + $0xb8] sm:$0xff]
      %v255 = vld [vmem:[%s1 + $0xc0] sm:$0xff]
      %v256 = vld [vmem:[%s1 + $0xc8] sm:$0xff]
      %v257 = vld [vmem:[%s1 + $0xd0] sm:$0xff]
      %v258 = vld [vmem:[%s1 + $0xd8] sm:$0xff]
      %v259 = vld [vmem:[%s1 + $0xe0] sm:$0xff]
      %v260 = vld [vmem:[%s1 + $0xe8] sm:$0xff]
      %v261 = vld [vmem:[%s1 + $0xf0] sm:$0xff]
      %v262 = vld [vmem:[%s1 + $0xf8] sm:$0xff]
      %v263 = vld [vmem:[%s1 + $0x100] sm:$0xff]
      %v264 = vld [vmem:[%s1 + $0x108] sm:$0xff]
      %v265 = vld [vmem:[%s1 + $0x110] sm:$0xff]
      %v266 = vld [vmem:[%s1 + $0x118] sm:$0xff]
      %v267 = vld [vmem:[%s1 + $0x120] sm:$0xff]
      %v268 = vld [vmem:[%s1 + $0x128] sm:$0xff]
      %v269 = vld [vmem:[%s1 + $0x130] sm:$0xff]
      %v270 = vld [vmem:[%s1 + $0x138] sm:$0xff]
      %v271 = vld [vmem:[%s1 + $0x140] sm:$0xff]
      %v272 = vld [vmem:[%s1 + $0x148] sm:$0xff]
      %v273 = vld [vmem:[%s1 + $0x150] sm:$0xff]
      %v274 = vld [vmem:[%s1 + $0x158] sm:$0xff]
      %v275 = vld [vmem:[%s1 + $0x160] sm:$0xff]
      %v276 = vld [vmem:[%s1 + $0x168] sm:$0xff]
      %v277 = vld [vmem:[%s1 + $0x170] sm:$0xff]
      %v278 = vld [vmem:[%s1 + $0x178] sm:$0xff]
      %v279 = vld [vmem:[%s1 + $0x180] sm:$0xff]
      %v280 = vld [vmem:[%s1 + $0x188] sm:$0xff]
      %v281 = vld [vmem:[%s1 + $0x190] sm:$0xff]
      %v282 = vld [vmem:[%s1 + $0x198] sm:$0xff]
      %v283 = vld [vmem:[%s1 + $0x1a0] sm:$0xff]
      %v284 = vld [vmem:[%s1 + $0x1a8] sm:$0xff]
      %v285 = vld [vmem:[%s1 + $0x1b0] sm:$0xff]
      %v286 = vld [vmem:[%s1 + $0x1b8] sm:$0xff]
      %v287 = vld [vmem:[%s1 + $0x1c0] sm:$0xff]
      %v288 = vld [vmem:[%s1 + $0x1c8] sm:$0xff]
      %v289 = vld [vmem:[%s1 + $0x1d0] sm:$0xff]
      %v290 = vld [vmem:[%s1 + $0x1d8] sm:$0xff]
      %v291 = vld [vmem:[%s1 + $0x1e0] sm:$0xff]
      %v292 = vld [vmem:[%s1 + $0x1e8] sm:$0xff]
      %v293 = vld [vmem:[%s1 + $0x1f0] sm:$0xff]
      %v294 = vld [vmem:[%s1 + $0x1f8] sm:$0xff]
      %v295 = vld [vmem:[%s1 + $0x200] sm:$0xff]
      %v296 = vld [vmem:[%s1 + $0x208] sm:$0xff]
      %v297 = vld [vmem:[%s1 + $0x210] sm:$0xff]
      %v298 = vld [vmem:[%s1 + $0x218] sm:$0xff]
      %v299 = vld [vmem:[%s1 + $0x220] sm:$0xff]
      %v300 = vld [vmem:[%s1 + $0x228] sm:$0xff]
      %v301 = vld [vmem:[%s1 + $0x230] sm:$0xff]
      %v302 = vld [vmem:[%s1 + $0x238] sm:$0xff]
      %v303 = vld [vmem:[%s1 + $0x240] sm:$0xff]
      %v304 = vld [vmem:[%s1 + $0x248] sm:$0xff]
      %v305 = vld [vmem:[%s1 + $0x250] sm:$0xff]
      %v306 = vld [vmem:[%s1 + $0x258] sm:$0xff]
      %v307 = vld [vmem:[%s1 + $0x260] sm:$0xff]
      %v308 = vld [vmem:[%s1 + $0x268] sm:$0xff]
      %v309 = vld [vmem:[%s1 + $0x270] sm:$0xff]
      %v310 = vld [vmem:[%s1 + $0x278] sm:$0xff]
      %v311 = vld [vmem:[%s1 + $0x280] sm:$0xff]
      %v312 = vld [vmem:[%s1 + $0x288] sm:$0xff]
      %v313 = vld [vmem:[%s1 + $0x290] sm:$0xff]
      %v314 = vld [vmem:[%s1 + $0x298] sm:$0xff]
      %v315 = vld [vmem:[%s1 + $0x2a0] sm:$0xff]
      %v316 = vld [vmem:[%s1 + $0x2a8] sm:$0xff]
      %v317 = vld [vmem:[%s1 + $0x2b0] sm:$0xff]
      %v318 = vld [vmem:[%s1 + $0x2b8] sm:$0xff]
      %v319 = vld [vmem:[%s1 + $0x2c0] sm:$0xff]
      %v320 = vld [vmem:[%s1 + $0x2c8] sm:$0xff]
      %v321 = vld [vmem:[%s1 + $0x2d0] sm:$0xff]
      %v322 = vld [vmem:[%s1 + $0x2d8] sm:$0xff]
      %v323 = vld [vmem:[%s1 + $0x2e0] sm:$0xff]
      %v324 = vld [vmem:[%s1 + $0x2e8] sm:$0xff]
      %v325 = vld [vmem:[%s1 + $0x2f0] sm:$0xff]
      %v326 = vld [vmem:[%s1 + $0x2f8] sm:$0xff]
      %v327 = vld [vmem:[%s1 + $0x300] sm:$0xff]
      %v328 = vld [vmem:[%s1 + $0x308] sm:$0xff]
      %v329 = vld [vmem:[%s1 + $0x310] sm:$0xff]
      %v330 = vld [vmem:[%s1 + $0x318] sm:$0xff]
      %v331 = vld [vmem:[%s1 + $0x320] sm:$0xff]
      %v332 = vld [vmem:[%s1 + $0x328] sm:$0xff]
      %v333 = vld [vmem:[%s1 + $0x330] sm:$0xff]
      %v334 = vld [vmem:[%s1 + $0x338] sm:$0xff]
      %v335 = vld [vmem:[%s1 + $0x340] sm:$0xff]
      %v336 = vld [vmem:[%s1 + $0x348] sm:$0xff]
      %v337 = vld [vmem:[%s1 + $0x350] sm:$0xff]
      %v338 = vld [vmem:[%s1 + $0x358] sm:$0xff]
      %v339 = vld [vmem:[%s1 + $0x360] sm:$0xff]
      %v340 = vld [vmem:[%s1 + $0x368] sm:$0xff]
      %v341 = vld [vmem:[%s1 + $0x370] sm:$0xff]
      %v342 = vld [vmem:[%s1 + $0x378] sm:$0xff]
      %v343 = vld [vmem:[%s1 + $0x380] sm:$0xff]
      %v344 = vld [vmem:[%s1 + $0x388] sm:$0xff]
      %v345 = vld [vmem:[%s1 + $0x390] sm:$0xff]
      %v346 = vld [vmem:[%s1 + $0x398] sm:$0xff]
      %v347 = vld [vmem:[%s1 + $0x3a0] sm:$0xff]
      %v348 = vld [vmem:[%s1 + $0x3a8] sm:$0xff]
      %v349 = vld [vmem:[%s1 + $0x3b0] sm:$0xff]
      %v350 = vld [vmem:[%s1 + $0x3b8] sm:$0xff]
      %v351 = vld [vmem:[%s1 + $0x3c0] sm:$0xff]
      %v352 = vld [vmem:[%s1 + $0x3c8] sm:$0xff]
      %v353 = vld [vmem:[%s1 + $0x3d0] sm:$0xff]
      %v354 = vld [vmem:[%s1 + $0x3d8] sm:$0xff]
      %v355 = vld [vmem:[%s1 + $0x3e0] sm:$0xff]
      %v356 = vld [vmem:[%s1 + $0x3e8] sm:$0xff]
      %v357 = vld [vmem:[%s1 + $0x3f0] sm:$0xff]
      %v358 = vld [vmem:[%s1 + $0x3f8] sm:$0xff]
      %v359 = vld [vmem:[%s1 + $0x400] sm:$0xff]
      %v360 = vld [vmem:[%s1 + $0x408] sm:$0xff]
      %v361 = vld [vmem:[%s1 + $0x410] sm:$0xff]
      %v362 = vld [vmem:[%s1 + $0x418] sm:$0xff]
      %v363 = vld [vmem:[%s1 + $0x420] sm:$0xff]
      %v364 = vld [vmem:[%s1 + $0x428] sm:$0xff]
      %v365 = vld [vmem:[%s1 + $0x430] sm:$0xff]
      %v366 = vld [vmem:[%s1 + $0x438] sm:$0xff]
      %v367 = vld [vmem:[%s1 + $0x440] sm:$0xff]
      %v368 = vld [vmem:[%s1 + $0x448] sm:$0xff]
      %v369 = vld [vmem:[%s1 + $0x450] sm:$0xff]
      %v370 = vld [vmem:[%s1 + $0x458] sm:$0xff]
      %v371 = vld [vmem:[%s1 + $0x460] sm:$0xff]
      %v372 = vld [vmem:[%s1 + $0x468] sm:$0xff]
      %v373 = vld [vmem:[%s1 + $0x470] sm:$0xff]
      %v374 = vld [vmem:[%s1 + $0x478] sm:$0xff]
      %v375 = vld [vmem:[%s1 + $0x480] sm:$0xff]
      %v376 = vld [vmem:[%s1 + $0x488] sm:$0xff]
      %v377 = vld [vmem:[%s1 + $0x490] sm:$0xff]
      %v378 = vld [vmem:[%s1 + $0x498] sm:$0xff]
      %v379 = vld [vmem:[%s1 + $0x4a0] sm:$0xff]
      %v380 = vld [vmem:[%s1 + $0x4a8] sm:$0xff]
      %v381 = vld [vmem:[%s1 + $0x4b0] sm:$0xff]
      %v382 = vld [vmem:[%s1 + $0x4b8] sm:$0xff]
      %v383 = vld [vmem:[%s1 + $0x4c0] sm:$0xff]
      %v384 = vld [vmem:[%s1 + $0x4c8] sm:$0xff]
      %v385 = vld [vmem:[%s1 + $0x4d0] sm:$0xff]
      %v386 = vld [vmem:[%s1 + $0x4d8] sm:$0xff]
      %v387 = vld [vmem:[%s1 + $0x4e0] sm:$0xff]
      %v388 = vld [vmem:[%s1 + $0x4e8] sm:$0xff]
      %v389 = vld [vmem:[%s1 + $0x4f0] sm:$0xff]
      %v390 = vld [vmem:[%s1 + $0x4f8] sm:$0xff]
      %v391 = vld [vmem:[%s1 + $0x500] sm:$0xff]
      %v392 = vld [vmem:[%s1 + $0x508] sm:$0xff]
      %v393 = vld [vmem:[%s1 + $0x510] sm:$0xff]
      %v394 = vld [vmem:[%s1 + $0x518] sm:$0xff]
      %v395 = vld [vmem:[%s1 + $0x520] sm:$0xff]
      %v396 = vld [vmem:[%s1 + $0x528] sm:$0xff]
      %v397 = vld [vmem:[%s1 + $0x530] sm:$0xff]
      %v398 = vld [vmem:[%s1 + $0x538] sm:$0xff]
      %v399 = vld [vmem:[%s1 + $0x540] sm:$0xff]
      %v400 = vld [vmem:[%s1 + $0x548] sm:$0xff]
      %v401 = vld [vmem:[%s1 + $0x550] sm:$0xff]
      %v402 = vld [vmem:[%s1 + $0x558] sm:$0xff]
      %v403 = vld [vmem:[%s1 + $0x560] sm:$0xff]
      %v404 = vld [vmem:[%s1 + $0x568] sm:$0xff]
      %v405 = vld [vmem:[%s1 + $0x570] sm:$0xff]
      %v406 = vld [vmem:[%s1 + $0x578] sm:$0xff]
      %v407 = vld [vmem:[%s1 + $0x580] sm:$0xff]
      %v408 = vld [vmem:[%s1 + $0x588] sm:$0xff]
      %v409 = vld [vmem:[%s1 + $0x590] sm:$0xff]
      %v410 = vld [vmem:[%s1 + $0x598] sm:$0xff]
      %v411 = vld [vmem:[%s1 + $0x5a0] sm:$0xff]
      %v412 = vld [vmem:[%s1 + $0x5a8] sm:$0xff]
      %v413 = vld [vmem:[%s1 + $0x5b0] sm:$0xff]
      %v414 = vld [vmem:[%s1 + $0x5b8] sm:$0xff]
      %v415 = vld [vmem:[%s1 + $0x5c0] sm:$0xff]
      %v416 = vld [vmem:[%s1 + $0x5c8] sm:$0xff]
      %v417 = vld [vmem:[%s1 + $0x5d0] sm:$0xff]
      %v418 = vld [vmem:[%s1 + $0x5d8] sm:$0xff]
      %v419 = vld [vmem:[%s1 + $0x5e0] sm:$0xff]
      %v420 = vld [vmem:[%s1 + $0x5e8] sm:$0xff]
      %v421 = vld [vmem:[%s1 + $0x5f0] sm:$0xff]
      %v422 = vld [vmem:[%s1 + $0x5f8] sm:$0xff]
      %v423 = vld [vmem:[%s1 + $0x600] sm:$0xff]
      %v424 = vld [vmem:[%s1 + $0x608] sm:$0xff]
      %v425 = vld [vmem:[%s1 + $0x610] sm:$0xff]
      %v426 = vld [vmem:[%s1 + $0x618] sm:$0xff]
      %v427 = vld [vmem:[%s1 + $0x620] sm:$0xff]
      %v428 = vld [vmem:[%s1 + $0x628] sm:$0xff]
      %v429 = vld [vmem:[%s1 + $0x630] sm:$0xff]
      %v430 = vld [vmem:[%s1 + $0x638] sm:$0xff]
      %v431 = vld [vmem:[%s1 + $0x640] sm:$0xff]
      %v432 = vld [vmem:[%s1 + $0x648] sm:$0xff]
      %v433 = vld [vmem:[%s1 + $0x650] sm:$0xff]
      %v434 = vld [vmem:[%s1 + $0x658] sm:$0xff]
      %v435 = vld [vmem:[%s1 + $0x660] sm:$0xff]
      %v436 = vld [vmem:[%s1 + $0x668] sm:$0xff]
      %v437 = vld [vmem:[%s1 + $0x670] sm:$0xff]
      %v438 = vld [vmem:[%s1 + $0x678] sm:$0xff]
      %v439 = vld [vmem:[%s1 + $0x680] sm:$0xff]
      %v440 = vld [vmem:[%s1 + $0x688] sm:$0xff]
      %v441 = vld [vmem:[%s1 + $0x690] sm:$0xff]
      %v442 = vld [vmem:[%s1 + $0x698] sm:$0xff]
      %v443 = vld [vmem:[%s1 + $0x6a0] sm:$0xff]
      %v444 = vld [vmem:[%s1 + $0x6a8] sm:$0xff]
      %v445 = vld [vmem:[%s1 + $0x6b0] sm:$0xff]
      %v446 = vld [vmem:[%s1 + $0x6b8] sm:$0xff]
      %v447 = vld [vmem:[%s1 + $0x6c0] sm:$0xff]
      %v448 = vld [vmem:[%s1 + $0x6c8] sm:$0xff]
      %v449 = vld [vmem:[%s1 + $0x6d0] sm:$0xff]
      %v450 = vld [vmem:[%s1 + $0x6d8] sm:$0xff]
      %v451 = vld [vmem:[%s1 + $0x6e0] sm:$0xff]
      %v452 = vld [vmem:[%s1 + $0x6e8] sm:$0xff]
      %v453 = vld [vmem:[%s1 + $0x6f0] sm:$0xff]
      %v454 = vld [vmem:[%s1 + $0x6f8] sm:$0xff]
      %v455 = vld [vmem:[%s1 + $0x700] sm:$0xff]
      %v456 = vld [vmem:[%s1 + $0x708] sm:$0xff]
      %v457 = vld [vmem:[%s1 + $0x710] sm:$0xff]
      %v458 = vld [vmem:[%s1 + $0x718] sm:$0xff]
      %v459 = vld [vmem:[%s1 + $0x720] sm:$0xff]
      %v460 = vld [vmem:[%s1 + $0x728] sm:$0xff]
      %v461 = vld [vmem:[%s1 + $0x730] sm:$0xff]
      %v462 = vld [vmem:[%s1 + $0x738] sm:$0xff]
      %v463 = vld [vmem:[%s1 + $0x740] sm:$0xff]
      %v464 = vld [vmem:[%s1 + $0x748] sm:$0xff]
      %v465 = vld [vmem:[%s1 + $0x750] sm:$0xff]
      %v466 = vld [vmem:[%s1 + $0x758] sm:$0xff]
      %v467 = vld [vmem:[%s1 + $0x760] sm:$0xff]
      %v468 = vld [vmem:[%s1 + $0x768] sm:$0xff]
      %v469 = vld [vmem:[%s1 + $0x770] sm:$0xff]
      %v470 = vld [vmem:[%s1 + $0x778] sm:$0xff]
      %v471 = vld [vmem:[%s1 + $0x780] sm:$0xff]
      %v472 = vld [vmem:[%s1 + $0x788] sm:$0xff]
      %v473 = vld [vmem:[%s1 + $0x790] sm:$0xff]
      %v474 = vld [vmem:[%s1 + $0x798] sm:$0xff]
      %v475 = vld [vmem:[%s1 + $0x7a0] sm:$0xff]
      %v476 = vld [vmem:[%s1 + $0x7a8] sm:$0xff]
      %v477 = vld [vmem:[%s1 + $0x7b0] sm:$0xff]
      %v478 = vld [vmem:[%s1 + $0x7b8] sm:$0xff]
      %v479 = vld [vmem:[%s1 + $0x7c0] sm:$0xff]
      %v480 = vld [vmem:[%s1 + $0x7c8] sm:$0xff]
      %v481 = vld [vmem:[%s1 + $0x7d0] sm:$0xff]
      %v482 = vld [vmem:[%s1 + $0x7d8] sm:$0xff]
      %v483 = vld [vmem:[%s1 + $0x7e0] sm:$0xff]
      %v484 = vld [vmem:[%s1 + $0x7e8] sm:$0xff]
      %v485 = vld [vmem:[%s1 + $0x7f0] sm:$0xff]
      %v486 = vld [vmem:[%s1 + $0x7f8] sm:$0xff]
      %v743 = vunpack.c.l.b16 %v231
      %v744 = vunpack.c.h.b16 %v231
      %v745 = vunpack.c.l.b16 %v232
      %v746 = vunpack.c.h.b16 %v232
      %v747 = vunpack.c.l.b16 %v233
      %v748 = vunpack.c.h.b16 %v233
      %v749 = vunpack.c.l.b16 %v234
      %v750 = vunpack.c.h.b16 %v234
      %v751 = vunpack.c.l.b16 %v235
      %v752 = vunpack.c.h.b16 %v235
      %v753 = vunpack.c.l.b16 %v236
      %v754 = vunpack.c.h.b16 %v236
      %v755 = vunpack.c.l.b16 %v237
      %v756 = vunpack.c.h.b16 %v237
      %v757 = vunpack.c.l.b16 %v238
      %v758 = vunpack.c.h.b16 %v238
      %v759 = vunpack.c.l.b16 %v239
      %v760 = vunpack.c.h.b16 %v239
      %v761 = vunpack.c.l.b16 %v240
      %v762 = vunpack.c.h.b16 %v240
      %v763 = vunpack.c.l.b16 %v241
      %v764 = vunpack.c.h.b16 %v241
      %v765 = vunpack.c.l.b16 %v242
      %v766 = vunpack.c.h.b16 %v242
      %v767 = vunpack.c.l.b16 %v243
      %v768 = vunpack.c.h.b16 %v243
      %v769 = vunpack.c.l.b16 %v244
      %v770 = vunpack.c.h.b16 %v244
      %v771 = vunpack.c.l.b16 %v245
      %v772 = vunpack.c.h.b16 %v245
      %v773 = vunpack.c.l.b16 %v246
      %v774 = vunpack.c.h.b16 %v246
      %v775 = vunpack.c.l.b16 %v247
      %v776 = vunpack.c.h.b16 %v247
      %v777 = vunpack.c.l.b16 %v248
      %v778 = vunpack.c.h.b16 %v248
      %v779 = vunpack.c.l.b16 %v249
      %v780 = vunpack.c.h.b16 %v249
      %v781 = vunpack.c.l.b16 %v250
      %v782 = vunpack.c.h.b16 %v250
      %v783 = vunpack.c.l.b16 %v251
      %v784 = vunpack.c.h.b16 %v251
      %v785 = vunpack.c.l.b16 %v252
      %v786 = vunpack.c.h.b16 %v252
      %v787 = vunpack.c.l.b16 %v253
      %v788 = vunpack.c.h.b16 %v253
      %v789 = vunpack.c.l.b16 %v254
      %v790 = vunpack.c.h.b16 %v254
      %v791 = vunpack.c.l.b16 %v255
      %v792 = vunpack.c.h.b16 %v255
      %v793 = vunpack.c.l.b16 %v256
      %v794 = vunpack.c.h.b16 %v256
      %v795 = vunpack.c.l.b16 %v257
      %v796 = vunpack.c.h.b16 %v257
      %v797 = vunpack.c.l.b16 %v258
      %v798 = vunpack.c.h.b16 %v258
      %v799 = vunpack.c.l.b16 %v259
      %v800 = vunpack.c.h.b16 %v259
      %v801 = vunpack.c.l.b16 %v260
      %v802 = vunpack.c.h.b16 %v260
      %v803 = vunpack.c.l.b16 %v261
      %v804 = vunpack.c.h.b16 %v261
      %v805 = vunpack.c.l.b16 %v262
      %v806 = vunpack.c.h.b16 %v262
      %v807 = vunpack.c.l.b16 %v263
      %v808 = vunpack.c.h.b16 %v263
      %v809 = vunpack.c.l.b16 %v264
      %v810 = vunpack.c.h.b16 %v264
      %v811 = vunpack.c.l.b16 %v265
      %v812 = vunpack.c.h.b16 %v265
      %v813 = vunpack.c.l.b16 %v266
      %v814 = vunpack.c.h.b16 %v266
      %v815 = vunpack.c.l.b16 %v267
      %v816 = vunpack.c.h.b16 %v267
      %v817 = vunpack.c.l.b16 %v268
      %v818 = vunpack.c.h.b16 %v268
      %v819 = vunpack.c.l.b16 %v269
      %v820 = vunpack.c.h.b16 %v269
      %v821 = vunpack.c.l.b16 %v270
      %v822 = vunpack.c.h.b16 %v270
      %v823 = vunpack.c.l.b16 %v271
      %v824 = vunpack.c.h.b16 %v271
      %v825 = vunpack.c.l.b16 %v272
      %v826 = vunpack.c.h.b16 %v272
      %v827 = vunpack.c.l.b16 %v273
      %v828 = vunpack.c.h.b16 %v273
      %v829 = vunpack.c.l.b16 %v274
      %v830 = vunpack.c.h.b16 %v274
      %v831 = vunpack.c.l.b16 %v275
      %v832 = vunpack.c.h.b16 %v275
      %v833 = vunpack.c.l.b16 %v276
      %v834 = vunpack.c.h.b16 %v276
      %v835 = vunpack.c.l.b16 %v277
      %v836 = vunpack.c.h.b16 %v277
      %v837 = vunpack.c.l.b16 %v278
      %v838 = vunpack.c.h.b16 %v278
      %v839 = vunpack.c.l.b16 %v279
      %v840 = vunpack.c.h.b16 %v279
      %v841 = vunpack.c.l.b16 %v280
      %v842 = vunpack.c.h.b16 %v280
      %v843 = vunpack.c.l.b16 %v281
      %v844 = vunpack.c.h.b16 %v281
      %v845 = vunpack.c.l.b16 %v282
      %v846 = vunpack.c.h.b16 %v282
      %v847 = vunpack.c.l.b16 %v283
      %v848 = vunpack.c.h.b16 %v283
      %v849 = vunpack.c.l.b16 %v284
      %v850 = vunpack.c.h.b16 %v284
      %v851 = vunpack.c.l.b16 %v285
      %v852 = vunpack.c.h.b16 %v285
      %v853 = vunpack.c.l.b16 %v286
      %v854 = vunpack.c.h.b16 %v286
      %v855 = vunpack.c.l.b16 %v287
      %v856 = vunpack.c.h.b16 %v287
      %v857 = vunpack.c.l.b16 %v288
      %v858 = vunpack.c.h.b16 %v288
      %v859 = vunpack.c.l.b16 %v289
      %v860 = vunpack.c.h.b16 %v289
      %v861 = vunpack.c.l.b16 %v290
      %v862 = vunpack.c.h.b16 %v290
      %v863 = vunpack.c.l.b16 %v291
      %v864 = vunpack.c.h.b16 %v291
      %v865 = vunpack.c.l.b16 %v292
      %v866 = vunpack.c.h.b16 %v292
      %v867 = vunpack.c.l.b16 %v293
      %v868 = vunpack.c.h.b16 %v293
      %v869 = vunpack.c.l.b16 %v294
      %v870 = vunpack.c.h.b16 %v294
      %v871 = vunpack.c.l.b16 %v295
      %v872 = vunpack.c.h.b16 %v295
      %v873 = vunpack.c.l.b16 %v296
      %v874 = vunpack.c.h.b16 %v296
      %v875 = vunpack.c.l.b16 %v297
      %v876 = vunpack.c.h.b16 %v297
      %v877 = vunpack.c.l.b16 %v298
      %v878 = vunpack.c.h.b16 %v298
      %v879 = vunpack.c.l.b16 %v299
      %v880 = vunpack.c.h.b16 %v299
      %v881 = vunpack.c.l.b16 %v300
      %v882 = vunpack.c.h.b16 %v300
      %v883 = vunpack.c.l.b16 %v301
      %v884 = vunpack.c.h.b16 %v301
      %v885 = vunpack.c.l.b16 %v302
      %v886 = vunpack.c.h.b16 %v302
      %v887 = vunpack.c.l.b16 %v303
      %v888 = vunpack.c.h.b16 %v303
      %v889 = vunpack.c.l.b16 %v304
      %v890 = vunpack.c.h.b16 %v304
      %v891 = vunpack.c.l.b16 %v305
      %v892 = vunpack.c.h.b16 %v305
      %v893 = vunpack.c.l.b16 %v306
      %v894 = vunpack.c.h.b16 %v306
      %v895 = vunpack.c.l.b16 %v307
      %v896 = vunpack.c.h.b16 %v307
      %v897 = vunpack.c.l.b16 %v308
      %v898 = vunpack.c.h.b16 %v308
      %v899 = vunpack.c.l.b16 %v309
      %v900 = vunpack.c.h.b16 %v309
      %v901 = vunpack.c.l.b16 %v310
      %v902 = vunpack.c.h.b16 %v310
      %v903 = vunpack.c.l.b16 %v311
      %v904 = vunpack.c.h.b16 %v311
      %v905 = vunpack.c.l.b16 %v312
      %v906 = vunpack.c.h.b16 %v312
      %v907 = vunpack.c.l.b16 %v313
      %v908 = vunpack.c.h.b16 %v313
      %v909 = vunpack.c.l.b16 %v314
      %v910 = vunpack.c.h.b16 %v314
      %v911 = vunpack.c.l.b16 %v315
      %v912 = vunpack.c.h.b16 %v315
      %v913 = vunpack.c.l.b16 %v316
      %v914 = vunpack.c.h.b16 %v316
      %v915 = vunpack.c.l.b16 %v317
      %v916 = vunpack.c.h.b16 %v317
      %v917 = vunpack.c.l.b16 %v318
      %v918 = vunpack.c.h.b16 %v318
      %v919 = vunpack.c.l.b16 %v319
      %v920 = vunpack.c.h.b16 %v319
      %v921 = vunpack.c.l.b16 %v320
      %v922 = vunpack.c.h.b16 %v320
      %v923 = vunpack.c.l.b16 %v321
      %v924 = vunpack.c.h.b16 %v321
      %v925 = vunpack.c.l.b16 %v322
      %v926 = vunpack.c.h.b16 %v322
      %v927 = vunpack.c.l.b16 %v323
      %v928 = vunpack.c.h.b16 %v323
      %v929 = vunpack.c.l.b16 %v324
      %v930 = vunpack.c.h.b16 %v324
      %v931 = vunpack.c.l.b16 %v325
      %v932 = vunpack.c.h.b16 %v325
      %v933 = vunpack.c.l.b16 %v326
      %v934 = vunpack.c.h.b16 %v326
      %v935 = vunpack.c.l.b16 %v327
      %v936 = vunpack.c.h.b16 %v327
      %v937 = vunpack.c.l.b16 %v328
      %v938 = vunpack.c.h.b16 %v328
      %v939 = vunpack.c.l.b16 %v329
      %v940 = vunpack.c.h.b16 %v329
      %v941 = vunpack.c.l.b16 %v330
      %v942 = vunpack.c.h.b16 %v330
      %v943 = vunpack.c.l.b16 %v331
      %v944 = vunpack.c.h.b16 %v331
      %v945 = vunpack.c.l.b16 %v332
      %v946 = vunpack.c.h.b16 %v332
      %v947 = vunpack.c.l.b16 %v333
      %v948 = vunpack.c.h.b16 %v333
      %v949 = vunpack.c.l.b16 %v334
      %v950 = vunpack.c.h.b16 %v334
      %v951 = vunpack.c.l.b16 %v335
      %v952 = vunpack.c.h.b16 %v335
      %v953 = vunpack.c.l.b16 %v336
      %v954 = vunpack.c.h.b16 %v336
      %v955 = vunpack.c.l.b16 %v337
      %v956 = vunpack.c.h.b16 %v337
      %v957 = vunpack.c.l.b16 %v338
      %v958 = vunpack.c.h.b16 %v338
      %v959 = vunpack.c.l.b16 %v339
      %v960 = vunpack.c.h.b16 %v339
      %v961 = vunpack.c.l.b16 %v340
      %v962 = vunpack.c.h.b16 %v340
      %v963 = vunpack.c.l.b16 %v341
      %v964 = vunpack.c.h.b16 %v341
      %v965 = vunpack.c.l.b16 %v342
      %v966 = vunpack.c.h.b16 %v342
      %v967 = vunpack.c.l.b16 %v343
      %v968 = vunpack.c.h.b16 %v343
      %v969 = vunpack.c.l.b16 %v344
      %v970 = vunpack.c.h.b16 %v344
      %v971 = vunpack.c.l.b16 %v345
      %v972 = vunpack.c.h.b16 %v345
      %v973 = vunpack.c.l.b16 %v346
      %v974 = vunpack.c.h.b16 %v346
      %v975 = vunpack.c.l.b16 %v347
      %v976 = vunpack.c.h.b16 %v347
      %v977 = vunpack.c.l.b16 %v348
      %v978 = vunpack.c.h.b16 %v348
      %v979 = vunpack.c.l.b16 %v349
      %v980 = vunpack.c.h.b16 %v349
      %v981 = vunpack.c.l.b16 %v350
      %v982 = vunpack.c.h.b16 %v350
      %v983 = vunpack.c.l.b16 %v351
      %v984 = vunpack.c.h.b16 %v351
      %v985 = vunpack.c.l.b16 %v352
      %v986 = vunpack.c.h.b16 %v352
      %v987 = vunpack.c.l.b16 %v353
      %v988 = vunpack.c.h.b16 %v353
      %v989 = vunpack.c.l.b16 %v354
      %v990 = vunpack.c.h.b16 %v354
      %v991 = vunpack.c.l.b16 %v355
      %v992 = vunpack.c.h.b16 %v355
      %v993 = vunpack.c.l.b16 %v356
      %v994 = vunpack.c.h.b16 %v356
      %v995 = vunpack.c.l.b16 %v357
      %v996 = vunpack.c.h.b16 %v357
      %v997 = vunpack.c.l.b16 %v358
      %v998 = vunpack.c.h.b16 %v358
      %v999 = vunpack.c.l.b16 %v359
      %v1000 = vunpack.c.h.b16 %v359
      %v1001 = vunpack.c.l.b16 %v360
      %v1002 = vunpack.c.h.b16 %v360
      %v1003 = vunpack.c.l.b16 %v361
      %v1004 = vunpack.c.h.b16 %v361
      %v1005 = vunpack.c.l.b16 %v362
      %v1006 = vunpack.c.h.b16 %v362
      %v1007 = vunpack.c.l.b16 %v363
      %v1008 = vunpack.c.h.b16 %v363
      %v1009 = vunpack.c.l.b16 %v364
      %v1010 = vunpack.c.h.b16 %v364
      %v1011 = vunpack.c.l.b16 %v365
      %v1012 = vunpack.c.h.b16 %v365
      %v1013 = vunpack.c.l.b16 %v366
      %v1014 = vunpack.c.h.b16 %v366
      %v1015 = vunpack.c.l.b16 %v367
      %v1016 = vunpack.c.h.b16 %v367
      %v1017 = vunpack.c.l.b16 %v368
      %v1018 = vunpack.c.h.b16 %v368
      %v1019 = vunpack.c.l.b16 %v369
      %v1020 = vunpack.c.h.b16 %v369
      %v1021 = vunpack.c.l.b16 %v370
      %v1022 = vunpack.c.h.b16 %v370
      %v1023 = vunpack.c.l.b16 %v371
      %v1024 = vunpack.c.h.b16 %v371
      %v1025 = vunpack.c.l.b16 %v372
      %v1026 = vunpack.c.h.b16 %v372
      %v1027 = vunpack.c.l.b16 %v373
      %v1028 = vunpack.c.h.b16 %v373
      %v1029 = vunpack.c.l.b16 %v374
      %v1030 = vunpack.c.h.b16 %v374
      %v1031 = vunpack.c.l.b16 %v375
      %v1032 = vunpack.c.h.b16 %v375
      %v1033 = vunpack.c.l.b16 %v376
      %v1034 = vunpack.c.h.b16 %v376
      %v1035 = vunpack.c.l.b16 %v377
      %v1036 = vunpack.c.h.b16 %v377
      %v1037 = vunpack.c.l.b16 %v378
      %v1038 = vunpack.c.h.b16 %v378
      %v1039 = vunpack.c.l.b16 %v379
      %v1040 = vunpack.c.h.b16 %v379
      %v1041 = vunpack.c.l.b16 %v380
      %v1042 = vunpack.c.h.b16 %v380
      %v1043 = vunpack.c.l.b16 %v381
      %v1044 = vunpack.c.h.b16 %v381
      %v1045 = vunpack.c.l.b16 %v382
      %v1046 = vunpack.c.h.b16 %v382
      %v1047 = vunpack.c.l.b16 %v383
      %v1048 = vunpack.c.h.b16 %v383
      %v1049 = vunpack.c.l.b16 %v384
      %v1050 = vunpack.c.h.b16 %v384
      %v1051 = vunpack.c.l.b16 %v385
      %v1052 = vunpack.c.h.b16 %v385
      %v1053 = vunpack.c.l.b16 %v386
      %v1054 = vunpack.c.h.b16 %v386
      %v1055 = vunpack.c.l.b16 %v387
      %v1056 = vunpack.c.h.b16 %v387
      %v1057 = vunpack.c.l.b16 %v388
      %v1058 = vunpack.c.h.b16 %v388
      %v1059 = vunpack.c.l.b16 %v389
      %v1060 = vunpack.c.h.b16 %v389
      %v1061 = vunpack.c.l.b16 %v390
      %v1062 = vunpack.c.h.b16 %v390
      %v1063 = vunpack.c.l.b16 %v391
      %v1064 = vunpack.c.h.b16 %v391
      %v1065 = vunpack.c.l.b16 %v392
      %v1066 = vunpack.c.h.b16 %v392
      %v1067 = vunpack.c.l.b16 %v393
      %v1068 = vunpack.c.h.b16 %v393
      %v1069 = vunpack.c.l.b16 %v394
      %v1070 = vunpack.c.h.b16 %v394
      %v1071 = vunpack.c.l.b16 %v395
      %v1072 = vunpack.c.h.b16 %v395
      %v1073 = vunpack.c.l.b16 %v396
      %v1074 = vunpack.c.h.b16 %v396
      %v1075 = vunpack.c.l.b16 %v397
      %v1076 = vunpack.c.h.b16 %v397
      %v1077 = vunpack.c.l.b16 %v398
      %v1078 = vunpack.c.h.b16 %v398
      %v1079 = vunpack.c.l.b16 %v399
      %v1080 = vunpack.c.h.b16 %v399
      %v1081 = vunpack.c.l.b16 %v400
      %v1082 = vunpack.c.h.b16 %v400
      %v1083 = vunpack.c.l.b16 %v401
      %v1084 = vunpack.c.h.b16 %v401
      %v1085 = vunpack.c.l.b16 %v402
      %v1086 = vunpack.c.h.b16 %v402
      %v1087 = vunpack.c.l.b16 %v403
      %v1088 = vunpack.c.h.b16 %v403
      %v1089 = vunpack.c.l.b16 %v404
      %v1090 = vunpack.c.h.b16 %v404
      %v1091 = vunpack.c.l.b16 %v405
      %v1092 = vunpack.c.h.b16 %v405
      %v1093 = vunpack.c.l.b16 %v406
      %v1094 = vunpack.c.h.b16 %v406
      %v1095 = vunpack.c.l.b16 %v407
      %v1096 = vunpack.c.h.b16 %v407
      %v1097 = vunpack.c.l.b16 %v408
      %v1098 = vunpack.c.h.b16 %v408
      %v1099 = vunpack.c.l.b16 %v409
      %v1100 = vunpack.c.h.b16 %v409
      %v1101 = vunpack.c.l.b16 %v410
      %v1102 = vunpack.c.h.b16 %v410
      %v1103 = vunpack.c.l.b16 %v411
      %v1104 = vunpack.c.h.b16 %v411
      %v1105 = vunpack.c.l.b16 %v412
      %v1106 = vunpack.c.h.b16 %v412
      %v1107 = vunpack.c.l.b16 %v413
      %v1108 = vunpack.c.h.b16 %v413
      %v1109 = vunpack.c.l.b16 %v414
      %v1110 = vunpack.c.h.b16 %v414
      %v1111 = vunpack.c.l.b16 %v415
      %v1112 = vunpack.c.h.b16 %v415
      %v1113 = vunpack.c.l.b16 %v416
      %v1114 = vunpack.c.h.b16 %v416
      %v1115 = vunpack.c.l.b16 %v417
      %v1116 = vunpack.c.h.b16 %v417
      %v1117 = vunpack.c.l.b16 %v418
      %v1118 = vunpack.c.h.b16 %v418
      %v1119 = vunpack.c.l.b16 %v419
      %v1120 = vunpack.c.h.b16 %v419
      %v1121 = vunpack.c.l.b16 %v420
      %v1122 = vunpack.c.h.b16 %v420
      %v1123 = vunpack.c.l.b16 %v421
      %v1124 = vunpack.c.h.b16 %v421
      %v1125 = vunpack.c.l.b16 %v422
      %v1126 = vunpack.c.h.b16 %v422
      %v1127 = vunpack.c.l.b16 %v423
      %v1128 = vunpack.c.h.b16 %v423
      %v1129 = vunpack.c.l.b16 %v424
      %v1130 = vunpack.c.h.b16 %v424
      %v1131 = vunpack.c.l.b16 %v425
      %v1132 = vunpack.c.h.b16 %v425
      %v1133 = vunpack.c.l.b16 %v426
      %v1134 = vunpack.c.h.b16 %v426
      %v1135 = vunpack.c.l.b16 %v427
      %v1136 = vunpack.c.h.b16 %v427
      %v1137 = vunpack.c.l.b16 %v428
      %v1138 = vunpack.c.h.b16 %v428
      %v1139 = vunpack.c.l.b16 %v429
      %v1140 = vunpack.c.h.b16 %v429
      %v1141 = vunpack.c.l.b16 %v430
      %v1142 = vunpack.c.h.b16 %v430
      %v1143 = vunpack.c.l.b16 %v431
      %v1144 = vunpack.c.h.b16 %v431
      %v1145 = vunpack.c.l.b16 %v432
      %v1146 = vunpack.c.h.b16 %v432
      %v1147 = vunpack.c.l.b16 %v433
      %v1148 = vunpack.c.h.b16 %v433
      %v1149 = vunpack.c.l.b16 %v434
      %v1150 = vunpack.c.h.b16 %v434
      %v1151 = vunpack.c.l.b16 %v435
      %v1152 = vunpack.c.h.b16 %v435
      %v1153 = vunpack.c.l.b16 %v436
      %v1154 = vunpack.c.h.b16 %v436
      %v1155 = vunpack.c.l.b16 %v437
      %v1156 = vunpack.c.h.b16 %v437
      %v1157 = vunpack.c.l.b16 %v438
      %v1158 = vunpack.c.h.b16 %v438
      %v1159 = vunpack.c.l.b16 %v439
      %v1160 = vunpack.c.h.b16 %v439
      %v1161 = vunpack.c.l.b16 %v440
      %v1162 = vunpack.c.h.b16 %v440
      %v1163 = vunpack.c.l.b16 %v441
      %v1164 = vunpack.c.h.b16 %v441
      %v1165 = vunpack.c.l.b16 %v442
      %v1166 = vunpack.c.h.b16 %v442
      %v1167 = vunpack.c.l.b16 %v443
      %v1168 = vunpack.c.h.b16 %v443
      %v1169 = vunpack.c.l.b16 %v444
      %v1170 = vunpack.c.h.b16 %v444
      %v1171 = vunpack.c.l.b16 %v445
      %v1172 = vunpack.c.h.b16 %v445
      %v1173 = vunpack.c.l.b16 %v446
      %v1174 = vunpack.c.h.b16 %v446
      %v1175 = vunpack.c.l.b16 %v447
      %v1176 = vunpack.c.h.b16 %v447
      %v1177 = vunpack.c.l.b16 %v448
      %v1178 = vunpack.c.h.b16 %v448
      %v1179 = vunpack.c.l.b16 %v449
      %v1180 = vunpack.c.h.b16 %v449
      %v1181 = vunpack.c.l.b16 %v450
      %v1182 = vunpack.c.h.b16 %v450
      %v1183 = vunpack.c.l.b16 %v451
      %v1184 = vunpack.c.h.b16 %v451
      %v1185 = vunpack.c.l.b16 %v452
      %v1186 = vunpack.c.h.b16 %v452
      %v1187 = vunpack.c.l.b16 %v453
      %v1188 = vunpack.c.h.b16 %v453
      %v1189 = vunpack.c.l.b16 %v454
      %v1190 = vunpack.c.h.b16 %v454
      %v1191 = vunpack.c.l.b16 %v455
      %v1192 = vunpack.c.h.b16 %v455
      %v1193 = vunpack.c.l.b16 %v456
      %v1194 = vunpack.c.h.b16 %v456
      %v1195 = vunpack.c.l.b16 %v457
      %v1196 = vunpack.c.h.b16 %v457
      %v1197 = vunpack.c.l.b16 %v458
      %v1198 = vunpack.c.h.b16 %v458
      %v1199 = vunpack.c.l.b16 %v459
      %v1200 = vunpack.c.h.b16 %v459
      %v1201 = vunpack.c.l.b16 %v460
      %v1202 = vunpack.c.h.b16 %v460
      %v1203 = vunpack.c.l.b16 %v461
      %v1204 = vunpack.c.h.b16 %v461
      %v1205 = vunpack.c.l.b16 %v462
      %v1206 = vunpack.c.h.b16 %v462
      %v1207 = vunpack.c.l.b16 %v463
      %v1208 = vunpack.c.h.b16 %v463
      %v1209 = vunpack.c.l.b16 %v464
      %v1210 = vunpack.c.h.b16 %v464
      %v1211 = vunpack.c.l.b16 %v465
      %v1212 = vunpack.c.h.b16 %v465
      %v1213 = vunpack.c.l.b16 %v466
      %v1214 = vunpack.c.h.b16 %v466
      %v1215 = vunpack.c.l.b16 %v467
      %v1216 = vunpack.c.h.b16 %v467
      %v1217 = vunpack.c.l.b16 %v468
      %v1218 = vunpack.c.h.b16 %v468
      %v1219 = vunpack.c.l.b16 %v469
      %v1220 = vunpack.c.h.b16 %v469
      %v1221 = vunpack.c.l.b16 %v470
      %v1222 = vunpack.c.h.b16 %v470
      %v1223 = vunpack.c.l.b16 %v471
      %v1224 = vunpack.c.h.b16 %v471
      %v1225 = vunpack.c.l.b16 %v472
      %v1226 = vunpack.c.h.b16 %v472
      %v1227 = vunpack.c.l.b16 %v473
      %v1228 = vunpack.c.h.b16 %v473
      %v1229 = vunpack.c.l.b16 %v474
      %v1230 = vunpack.c.h.b16 %v474
      %v1231 = vunpack.c.l.b16 %v475
      %v1232 = vunpack.c.h.b16 %v475
      %v1233 = vunpack.c.l.b16 %v476
      %v1234 = vunpack.c.h.b16 %v476
      %v1235 = vunpack.c.l.b16 %v477
      %v1236 = vunpack.c.h.b16 %v477
      %v1237 = vunpack.c.l.b16 %v478
      %v1238 = vunpack.c.h.b16 %v478
      %v1239 = vunpack.c.l.b16 %v479
      %v1240 = vunpack.c.h.b16 %v479
      %v1241 = vunpack.c.l.b16 %v480
      %v1242 = vunpack.c.h.b16 %v480
      %v1243 = vunpack.c.l.b16 %v481
      %v1244 = vunpack.c.h.b16 %v481
      %v1245 = vunpack.c.l.b16 %v482
      %v1246 = vunpack.c.h.b16 %v482
      %v1247 = vunpack.c.l.b16 %v483
      %v1248 = vunpack.c.h.b16 %v483
      %v1249 = vunpack.c.l.b16 %v484
      %v1250 = vunpack.c.h.b16 %v484
      %v1251 = vunpack.c.l.b16 %v485
      %v1252 = vunpack.c.h.b16 %v485
      %v1253 = vunpack.c.l.b16 %v486
      %v1254 = vunpack.c.h.b16 %v486
      %v1255 = vpack.c.b16 %v807, %v743
      %v1256 = vpack.c.b16 %v808, %v744
      %v1257 = vpack.c.b16 %v809, %v745
      %v1258 = vpack.c.b16 %v810, %v746
      %v1259 = vpack.c.b16 %v811, %v747
      %v1260 = vpack.c.b16 %v812, %v748
      %v1261 = vpack.c.b16 %v813, %v749
      %v1262 = vpack.c.b16 %v814, %v750
      %v1263 = vpack.c.b16 %v815, %v751
      %v1264 = vpack.c.b16 %v816, %v752
      %v1265 = vpack.c.b16 %v817, %v753
      %v1266 = vpack.c.b16 %v818, %v754
      %v1267 = vpack.c.b16 %v819, %v755
      %v1268 = vpack.c.b16 %v820, %v756
      %v1269 = vpack.c.b16 %v821, %v757
      %v1270 = vpack.c.b16 %v822, %v758
      %v1271 = vpack.c.b16 %v823, %v759
      %v1272 = vpack.c.b16 %v824, %v760
      %v1273 = vpack.c.b16 %v825, %v761
      %v1274 = vpack.c.b16 %v826, %v762
      %v1275 = vpack.c.b16 %v827, %v763
      %v1276 = vpack.c.b16 %v828, %v764
      %v1277 = vpack.c.b16 %v829, %v765
      %v1278 = vpack.c.b16 %v830, %v766
      %v1279 = vpack.c.b16 %v831, %v767
      %v1280 = vpack.c.b16 %v832, %v768
      %v1281 = vpack.c.b16 %v833, %v769
      %v1282 = vpack.c.b16 %v834, %v770
      %v1283 = vpack.c.b16 %v835, %v771
      %v1284 = vpack.c.b16 %v836, %v772
      %v1285 = vpack.c.b16 %v837, %v773
      %v1286 = vpack.c.b16 %v838, %v774
      %v1287 = vpack.c.b16 %v839, %v775
      %v1288 = vpack.c.b16 %v840, %v776
      %v1289 = vpack.c.b16 %v841, %v777
      %v1290 = vpack.c.b16 %v842, %v778
      %v1291 = vpack.c.b16 %v843, %v779
      %v1292 = vpack.c.b16 %v844, %v780
      %v1293 = vpack.c.b16 %v845, %v781
      %v1294 = vpack.c.b16 %v846, %v782
      %v1295 = vpack.c.b16 %v847, %v783
      %v1296 = vpack.c.b16 %v848, %v784
      %v1297 = vpack.c.b16 %v849, %v785
      %v1298 = vpack.c.b16 %v850, %v786
      %v1299 = vpack.c.b16 %v851, %v787
      %v1300 = vpack.c.b16 %v852, %v788
      %v1301 = vpack.c.b16 %v853, %v789
      %v1302 = vpack.c.b16 %v854, %v790
      %v1303 = vpack.c.b16 %v855, %v791
      %v1304 = vpack.c.b16 %v856, %v792
      %v1305 = vpack.c.b16 %v857, %v793
      %v1306 = vpack.c.b16 %v858, %v794
      %v1307 = vpack.c.b16 %v859, %v795
      %v1308 = vpack.c.b16 %v860, %v796
      %v1309 = vpack.c.b16 %v861, %v797
      %v1310 = vpack.c.b16 %v862, %v798
      %v1311 = vpack.c.b16 %v863, %v799
      %v1312 = vpack.c.b16 %v864, %v800
      %v1313 = vpack.c.b16 %v865, %v801
      %v1314 = vpack.c.b16 %v866, %v802
      %v1315 = vpack.c.b16 %v867, %v803
      %v1316 = vpack.c.b16 %v868, %v804
      %v1317 = vpack.c.b16 %v869, %v805
      %v1318 = vpack.c.b16 %v870, %v806
      %v1319 = vpack.c.b16 %v935, %v871
      %v1320 = vpack.c.b16 %v936, %v872
      %v1321 = vpack.c.b16 %v937, %v873
      %v1322 = vpack.c.b16 %v938, %v874
      %v1323 = vpack.c.b16 %v939, %v875
      %v1324 = vpack.c.b16 %v940, %v876
      %v1325 = vpack.c.b16 %v941, %v877
      %v1326 = vpack.c.b16 %v942, %v878
      %v1327 = vpack.c.b16 %v943, %v879
      %v1328 = vpack.c.b16 %v944, %v880
      %v1329 = vpack.c.b16 %v945, %v881
      %v1330 = vpack.c.b16 %v946, %v882
      %v1331 = vpack.c.b16 %v947, %v883
      %v1332 = vpack.c.b16 %v948, %v884
      %v1333 = vpack.c.b16 %v949, %v885
      %v1334 = vpack.c.b16 %v950, %v886
      %v1335 = vpack.c.b16 %v951, %v887
      %v1336 = vpack.c.b16 %v952, %v888
      %v1337 = vpack.c.b16 %v953, %v889
      %v1338 = vpack.c.b16 %v954, %v890
      %v1339 = vpack.c.b16 %v955, %v891
      %v1340 = vpack.c.b16 %v956, %v892
      %v1341 = vpack.c.b16 %v957, %v893
      %v1342 = vpack.c.b16 %v958, %v894
      %v1343 = vpack.c.b16 %v959, %v895
      %v1344 = vpack.c.b16 %v960, %v896
      %v1345 = vpack.c.b16 %v961, %v897
      %v1346 = vpack.c.b16 %v962, %v898
      %v1347 = vpack.c.b16 %v963, %v899
      %v1348 = vpack.c.b16 %v964, %v900
      %v1349 = vpack.c.b16 %v965, %v901
      %v1350 = vpack.c.b16 %v966, %v902
      %v1351 = vpack.c.b16 %v967, %v903
      %v1352 = vpack.c.b16 %v968, %v904
      %v1353 = vpack.c.b16 %v969, %v905
      %v1354 = vpack.c.b16 %v970, %v906
      %v1355 = vpack.c.b16 %v971, %v907
      %v1356 = vpack.c.b16 %v972, %v908
      %v1357 = vpack.c.b16 %v973, %v909
      %v1358 = vpack.c.b16 %v974, %v910
      %v1359 = vpack.c.b16 %v975, %v911
      %v1360 = vpack.c.b16 %v976, %v912
      %v1361 = vpack.c.b16 %v977, %v913
      %v1362 = vpack.c.b16 %v978, %v914
      %v1363 = vpack.c.b16 %v979, %v915
      %v1364 = vpack.c.b16 %v980, %v916
      %v1365 = vpack.c.b16 %v981, %v917
      %v1366 = vpack.c.b16 %v982, %v918
      %v1367 = vpack.c.b16 %v983, %v919
      %v1368 = vpack.c.b16 %v984, %v920
      %v1369 = vpack.c.b16 %v985, %v921
      %v1370 = vpack.c.b16 %v986, %v922
      %v1371 = vpack.c.b16 %v987, %v923
      %v1372 = vpack.c.b16 %v988, %v924
      %v1373 = vpack.c.b16 %v989, %v925
      %v1374 = vpack.c.b16 %v990, %v926
      %v1375 = vpack.c.b16 %v991, %v927
      %v1376 = vpack.c.b16 %v992, %v928
      %v1377 = vpack.c.b16 %v993, %v929
      %v1378 = vpack.c.b16 %v994, %v930
      %v1379 = vpack.c.b16 %v995, %v931
      %v1380 = vpack.c.b16 %v996, %v932
      %v1381 = vpack.c.b16 %v997, %v933
      %v1382 = vpack.c.b16 %v998, %v934
      %v1383 = vpack.c.b16 %v1063, %v999
      %v1384 = vpack.c.b16 %v1064, %v1000
      %v1385 = vpack.c.b16 %v1065, %v1001
      %v1386 = vpack.c.b16 %v1066, %v1002
      %v1387 = vpack.c.b16 %v1067, %v1003
      %v1388 = vpack.c.b16 %v1068, %v1004
      %v1389 = vpack.c.b16 %v1069, %v1005
      %v1390 = vpack.c.b16 %v1070, %v1006
      %v1391 = vpack.c.b16 %v1071, %v1007
      %v1392 = vpack.c.b16 %v1072, %v1008
      %v1393 = vpack.c.b16 %v1073, %v1009
      %v1394 = vpack.c.b16 %v1074, %v1010
      %v1395 = vpack.c.b16 %v1075, %v1011
      %v1396 = vpack.c.b16 %v1076, %v1012
      %v1397 = vpack.c.b16 %v1077, %v1013
      %v1398 = vpack.c.b16 %v1078, %v1014
      %v1399 = vpack.c.b16 %v1079, %v1015
      %v1400 = vpack.c.b16 %v1080, %v1016
      %v1401 = vpack.c.b16 %v1081, %v1017
      %v1402 = vpack.c.b16 %v1082, %v1018
      %v1403 = vpack.c.b16 %v1083, %v1019
      %v1404 = vpack.c.b16 %v1084, %v1020
      %v1405 = vpack.c.b16 %v1085, %v1021
      %v1406 = vpack.c.b16 %v1086, %v1022
      %v1407 = vpack.c.b16 %v1087, %v1023
      %v1408 = vpack.c.b16 %v1088, %v1024
      %v1409 = vpack.c.b16 %v1089, %v1025
      %v1410 = vpack.c.b16 %v1090, %v1026
      %v1411 = vpack.c.b16 %v1091, %v1027
      %v1412 = vpack.c.b16 %v1092, %v1028
      %v1413 = vpack.c.b16 %v1093, %v1029
      %v1414 = vpack.c.b16 %v1094, %v1030
      %v1415 = vpack.c.b16 %v1095, %v1031
      %v1416 = vpack.c.b16 %v1096, %v1032
      %v1417 = vpack.c.b16 %v1097, %v1033
      %v1418 = vpack.c.b16 %v1098, %v1034
      %v1419 = vpack.c.b16 %v1099, %v1035
      %v1420 = vpack.c.b16 %v1100, %v1036
      %v1421 = vpack.c.b16 %v1101, %v1037
      %v1422 = vpack.c.b16 %v1102, %v1038
      %v1423 = vpack.c.b16 %v1103, %v1039
      %v1424 = vpack.c.b16 %v1104, %v1040
      %v1425 = vpack.c.b16 %v1105, %v1041
      %v1426 = vpack.c.b16 %v1106, %v1042
      %v1427 = vpack.c.b16 %v1107, %v1043
      %v1428 = vpack.c.b16 %v1108, %v1044
      %v1429 = vpack.c.b16 %v1109, %v1045
      %v1430 = vpack.c.b16 %v1110, %v1046
      %v1431 = vpack.c.b16 %v1111, %v1047
      %v1432 = vpack.c.b16 %v1112, %v1048
      %v1433 = vpack.c.b16 %v1113, %v1049
      %v1434 = vpack.c.b16 %v1114, %v1050
      %v1435 = vpack.c.b16 %v1115, %v1051
      %v1436 = vpack.c.b16 %v1116, %v1052
      %v1437 = vpack.c.b16 %v1117, %v1053
      %v1438 = vpack.c.b16 %v1118, %v1054
      %v1439 = vpack.c.b16 %v1119, %v1055
      %v1440 = vpack.c.b16 %v1120, %v1056
      %v1441 = vpack.c.b16 %v1121, %v1057
      %v1442 = vpack.c.b16 %v1122, %v1058
      %v1443 = vpack.c.b16 %v1123, %v1059
      %v1444 = vpack.c.b16 %v1124, %v1060
      %v1445 = vpack.c.b16 %v1125, %v1061
      %v1446 = vpack.c.b16 %v1126, %v1062
      %v1447 = vpack.c.b16 %v1191, %v1127
      %v1448 = vpack.c.b16 %v1192, %v1128
      %v1449 = vpack.c.b16 %v1193, %v1129
      %v1450 = vpack.c.b16 %v1194, %v1130
      %v1451 = vpack.c.b16 %v1195, %v1131
      %v1452 = vpack.c.b16 %v1196, %v1132
      %v1453 = vpack.c.b16 %v1197, %v1133
      %v1454 = vpack.c.b16 %v1198, %v1134
      %v1455 = vpack.c.b16 %v1199, %v1135
      %v1456 = vpack.c.b16 %v1200, %v1136
      %v1457 = vpack.c.b16 %v1201, %v1137
      %v1458 = vpack.c.b16 %v1202, %v1138
      %v1459 = vpack.c.b16 %v1203, %v1139
      %v1460 = vpack.c.b16 %v1204, %v1140
      %v1461 = vpack.c.b16 %v1205, %v1141
      %v1462 = vpack.c.b16 %v1206, %v1142
      %v1463 = vpack.c.b16 %v1207, %v1143
      %v1464 = vpack.c.b16 %v1208, %v1144
      %v1465 = vpack.c.b16 %v1209, %v1145
      %v1466 = vpack.c.b16 %v1210, %v1146
      %v1467 = vpack.c.b16 %v1211, %v1147
      %v1468 = vpack.c.b16 %v1212, %v1148
      %v1469 = vpack.c.b16 %v1213, %v1149
      %v1470 = vpack.c.b16 %v1214, %v1150
      %v1471 = vpack.c.b16 %v1215, %v1151
      %v1472 = vpack.c.b16 %v1216, %v1152
      %v1473 = vpack.c.b16 %v1217, %v1153
      %v1474 = vpack.c.b16 %v1218, %v1154
      %v1475 = vpack.c.b16 %v1219, %v1155
      %v1476 = vpack.c.b16 %v1220, %v1156
      %v1477 = vpack.c.b16 %v1221, %v1157
      %v1478 = vpack.c.b16 %v1222, %v1158
      %v1479 = vpack.c.b16 %v1223, %v1159
      %v1480 = vpack.c.b16 %v1224, %v1160
      %v1481 = vpack.c.b16 %v1225, %v1161
      %v1482 = vpack.c.b16 %v1226, %v1162
      %v1483 = vpack.c.b16 %v1227, %v1163
      %v1484 = vpack.c.b16 %v1228, %v1164
      %v1485 = vpack.c.b16 %v1229, %v1165
      %v1486 = vpack.c.b16 %v1230, %v1166
      %v1487 = vpack.c.b16 %v1231, %v1167
      %v1488 = vpack.c.b16 %v1232, %v1168
      %v1489 = vpack.c.b16 %v1233, %v1169
      %v1490 = vpack.c.b16 %v1234, %v1170
      %v1491 = vpack.c.b16 %v1235, %v1171
      %v1492 = vpack.c.b16 %v1236, %v1172
      %v1493 = vpack.c.b16 %v1237, %v1173
      %v1494 = vpack.c.b16 %v1238, %v1174
      %v1495 = vpack.c.b16 %v1239, %v1175
      %v1496 = vpack.c.b16 %v1240, %v1176
      %v1497 = vpack.c.b16 %v1241, %v1177
      %v1498 = vpack.c.b16 %v1242, %v1178
      %v1499 = vpack.c.b16 %v1243, %v1179
      %v1500 = vpack.c.b16 %v1244, %v1180
      %v1501 = vpack.c.b16 %v1245, %v1181
      %v1502 = vpack.c.b16 %v1246, %v1182
      %v1503 = vpack.c.b16 %v1247, %v1183
      %v1504 = vpack.c.b16 %v1248, %v1184
      %v1505 = vpack.c.b16 %v1249, %v1185
      %v1506 = vpack.c.b16 %v1250, %v1186
      %v1507 = vpack.c.b16 %v1251, %v1187
      %v1508 = vpack.c.b16 %v1252, %v1188
      %v1509 = vpack.c.b16 %v1253, %v1189
      %v1510 = vpack.c.b16 %v1254, %v1190
      %vm1767 = vcmask 523264
      %v1769 = vsel %vm1767, %v230, 0
      %1771 = vmatpush.bf16.msra.mxu0 0
      %1772 = vmatpush.bf16.msra.mxu0 0
      %1773 = vmatpush.bf16.msra.mxu0 0
      %1774 = vmatpush.bf16.msra.mxu0 0
      %1775 = vmatpush.bf16.msra.mxu0 %v1447
      %1776 = vmatpush.bf16.msra.mxu0 %v1383
      %1777 = vmatpush.bf16.msra.mxu0 %v1319
      %1778 = vmatpush.bf16.msra.mxu0 %v1255
      %1779 = vmatmul.bf16.gmra.mxu0 %v1769
      %v1780 = vpop.f32.mrf.mxu0
      %v1781 = vadd.f32 0.0, %v1780
      %v1782 = vpop.f32.mrf.mxu0
      %1783 = vdwg.mxu0
      %1784 = vmatpush.bf16.msra.mxu0 0
      %1785 = vmatpush.bf16.msra.mxu0 0
      %1786 = vmatpush.bf16.msra.mxu0 0
      %1787 = vmatpush.bf16.msra.mxu0 0
      %1788 = vmatpush.bf16.msra.mxu0 %v1448
      %1789 = vmatpush.bf16.msra.mxu0 %v1384
      %1790 = vmatpush.bf16.msra.mxu0 %v1320
      %1791 = vmatpush.bf16.msra.mxu0 %v1256
      %1792 = vmatmul.bf16.gmra.mxu0 %v1769
      %v1793 = vpop.f32.mrf.mxu0
      %v1794 = vadd.f32 0.0, %v1793
      %v1795 = vpop.f32.mrf.mxu0
      %1796 = vdwg.mxu0
      %1797 = vmatpush.bf16.msra.mxu0 0
      %1798 = vmatpush.bf16.msra.mxu0 0
      %1799 = vmatpush.bf16.msra.mxu0 0
      %1800 = vmatpush.bf16.msra.mxu0 0
      %1801 = vmatpush.bf16.msra.mxu0 %v1449
      %1802 = vmatpush.bf16.msra.mxu0 %v1385
      %1803 = vmatpush.bf16.msra.mxu0 %v1321
      %1804 = vmatpush.bf16.msra.mxu0 %v1257
      %1805 = vmatmul.bf16.gmra.mxu0 %v1769
      %v1806 = vpop.f32.mrf.mxu0
      %v1807 = vadd.f32 0.0, %v1806
      %v1808 = vpop.f32.mrf.mxu0
      %1809 = vdwg.mxu0
      %1810 = vmatpush.bf16.msra.mxu0 0
      %1811 = vmatpush.bf16.msra.mxu0 0
      %1812 = vmatpush.bf16.msra.mxu0 0
      %1813 = vmatpush.bf16.msra.mxu0 0
      %1814 = vmatpush.bf16.msra.mxu0 %v1450
      %1815 = vmatpush.bf16.msra.mxu0 %v1386
      %1816 = vmatpush.bf16.msra.mxu0 %v1322
      %1817 = vmatpush.bf16.msra.mxu0 %v1258
      %1818 = vmatmul.bf16.gmra.mxu0 %v1769
      %v1819 = vpop.f32.mrf.mxu0
      %v1820 = vadd.f32 0.0, %v1819
      %v1821 = vpop.f32.mrf.mxu0
      %1822 = vdwg.mxu0
      %1823 = vmatpush.bf16.msra.mxu0 0
      %1824 = vmatpush.bf16.msra.mxu0 0
      %1825 = vmatpush.bf16.msra.mxu0 0
      %1826 = vmatpush.bf16.msra.mxu0 0
      %1827 = vmatpush.bf16.msra.mxu0 %v1451
      %1828 = vmatpush.bf16.msra.mxu0 %v1387
      %1829 = vmatpush.bf16.msra.mxu0 %v1323
      %1830 = vmatpush.bf16.msra.mxu0 %v1259
      %1831 = vmatmul.bf16.gmra.mxu0 %v1769
      %v1832 = vpop.f32.mrf.mxu0
      %v1833 = vadd.f32 0.0, %v1832
      %v1834 = vpop.f32.mrf.mxu0
      %1835 = vdwg.mxu0
      %1836 = vmatpush.bf16.msra.mxu0 0
      %1837 = vmatpush.bf16.msra.mxu0 0
      %1838 = vmatpush.bf16.msra.mxu0 0
      %1839 = vmatpush.bf16.msra.mxu0 0
      %1840 = vmatpush.bf16.msra.mxu0 %v1452
      %1841 = vmatpush.bf16.msra.mxu0 %v1388
      %1842 = vmatpush.bf16.msra.mxu0 %v1324
      %1843 = vmatpush.bf16.msra.mxu0 %v1260
      %1844 = vmatmul.bf16.gmra.mxu0 %v1769
      %v1845 = vpop.f32.mrf.mxu0
      %v1846 = vadd.f32 0.0, %v1845
      %v1847 = vpop.f32.mrf.mxu0
      %1848 = vdwg.mxu0
      %1849 = vmatpush.bf16.msra.mxu0 0
      %1850 = vmatpush.bf16.msra.mxu0 0
      %1851 = vmatpush.bf16.msra.mxu0 0
      %1852 = vmatpush.bf16.msra.mxu0 0
      %1853 = vmatpush.bf16.msra.mxu0 %v1453
      %1854 = vmatpush.bf16.msra.mxu0 %v1389
      %1855 = vmatpush.bf16.msra.mxu0 %v1325
      %1856 = vmatpush.bf16.msra.mxu0 %v1261
      %1857 = vmatmul.bf16.gmra.mxu0 %v1769
      %v1858 = vpop.f32.mrf.mxu0
      %v1859 = vadd.f32 0.0, %v1858
      %v1860 = vpop.f32.mrf.mxu0
      %1861 = vdwg.mxu0
      %1862 = vmatpush.bf16.msra.mxu0 0
      %1863 = vmatpush.bf16.msra.mxu0 0
      %1864 = vmatpush.bf16.msra.mxu0 0
      %1865 = vmatpush.bf16.msra.mxu0 0
      %1866 = vmatpush.bf16.msra.mxu0 %v1454
      %1867 = vmatpush.bf16.msra.mxu0 %v1390
      %1868 = vmatpush.bf16.msra.mxu0 %v1326
      %1869 = vmatpush.bf16.msra.mxu0 %v1262
      %1870 = vmatmul.bf16.gmra.mxu0 %v1769
      %v1871 = vpop.f32.mrf.mxu0
      %v1872 = vadd.f32 0.0, %v1871
      %v1873 = vpop.f32.mrf.mxu0
      %1874 = vdwg.mxu0
      %1875 = vmatpush.bf16.msra.mxu0 0
      %1876 = vmatpush.bf16.msra.mxu0 0
      %1877 = vmatpush.bf16.msra.mxu0 0
      %1878 = vmatpush.bf16.msra.mxu0 0
      %1879 = vmatpush.bf16.msra.mxu0 %v1455
      %1880 = vmatpush.bf16.msra.mxu0 %v1391
      %1881 = vmatpush.bf16.msra.mxu0 %v1327
      %1882 = vmatpush.bf16.msra.mxu0 %v1263
      %1883 = vmatmul.bf16.gmra.mxu0 %v1769
      %v1884 = vpop.f32.mrf.mxu0
      %v1885 = vadd.f32 0.0, %v1884
      %v1886 = vpop.f32.mrf.mxu0
      %1887 = vdwg.mxu0
      %1888 = vmatpush.bf16.msra.mxu0 0
      %1889 = vmatpush.bf16.msra.mxu0 0
      %1890 = vmatpush.bf16.msra.mxu0 0
      %1891 = vmatpush.bf16.msra.mxu0 0
      %1892 = vmatpush.bf16.msra.mxu0 %v1456
      %1893 = vmatpush.bf16.msra.mxu0 %v1392
      %1894 = vmatpush.bf16.msra.mxu0 %v1328
      %1895 = vmatpush.bf16.msra.mxu0 %v1264
      %1896 = vmatmul.bf16.gmra.mxu0 %v1769
      %v1897 = vpop.f32.mrf.mxu0
      %v1898 = vadd.f32 0.0, %v1897
      %v1899 = vpop.f32.mrf.mxu0
      %1900 = vdwg.mxu0
      %1901 = vmatpush.bf16.msra.mxu0 0
      %1902 = vmatpush.bf16.msra.mxu0 0
      %1903 = vmatpush.bf16.msra.mxu0 0
      %1904 = vmatpush.bf16.msra.mxu0 0
      %1905 = vmatpush.bf16.msra.mxu0 %v1457
      %1906 = vmatpush.bf16.msra.mxu0 %v1393
      %1907 = vmatpush.bf16.msra.mxu0 %v1329
      %1908 = vmatpush.bf16.msra.mxu0 %v1265
      %1909 = vmatmul.bf16.gmra.mxu0 %v1769
      %v1910 = vpop.f32.mrf.mxu0
      %v1911 = vadd.f32 0.0, %v1910
      %v1912 = vpop.f32.mrf.mxu0
      %1913 = vdwg.mxu0
      %1914 = vmatpush.bf16.msra.mxu0 0
      %1915 = vmatpush.bf16.msra.mxu0 0
      %1916 = vmatpush.bf16.msra.mxu0 0
      %1917 = vmatpush.bf16.msra.mxu0 0
      %1918 = vmatpush.bf16.msra.mxu0 %v1458
      %1919 = vmatpush.bf16.msra.mxu0 %v1394
      %1920 = vmatpush.bf16.msra.mxu0 %v1330
      %1921 = vmatpush.bf16.msra.mxu0 %v1266
      %1922 = vmatmul.bf16.gmra.mxu0 %v1769
      %v1923 = vpop.f32.mrf.mxu0
      %v1924 = vadd.f32 0.0, %v1923
      %v1925 = vpop.f32.mrf.mxu0
      %1926 = vdwg.mxu0
      %1927 = vmatpush.bf16.msra.mxu0 0
      %1928 = vmatpush.bf16.msra.mxu0 0
      %1929 = vmatpush.bf16.msra.mxu0 0
      %1930 = vmatpush.bf16.msra.mxu0 0
      %1931 = vmatpush.bf16.msra.mxu0 %v1459
      %1932 = vmatpush.bf16.msra.mxu0 %v1395
      %1933 = vmatpush.bf16.msra.mxu0 %v1331
      %1934 = vmatpush.bf16.msra.mxu0 %v1267
      %1935 = vmatmul.bf16.gmra.mxu0 %v1769
      %v1936 = vpop.f32.mrf.mxu0
      %v1937 = vadd.f32 0.0, %v1936
      %v1938 = vpop.f32.mrf.mxu0
      %1939 = vdwg.mxu0
      %1940 = vmatpush.bf16.msra.mxu0 0
      %1941 = vmatpush.bf16.msra.mxu0 0
      %1942 = vmatpush.bf16.msra.mxu0 0
      %1943 = vmatpush.bf16.msra.mxu0 0
      %1944 = vmatpush.bf16.msra.mxu0 %v1460
      %1945 = vmatpush.bf16.msra.mxu0 %v1396
      %1946 = vmatpush.bf16.msra.mxu0 %v1332
      %1947 = vmatpush.bf16.msra.mxu0 %v1268
      %1948 = vmatmul.bf16.gmra.mxu0 %v1769
      %v1949 = vpop.f32.mrf.mxu0
      %v1950 = vadd.f32 0.0, %v1949
      %v1951 = vpop.f32.mrf.mxu0
      %1952 = vdwg.mxu0
      %1953 = vmatpush.bf16.msra.mxu0 0
      %1954 = vmatpush.bf16.msra.mxu0 0
      %1955 = vmatpush.bf16.msra.mxu0 0
      %1956 = vmatpush.bf16.msra.mxu0 0
      %1957 = vmatpush.bf16.msra.mxu0 %v1461
      %1958 = vmatpush.bf16.msra.mxu0 %v1397
      %1959 = vmatpush.bf16.msra.mxu0 %v1333
      %1960 = vmatpush.bf16.msra.mxu0 %v1269
      %1961 = vmatmul.bf16.gmra.mxu0 %v1769
      %v1962 = vpop.f32.mrf.mxu0
      %v1963 = vadd.f32 0.0, %v1962
      %v1964 = vpop.f32.mrf.mxu0
      %1965 = vdwg.mxu0
      %1966 = vmatpush.bf16.msra.mxu0 0
      %1967 = vmatpush.bf16.msra.mxu0 0
      %1968 = vmatpush.bf16.msra.mxu0 0
      %1969 = vmatpush.bf16.msra.mxu0 0
      %1970 = vmatpush.bf16.msra.mxu0 %v1462
      %1971 = vmatpush.bf16.msra.mxu0 %v1398
      %1972 = vmatpush.bf16.msra.mxu0 %v1334
      %1973 = vmatpush.bf16.msra.mxu0 %v1270
      %1974 = vmatmul.bf16.gmra.mxu0 %v1769
      %v1975 = vpop.f32.mrf.mxu0
      %v1976 = vadd.f32 0.0, %v1975
      %v1977 = vpop.f32.mrf.mxu0
      %1978 = vdwg.mxu0
      %1979 = vmatpush.bf16.msra.mxu0 0
      %1980 = vmatpush.bf16.msra.mxu0 0
      %1981 = vmatpush.bf16.msra.mxu0 0
      %1982 = vmatpush.bf16.msra.mxu0 0
      %1983 = vmatpush.bf16.msra.mxu0 %v1463
      %1984 = vmatpush.bf16.msra.mxu0 %v1399
      %1985 = vmatpush.bf16.msra.mxu0 %v1335
      %1986 = vmatpush.bf16.msra.mxu0 %v1271
      %1987 = vmatmul.bf16.gmra.mxu0 %v1769
      %v1988 = vpop.f32.mrf.mxu0
      %v1989 = vadd.f32 0.0, %v1988
      %v1990 = vpop.f32.mrf.mxu0
      %1991 = vdwg.mxu0
      %1992 = vmatpush.bf16.msra.mxu0 0
      %1993 = vmatpush.bf16.msra.mxu0 0
      %1994 = vmatpush.bf16.msra.mxu0 0
      %1995 = vmatpush.bf16.msra.mxu0 0
      %1996 = vmatpush.bf16.msra.mxu0 %v1464
      %1997 = vmatpush.bf16.msra.mxu0 %v1400
      %1998 = vmatpush.bf16.msra.mxu0 %v1336
      %1999 = vmatpush.bf16.msra.mxu0 %v1272
      %2000 = vmatmul.bf16.gmra.mxu0 %v1769
      %v2001 = vpop.f32.mrf.mxu0
      %v2002 = vadd.f32 0.0, %v2001
      %v2003 = vpop.f32.mrf.mxu0
      %2004 = vdwg.mxu0
      %2005 = vmatpush.bf16.msra.mxu0 0
      %2006 = vmatpush.bf16.msra.mxu0 0
      %2007 = vmatpush.bf16.msra.mxu0 0
      %2008 = vmatpush.bf16.msra.mxu0 0
      %2009 = vmatpush.bf16.msra.mxu0 %v1465
      %2010 = vmatpush.bf16.msra.mxu0 %v1401
      %2011 = vmatpush.bf16.msra.mxu0 %v1337
      %2012 = vmatpush.bf16.msra.mxu0 %v1273
      %2013 = vmatmul.bf16.gmra.mxu0 %v1769
      %v2014 = vpop.f32.mrf.mxu0
      %v2015 = vadd.f32 0.0, %v2014
      %v2016 = vpop.f32.mrf.mxu0
      %2017 = vdwg.mxu0
      %2018 = vmatpush.bf16.msra.mxu0 0
      %2019 = vmatpush.bf16.msra.mxu0 0
      %2020 = vmatpush.bf16.msra.mxu0 0
      %2021 = vmatpush.bf16.msra.mxu0 0
      %2022 = vmatpush.bf16.msra.mxu0 %v1466
      %2023 = vmatpush.bf16.msra.mxu0 %v1402
      %2024 = vmatpush.bf16.msra.mxu0 %v1338
      %2025 = vmatpush.bf16.msra.mxu0 %v1274
      %2026 = vmatmul.bf16.gmra.mxu0 %v1769
      %v2027 = vpop.f32.mrf.mxu0
      %v2028 = vadd.f32 0.0, %v2027
      %v2029 = vpop.f32.mrf.mxu0
      %2030 = vdwg.mxu0
      %2031 = vmatpush.bf16.msra.mxu0 0
      %2032 = vmatpush.bf16.msra.mxu0 0
      %2033 = vmatpush.bf16.msra.mxu0 0
      %2034 = vmatpush.bf16.msra.mxu0 0
      %2035 = vmatpush.bf16.msra.mxu0 %v1467
      %2036 = vmatpush.bf16.msra.mxu0 %v1403
      %2037 = vmatpush.bf16.msra.mxu0 %v1339
      %2038 = vmatpush.bf16.msra.mxu0 %v1275
      %2039 = vmatmul.bf16.gmra.mxu0 %v1769
      %v2040 = vpop.f32.mrf.mxu0
      %v2041 = vadd.f32 0.0, %v2040
      %v2042 = vpop.f32.mrf.mxu0
      %2043 = vdwg.mxu0
      %2044 = vmatpush.bf16.msra.mxu0 0
      %2045 = vmatpush.bf16.msra.mxu0 0
      %2046 = vmatpush.bf16.msra.mxu0 0
      %2047 = vmatpush.bf16.msra.mxu0 0
      %2048 = vmatpush.bf16.msra.mxu0 %v1468
      %2049 = vmatpush.bf16.msra.mxu0 %v1404
      %2050 = vmatpush.bf16.msra.mxu0 %v1340
      %2051 = vmatpush.bf16.msra.mxu0 %v1276
      %2052 = vmatmul.bf16.gmra.mxu0 %v1769
      %v2053 = vpop.f32.mrf.mxu0
      %v2054 = vadd.f32 0.0, %v2053
      %v2055 = vpop.f32.mrf.mxu0
      %2056 = vdwg.mxu0
      %2057 = vmatpush.bf16.msra.mxu0 0
      %2058 = vmatpush.bf16.msra.mxu0 0
      %2059 = vmatpush.bf16.msra.mxu0 0
      %2060 = vmatpush.bf16.msra.mxu0 0
      %2061 = vmatpush.bf16.msra.mxu0 %v1469
      %2062 = vmatpush.bf16.msra.mxu0 %v1405
      %2063 = vmatpush.bf16.msra.mxu0 %v1341
      %2064 = vmatpush.bf16.msra.mxu0 %v1277
      %2065 = vmatmul.bf16.gmra.mxu0 %v1769
      %v2066 = vpop.f32.mrf.mxu0
      %v2067 = vadd.f32 0.0, %v2066
      %v2068 = vpop.f32.mrf.mxu0
      %2069 = vdwg.mxu0
      %2070 = vmatpush.bf16.msra.mxu0 0
      %2071 = vmatpush.bf16.msra.mxu0 0
      %2072 = vmatpush.bf16.msra.mxu0 0
      %2073 = vmatpush.bf16.msra.mxu0 0
      %2074 = vmatpush.bf16.msra.mxu0 %v1470
      %2075 = vmatpush.bf16.msra.mxu0 %v1406
      %2076 = vmatpush.bf16.msra.mxu0 %v1342
      %2077 = vmatpush.bf16.msra.mxu0 %v1278
      %2078 = vmatmul.bf16.gmra.mxu0 %v1769
      %v2079 = vpop.f32.mrf.mxu0
      %v2080 = vadd.f32 0.0, %v2079
      %v2081 = vpop.f32.mrf.mxu0
      %2082 = vdwg.mxu0
      %2083 = vmatpush.bf16.msra.mxu0 0
      %2084 = vmatpush.bf16.msra.mxu0 0
      %2085 = vmatpush.bf16.msra.mxu0 0
      %2086 = vmatpush.bf16.msra.mxu0 0
      %2087 = vmatpush.bf16.msra.mxu0 %v1471
      %2088 = vmatpush.bf16.msra.mxu0 %v1407
      %2089 = vmatpush.bf16.msra.mxu0 %v1343
      %2090 = vmatpush.bf16.msra.mxu0 %v1279
      %2091 = vmatmul.bf16.gmra.mxu0 %v1769
      %v2092 = vpop.f32.mrf.mxu0
      %v2093 = vadd.f32 0.0, %v2092
      %v2094 = vpop.f32.mrf.mxu0
      %2095 = vdwg.mxu0
      %2096 = vmatpush.bf16.msra.mxu0 0
      %2097 = vmatpush.bf16.msra.mxu0 0
      %2098 = vmatpush.bf16.msra.mxu0 0
      %2099 = vmatpush.bf16.msra.mxu0 0
      %2100 = vmatpush.bf16.msra.mxu0 %v1472
      %2101 = vmatpush.bf16.msra.mxu0 %v1408
      %2102 = vmatpush.bf16.msra.mxu0 %v1344
      %2103 = vmatpush.bf16.msra.mxu0 %v1280
      %2104 = vmatmul.bf16.gmra.mxu0 %v1769
      %v2105 = vpop.f32.mrf.mxu0
      %v2106 = vadd.f32 0.0, %v2105
      %v2107 = vpop.f32.mrf.mxu0
      %2108 = vdwg.mxu0
      %2109 = vmatpush.bf16.msra.mxu0 0
      %2110 = vmatpush.bf16.msra.mxu0 0
      %2111 = vmatpush.bf16.msra.mxu0 0
      %2112 = vmatpush.bf16.msra.mxu0 0
      %2113 = vmatpush.bf16.msra.mxu0 %v1473
      %2114 = vmatpush.bf16.msra.mxu0 %v1409
      %2115 = vmatpush.bf16.msra.mxu0 %v1345
      %2116 = vmatpush.bf16.msra.mxu0 %v1281
      %2117 = vmatmul.bf16.gmra.mxu0 %v1769
      %v2118 = vpop.f32.mrf.mxu0
      %v2119 = vadd.f32 0.0, %v2118
      %v2120 = vpop.f32.mrf.mxu0
      %2121 = vdwg.mxu0
      %2122 = vmatpush.bf16.msra.mxu0 0
      %2123 = vmatpush.bf16.msra.mxu0 0
      %2124 = vmatpush.bf16.msra.mxu0 0
      %2125 = vmatpush.bf16.msra.mxu0 0
      %2126 = vmatpush.bf16.msra.mxu0 %v1474
      %2127 = vmatpush.bf16.msra.mxu0 %v1410
      %2128 = vmatpush.bf16.msra.mxu0 %v1346
      %2129 = vmatpush.bf16.msra.mxu0 %v1282
      %2130 = vmatmul.bf16.gmra.mxu0 %v1769
      %v2131 = vpop.f32.mrf.mxu0
      %v2132 = vadd.f32 0.0, %v2131
      %v2133 = vpop.f32.mrf.mxu0
      %2134 = vdwg.mxu0
      %2135 = vmatpush.bf16.msra.mxu0 0
      %2136 = vmatpush.bf16.msra.mxu0 0
      %2137 = vmatpush.bf16.msra.mxu0 0
      %2138 = vmatpush.bf16.msra.mxu0 0
      %2139 = vmatpush.bf16.msra.mxu0 %v1475
      %2140 = vmatpush.bf16.msra.mxu0 %v1411
      %2141 = vmatpush.bf16.msra.mxu0 %v1347
      %2142 = vmatpush.bf16.msra.mxu0 %v1283
      %2143 = vmatmul.bf16.gmra.mxu0 %v1769
      %v2144 = vpop.f32.mrf.mxu0
      %v2145 = vadd.f32 0.0, %v2144
      %v2146 = vpop.f32.mrf.mxu0
      %2147 = vdwg.mxu0
      %2148 = vmatpush.bf16.msra.mxu0 0
      %2149 = vmatpush.bf16.msra.mxu0 0
      %2150 = vmatpush.bf16.msra.mxu0 0
      %2151 = vmatpush.bf16.msra.mxu0 0
      %2152 = vmatpush.bf16.msra.mxu0 %v1476
      %2153 = vmatpush.bf16.msra.mxu0 %v1412
      %2154 = vmatpush.bf16.msra.mxu0 %v1348
      %2155 = vmatpush.bf16.msra.mxu0 %v1284
      %2156 = vmatmul.bf16.gmra.mxu0 %v1769
      %v2157 = vpop.f32.mrf.mxu0
      %v2158 = vadd.f32 0.0, %v2157
      %v2159 = vpop.f32.mrf.mxu0
      %2160 = vdwg.mxu0
      %2161 = vmatpush.bf16.msra.mxu0 0
      %2162 = vmatpush.bf16.msra.mxu0 0
      %2163 = vmatpush.bf16.msra.mxu0 0
      %2164 = vmatpush.bf16.msra.mxu0 0
      %2165 = vmatpush.bf16.msra.mxu0 %v1477
      %2166 = vmatpush.bf16.msra.mxu0 %v1413
      %2167 = vmatpush.bf16.msra.mxu0 %v1349
      %2168 = vmatpush.bf16.msra.mxu0 %v1285
      %2169 = vmatmul.bf16.gmra.mxu0 %v1769
      %v2170 = vpop.f32.mrf.mxu0
      %v2171 = vadd.f32 0.0, %v2170
      %v2172 = vpop.f32.mrf.mxu0
      %2173 = vdwg.mxu0
      %2174 = vmatpush.bf16.msra.mxu0 0
      %2175 = vmatpush.bf16.msra.mxu0 0
      %2176 = vmatpush.bf16.msra.mxu0 0
      %2177 = vmatpush.bf16.msra.mxu0 0
      %2178 = vmatpush.bf16.msra.mxu0 %v1478
      %2179 = vmatpush.bf16.msra.mxu0 %v1414
      %2180 = vmatpush.bf16.msra.mxu0 %v1350
      %2181 = vmatpush.bf16.msra.mxu0 %v1286
      %2182 = vmatmul.bf16.gmra.mxu0 %v1769
      %v2183 = vpop.f32.mrf.mxu0
      %v2184 = vadd.f32 0.0, %v2183
      %v2185 = vpop.f32.mrf.mxu0
      %2186 = vdwg.mxu0
      %2187 = vmatpush.bf16.msra.mxu0 0
      %2188 = vmatpush.bf16.msra.mxu0 0
      %2189 = vmatpush.bf16.msra.mxu0 0
      %2190 = vmatpush.bf16.msra.mxu0 0
      %2191 = vmatpush.bf16.msra.mxu0 %v1479
      %2192 = vmatpush.bf16.msra.mxu0 %v1415
      %2193 = vmatpush.bf16.msra.mxu0 %v1351
      %2194 = vmatpush.bf16.msra.mxu0 %v1287
      %2195 = vmatmul.bf16.gmra.mxu0 %v1769
      %v2196 = vpop.f32.mrf.mxu0
      %v2197 = vadd.f32 0.0, %v2196
      %v2198 = vpop.f32.mrf.mxu0
      %2199 = vdwg.mxu0
      %2200 = vmatpush.bf16.msra.mxu0 0
      %2201 = vmatpush.bf16.msra.mxu0 0
      %2202 = vmatpush.bf16.msra.mxu0 0
      %2203 = vmatpush.bf16.msra.mxu0 0
      %2204 = vmatpush.bf16.msra.mxu0 %v1480
      %2205 = vmatpush.bf16.msra.mxu0 %v1416
      %2206 = vmatpush.bf16.msra.mxu0 %v1352
      %2207 = vmatpush.bf16.msra.mxu0 %v1288
      %2208 = vmatmul.bf16.gmra.mxu0 %v1769
      %v2209 = vpop.f32.mrf.mxu0
      %v2210 = vadd.f32 0.0, %v2209
      %v2211 = vpop.f32.mrf.mxu0
      %2212 = vdwg.mxu0
      %2213 = vmatpush.bf16.msra.mxu0 0
      %2214 = vmatpush.bf16.msra.mxu0 0
      %2215 = vmatpush.bf16.msra.mxu0 0
      %2216 = vmatpush.bf16.msra.mxu0 0
      %2217 = vmatpush.bf16.msra.mxu0 %v1481
      %2218 = vmatpush.bf16.msra.mxu0 %v1417
      %2219 = vmatpush.bf16.msra.mxu0 %v1353
      %2220 = vmatpush.bf16.msra.mxu0 %v1289
      %2221 = vmatmul.bf16.gmra.mxu0 %v1769
      %v2222 = vpop.f32.mrf.mxu0
      %v2223 = vadd.f32 0.0, %v2222
      %v2224 = vpop.f32.mrf.mxu0
      %2225 = vdwg.mxu0
      %2226 = vmatpush.bf16.msra.mxu0 0
      %2227 = vmatpush.bf16.msra.mxu0 0
      %2228 = vmatpush.bf16.msra.mxu0 0
      %2229 = vmatpush.bf16.msra.mxu0 0
      %2230 = vmatpush.bf16.msra.mxu0 %v1482
      %2231 = vmatpush.bf16.msra.mxu0 %v1418
      %2232 = vmatpush.bf16.msra.mxu0 %v1354
      %2233 = vmatpush.bf16.msra.mxu0 %v1290
      %2234 = vmatmul.bf16.gmra.mxu0 %v1769
      %v2235 = vpop.f32.mrf.mxu0
      %v2236 = vadd.f32 0.0, %v2235
      %v2237 = vpop.f32.mrf.mxu0
      %2238 = vdwg.mxu0
      %2239 = vmatpush.bf16.msra.mxu0 0
      %2240 = vmatpush.bf16.msra.mxu0 0
      %2241 = vmatpush.bf16.msra.mxu0 0
      %2242 = vmatpush.bf16.msra.mxu0 0
      %2243 = vmatpush.bf16.msra.mxu0 %v1483
      %2244 = vmatpush.bf16.msra.mxu0 %v1419
      %2245 = vmatpush.bf16.msra.mxu0 %v1355
      %2246 = vmatpush.bf16.msra.mxu0 %v1291
      %2247 = vmatmul.bf16.gmra.mxu0 %v1769
      %v2248 = vpop.f32.mrf.mxu0
      %v2249 = vadd.f32 0.0, %v2248
      %v2250 = vpop.f32.mrf.mxu0
      %2251 = vdwg.mxu0
      %2252 = vmatpush.bf16.msra.mxu0 0
      %2253 = vmatpush.bf16.msra.mxu0 0
      %2254 = vmatpush.bf16.msra.mxu0 0
      %2255 = vmatpush.bf16.msra.mxu0 0
      %2256 = vmatpush.bf16.msra.mxu0 %v1484
      %2257 = vmatpush.bf16.msra.mxu0 %v1420
      %2258 = vmatpush.bf16.msra.mxu0 %v1356
      %2259 = vmatpush.bf16.msra.mxu0 %v1292
      %2260 = vmatmul.bf16.gmra.mxu0 %v1769
      %v2261 = vpop.f32.mrf.mxu0
      %v2262 = vadd.f32 0.0, %v2261
      %v2263 = vpop.f32.mrf.mxu0
      %2264 = vdwg.mxu0
      %2265 = vmatpush.bf16.msra.mxu0 0
      %2266 = vmatpush.bf16.msra.mxu0 0
      %2267 = vmatpush.bf16.msra.mxu0 0
      %2268 = vmatpush.bf16.msra.mxu0 0
      %2269 = vmatpush.bf16.msra.mxu0 %v1485
      %2270 = vmatpush.bf16.msra.mxu0 %v1421
      %2271 = vmatpush.bf16.msra.mxu0 %v1357
      %2272 = vmatpush.bf16.msra.mxu0 %v1293
      %2273 = vmatmul.bf16.gmra.mxu0 %v1769
      %v2274 = vpop.f32.mrf.mxu0
      %v2275 = vadd.f32 0.0, %v2274
      %v2276 = vpop.f32.mrf.mxu0
      %2277 = vdwg.mxu0
      %2278 = vmatpush.bf16.msra.mxu0 0
      %2279 = vmatpush.bf16.msra.mxu0 0
      %2280 = vmatpush.bf16.msra.mxu0 0
      %2281 = vmatpush.bf16.msra.mxu0 0
      %2282 = vmatpush.bf16.msra.mxu0 %v1486
      %2283 = vmatpush.bf16.msra.mxu0 %v1422
      %2284 = vmatpush.bf16.msra.mxu0 %v1358
      %2285 = vmatpush.bf16.msra.mxu0 %v1294
      %2286 = vmatmul.bf16.gmra.mxu0 %v1769
      %v2287 = vpop.f32.mrf.mxu0
      %v2288 = vadd.f32 0.0, %v2287
      %v2289 = vpop.f32.mrf.mxu0
      %2290 = vdwg.mxu0
      %2291 = vmatpush.bf16.msra.mxu0 0
      %2292 = vmatpush.bf16.msra.mxu0 0
      %2293 = vmatpush.bf16.msra.mxu0 0
      %2294 = vmatpush.bf16.msra.mxu0 0
      %2295 = vmatpush.bf16.msra.mxu0 %v1487
      %2296 = vmatpush.bf16.msra.mxu0 %v1423
      %2297 = vmatpush.bf16.msra.mxu0 %v1359
      %2298 = vmatpush.bf16.msra.mxu0 %v1295
      %2299 = vmatmul.bf16.gmra.mxu0 %v1769
      %v2300 = vpop.f32.mrf.mxu0
      %v2301 = vadd.f32 0.0, %v2300
      %v2302 = vpop.f32.mrf.mxu0
      %2303 = vdwg.mxu0
      %2304 = vmatpush.bf16.msra.mxu0 0
      %2305 = vmatpush.bf16.msra.mxu0 0
      %2306 = vmatpush.bf16.msra.mxu0 0
      %2307 = vmatpush.bf16.msra.mxu0 0
      %2308 = vmatpush.bf16.msra.mxu0 %v1488
      %2309 = vmatpush.bf16.msra.mxu0 %v1424
      %2310 = vmatpush.bf16.msra.mxu0 %v1360
      %2311 = vmatpush.bf16.msra.mxu0 %v1296
      %2312 = vmatmul.bf16.gmra.mxu0 %v1769
      %v2313 = vpop.f32.mrf.mxu0
      %v2314 = vadd.f32 0.0, %v2313
      %v2315 = vpop.f32.mrf.mxu0
      %2316 = vdwg.mxu0
      %2317 = vmatpush.bf16.msra.mxu0 0
      %2318 = vmatpush.bf16.msra.mxu0 0
      %2319 = vmatpush.bf16.msra.mxu0 0
      %2320 = vmatpush.bf16.msra.mxu0 0
      %2321 = vmatpush.bf16.msra.mxu0 %v1489
      %2322 = vmatpush.bf16.msra.mxu0 %v1425
      %2323 = vmatpush.bf16.msra.mxu0 %v1361
      %2324 = vmatpush.bf16.msra.mxu0 %v1297
      %2325 = vmatmul.bf16.gmra.mxu0 %v1769
      %v2326 = vpop.f32.mrf.mxu0
      %v2327 = vadd.f32 0.0, %v2326
      %v2328 = vpop.f32.mrf.mxu0
      %2329 = vdwg.mxu0
      %2330 = vmatpush.bf16.msra.mxu0 0
      %2331 = vmatpush.bf16.msra.mxu0 0
      %2332 = vmatpush.bf16.msra.mxu0 0
      %2333 = vmatpush.bf16.msra.mxu0 0
      %2334 = vmatpush.bf16.msra.mxu0 %v1490
      %2335 = vmatpush.bf16.msra.mxu0 %v1426
      %2336 = vmatpush.bf16.msra.mxu0 %v1362
      %2337 = vmatpush.bf16.msra.mxu0 %v1298
      %2338 = vmatmul.bf16.gmra.mxu0 %v1769
      %v2339 = vpop.f32.mrf.mxu0
      %v2340 = vadd.f32 0.0, %v2339
      %v2341 = vpop.f32.mrf.mxu0
      %2342 = vdwg.mxu0
      %2343 = vmatpush.bf16.msra.mxu0 0
      %2344 = vmatpush.bf16.msra.mxu0 0
      %2345 = vmatpush.bf16.msra.mxu0 0
      %2346 = vmatpush.bf16.msra.mxu0 0
      %2347 = vmatpush.bf16.msra.mxu0 %v1491
      %2348 = vmatpush.bf16.msra.mxu0 %v1427
      %2349 = vmatpush.bf16.msra.mxu0 %v1363
      %2350 = vmatpush.bf16.msra.mxu0 %v1299
      %2351 = vmatmul.bf16.gmra.mxu0 %v1769
      %v2352 = vpop.f32.mrf.mxu0
      %v2353 = vadd.f32 0.0, %v2352
      %v2354 = vpop.f32.mrf.mxu0
      %2355 = vdwg.mxu0
      %2356 = vmatpush.bf16.msra.mxu0 0
      %2357 = vmatpush.bf16.msra.mxu0 0
      %2358 = vmatpush.bf16.msra.mxu0 0
      %2359 = vmatpush.bf16.msra.mxu0 0
      %2360 = vmatpush.bf16.msra.mxu0 %v1492
      %2361 = vmatpush.bf16.msra.mxu0 %v1428
      %2362 = vmatpush.bf16.msra.mxu0 %v1364
      %2363 = vmatpush.bf16.msra.mxu0 %v1300
      %2364 = vmatmul.bf16.gmra.mxu0 %v1769
      %v2365 = vpop.f32.mrf.mxu0
      %v2366 = vadd.f32 0.0, %v2365
      %v2367 = vpop.f32.mrf.mxu0
      %2368 = vdwg.mxu0
      %2369 = vmatpush.bf16.msra.mxu0 0
      %2370 = vmatpush.bf16.msra.mxu0 0
      %2371 = vmatpush.bf16.msra.mxu0 0
      %2372 = vmatpush.bf16.msra.mxu0 0
      %2373 = vmatpush.bf16.msra.mxu0 %v1493
      %2374 = vmatpush.bf16.msra.mxu0 %v1429
      %2375 = vmatpush.bf16.msra.mxu0 %v1365
      %2376 = vmatpush.bf16.msra.mxu0 %v1301
      %2377 = vmatmul.bf16.gmra.mxu0 %v1769
      %v2378 = vpop.f32.mrf.mxu0
      %v2379 = vadd.f32 0.0, %v2378
      %v2380 = vpop.f32.mrf.mxu0
      %2381 = vdwg.mxu0
      %2382 = vmatpush.bf16.msra.mxu0 0
      %2383 = vmatpush.bf16.msra.mxu0 0
      %2384 = vmatpush.bf16.msra.mxu0 0
      %2385 = vmatpush.bf16.msra.mxu0 0
      %2386 = vmatpush.bf16.msra.mxu0 %v1494
      %2387 = vmatpush.bf16.msra.mxu0 %v1430
      %2388 = vmatpush.bf16.msra.mxu0 %v1366
      %2389 = vmatpush.bf16.msra.mxu0 %v1302
      %2390 = vmatmul.bf16.gmra.mxu0 %v1769
      %v2391 = vpop.f32.mrf.mxu0
      %v2392 = vadd.f32 0.0, %v2391
      %v2393 = vpop.f32.mrf.mxu0
      %2394 = vdwg.mxu0
      %2395 = vmatpush.bf16.msra.mxu0 0
      %2396 = vmatpush.bf16.msra.mxu0 0
      %2397 = vmatpush.bf16.msra.mxu0 0
      %2398 = vmatpush.bf16.msra.mxu0 0
      %2399 = vmatpush.bf16.msra.mxu0 %v1495
      %2400 = vmatpush.bf16.msra.mxu0 %v1431
      %2401 = vmatpush.bf16.msra.mxu0 %v1367
      %2402 = vmatpush.bf16.msra.mxu0 %v1303
      %2403 = vmatmul.bf16.gmra.mxu0 %v1769
      %v2404 = vpop.f32.mrf.mxu0
      %v2405 = vadd.f32 0.0, %v2404
      %v2406 = vpop.f32.mrf.mxu0
      %2407 = vdwg.mxu0
      %2408 = vmatpush.bf16.msra.mxu0 0
      %2409 = vmatpush.bf16.msra.mxu0 0
      %2410 = vmatpush.bf16.msra.mxu0 0
      %2411 = vmatpush.bf16.msra.mxu0 0
      %2412 = vmatpush.bf16.msra.mxu0 %v1496
      %2413 = vmatpush.bf16.msra.mxu0 %v1432
      %2414 = vmatpush.bf16.msra.mxu0 %v1368
      %2415 = vmatpush.bf16.msra.mxu0 %v1304
      %2416 = vmatmul.bf16.gmra.mxu0 %v1769
      %v2417 = vpop.f32.mrf.mxu0
      %v2418 = vadd.f32 0.0, %v2417
      %v2419 = vpop.f32.mrf.mxu0
      %2420 = vdwg.mxu0
      %2421 = vmatpush.bf16.msra.mxu0 0
      %2422 = vmatpush.bf16.msra.mxu0 0
      %2423 = vmatpush.bf16.msra.mxu0 0
      %2424 = vmatpush.bf16.msra.mxu0 0
      %2425 = vmatpush.bf16.msra.mxu0 %v1497
      %2426 = vmatpush.bf16.msra.mxu0 %v1433
      %2427 = vmatpush.bf16.msra.mxu0 %v1369
      %2428 = vmatpush.bf16.msra.mxu0 %v1305
      %2429 = vmatmul.bf16.gmra.mxu0 %v1769
      %v2430 = vpop.f32.mrf.mxu0
      %v2431 = vadd.f32 0.0, %v2430
      %v2432 = vpop.f32.mrf.mxu0
      %2433 = vdwg.mxu0
      %2434 = vmatpush.bf16.msra.mxu0 0
      %2435 = vmatpush.bf16.msra.mxu0 0
      %2436 = vmatpush.bf16.msra.mxu0 0
      %2437 = vmatpush.bf16.msra.mxu0 0
      %2438 = vmatpush.bf16.msra.mxu0 %v1498
      %2439 = vmatpush.bf16.msra.mxu0 %v1434
      %2440 = vmatpush.bf16.msra.mxu0 %v1370
      %2441 = vmatpush.bf16.msra.mxu0 %v1306
      %2442 = vmatmul.bf16.gmra.mxu0 %v1769
      %v2443 = vpop.f32.mrf.mxu0
      %v2444 = vadd.f32 0.0, %v2443
      %v2445 = vpop.f32.mrf.mxu0
      %2446 = vdwg.mxu0
      %2447 = vmatpush.bf16.msra.mxu0 0
      %2448 = vmatpush.bf16.msra.mxu0 0
      %2449 = vmatpush.bf16.msra.mxu0 0
      %2450 = vmatpush.bf16.msra.mxu0 0
      %2451 = vmatpush.bf16.msra.mxu0 %v1499
      %2452 = vmatpush.bf16.msra.mxu0 %v1435
      %2453 = vmatpush.bf16.msra.mxu0 %v1371
      %2454 = vmatpush.bf16.msra.mxu0 %v1307
      %2455 = vmatmul.bf16.gmra.mxu0 %v1769
      %v2456 = vpop.f32.mrf.mxu0
      %v2457 = vadd.f32 0.0, %v2456
      %v2458 = vpop.f32.mrf.mxu0
      %2459 = vdwg.mxu0
      %2460 = vmatpush.bf16.msra.mxu0 0
      %2461 = vmatpush.bf16.msra.mxu0 0
      %2462 = vmatpush.bf16.msra.mxu0 0
      %2463 = vmatpush.bf16.msra.mxu0 0
      %2464 = vmatpush.bf16.msra.mxu0 %v1500
      %2465 = vmatpush.bf16.msra.mxu0 %v1436
      %2466 = vmatpush.bf16.msra.mxu0 %v1372
      %2467 = vmatpush.bf16.msra.mxu0 %v1308
      %2468 = vmatmul.bf16.gmra.mxu0 %v1769
      %v2469 = vpop.f32.mrf.mxu0
      %v2470 = vadd.f32 0.0, %v2469
      %v2471 = vpop.f32.mrf.mxu0
      %2472 = vdwg.mxu0
      %2473 = vmatpush.bf16.msra.mxu0 0
      %2474 = vmatpush.bf16.msra.mxu0 0
      %2475 = vmatpush.bf16.msra.mxu0 0
      %2476 = vmatpush.bf16.msra.mxu0 0
      %2477 = vmatpush.bf16.msra.mxu0 %v1501
      %2478 = vmatpush.bf16.msra.mxu0 %v1437
      %2479 = vmatpush.bf16.msra.mxu0 %v1373
      %2480 = vmatpush.bf16.msra.mxu0 %v1309
      %2481 = vmatmul.bf16.gmra.mxu0 %v1769
      %v2482 = vpop.f32.mrf.mxu0
      %v2483 = vadd.f32 0.0, %v2482
      %v2484 = vpop.f32.mrf.mxu0
      %2485 = vdwg.mxu0
      %2486 = vmatpush.bf16.msra.mxu0 0
      %2487 = vmatpush.bf16.msra.mxu0 0
      %2488 = vmatpush.bf16.msra.mxu0 0
      %2489 = vmatpush.bf16.msra.mxu0 0
      %2490 = vmatpush.bf16.msra.mxu0 %v1502
      %2491 = vmatpush.bf16.msra.mxu0 %v1438
      %2492 = vmatpush.bf16.msra.mxu0 %v1374
      %2493 = vmatpush.bf16.msra.mxu0 %v1310
      %2494 = vmatmul.bf16.gmra.mxu0 %v1769
      %v2495 = vpop.f32.mrf.mxu0
      %v2496 = vadd.f32 0.0, %v2495
      %v2497 = vpop.f32.mrf.mxu0
      %2498 = vdwg.mxu0
      %2499 = vmatpush.bf16.msra.mxu0 0
      %2500 = vmatpush.bf16.msra.mxu0 0
      %2501 = vmatpush.bf16.msra.mxu0 0
      %2502 = vmatpush.bf16.msra.mxu0 0
      %2503 = vmatpush.bf16.msra.mxu0 %v1503
      %2504 = vmatpush.bf16.msra.mxu0 %v1439
      %2505 = vmatpush.bf16.msra.mxu0 %v1375
      %2506 = vmatpush.bf16.msra.mxu0 %v1311
      %2507 = vmatmul.bf16.gmra.mxu0 %v1769
      %v2508 = vpop.f32.mrf.mxu0
      %v2509 = vadd.f32 0.0, %v2508
      %v2510 = vpop.f32.mrf.mxu0
      %2511 = vdwg.mxu0
      %2512 = vmatpush.bf16.msra.mxu0 0
      %2513 = vmatpush.bf16.msra.mxu0 0
      %2514 = vmatpush.bf16.msra.mxu0 0
      %2515 = vmatpush.bf16.msra.mxu0 0
      %2516 = vmatpush.bf16.msra.mxu0 %v1504
      %2517 = vmatpush.bf16.msra.mxu0 %v1440
      %2518 = vmatpush.bf16.msra.mxu0 %v1376
      %2519 = vmatpush.bf16.msra.mxu0 %v1312
      %2520 = vmatmul.bf16.gmra.mxu0 %v1769
      %v2521 = vpop.f32.mrf.mxu0
      %v2522 = vadd.f32 0.0, %v2521
      %v2523 = vpop.f32.mrf.mxu0
      %2524 = vdwg.mxu0
      %2525 = vmatpush.bf16.msra.mxu0 0
      %2526 = vmatpush.bf16.msra.mxu0 0
      %2527 = vmatpush.bf16.msra.mxu0 0
      %2528 = vmatpush.bf16.msra.mxu0 0
      %2529 = vmatpush.bf16.msra.mxu0 %v1505
      %2530 = vmatpush.bf16.msra.mxu0 %v1441
      %2531 = vmatpush.bf16.msra.mxu0 %v1377
      %2532 = vmatpush.bf16.msra.mxu0 %v1313
      %2533 = vmatmul.bf16.gmra.mxu0 %v1769
      %v2534 = vpop.f32.mrf.mxu0
      %v2535 = vadd.f32 0.0, %v2534
      %v2536 = vpop.f32.mrf.mxu0
      %2537 = vdwg.mxu0
      %2538 = vmatpush.bf16.msra.mxu0 0
      %2539 = vmatpush.bf16.msra.mxu0 0
      %2540 = vmatpush.bf16.msra.mxu0 0
      %2541 = vmatpush.bf16.msra.mxu0 0
      %2542 = vmatpush.bf16.msra.mxu0 %v1506
      %2543 = vmatpush.bf16.msra.mxu0 %v1442
      %2544 = vmatpush.bf16.msra.mxu0 %v1378
      %2545 = vmatpush.bf16.msra.mxu0 %v1314
      %2546 = vmatmul.bf16.gmra.mxu0 %v1769
      %v2547 = vpop.f32.mrf.mxu0
      %v2548 = vadd.f32 0.0, %v2547
      %v2549 = vpop.f32.mrf.mxu0
      %2550 = vdwg.mxu0
      %2551 = vmatpush.bf16.msra.mxu0 0
      %2552 = vmatpush.bf16.msra.mxu0 0
      %2553 = vmatpush.bf16.msra.mxu0 0
      %2554 = vmatpush.bf16.msra.mxu0 0
      %2555 = vmatpush.bf16.msra.mxu0 %v1507
      %2556 = vmatpush.bf16.msra.mxu0 %v1443
      %2557 = vmatpush.bf16.msra.mxu0 %v1379
      %2558 = vmatpush.bf16.msra.mxu0 %v1315
      %2559 = vmatmul.bf16.gmra.mxu0 %v1769
      %v2560 = vpop.f32.mrf.mxu0
      %v2561 = vadd.f32 0.0, %v2560
      %v2562 = vpop.f32.mrf.mxu0
      %2563 = vdwg.mxu0
      %2564 = vmatpush.bf16.msra.mxu0 0
      %2565 = vmatpush.bf16.msra.mxu0 0
      %2566 = vmatpush.bf16.msra.mxu0 0
      %2567 = vmatpush.bf16.msra.mxu0 0
      %2568 = vmatpush.bf16.msra.mxu0 %v1508
      %2569 = vmatpush.bf16.msra.mxu0 %v1444
      %2570 = vmatpush.bf16.msra.mxu0 %v1380
      %2571 = vmatpush.bf16.msra.mxu0 %v1316
      %2572 = vmatmul.bf16.gmra.mxu0 %v1769
      %v2573 = vpop.f32.mrf.mxu0
      %v2574 = vadd.f32 0.0, %v2573
      %v2575 = vpop.f32.mrf.mxu0
      %2576 = vdwg.mxu0
      %2577 = vmatpush.bf16.msra.mxu0 0
      %2578 = vmatpush.bf16.msra.mxu0 0
      %2579 = vmatpush.bf16.msra.mxu0 0
      %2580 = vmatpush.bf16.msra.mxu0 0
      %2581 = vmatpush.bf16.msra.mxu0 %v1509
      %2582 = vmatpush.bf16.msra.mxu0 %v1445
      %2583 = vmatpush.bf16.msra.mxu0 %v1381
      %2584 = vmatpush.bf16.msra.mxu0 %v1317
      %2585 = vmatmul.bf16.gmra.mxu0 %v1769
      %v2586 = vpop.f32.mrf.mxu0
      %v2587 = vadd.f32 0.0, %v2586
      %v2588 = vpop.f32.mrf.mxu0
      %2589 = vdwg.mxu0
      %2590 = vmatpush.bf16.msra.mxu0 0
      %2591 = vmatpush.bf16.msra.mxu0 0
      %2592 = vmatpush.bf16.msra.mxu0 0
      %2593 = vmatpush.bf16.msra.mxu0 0
      %2594 = vmatpush.bf16.msra.mxu0 %v1510
      %2595 = vmatpush.bf16.msra.mxu0 %v1446
      %2596 = vmatpush.bf16.msra.mxu0 %v1382
      %2597 = vmatpush.bf16.msra.mxu0 %v1318
      %2598 = vmatmul.bf16.gmra.mxu0 %v1769
      %v2599 = vpop.f32.mrf.mxu0
      %v2600 = vadd.f32 0.0, %v2599
      %v2601 = vpop.f32.mrf.mxu0
      %2602 = vdwg.mxu0
      %v2603 = vadd.f32 %v1781, %v1794
      %v2604 = vadd.f32 %v2603, %v1807
      %v2605 = vadd.f32 %v2604, %v1820
      %v2606 = vadd.f32 %v2605, %v1833
      %v2607 = vadd.f32 %v2606, %v1846
      %v2608 = vadd.f32 %v2607, %v1859
      %v2609 = vadd.f32 %v2608, %v1872
      %v2610 = vadd.f32 %v2609, %v1885
      %v2611 = vadd.f32 %v2610, %v1898
      %v2612 = vadd.f32 %v2611, %v1911
      %v2613 = vadd.f32 %v2612, %v1924
      %v2614 = vadd.f32 %v2613, %v1937
      %v2615 = vadd.f32 %v2614, %v1950
      %v2616 = vadd.f32 %v2615, %v1963
      %v2617 = vadd.f32 %v2616, %v1976
      %v2618 = vadd.f32 %v2617, %v1989
      %v2619 = vadd.f32 %v2618, %v2002
      %v2620 = vadd.f32 %v2619, %v2015
      %v2621 = vadd.f32 %v2620, %v2028
      %v2622 = vadd.f32 %v2621, %v2041
      %v2623 = vadd.f32 %v2622, %v2054
      %v2624 = vadd.f32 %v2623, %v2067
      %v2625 = vadd.f32 %v2624, %v2080
      %v2626 = vadd.f32 %v2625, %v2093
      %v2627 = vadd.f32 %v2626, %v2106
      %v2628 = vadd.f32 %v2627, %v2119
      %v2629 = vadd.f32 %v2628, %v2132
      %v2630 = vadd.f32 %v2629, %v2145
      %v2631 = vadd.f32 %v2630, %v2158
      %v2632 = vadd.f32 %v2631, %v2171
      %v2633 = vadd.f32 %v2632, %v2184
      %v2634 = vadd.f32 %v2633, %v2197
      %v2635 = vadd.f32 %v2634, %v2210
      %v2636 = vadd.f32 %v2635, %v2223
      %v2637 = vadd.f32 %v2636, %v2236
      %v2638 = vadd.f32 %v2637, %v2249
      %v2639 = vadd.f32 %v2638, %v2262
      %v2640 = vadd.f32 %v2639, %v2275
      %v2641 = vadd.f32 %v2640, %v2288
      %v2642 = vadd.f32 %v2641, %v2301
      %v2643 = vadd.f32 %v2642, %v2314
      %v2644 = vadd.f32 %v2643, %v2327
      %v2645 = vadd.f32 %v2644, %v2340
      %v2646 = vadd.f32 %v2645, %v2353
      %v2647 = vadd.f32 %v2646, %v2366
      %v2648 = vadd.f32 %v2647, %v2379
      %v2649 = vadd.f32 %v2648, %v2392
      %v2650 = vadd.f32 %v2649, %v2405
      %v2651 = vadd.f32 %v2650, %v2418
      %v2652 = vadd.f32 %v2651, %v2431
      %v2653 = vadd.f32 %v2652, %v2444
      %v2654 = vadd.f32 %v2653, %v2457
      %v2655 = vadd.f32 %v2654, %v2470
      %v2656 = vadd.f32 %v2655, %v2483
      %v2657 = vadd.f32 %v2656, %v2496
      %v2658 = vadd.f32 %v2657, %v2509
      %v2659 = vadd.f32 %v2658, %v2522
      %v2660 = vadd.f32 %v2659, %v2535
      %v2661 = vadd.f32 %v2660, %v2548
      %v2662 = vadd.f32 %v2661, %v2561
      %v2663 = vadd.f32 %v2662, %v2574
      %v2664 = vadd.f32 %v2663, %v2587
      %v2665 = vadd.f32 %v2664, %v2600
      %2666 = vadd.xlane.f32.xlu0 %v2665
      %v2667 = vpop.xlane.xlu0 %2666
      %v2668 = vmul.f32 %v2667, 0.00012207031
      %v2669 = vsub.f32 %v1781, %v2668
      %v2670 = vsub.f32 %v1794, %v2668
      %v2671 = vsub.f32 %v1807, %v2668
      %v2672 = vsub.f32 %v1820, %v2668
      %v2673 = vsub.f32 %v1833, %v2668
      %v2674 = vsub.f32 %v1846, %v2668
      %v2675 = vsub.f32 %v1859, %v2668
      %v2676 = vsub.f32 %v1872, %v2668
      %v2677 = vsub.f32 %v1885, %v2668
      %v2678 = vsub.f32 %v1898, %v2668
      %v2679 = vsub.f32 %v1911, %v2668
      %v2680 = vsub.f32 %v1924, %v2668
      %v2681 = vsub.f32 %v1937, %v2668
      %v2682 = vsub.f32 %v1950, %v2668
      %v2683 = vsub.f32 %v1963, %v2668
      %v2684 = vsub.f32 %v1976, %v2668
      %v2685 = vsub.f32 %v1989, %v2668
      %v2686 = vsub.f32 %v2002, %v2668
      %v2687 = vsub.f32 %v2015, %v2668
      %v2688 = vsub.f32 %v2028, %v2668
      %v2689 = vsub.f32 %v2041, %v2668
      %v2690 = vsub.f32 %v2054, %v2668
      %v2691 = vsub.f32 %v2067, %v2668
      %v2692 = vsub.f32 %v2080, %v2668
      %v2693 = vsub.f32 %v2093, %v2668
      %v2694 = vsub.f32 %v2106, %v2668
      %v2695 = vsub.f32 %v2119, %v2668
      %v2696 = vsub.f32 %v2132, %v2668
      %v2697 = vsub.f32 %v2145, %v2668
      %v2698 = vsub.f32 %v2158, %v2668
      %v2699 = vsub.f32 %v2171, %v2668
      %v2700 = vsub.f32 %v2184, %v2668
      %v2701 = vsub.f32 %v2197, %v2668
      %v2702 = vsub.f32 %v2210, %v2668
      %v2703 = vsub.f32 %v2223, %v2668
      %v2704 = vsub.f32 %v2236, %v2668
      %v2705 = vsub.f32 %v2249, %v2668
      %v2706 = vsub.f32 %v2262, %v2668
      %v2707 = vsub.f32 %v2275, %v2668
      %v2708 = vsub.f32 %v2288, %v2668
      %v2709 = vsub.f32 %v2301, %v2668
      %v2710 = vsub.f32 %v2314, %v2668
      %v2711 = vsub.f32 %v2327, %v2668
      %v2712 = vsub.f32 %v2340, %v2668
      %v2713 = vsub.f32 %v2353, %v2668
      %v2714 = vsub.f32 %v2366, %v2668
      %v2715 = vsub.f32 %v2379, %v2668
      %v2716 = vsub.f32 %v2392, %v2668
      %v2717 = vsub.f32 %v2405, %v2668
      %v2718 = vsub.f32 %v2418, %v2668
      %v2719 = vsub.f32 %v2431, %v2668
      %v2720 = vsub.f32 %v2444, %v2668
      %v2721 = vsub.f32 %v2457, %v2668
      %v2722 = vsub.f32 %v2470, %v2668
      %v2723 = vsub.f32 %v2483, %v2668
      %v2724 = vsub.f32 %v2496, %v2668
      %v2725 = vsub.f32 %v2509, %v2668
      %v2726 = vsub.f32 %v2522, %v2668
      %v2727 = vsub.f32 %v2535, %v2668
      %v2728 = vsub.f32 %v2548, %v2668
      %v2729 = vsub.f32 %v2561, %v2668
      %v2730 = vsub.f32 %v2574, %v2668
      %v2731 = vsub.f32 %v2587, %v2668
      %v2732 = vsub.f32 %v2600, %v2668
      %v2733 = vmul.f32 %v2669, %v2669
      %v2734 = vmul.f32 %v2670, %v2670
      %v2735 = vmul.f32 %v2671, %v2671
      %v2736 = vmul.f32 %v2672, %v2672
      %v2737 = vmul.f32 %v2673, %v2673
      %v2738 = vmul.f32 %v2674, %v2674
      %v2739 = vmul.f32 %v2675, %v2675
      %v2740 = vmul.f32 %v2676, %v2676
      %v2741 = vmul.f32 %v2677, %v2677
      %v2742 = vmul.f32 %v2678, %v2678
      %v2743 = vmul.f32 %v2679, %v2679
      %v2744 = vmul.f32 %v2680, %v2680
      %v2745 = vmul.f32 %v2681, %v2681
      %v2746 = vmul.f32 %v2682, %v2682
      %v2747 = vmul.f32 %v2683, %v2683
      %v2748 = vmul.f32 %v2684, %v2684
      %v2749 = vmul.f32 %v2685, %v2685
      %v2750 = vmul.f32 %v2686, %v2686
      %v2751 = vmul.f32 %v2687, %v2687
      %v2752 = vmul.f32 %v2688, %v2688
      %v2753 = vmul.f32 %v2689, %v2689
      %v2754 = vmul.f32 %v2690, %v2690
      %v2755 = vmul.f32 %v2691, %v2691
      %v2756 = vmul.f32 %v2692, %v2692
      %v2757 = vmul.f32 %v2693, %v2693
      %v2758 = vmul.f32 %v2694, %v2694
      %v2759 = vmul.f32 %v2695, %v2695
      %v2760 = vmul.f32 %v2696, %v2696
      %v2761 = vmul.f32 %v2697, %v2697
      %v2762 = vmul.f32 %v2698, %v2698
      %v2763 = vmul.f32 %v2699, %v2699
      %v2764 = vmul.f32 %v2700, %v2700
      %v2765 = vmul.f32 %v2701, %v2701
      %v2766 = vmul.f32 %v2702, %v2702
      %v2767 = vmul.f32 %v2703, %v2703
      %v2768 = vmul.f32 %v2704, %v2704
      %v2769 = vmul.f32 %v2705, %v2705
      %v2770 = vmul.f32 %v2706, %v2706
      %v2771 = vmul.f32 %v2707, %v2707
      %v2772 = vmul.f32 %v2708, %v2708
      %v2773 = vmul.f32 %v2709, %v2709
      %v2774 = vmul.f32 %v2710, %v2710
      %v2775 = vmul.f32 %v2711, %v2711
      %v2776 = vmul.f32 %v2712, %v2712
      %v2777 = vmul.f32 %v2713, %v2713
      %v2778 = vmul.f32 %v2714, %v2714
      %v2779 = vmul.f32 %v2715, %v2715
      %v2780 = vmul.f32 %v2716, %v2716
      %v2781 = vmul.f32 %v2717, %v2717
      %v2782 = vmul.f32 %v2718, %v2718
      %v2783 = vmul.f32 %v2719, %v2719
      %v2784 = vmul.f32 %v2720, %v2720
      %v2785 = vmul.f32 %v2721, %v2721
      %v2786 = vmul.f32 %v2722, %v2722
      %v2787 = vmul.f32 %v2723, %v2723
      %v2788 = vmul.f32 %v2724, %v2724
      %v2789 = vmul.f32 %v2725, %v2725
      %v2790 = vmul.f32 %v2726, %v2726
      %v2791 = vmul.f32 %v2727, %v2727
      %v2792 = vmul.f32 %v2728, %v2728
      %v2793 = vmul.f32 %v2729, %v2729
      %v2794 = vmul.f32 %v2730, %v2730
      %v2795 = vmul.f32 %v2731, %v2731
      %v2796 = vmul.f32 %v2732, %v2732
      %v2797 = vadd.f32 %v2733, %v2734
      %v2798 = vadd.f32 %v2797, %v2735
      %v2799 = vadd.f32 %v2798, %v2736
      %v2800 = vadd.f32 %v2799, %v2737
      %v2801 = vadd.f32 %v2800, %v2738
      %v2802 = vadd.f32 %v2801, %v2739
      %v2803 = vadd.f32 %v2802, %v2740
      %v2804 = vadd.f32 %v2803, %v2741
      %v2805 = vadd.f32 %v2804, %v2742
      %v2806 = vadd.f32 %v2805, %v2743
      %v2807 = vadd.f32 %v2806, %v2744
      %v2808 = vadd.f32 %v2807, %v2745
      %v2809 = vadd.f32 %v2808, %v2746
      %v2810 = vadd.f32 %v2809, %v2747
      %v2811 = vadd.f32 %v2810, %v2748
      %v2812 = vadd.f32 %v2811, %v2749
      %v2813 = vadd.f32 %v2812, %v2750
      %v2814 = vadd.f32 %v2813, %v2751
      %v2815 = vadd.f32 %v2814, %v2752
      %v2816 = vadd.f32 %v2815, %v2753
      %v2817 = vadd.f32 %v2816, %v2754
      %v2818 = vadd.f32 %v2817, %v2755
      %v2819 = vadd.f32 %v2818, %v2756
      %v2820 = vadd.f32 %v2819, %v2757
      %v2821 = vadd.f32 %v2820, %v2758
      %v2822 = vadd.f32 %v2821, %v2759
      %v2823 = vadd.f32 %v2822, %v2760
      %v2824 = vadd.f32 %v2823, %v2761
      %v2825 = vadd.f32 %v2824, %v2762
      %v2826 = vadd.f32 %v2825, %v2763
      %v2827 = vadd.f32 %v2826, %v2764
      %v2828 = vadd.f32 %v2827, %v2765
      %v2829 = vadd.f32 %v2828, %v2766
      %v2830 = vadd.f32 %v2829, %v2767
      %v2831 = vadd.f32 %v2830, %v2768
      %v2832 = vadd.f32 %v2831, %v2769
      %v2833 = vadd.f32 %v2832, %v2770
      %v2834 = vadd.f32 %v2833, %v2771
      %v2835 = vadd.f32 %v2834, %v2772
      %v2836 = vadd.f32 %v2835, %v2773
      %v2837 = vadd.f32 %v2836, %v2774
      %v2838 = vadd.f32 %v2837, %v2775
      %v2839 = vadd.f32 %v2838, %v2776
      %v2840 = vadd.f32 %v2839, %v2777
      %v2841 = vadd.f32 %v2840, %v2778
      %v2842 = vadd.f32 %v2841, %v2779
      %v2843 = vadd.f32 %v2842, %v2780
      %v2844 = vadd.f32 %v2843, %v2781
      %v2845 = vadd.f32 %v2844, %v2782
      %v2846 = vadd.f32 %v2845, %v2783
      %v2847 = vadd.f32 %v2846, %v2784
      %v2848 = vadd.f32 %v2847, %v2785
      %v2849 = vadd.f32 %v2848, %v2786
      %v2850 = vadd.f32 %v2849, %v2787
      %v2851 = vadd.f32 %v2850, %v2788
      %v2852 = vadd.f32 %v2851, %v2789
      %v2853 = vadd.f32 %v2852, %v2790
      %v2854 = vadd.f32 %v2853, %v2791
      %v2855 = vadd.f32 %v2854, %v2792
      %v2856 = vadd.f32 %v2855, %v2793
      %v2857 = vadd.f32 %v2856, %v2794
      %v2858 = vadd.f32 %v2857, %v2795
      %v2859 = vadd.f32 %v2858, %v2796
      %2860 = vadd.xlane.f32.xlu0 %v2859
      %v2861 = vpop.xlane.xlu0 %2860
      %v2862 = vmul.f32 %v2861, 0.00012207031
      %v2863 = vld [vmem:[%s219] sm:$0xff]
      %v2864 = vadd.f32 %v2862, 1e-05
      %v2865 = vrsqrt.pop %v2864
      %v2866 = vmul.f32 %v2865, %v2864
      %v2867 = vmul.f32 %v2866, %v2865
      %v2868 = vmul.f32 0.5, %v2867
      %v2869 = vsub.f32 1.5, %v2868
      %v2870 = vmul.f32 %v2865, %v2869
      %vm2871 = vweird.f32 %v2864
      %vm2872 = vweird.f32 %v2865
      %vm2873 = vmor %vm2871, %vm2872
      %v2874 = vsel %vm2873, %v2865, %v2870
      %v2875 = vmul.f32 %v2863, %v2874
      %v2876 = vld [vmem:[%s223] sm:$0xff]
      %v2877 = vmul.f32 %v2668, %v2875
      %v2878 = vsub.f32 %v2876, %v2877
      %2880 = vset.pattern.permute.xlu0 0
      %2881 = vperm.xlu0 %2880, %v2875
      %v2882 = vpop.permute.xlu0 %2881
      %v2884 = vmul.f32 %v1781, %v2882
      %v2885 = vmul.f32 %v1794, %v2882
      %v2886 = vmul.f32 %v1807, %v2882
      %v2887 = vmul.f32 %v1820, %v2882
      %v2888 = vmul.f32 %v1833, %v2882
      %v2889 = vmul.f32 %v1846, %v2882
      %v2890 = vmul.f32 %v1859, %v2882
      %v2891 = vmul.f32 %v1872, %v2882
      %v2892 = vmul.f32 %v1885, %v2882
      %v2893 = vmul.f32 %v1898, %v2882
      %v2894 = vmul.f32 %v1911, %v2882
      %v2895 = vmul.f32 %v1924, %v2882
      %v2896 = vmul.f32 %v1937, %v2882
      %v2897 = vmul.f32 %v1950, %v2882
      %v2898 = vmul.f32 %v1963, %v2882
      %v2899 = vmul.f32 %v1976, %v2882
      %v2900 = vmul.f32 %v1989, %v2882
      %v2901 = vmul.f32 %v2002, %v2882
      %v2902 = vmul.f32 %v2015, %v2882
      %v2903 = vmul.f32 %v2028, %v2882
      %v2904 = vmul.f32 %v2041, %v2882
      %v2905 = vmul.f32 %v2054, %v2882
      %v2906 = vmul.f32 %v2067, %v2882
      %v2907 = vmul.f32 %v2080, %v2882
      %v2908 = vmul.f32 %v2093, %v2882
      %v2909 = vmul.f32 %v2106, %v2882
      %v2910 = vmul.f32 %v2119, %v2882
      %v2911 = vmul.f32 %v2132, %v2882
      %v2912 = vmul.f32 %v2145, %v2882
      %v2913 = vmul.f32 %v2158, %v2882
      %v2914 = vmul.f32 %v2171, %v2882
      %v2915 = vmul.f32 %v2184, %v2882
      %v2916 = vmul.f32 %v2197, %v2882
      %v2917 = vmul.f32 %v2210, %v2882
      %v2918 = vmul.f32 %v2223, %v2882
      %v2919 = vmul.f32 %v2236, %v2882
      %v2920 = vmul.f32 %v2249, %v2882
      %v2921 = vmul.f32 %v2262, %v2882
      %v2922 = vmul.f32 %v2275, %v2882
      %v2923 = vmul.f32 %v2288, %v2882
      %v2924 = vmul.f32 %v2301, %v2882
      %v2925 = vmul.f32 %v2314, %v2882
      %v2926 = vmul.f32 %v2327, %v2882
      %v2927 = vmul.f32 %v2340, %v2882
      %v2928 = vmul.f32 %v2353, %v2882
      %v2929 = vmul.f32 %v2366, %v2882
      %v2930 = vmul.f32 %v2379, %v2882
      %v2931 = vmul.f32 %v2392, %v2882
      %v2932 = vmul.f32 %v2405, %v2882
      %v2933 = vmul.f32 %v2418, %v2882
      %v2934 = vmul.f32 %v2431, %v2882
      %v2935 = vmul.f32 %v2444, %v2882
      %v2936 = vmul.f32 %v2457, %v2882
      %v2937 = vmul.f32 %v2470, %v2882
      %v2938 = vmul.f32 %v2483, %v2882
      %v2939 = vmul.f32 %v2496, %v2882
      %v2940 = vmul.f32 %v2509, %v2882
      %v2941 = vmul.f32 %v2522, %v2882
      %v2942 = vmul.f32 %v2535, %v2882
      %v2943 = vmul.f32 %v2548, %v2882
      %v2944 = vmul.f32 %v2561, %v2882
      %v2945 = vmul.f32 %v2574, %v2882
      %v2946 = vmul.f32 %v2587, %v2882
      %v2947 = vmul.f32 %v2600, %v2882
      %2949 = vset.pattern.permute.xlu0 0
      %2950 = vperm.xlu0 %2949, %v2878
      %v2951 = vpop.permute.xlu0 %2950
      %v2953 = vadd.f32 %v2884, %v2951
      %v2954 = vadd.f32 %v2885, %v2951
      %v2955 = vadd.f32 %v2886, %v2951
      %v2956 = vadd.f32 %v2887, %v2951
      %v2957 = vadd.f32 %v2888, %v2951
      %v2958 = vadd.f32 %v2889, %v2951
      %v2959 = vadd.f32 %v2890, %v2951
      %v2960 = vadd.f32 %v2891, %v2951
      %v2961 = vadd.f32 %v2892, %v2951
      %v2962 = vadd.f32 %v2893, %v2951
      %v2963 = vadd.f32 %v2894, %v2951
      %v2964 = vadd.f32 %v2895, %v2951
      %v2965 = vadd.f32 %v2896, %v2951
      %v2966 = vadd.f32 %v2897, %v2951
      %v2967 = vadd.f32 %v2898, %v2951
      %v2968 = vadd.f32 %v2899, %v2951
      %v2969 = vadd.f32 %v2900, %v2951
      %v2970 = vadd.f32 %v2901, %v2951
      %v2971 = vadd.f32 %v2902, %v2951
      %v2972 = vadd.f32 %v2903, %v2951
      %v2973 = vadd.f32 %v2904, %v2951
      %v2974 = vadd.f32 %v2905, %v2951
      %v2975 = vadd.f32 %v2906, %v2951
      %v2976 = vadd.f32 %v2907, %v2951
      %v2977 = vadd.f32 %v2908, %v2951
      %v2978 = vadd.f32 %v2909, %v2951
      %v2979 = vadd.f32 %v2910, %v2951
      %v2980 = vadd.f32 %v2911, %v2951
      %v2981 = vadd.f32 %v2912, %v2951
      %v2982 = vadd.f32 %v2913, %v2951
      %v2983 = vadd.f32 %v2914, %v2951
      %v2984 = vadd.f32 %v2915, %v2951
      %v2985 = vadd.f32 %v2916, %v2951
      %v2986 = vadd.f32 %v2917, %v2951
      %v2987 = vadd.f32 %v2918, %v2951
      %v2988 = vadd.f32 %v2919, %v2951
      %v2989 = vadd.f32 %v2920, %v2951
      %v2990 = vadd.f32 %v2921, %v2951
      %v2991 = vadd.f32 %v2922, %v2951
      %v2992 = vadd.f32 %v2923, %v2951
      %v2993 = vadd.f32 %v2924, %v2951
      %v2994 = vadd.f32 %v2925, %v2951
      %v2995 = vadd.f32 %v2926, %v2951
      %v2996 = vadd.f32 %v2927, %v2951
      %v2997 = vadd.f32 %v2928, %v2951
      %v2998 = vadd.f32 %v2929, %v2951
      %v2999 = vadd.f32 %v2930, %v2951
      %v3000 = vadd.f32 %v2931, %v2951
      %v3001 = vadd.f32 %v2932, %v2951
      %v3002 = vadd.f32 %v2933, %v2951
      %v3003 = vadd.f32 %v2934, %v2951
      %v3004 = vadd.f32 %v2935, %v2951
      %v3005 = vadd.f32 %v2936, %v2951
      %v3006 = vadd.f32 %v2937, %v2951
      %v3007 = vadd.f32 %v2938, %v2951
      %v3008 = vadd.f32 %v2939, %v2951
      %v3009 = vadd.f32 %v2940, %v2951
      %v3010 = vadd.f32 %v2941, %v2951
      %v3011 = vadd.f32 %v2942, %v2951
      %v3012 = vadd.f32 %v2943, %v2951
      %v3013 = vadd.f32 %v2944, %v2951
      %v3014 = vadd.f32 %v2945, %v2951
      %v3015 = vadd.f32 %v2946, %v2951
      %v3016 = vadd.f32 %v2947, %v2951
      %vm3017 = vcmp.ge.f32.partialorder %v2953, 0.0
      %vm3018 = vcmp.ge.f32.partialorder %v2954, 0.0
      %vm3019 = vcmp.ge.f32.partialorder %v2955, 0.0
      %vm3020 = vcmp.ge.f32.partialorder %v2956, 0.0
      %vm3021 = vcmp.ge.f32.partialorder %v2957, 0.0
      %vm3022 = vcmp.ge.f32.partialorder %v2958, 0.0
      %vm3023 = vcmp.ge.f32.partialorder %v2959, 0.0
      %vm3024 = vcmp.ge.f32.partialorder %v2960, 0.0
      %vm3025 = vcmp.ge.f32.partialorder %v2961, 0.0
      %vm3026 = vcmp.ge.f32.partialorder %v2962, 0.0
      %vm3027 = vcmp.ge.f32.partialorder %v2963, 0.0
      %vm3028 = vcmp.ge.f32.partialorder %v2964, 0.0
      %vm3029 = vcmp.ge.f32.partialorder %v2965, 0.0
      %vm3030 = vcmp.ge.f32.partialorder %v2966, 0.0
      %vm3031 = vcmp.ge.f32.partialorder %v2967, 0.0
      %vm3032 = vcmp.ge.f32.partialorder %v2968, 0.0
      %vm3033 = vcmp.ge.f32.partialorder %v2969, 0.0
      %vm3034 = vcmp.ge.f32.partialorder %v2970, 0.0
      %vm3035 = vcmp.ge.f32.partialorder %v2971, 0.0
      %vm3036 = vcmp.ge.f32.partialorder %v2972, 0.0
      %vm3037 = vcmp.ge.f32.partialorder %v2973, 0.0
      %vm3038 = vcmp.ge.f32.partialorder %v2974, 0.0
      %vm3039 = vcmp.ge.f32.partialorder %v2975, 0.0
      %vm3040 = vcmp.ge.f32.partialorder %v2976, 0.0
      %vm3041 = vcmp.ge.f32.partialorder %v2977, 0.0
      %vm3042 = vcmp.ge.f32.partialorder %v2978, 0.0
      %vm3043 = vcmp.ge.f32.partialorder %v2979, 0.0
      %vm3044 = vcmp.ge.f32.partialorder %v2980, 0.0
      %vm3045 = vcmp.ge.f32.partialorder %v2981, 0.0
      %vm3046 = vcmp.ge.f32.partialorder %v2982, 0.0
      %vm3047 = vcmp.ge.f32.partialorder %v2983, 0.0
      %vm3048 = vcmp.ge.f32.partialorder %v2984, 0.0
      %vm3049 = vcmp.ge.f32.partialorder %v2985, 0.0
      %vm3050 = vcmp.ge.f32.partialorder %v2986, 0.0
      %vm3051 = vcmp.ge.f32.partialorder %v2987, 0.0
      %vm3052 = vcmp.ge.f32.partialorder %v2988, 0.0
      %vm3053 = vcmp.ge.f32.partialorder %v2989, 0.0
      %vm3054 = vcmp.ge.f32.partialorder %v2990, 0.0
      %vm3055 = vcmp.ge.f32.partialorder %v2991, 0.0
      %vm3056 = vcmp.ge.f32.partialorder %v2992, 0.0
      %vm3057 = vcmp.ge.f32.partialorder %v2993, 0.0
      %vm3058 = vcmp.ge.f32.partialorder %v2994, 0.0
      %vm3059 = vcmp.ge.f32.partialorder %v2995, 0.0
      %vm3060 = vcmp.ge.f32.partialorder %v2996, 0.0
      %vm3061 = vcmp.ge.f32.partialorder %v2997, 0.0
      %vm3062 = vcmp.ge.f32.partialorder %v2998, 0.0
      %vm3063 = vcmp.ge.f32.partialorder %v2999, 0.0
      %vm3064 = vcmp.ge.f32.partialorder %v3000, 0.0
      %vm3065 = vcmp.ge.f32.partialorder %v3001, 0.0
      %vm3066 = vcmp.ge.f32.partialorder %v3002, 0.0
      %vm3067 = vcmp.ge.f32.partialorder %v3003, 0.0
      %vm3068 = vcmp.ge.f32.partialorder %v3004, 0.0
      %vm3069 = vcmp.ge.f32.partialorder %v3005, 0.0
      %vm3070 = vcmp.ge.f32.partialorder %v3006, 0.0
      %vm3071 = vcmp.ge.f32.partialorder %v3007, 0.0
      %vm3072 = vcmp.ge.f32.partialorder %v3008, 0.0
      %vm3073 = vcmp.ge.f32.partialorder %v3009, 0.0
      %vm3074 = vcmp.ge.f32.partialorder %v3010, 0.0
      %vm3075 = vcmp.ge.f32.partialorder %v3011, 0.0
      %vm3076 = vcmp.ge.f32.partialorder %v3012, 0.0
      %vm3077 = vcmp.ge.f32.partialorder %v3013, 0.0
      %vm3078 = vcmp.ge.f32.partialorder %v3014, 0.0
      %vm3079 = vcmp.ge.f32.partialorder %v3015, 0.0
      %vm3080 = vcmp.ge.f32.partialorder %v3016, 0.0
      %v3081 = vmul.f32 %v2953, 0.2
      %v3082 = vmul.f32 %v2954, 0.2
      %v3083 = vmul.f32 %v2955, 0.2
      %v3084 = vmul.f32 %v2956, 0.2
      %v3085 = vmul.f32 %v2957, 0.2
      %v3086 = vmul.f32 %v2958, 0.2
      %v3087 = vmul.f32 %v2959, 0.2
      %v3088 = vmul.f32 %v2960, 0.2
      %v3089 = vmul.f32 %v2961, 0.2
      %v3090 = vmul.f32 %v2962, 0.2
      %v3091 = vmul.f32 %v2963, 0.2
      %v3092 = vmul.f32 %v2964, 0.2
      %v3093 = vmul.f32 %v2965, 0.2
      %v3094 = vmul.f32 %v2966, 0.2
      %v3095 = vmul.f32 %v2967, 0.2
      %v3096 = vmul.f32 %v2968, 0.2
      %v3097 = vmul.f32 %v2969, 0.2
      %v3098 = vmul.f32 %v2970, 0.2
      %v3099 = vmul.f32 %v2971, 0.2
      %v3100 = vmul.f32 %v2972, 0.2
      %v3101 = vmul.f32 %v2973, 0.2
      %v3102 = vmul.f32 %v2974, 0.2
      %v3103 = vmul.f32 %v2975, 0.2
      %v3104 = vmul.f32 %v2976, 0.2
      %v3105 = vmul.f32 %v2977, 0.2
      %v3106 = vmul.f32 %v2978, 0.2
      %v3107 = vmul.f32 %v2979, 0.2
      %v3108 = vmul.f32 %v2980, 0.2
      %v3109 = vmul.f32 %v2981, 0.2
      %v3110 = vmul.f32 %v2982, 0.2
      %v3111 = vmul.f32 %v2983, 0.2
      %v3112 = vmul.f32 %v2984, 0.2
      %v3113 = vmul.f32 %v2985, 0.2
      %v3114 = vmul.f32 %v2986, 0.2
      %v3115 = vmul.f32 %v2987, 0.2
      %v3116 = vmul.f32 %v2988, 0.2
      %v3117 = vmul.f32 %v2989, 0.2
      %v3118 = vmul.f32 %v2990, 0.2
      %v3119 = vmul.f32 %v2991, 0.2
      %v3120 = vmul.f32 %v2992, 0.2
      %v3121 = vmul.f32 %v2993, 0.2
      %v3122 = vmul.f32 %v2994, 0.2
      %v3123 = vmul.f32 %v2995, 0.2
      %v3124 = vmul.f32 %v2996, 0.2
      %v3125 = vmul.f32 %v2997, 0.2
      %v3126 = vmul.f32 %v2998, 0.2
      %v3127 = vmul.f32 %v2999, 0.2
      %v3128 = vmul.f32 %v3000, 0.2
      %v3129 = vmul.f32 %v3001, 0.2
      %v3130 = vmul.f32 %v3002, 0.2
      %v3131 = vmul.f32 %v3003, 0.2
      %v3132 = vmul.f32 %v3004, 0.2
      %v3133 = vmul.f32 %v3005, 0.2
      %v3134 = vmul.f32 %v3006, 0.2
      %v3135 = vmul.f32 %v3007, 0.2
      %v3136 = vmul.f32 %v3008, 0.2
      %v3137 = vmul.f32 %v3009, 0.2
      %v3138 = vmul.f32 %v3010, 0.2
      %v3139 = vmul.f32 %v3011, 0.2
      %v3140 = vmul.f32 %v3012, 0.2
      %v3141 = vmul.f32 %v3013, 0.2
      %v3142 = vmul.f32 %v3014, 0.2
      %v3143 = vmul.f32 %v3015, 0.2
      %v3144 = vmul.f32 %v3016, 0.2
      %v3145 = vsel %vm3017, %v2953, %v3081
      %v3146 = vsel %vm3018, %v2954, %v3082
      %v3147 = vsel %vm3019, %v2955, %v3083
      %v3148 = vsel %vm3020, %v2956, %v3084
      %v3149 = vsel %vm3021, %v2957, %v3085
      %v3150 = vsel %vm3022, %v2958, %v3086
      %v3151 = vsel %vm3023, %v2959, %v3087
      %v3152 = vsel %vm3024, %v2960, %v3088
      %v3153 = vsel %vm3025, %v2961, %v3089
      %v3154 = vsel %vm3026, %v2962, %v3090
      %v3155 = vsel %vm3027, %v2963, %v3091
      %v3156 = vsel %vm3028, %v2964, %v3092
      %v3157 = vsel %vm3029, %v2965, %v3093
      %v3158 = vsel %vm3030, %v2966, %v3094
      %v3159 = vsel %vm3031, %v2967, %v3095
      %v3160 = vsel %vm3032, %v2968, %v3096
      %v3161 = vsel %vm3033, %v2969, %v3097
      %v3162 = vsel %vm3034, %v2970, %v3098
      %v3163 = vsel %vm3035, %v2971, %v3099
      %v3164 = vsel %vm3036, %v2972, %v3100
      %v3165 = vsel %vm3037, %v2973, %v3101
      %v3166 = vsel %vm3038, %v2974, %v3102
      %v3167 = vsel %vm3039, %v2975, %v3103
      %v3168 = vsel %vm3040, %v2976, %v3104
      %v3169 = vsel %vm3041, %v2977, %v3105
      %v3170 = vsel %vm3042, %v2978, %v3106
      %v3171 = vsel %vm3043, %v2979, %v3107
      %v3172 = vsel %vm3044, %v2980, %v3108
      %v3173 = vsel %vm3045, %v2981, %v3109
      %v3174 = vsel %vm3046, %v2982, %v3110
      %v3175 = vsel %vm3047, %v2983, %v3111
      %v3176 = vsel %vm3048, %v2984, %v3112
      %v3177 = vsel %vm3049, %v2985, %v3113
      %v3178 = vsel %vm3050, %v2986, %v3114
      %v3179 = vsel %vm3051, %v2987, %v3115
      %v3180 = vsel %vm3052, %v2988, %v3116
      %v3181 = vsel %vm3053, %v2989, %v3117
      %v3182 = vsel %vm3054, %v2990, %v3118
      %v3183 = vsel %vm3055, %v2991, %v3119
      %v3184 = vsel %vm3056, %v2992, %v3120
      %v3185 = vsel %vm3057, %v2993, %v3121
      %v3186 = vsel %vm3058, %v2994, %v3122
      %v3187 = vsel %vm3059, %v2995, %v3123
      %v3188 = vsel %vm3060, %v2996, %v3124
      %v3189 = vsel %vm3061, %v2997, %v3125
      %v3190 = vsel %vm3062, %v2998, %v3126
      %v3191 = vsel %vm3063, %v2999, %v3127
      %v3192 = vsel %vm3064, %v3000, %v3128
      %v3193 = vsel %vm3065, %v3001, %v3129
      %v3194 = vsel %vm3066, %v3002, %v3130
      %v3195 = vsel %vm3067, %v3003, %v3131
      %v3196 = vsel %vm3068, %v3004, %v3132
      %v3197 = vsel %vm3069, %v3005, %v3133
      %v3198 = vsel %vm3070, %v3006, %v3134
      %v3199 = vsel %vm3071, %v3007, %v3135
      %v3200 = vsel %vm3072, %v3008, %v3136
      %v3201 = vsel %vm3073, %v3009, %v3137
      %v3202 = vsel %vm3074, %v3010, %v3138
      %v3203 = vsel %vm3075, %v3011, %v3139
      %v3204 = vsel %vm3076, %v3012, %v3140
      %v3205 = vsel %vm3077, %v3013, %v3141
      %v3206 = vsel %vm3078, %v3014, %v3142
      %v3207 = vsel %vm3079, %v3015, %v3143
      %v3208 = vsel %vm3080, %v3016, %v3144
      %v3209 = vpack.c.bf16 %v3146, %v3145
      %v3210 = vpack.c.bf16 %v3148, %v3147
      %v3211 = vpack.c.bf16 %v3150, %v3149
      %v3212 = vpack.c.bf16 %v3152, %v3151
      %v3213 = vpack.c.bf16 %v3154, %v3153
      %v3214 = vpack.c.bf16 %v3156, %v3155
      %v3215 = vpack.c.bf16 %v3158, %v3157
      %v3216 = vpack.c.bf16 %v3160, %v3159
      %v3217 = vpack.c.bf16 %v3162, %v3161
      %v3218 = vpack.c.bf16 %v3164, %v3163
      %v3219 = vpack.c.bf16 %v3166, %v3165
      %v3220 = vpack.c.bf16 %v3168, %v3167
      %v3221 = vpack.c.bf16 %v3170, %v3169
      %v3222 = vpack.c.bf16 %v3172, %v3171
      %v3223 = vpack.c.bf16 %v3174, %v3173
      %v3224 = vpack.c.bf16 %v3176, %v3175
      %v3225 = vpack.c.bf16 %v3178, %v3177
      %v3226 = vpack.c.bf16 %v3180, %v3179
      %v3227 = vpack.c.bf16 %v3182, %v3181
      %v3228 = vpack.c.bf16 %v3184, %v3183
      %v3229 = vpack.c.bf16 %v3186, %v3185
      %v3230 = vpack.c.bf16 %v3188, %v3187
      %v3231 = vpack.c.bf16 %v3190, %v3189
      %v3232 = vpack.c.bf16 %v3192, %v3191
      %v3233 = vpack.c.bf16 %v3194, %v3193
      %v3234 = vpack.c.bf16 %v3196, %v3195
      %v3235 = vpack.c.bf16 %v3198, %v3197
      %v3236 = vpack.c.bf16 %v3200, %v3199
      %v3237 = vpack.c.bf16 %v3202, %v3201
      %v3238 = vpack.c.bf16 %v3204, %v3203
      %v3239 = vpack.c.bf16 %v3206, %v3205
      %v3240 = vpack.c.bf16 %v3208, %v3207
      %3241 = vst [vmem:[%s228] sm:$0xff] %v3209
      %3242 = vst [vmem:[%s228 + $0x8] sm:$0xff] %v3210
      %3243 = vst [vmem:[%s228 + $0x10] sm:$0xff] %v3211
      %3244 = vst [vmem:[%s228 + $0x18] sm:$0xff] %v3212
      %3245 = vst [vmem:[%s228 + $0x20] sm:$0xff] %v3213
      %3246 = vst [vmem:[%s228 + $0x28] sm:$0xff] %v3214
      %3247 = vst [vmem:[%s228 + $0x30] sm:$0xff] %v3215
      %3248 = vst [vmem:[%s228 + $0x38] sm:$0xff] %v3216
      %3249 = vst [vmem:[%s228 + $0x40] sm:$0xff] %v3217
      %3250 = vst [vmem:[%s228 + $0x48] sm:$0xff] %v3218
      %3251 = vst [vmem:[%s228 + $0x50] sm:$0xff] %v3219
      %3252 = vst [vmem:[%s228 + $0x58] sm:$0xff] %v3220
      %3253 = vst [vmem:[%s228 + $0x60] sm:$0xff] %v3221
      %3254 = vst [vmem:[%s228 + $0x68] sm:$0xff] %v3222
      %3255 = vst [vmem:[%s228 + $0x70] sm:$0xff] %v3223
      %3256 = vst [vmem:[%s228 + $0x78] sm:$0xff] %v3224
      %3257 = vst [vmem:[%s228 + $0x80] sm:$0xff] %v3225
      %3258 = vst [vmem:[%s228 + $0x88] sm:$0xff] %v3226
      %3259 = vst [vmem:[%s228 + $0x90] sm:$0xff] %v3227
      %3260 = vst [vmem:[%s228 + $0x98] sm:$0xff] %v3228
      %3261 = vst [vmem:[%s228 + $0xa0] sm:$0xff] %v3229
      %3262 = vst [vmem:[%s228 + $0xa8] sm:$0xff] %v3230
      %3263 = vst [vmem:[%s228 + $0xb0] sm:$0xff] %v3231
      %3264 = vst [vmem:[%s228 + $0xb8] sm:$0xff] %v3232
      %3265 = vst [vmem:[%s228 + $0xc0] sm:$0xff] %v3233
      %3266 = vst [vmem:[%s228 + $0xc8] sm:$0xff] %v3234
      %3267 = vst [vmem:[%s228 + $0xd0] sm:$0xff] %v3235
      %3268 = vst [vmem:[%s228 + $0xd8] sm:$0xff] %v3236
      %3269 = vst [vmem:[%s228 + $0xe0] sm:$0xff] %v3237
      %3270 = vst [vmem:[%s228 + $0xe8] sm:$0xff] %v3238
      %3271 = vst [vmem:[%s228 + $0xf0] sm:$0xff] %v3239
      %3272 = vst [vmem:[%s228 + $0xf8] sm:$0xff] %v3240
      %p3273 = scmp.lt.s32.totalorder %s15, 1
      %s3274 = scalar_select %p3273, %s15, 1
      %s3275 = smul.addr %s3274, 64
      %s3276 = smul.addr %s3275, 4
      %s3277 = scalar_lea.vmem %s4, %s3276
      // Predicated region
      $region37: #{discriminator_forward.3} parent=35 // pred_check
        %p3278 = pneg %p132
      $region38: #{discriminator_forward.3} parent=35 // pred_check_branch
        %3280 = sbr.rel (%p3278) target = $region40
      $region39: #{discriminator_forward.3} parent=35 // pred_region
        _
      $region40: #{discriminator_forward.3} parent=35 // pred_fallthru
        _
    $region36: #{discriminator_forward.3} parent=5 // pred_fallthru
      _
    %p3281 = scmp.le.s32.totalorder 2, %s10
    // Predicated region
    $region41: #{discriminator_forward.3} parent=5 // pred_check
      %p3282 = pneg %p3281
    $region42: #{discriminator_forward.3} parent=5 // pred_check_branch
      %3284 = sbr.rel (%p3282) target = $region44
    $region43: #{discriminator_forward.3} parent=5 // pred_region
      %s3285 = ssub.s32 %s10, 2
      // Predicated region
      $region45: #{discriminator_forward.3} parent=43 // pred_check
        %p3286 = pneg %p138
      $region46: #{discriminator_forward.3} parent=43 // pred_check_branch
        %3288 = sbr.rel (%p3286) target = $region48
      $region47: #{discriminator_forward.3} parent=43 // pred_region
        %p3289 = scmp.lt.s32.totalorder %s16, 1
        %s3290 = scalar_select %p3289, %s16, 1
        %s3291 = smul.addr %s3290, 64
        %s3292 = smul.addr %s3291, 4
        %s3293 = scalar_lea.vmem %s4, %s3292
      $region48: #{discriminator_forward.3} parent=43 // pred_fallthru
        _
    $region44: #{discriminator_forward.3} parent=5 // pred_fallthru
      _
  $region6: #{discriminator_forward.3} parent=0 // loop_footer
    %s14 = sadd.s32 1, %s10
  $region7: #{discriminator_forward.3} parent=0 // loop_footer_branch
    %9 = sbr.rel target = $region3
  $region8: #{discriminator_forward.3} parent=0 // loop_exit
    _

// kernel: discriminator_forward.4
$region0: #{discriminator_forward.4}
  #allocation0 [shape = 'u32[]', space=smem, size = 0x4, offset = 0x4, fixed_abs, tag = 'smem constant byte address 0x4 - core index']
  #allocation1 [shape = 'u32[72,128]{1,0:T(1,128)}', space=vmem, size = 0x9000, scoped, tag = 'internal scratch']
  %s0 = inlined_call_operand.vmem [shape: bf16[32,1024], index: 0, kind: input, shape index: {}]
  %s1 = inlined_call_operand.vmem [shape: bf16[1024,1024], index: 1, kind: input, shape index: {}]
  %s2 = inlined_call_operand.vmem [shape: f32[32,1], index: 2, kind: input, shape index: {}]
  %s3 = inlined_call_operand.vmem [shape: f32[32,1], index: 3, kind: input, shape index: {}]
  %s4 = inlined_call_operand.vmem [shape: bf16[32,1024], index: 4, kind: output, shape index: {}]
  %s5 = sld [smem:[#allocation0]]
  $region49: #{discriminator_forward.4} parent=0
    _
  %s7 = ssub.s32 1, %s5
  %s8 = scalar_select 0, %s7, %s5
  loop: start=0, step=1, limit=4
  $region2: #{discriminator_forward.4} parent=0 // loop_pre_header
    _
  $region3: #{discriminator_forward.4} parent=0 // loop_header
    %s10 = sphi 0, %s14
    %p11 = scmp.ge.s32.totalorder %s10, 4
    %s20 = sphi 0, %s22
    %s23 = sphi 0, %s20
    %s24 = sphi 0, %s23
    %s40 = sphi 0, %s24
    %s44 = sphi 0, %s44
    %s46 = sphi 0, %s44
    %s47 = sphi 0, %s46
    %s61 = sphi 0, %s47
    %s67 = sphi 0, %s69
    %s70 = sphi 0, %s67
    %s71 = sphi 0, %s70
    %s87 = sphi 0, %s71
    %s93 = sphi 0, %s95
    %s96 = sphi 0, %s93
    %s97 = sphi 0, %s96
    %s113 = sphi 0, %s97
    %s119 = sphi 0, %s121
    %s122 = sphi 0, %s119
    %s123 = sphi 0, %s122
    %s139 = sphi 0, %s123
  $region4: #{discriminator_forward.4} parent=0 // loop_header_branch
    %13 = sbr.rel (%p11) target = $region8
  $region5: #{discriminator_forward.4} parent=0 // loop_body
    %s15 = ssub.s32 %s10, 1
    %s16 = ssub.s32 %s10, 2
    %s17 = sadd.s32 %s10, 1
    %s18 = ssub.s32 %s10, %s17
    %p19 = scmp.eq.s32.totalorder %s18, 0
    %s21 = sadd.s32 %s20, 1
    %s22 = scalar_select %p19, %s20, %s21
    %p25 = pneg %p19
    %p26 = scmp.eq.s32.totalorder %s10, 1
    %p27 = por %p25, %p26
    %p28 = scmp.ne.s32.totalorder %s20, %s23
    %p29 = scmp.eq.s32.totalorder %s10, 0
    %p30 = por %p28, %p29
    %p31 = scmp.ne.s32.totalorder %s20, %s23
    %p32 = scmp.eq.s32.totalorder %s15, 1
    %p33 = por %p31, %p32
    %p34 = scmp.ne.s32.totalorder %s23, %s24
    %p35 = scmp.eq.s32.totalorder %s15, 0
    %p36 = por %p34, %p35
    %p37 = scmp.ne.s32.totalorder %s23, %s24
    %p38 = scmp.eq.s32.totalorder %s16, 1
    %p39 = por %p37, %p38
    %p41 = scmp.ne.s32.totalorder %s24, %s40
    %p42 = scmp.eq.s32.totalorder %s16, 0
    %p43 = por %p41, %p42
    %s45 = sadd.s32 %s44, 1
    %p48 = scmp.eq.s32.totalorder %s10, 1
    %p49 = scmp.ne.s32.totalorder %s44, %s46
    %p50 = scmp.eq.s32.totalorder %s10, 0
    %p51 = por %p49, %p50
    %p52 = scmp.ne.s32.totalorder %s44, %s46
    %p53 = scmp.eq.s32.totalorder %s15, 1
    %p54 = por %p52, %p53
    %p55 = scmp.ne.s32.totalorder %s46, %s47
    %p56 = scmp.eq.s32.totalorder %s15, 0
    %p57 = por %p55, %p56
    %p58 = scmp.ne.s32.totalorder %s46, %s47
    %p59 = scmp.eq.s32.totalorder %s16, 1
    %p60 = por %p58, %p59
    %p62 = scmp.ne.s32.totalorder %s47, %s61
    %p63 = scmp.eq.s32.totalorder %s16, 0
    %p64 = por %p62, %p63
    %s65 = ssub.s32 %s10, %s17
    %p66 = scmp.eq.s32.totalorder %s65, 0
    %s68 = sadd.s32 %s67, 1
    %s69 = scalar_select %p66, %s67, %s68
    %p72 = pneg %p66
    %p73 = scmp.eq.s32.totalorder %s10, 1
    %p74 = por %p72, %p73
    %p75 = scmp.ne.s32.totalorder %s67, %s70
    %p76 = scmp.eq.s32.totalorder %s10, 0
    %p77 = por %p75, %p76
    %p78 = scmp.ne.s32.totalorder %s67, %s70
    %p79 = scmp.eq.s32.totalorder %s15, 1
    %p80 = por %p78, %p79
    %p81 = scmp.ne.s32.totalorder %s70, %s71
    %p82 = scmp.eq.s32.totalorder %s15, 0
    %p83 = por %p81, %p82
    %p84 = scmp.ne.s32.totalorder %s70, %s71
    %p85 = scmp.eq.s32.totalorder %s16, 1
    %p86 = por %p84, %p85
    %p88 = scmp.ne.s32.totalorder %s71, %s87
    %p89 = scmp.eq.s32.totalorder %s16, 0
    %p90 = por %p88, %p89
    %s91 = ssub.s32 %s10, %s17
    %p92 = scmp.eq.s32.totalorder %s91, 0
    %s94 = sadd.s32 %s93, 1
    %s95 = scalar_select %p92, %s93, %s94
    %p98 = pneg %p92
    %p99 = scmp.eq.s32.totalorder %s10, 1
    %p100 = por %p98, %p99
    %p101 = scmp.ne.s32.totalorder %s93, %s96
    %p102 = scmp.eq.s32.totalorder %s10, 0
    %p103 = por %p101, %p102
    %p104 = scmp.ne.s32.totalorder %s93, %s96
    %p105 = scmp.eq.s32.totalorder %s15, 1
    %p106 = por %p104, %p105
    %p107 = scmp.ne.s32.totalorder %s96, %s97
    %p108 = scmp.eq.s32.totalorder %s15, 0
    %p109 = por %p107, %p108
    %p110 = scmp.ne.s32.totalorder %s96, %s97
    %p111 = scmp.eq.s32.totalorder %s16, 1
    %p112 = por %p110, %p111
    %p114 = scmp.ne.s32.totalorder %s97, %s113
    %p115 = scmp.eq.s32.totalorder %s16, 0
    %p116 = por %p114, %p115
    %s117 = ssub.s32 %s10, %s17
    %p118 = scmp.eq.s32.totalorder %s117, 0
    %s120 = sadd.s32 %s119, 1
    %s121 = scalar_select %p118, %s119, %s120
    %p124 = pneg %p118
    %p125 = scmp.eq.s32.totalorder %s10, 1
    %p126 = por %p124, %p125
    %p127 = scmp.ne.s32.totalorder %s119, %s122
    %p128 = scmp.eq.s32.totalorder %s10, 0
    %p129 = por %p127, %p128
    %p130 = scmp.ne.s32.totalorder %s119, %s122
    %p131 = scmp.eq.s32.totalorder %s15, 1
    %p132 = por %p130, %p131
    %p133 = scmp.ne.s32.totalorder %s122, %s123
    %p134 = scmp.eq.s32.totalorder %s15, 0
    %p135 = por %p133, %p134
    %p136 = scmp.ne.s32.totalorder %s122, %s123
    %p137 = scmp.eq.s32.totalorder %s16, 1
    %p138 = por %p136, %p137
    %p140 = scmp.ne.s32.totalorder %s123, %s139
    %p141 = scmp.eq.s32.totalorder %s16, 0
    %p142 = por %p140, %p141
    %p143 = scmp.le.s32.totalorder 1, %s10
    %p144 = scmp.lt.s32.totalorder %s10, 3
    %p145 = pnand %p143, %p144
    %p146 = pneg %p145
    // Predicated region
    $region9: #{discriminator_forward.4} parent=5 // pred_check
      _
    $region10: #{discriminator_forward.4} parent=5 // pred_check_branch
      %148 = sbr.rel (%p145) target = $region12
    $region11: #{discriminator_forward.4} parent=5 // pred_region
      %s149 = ssub.s32 %s10, 1
      // Predicated region
      $region13: #{discriminator_forward.4} parent=11 // pred_check
        %p150 = pneg %p57
      $region14: #{discriminator_forward.4} parent=11 // pred_check_branch
        %152 = sbr.rel (%p150) target = $region16
      $region15: #{discriminator_forward.4} parent=11 // pred_region
        _
      $region16: #{discriminator_forward.4} parent=11 // pred_fallthru
        _
    $region12: #{discriminator_forward.4} parent=5 // pred_fallthru
      _
    %p153 = scmp.lt.s32.totalorder %s10, 2
    // Predicated region
    $region17: #{discriminator_forward.4} parent=5 // pred_check
      %p154 = pneg %p153
    $region18: #{discriminator_forward.4} parent=5 // pred_check_branch
      %156 = sbr.rel (%p154) target = $region20
    $region19: #{discriminator_forward.4} parent=5 // pred_region
      // Predicated region
      $region21: #{discriminator_forward.4} parent=19 // pred_check
        %p157 = pneg %p30
      $region22: #{discriminator_forward.4} parent=19 // pred_check_branch
        %159 = sbr.rel (%p157) target = $region24
      $region23: #{discriminator_forward.4} parent=19 // pred_region
        %s160 = smul.u32 2, %s10
        %p161 = scmp.lt.s32.totalorder %s160, 3
        %s162 = scalar_select %p161, %s160, 3
        %s163 = smul.addr %s162, 8
        %s164 = smul.addr %s163, 4
        %s165 = scalar_lea.vmem %s0, %s164
        %s166 = smul.u32 2, %s10
      $region24: #{discriminator_forward.4} parent=19 // pred_fallthru
        _
      // Predicated region
      $region25: #{discriminator_forward.4} parent=19 // pred_check
        %p167 = pneg %p77
      $region26: #{discriminator_forward.4} parent=19 // pred_check_branch
        %169 = sbr.rel (%p167) target = $region28
      $region27: #{discriminator_forward.4} parent=19 // pred_region
        %s170 = smul.u32 2, %s10
        %p171 = scmp.lt.s32.totalorder %s170, 3
        %s172 = scalar_select %p171, %s170, 3
        %s173 = smul.addr %s172, 8
        %s174 = scalar_lea.vmem %s2, %s173
        %s175 = smul.u32 2, %s10
      $region28: #{discriminator_forward.4} parent=19 // pred_fallthru
        _
      // Predicated region
      $region29: #{discriminator_forward.4} parent=19 // pred_check
        %p176 = pneg %p103
      $region30: #{discriminator_forward.4} parent=19 // pred_check_branch
        %178 = sbr.rel (%p176) target = $region32
      $region31: #{discriminator_forward.4} parent=19 // pred_region
        %s179 = smul.u32 2, %s10
        %p180 = scmp.lt.s32.totalorder %s179, 3
        %s181 = scalar_select %p180, %s179, 3
        %s182 = smul.addr %s181, 8
        %s183 = scalar_lea.vmem %s3, %s182
        %s184 = smul.u32 2, %s10
      $region32: #{discriminator_forward.4} parent=19 // pred_fallthru
        _
    $region20: #{discriminator_forward.4} parent=5 // pred_fallthru
      _
    %p185 = scmp.le.s32.totalorder 1, %s10
    %p186 = scmp.lt.s32.totalorder %s10, 3
    %p187 = pnand %p185, %p186
    %p188 = pneg %p187
    // Predicated region
    $region33: #{discriminator_forward.4} parent=5 // pred_check
      _
    $region34: #{discriminator_forward.4} parent=5 // pred_check_branch
      %190 = sbr.rel (%p187) target = $region36
    $region35: #{discriminator_forward.4} parent=5 // pred_region
      %s191 = ssub.s32 %s10, 1
      %s192 = smul.u32 2, %s15
      %p193 = scmp.lt.s32.totalorder %s192, 3
      %s194 = scalar_select %p193, %s192, 3
      %s195 = smul.addr %s194, 8
      %s196 = smul.addr %s195, 4
      %s197 = scalar_lea.vmem %s0, %s196
      %p198 = pneg %p36
      %p199 = pneg %p33
      %p200 = pneg %p57
      %p201 = pneg %p54
      %s202 = smul.u32 2, %s15
      %p203 = scmp.lt.s32.totalorder %s202, 3
      %s204 = scalar_select %p203, %s202, 3
      %s205 = smul.addr %s204, 8
      %s206 = scalar_lea.vmem %s2, %s205
      %p207 = pneg %p83
      %p208 = pneg %p80
      %s209 = smul.u32 2, %s15
      %p210 = scmp.lt.s32.totalorder %s209, 3
      %s211 = scalar_select %p210, %s209, 3
      %s212 = smul.addr %s211, 8
      %s213 = scalar_lea.vmem %s3, %s212
      %p214 = pneg %p109
      %p215 = pneg %p106
      %p216 = pneg %p135
      %p217 = pneg %p132
      %s218 = smul.u32 2, %s15
      %p219 = scmp.lt.s32.totalorder %s218, 3
      %s220 = scalar_select %p219, %s218, 3
      %s221 = smul.addr %s220, 8
      %s222 = smul.addr %s221, 4
      %s223 = scalar_lea.vmem %s4, %s222
      %s224 = smul.u32 2, %s15
      %p225 = scmp.lt.s32.totalorder %s224, 3
      %s226 = scalar_select %p225, %s224, 3
      %s227 = smul.addr %s226, 8
      %s228 = smul.addr %s227, 4
      %s229 = scalar_lea.vmem %s0, %s228
      %s230 = smul.u32 2, %s15
      %s231 = smul.u32 2, %s15
      %p232 = scmp.lt.s32.totalorder %s231, 3
      %s233 = scalar_select %p232, %s231, 3
      %s234 = smul.addr %s233, 8
      %s235 = scalar_lea.vmem %s2, %s234
      %s236 = smul.u32 2, %s15
      %s237 = smul.u32 2, %s15
      %p238 = scmp.lt.s32.totalorder %s237, 3
      %s239 = scalar_select %p238, %s237, 3
      %s240 = smul.addr %s239, 8
      %s241 = scalar_lea.vmem %s3, %s240
      %s242 = smul.u32 2, %s15
      %s243 = smul.u32 2, %s15
      %p244 = scmp.lt.s32.totalorder %s243, 3
      %s245 = scalar_select %p244, %s243, 3
      %s246 = smul.addr %s245, 8
      %s247 = smul.addr %s246, 4
      %s248 = scalar_lea.vmem %s4, %s247
      %s249 = smul.u32 2, %s15
      %v250 = vld [vmem:[%s229] sm:$0xff]
      %v251 = vld [vmem:[%s229 + $0x8] sm:$0xff]
      %v252 = vld [vmem:[%s229 + $0x10] sm:$0xff]
      %v253 = vld [vmem:[%s229 + $0x18] sm:$0xff]
      %v254 = vld [vmem:[%s229 + $0x20] sm:$0xff]
      %v255 = vld [vmem:[%s229 + $0x28] sm:$0xff]
      %v256 = vld [vmem:[%s229 + $0x30] sm:$0xff]
      %v257 = vld [vmem:[%s229 + $0x38] sm:$0xff]
      %v258 = vld [vmem:[%s1] sm:$0xff]
      %v259 = vld [vmem:[%s1 + $0x8] sm:$0xff]
      %v260 = vld [vmem:[%s1 + $0x10] sm:$0xff]
      %v261 = vld [vmem:[%s1 + $0x18] sm:$0xff]
      %v262 = vld [vmem:[%s1 + $0x20] sm:$0xff]
      %v263 = vld [vmem:[%s1 + $0x28] sm:$0xff]
      %v264 = vld [vmem:[%s1 + $0x30] sm:$0xff]
      %v265 = vld [vmem:[%s1 + $0x38] sm:$0xff]
      %v266 = vld [vmem:[%s1 + $0x40] sm:$0xff]
      %v267 = vld [vmem:[%s1 + $0x48] sm:$0xff]
      %v268 = vld [vmem:[%s1 + $0x50] sm:$0xff]
      %v269 = vld [vmem:[%s1 + $0x58] sm:$0xff]
      %v270 = vld [vmem:[%s1 + $0x60] sm:$0xff]
      %v271 = vld [vmem:[%s1 + $0x68] sm:$0xff]
      %v272 = vld [vmem:[%s1 + $0x70] sm:$0xff]
      %v273 = vld [vmem:[%s1 + $0x78] sm:$0xff]
      %v274 = vld [vmem:[%s1 + $0x80] sm:$0xff]
      %v275 = vld [vmem:[%s1 + $0x88] sm:$0xff]
      %v276 = vld [vmem:[%s1 + $0x90] sm:$0xff]
      %v277 = vld [vmem:[%s1 + $0x98] sm:$0xff]
      %v278 = vld [vmem:[%s1 + $0xa0] sm:$0xff]
      %v279 = vld [vmem:[%s1 + $0xa8] sm:$0xff]
      %v280 = vld [vmem:[%s1 + $0xb0] sm:$0xff]
      %v281 = vld [vmem:[%s1 + $0xb8] sm:$0xff]
      %v282 = vld [vmem:[%s1 + $0xc0] sm:$0xff]
      %v283 = vld [vmem:[%s1 + $0xc8] sm:$0xff]
      %v284 = vld [vmem:[%s1 + $0xd0] sm:$0xff]
      %v285 = vld [vmem:[%s1 + $0xd8] sm:$0xff]
      %v286 = vld [vmem:[%s1 + $0xe0] sm:$0xff]
      %v287 = vld [vmem:[%s1 + $0xe8] sm:$0xff]
      %v288 = vld [vmem:[%s1 + $0xf0] sm:$0xff]
      %v289 = vld [vmem:[%s1 + $0xf8] sm:$0xff]
      %v290 = vld [vmem:[%s1 + $0x100] sm:$0xff]
      %v291 = vld [vmem:[%s1 + $0x108] sm:$0xff]
      %v292 = vld [vmem:[%s1 + $0x110] sm:$0xff]
      %v293 = vld [vmem:[%s1 + $0x118] sm:$0xff]
      %v294 = vld [vmem:[%s1 + $0x120] sm:$0xff]
      %v295 = vld [vmem:[%s1 + $0x128] sm:$0xff]
      %v296 = vld [vmem:[%s1 + $0x130] sm:$0xff]
      %v297 = vld [vmem:[%s1 + $0x138] sm:$0xff]
      %v298 = vld [vmem:[%s1 + $0x140] sm:$0xff]
      %v299 = vld [vmem:[%s1 + $0x148] sm:$0xff]
      %v300 = vld [vmem:[%s1 + $0x150] sm:$0xff]
      %v301 = vld [vmem:[%s1 + $0x158] sm:$0xff]
      %v302 = vld [vmem:[%s1 + $0x160] sm:$0xff]
      %v303 = vld [vmem:[%s1 + $0x168] sm:$0xff]
      %v304 = vld [vmem:[%s1 + $0x170] sm:$0xff]
      %v305 = vld [vmem:[%s1 + $0x178] sm:$0xff]
      %v306 = vld [vmem:[%s1 + $0x180] sm:$0xff]
      %v307 = vld [vmem:[%s1 + $0x188] sm:$0xff]
      %v308 = vld [vmem:[%s1 + $0x190] sm:$0xff]
      %v309 = vld [vmem:[%s1 + $0x198] sm:$0xff]
      %v310 = vld [vmem:[%s1 + $0x1a0] sm:$0xff]
      %v311 = vld [vmem:[%s1 + $0x1a8] sm:$0xff]
      %v312 = vld [vmem:[%s1 + $0x1b0] sm:$0xff]
      %v313 = vld [vmem:[%s1 + $0x1b8] sm:$0xff]
      %v314 = vld [vmem:[%s1 + $0x1c0] sm:$0xff]
      %v315 = vld [vmem:[%s1 + $0x1c8] sm:$0xff]
      %v316 = vld [vmem:[%s1 + $0x1d0] sm:$0xff]
      %v317 = vld [vmem:[%s1 + $0x1d8] sm:$0xff]
      %v318 = vld [vmem:[%s1 + $0x1e0] sm:$0xff]
      %v319 = vld [vmem:[%s1 + $0x1e8] sm:$0xff]
      %v320 = vld [vmem:[%s1 + $0x1f0] sm:$0xff]
      %v321 = vld [vmem:[%s1 + $0x1f8] sm:$0xff]
      %v322 = vld [vmem:[%s1 + $0x200] sm:$0xff]
      %v323 = vld [vmem:[%s1 + $0x208] sm:$0xff]
      %v324 = vld [vmem:[%s1 + $0x210] sm:$0xff]
      %v325 = vld [vmem:[%s1 + $0x218] sm:$0xff]
      %v326 = vld [vmem:[%s1 + $0x220] sm:$0xff]
      %v327 = vld [vmem:[%s1 + $0x228] sm:$0xff]
      %v328 = vld [vmem:[%s1 + $0x230] sm:$0xff]
      %v329 = vld [vmem:[%s1 + $0x238] sm:$0xff]
      %v330 = vld [vmem:[%s1 + $0x240] sm:$0xff]
      %v331 = vld [vmem:[%s1 + $0x248] sm:$0xff]
      %v332 = vld [vmem:[%s1 + $0x250] sm:$0xff]
      %v333 = vld [vmem:[%s1 + $0x258] sm:$0xff]
      %v334 = vld [vmem:[%s1 + $0x260] sm:$0xff]
      %v335 = vld [vmem:[%s1 + $0x268] sm:$0xff]
      %v336 = vld [vmem:[%s1 + $0x270] sm:$0xff]
      %v337 = vld [vmem:[%s1 + $0x278] sm:$0xff]
      %v338 = vld [vmem:[%s1 + $0x280] sm:$0xff]
      %v339 = vld [vmem:[%s1 + $0x288] sm:$0xff]
      %v340 = vld [vmem:[%s1 + $0x290] sm:$0xff]
      %v341 = vld [vmem:[%s1 + $0x298] sm:$0xff]
      %v342 = vld [vmem:[%s1 + $0x2a0] sm:$0xff]
      %v343 = vld [vmem:[%s1 + $0x2a8] sm:$0xff]
      %v344 = vld [vmem:[%s1 + $0x2b0] sm:$0xff]
      %v345 = vld [vmem:[%s1 + $0x2b8] sm:$0xff]
      %v346 = vld [vmem:[%s1 + $0x2c0] sm:$0xff]
      %v347 = vld [vmem:[%s1 + $0x2c8] sm:$0xff]
      %v348 = vld [vmem:[%s1 + $0x2d0] sm:$0xff]
      %v349 = vld [vmem:[%s1 + $0x2d8] sm:$0xff]
      %v350 = vld [vmem:[%s1 + $0x2e0] sm:$0xff]
      %v351 = vld [vmem:[%s1 + $0x2e8] sm:$0xff]
      %v352 = vld [vmem:[%s1 + $0x2f0] sm:$0xff]
      %v353 = vld [vmem:[%s1 + $0x2f8] sm:$0xff]
      %v354 = vld [vmem:[%s1 + $0x300] sm:$0xff]
      %v355 = vld [vmem:[%s1 + $0x308] sm:$0xff]
      %v356 = vld [vmem:[%s1 + $0x310] sm:$0xff]
      %v357 = vld [vmem:[%s1 + $0x318] sm:$0xff]
      %v358 = vld [vmem:[%s1 + $0x320] sm:$0xff]
      %v359 = vld [vmem:[%s1 + $0x328] sm:$0xff]
      %v360 = vld [vmem:[%s1 + $0x330] sm:$0xff]
      %v361 = vld [vmem:[%s1 + $0x338] sm:$0xff]
      %v362 = vld [vmem:[%s1 + $0x340] sm:$0xff]
      %v363 = vld [vmem:[%s1 + $0x348] sm:$0xff]
      %v364 = vld [vmem:[%s1 + $0x350] sm:$0xff]
      %v365 = vld [vmem:[%s1 + $0x358] sm:$0xff]
      %v366 = vld [vmem:[%s1 + $0x360] sm:$0xff]
      %v367 = vld [vmem:[%s1 + $0x368] sm:$0xff]
      %v368 = vld [vmem:[%s1 + $0x370] sm:$0xff]
      %v369 = vld [vmem:[%s1 + $0x378] sm:$0xff]
      %v370 = vld [vmem:[%s1 + $0x380] sm:$0xff]
      %v371 = vld [vmem:[%s1 + $0x388] sm:$0xff]
      %v372 = vld [vmem:[%s1 + $0x390] sm:$0xff]
      %v373 = vld [vmem:[%s1 + $0x398] sm:$0xff]
      %v374 = vld [vmem:[%s1 + $0x3a0] sm:$0xff]
      %v375 = vld [vmem:[%s1 + $0x3a8] sm:$0xff]
      %v376 = vld [vmem:[%s1 + $0x3b0] sm:$0xff]
      %v377 = vld [vmem:[%s1 + $0x3b8] sm:$0xff]
      %v378 = vld [vmem:[%s1 + $0x3c0] sm:$0xff]
      %v379 = vld [vmem:[%s1 + $0x3c8] sm:$0xff]
      %v380 = vld [vmem:[%s1 + $0x3d0] sm:$0xff]
      %v381 = vld [vmem:[%s1 + $0x3d8] sm:$0xff]
      %v382 = vld [vmem:[%s1 + $0x3e0] sm:$0xff]
      %v383 = vld [vmem:[%s1 + $0x3e8] sm:$0xff]
      %v384 = vld [vmem:[%s1 + $0x3f0] sm:$0xff]
      %v385 = vld [vmem:[%s1 + $0x3f8] sm:$0xff]
      %v386 = vld [vmem:[%s1 + $0x400] sm:$0xff]
      %v387 = vld [vmem:[%s1 + $0x408] sm:$0xff]
      %v388 = vld [vmem:[%s1 + $0x410] sm:$0xff]
      %v389 = vld [vmem:[%s1 + $0x418] sm:$0xff]
      %v390 = vld [vmem:[%s1 + $0x420] sm:$0xff]
      %v391 = vld [vmem:[%s1 + $0x428] sm:$0xff]
      %v392 = vld [vmem:[%s1 + $0x430] sm:$0xff]
      %v393 = vld [vmem:[%s1 + $0x438] sm:$0xff]
      %v394 = vld [vmem:[%s1 + $0x440] sm:$0xff]
      %v395 = vld [vmem:[%s1 + $0x448] sm:$0xff]
      %v396 = vld [vmem:[%s1 + $0x450] sm:$0xff]
      %v397 = vld [vmem:[%s1 + $0x458] sm:$0xff]
      %v398 = vld [vmem:[%s1 + $0x460] sm:$0xff]
      %v399 = vld [vmem:[%s1 + $0x468] sm:$0xff]
      %v400 = vld [vmem:[%s1 + $0x470] sm:$0xff]
      %v401 = vld [vmem:[%s1 + $0x478] sm:$0xff]
      %v402 = vld [vmem:[%s1 + $0x480] sm:$0xff]
      %v403 = vld [vmem:[%s1 + $0x488] sm:$0xff]
      %v404 = vld [vmem:[%s1 + $0x490] sm:$0xff]
      %v405 = vld [vmem:[%s1 + $0x498] sm:$0xff]
      %v406 = vld [vmem:[%s1 + $0x4a0] sm:$0xff]
      %v407 = vld [vmem:[%s1 + $0x4a8] sm:$0xff]
      %v408 = vld [vmem:[%s1 + $0x4b0] sm:$0xff]
      %v409 = vld [vmem:[%s1 + $0x4b8] sm:$0xff]
      %v410 = vld [vmem:[%s1 + $0x4c0] sm:$0xff]
      %v411 = vld [vmem:[%s1 + $0x4c8] sm:$0xff]
      %v412 = vld [vmem:[%s1 + $0x4d0] sm:$0xff]
      %v413 = vld [vmem:[%s1 + $0x4d8] sm:$0xff]
      %v414 = vld [vmem:[%s1 + $0x4e0] sm:$0xff]
      %v415 = vld [vmem:[%s1 + $0x4e8] sm:$0xff]
      %v416 = vld [vmem:[%s1 + $0x4f0] sm:$0xff]
      %v417 = vld [vmem:[%s1 + $0x4f8] sm:$0xff]
      %v418 = vld [vmem:[%s1 + $0x500] sm:$0xff]
      %v419 = vld [vmem:[%s1 + $0x508] sm:$0xff]
      %v420 = vld [vmem:[%s1 + $0x510] sm:$0xff]
      %v421 = vld [vmem:[%s1 + $0x518] sm:$0xff]
      %v422 = vld [vmem:[%s1 + $0x520] sm:$0xff]
      %v423 = vld [vmem:[%s1 + $0x528] sm:$0xff]
      %v424 = vld [vmem:[%s1 + $0x530] sm:$0xff]
      %v425 = vld [vmem:[%s1 + $0x538] sm:$0xff]
      %v426 = vld [vmem:[%s1 + $0x540] sm:$0xff]
      %v427 = vld [vmem:[%s1 + $0x548] sm:$0xff]
      %v428 = vld [vmem:[%s1 + $0x550] sm:$0xff]
      %v429 = vld [vmem:[%s1 + $0x558] sm:$0xff]
      %v430 = vld [vmem:[%s1 + $0x560] sm:$0xff]
      %v431 = vld [vmem:[%s1 + $0x568] sm:$0xff]
      %v432 = vld [vmem:[%s1 + $0x570] sm:$0xff]
      %v433 = vld [vmem:[%s1 + $0x578] sm:$0xff]
      %v434 = vld [vmem:[%s1 + $0x580] sm:$0xff]
      %v435 = vld [vmem:[%s1 + $0x588] sm:$0xff]
      %v436 = vld [vmem:[%s1 + $0x590] sm:$0xff]
      %v437 = vld [vmem:[%s1 + $0x598] sm:$0xff]
      %v438 = vld [vmem:[%s1 + $0x5a0] sm:$0xff]
      %v439 = vld [vmem:[%s1 + $0x5a8] sm:$0xff]
      %v440 = vld [vmem:[%s1 + $0x5b0] sm:$0xff]
      %v441 = vld [vmem:[%s1 + $0x5b8] sm:$0xff]
      %v442 = vld [vmem:[%s1 + $0x5c0] sm:$0xff]
      %v443 = vld [vmem:[%s1 + $0x5c8] sm:$0xff]
      %v444 = vld [vmem:[%s1 + $0x5d0] sm:$0xff]
      %v445 = vld [vmem:[%s1 + $0x5d8] sm:$0xff]
      %v446 = vld [vmem:[%s1 + $0x5e0] sm:$0xff]
      %v447 = vld [vmem:[%s1 + $0x5e8] sm:$0xff]
      %v448 = vld [vmem:[%s1 + $0x5f0] sm:$0xff]
      %v449 = vld [vmem:[%s1 + $0x5f8] sm:$0xff]
      %v450 = vld [vmem:[%s1 + $0x600] sm:$0xff]
      %v451 = vld [vmem:[%s1 + $0x608] sm:$0xff]
      %v452 = vld [vmem:[%s1 + $0x610] sm:$0xff]
      %v453 = vld [vmem:[%s1 + $0x618] sm:$0xff]
      %v454 = vld [vmem:[%s1 + $0x620] sm:$0xff]
      %v455 = vld [vmem:[%s1 + $0x628] sm:$0xff]
      %v456 = vld [vmem:[%s1 + $0x630] sm:$0xff]
      %v457 = vld [vmem:[%s1 + $0x638] sm:$0xff]
      %v458 = vld [vmem:[%s1 + $0x640] sm:$0xff]
      %v459 = vld [vmem:[%s1 + $0x648] sm:$0xff]
      %v460 = vld [vmem:[%s1 + $0x650] sm:$0xff]
      %v461 = vld [vmem:[%s1 + $0x658] sm:$0xff]
      %v462 = vld [vmem:[%s1 + $0x660] sm:$0xff]
      %v463 = vld [vmem:[%s1 + $0x668] sm:$0xff]
      %v464 = vld [vmem:[%s1 + $0x670] sm:$0xff]
      %v465 = vld [vmem:[%s1 + $0x678] sm:$0xff]
      %v466 = vld [vmem:[%s1 + $0x680] sm:$0xff]
      %v467 = vld [vmem:[%s1 + $0x688] sm:$0xff]
      %v468 = vld [vmem:[%s1 + $0x690] sm:$0xff]
      %v469 = vld [vmem:[%s1 + $0x698] sm:$0xff]
      %v470 = vld [vmem:[%s1 + $0x6a0] sm:$0xff]
      %v471 = vld [vmem:[%s1 + $0x6a8] sm:$0xff]
      %v472 = vld [vmem:[%s1 + $0x6b0] sm:$0xff]
      %v473 = vld [vmem:[%s1 + $0x6b8] sm:$0xff]
      %v474 = vld [vmem:[%s1 + $0x6c0] sm:$0xff]
      %v475 = vld [vmem:[%s1 + $0x6c8] sm:$0xff]
      %v476 = vld [vmem:[%s1 + $0x6d0] sm:$0xff]
      %v477 = vld [vmem:[%s1 + $0x6d8] sm:$0xff]
      %v478 = vld [vmem:[%s1 + $0x6e0] sm:$0xff]
      %v479 = vld [vmem:[%s1 + $0x6e8] sm:$0xff]
      %v480 = vld [vmem:[%s1 + $0x6f0] sm:$0xff]
      %v481 = vld [vmem:[%s1 + $0x6f8] sm:$0xff]
      %v482 = vld [vmem:[%s1 + $0x700] sm:$0xff]
      %v483 = vld [vmem:[%s1 + $0x708] sm:$0xff]
      %v484 = vld [vmem:[%s1 + $0x710] sm:$0xff]
      %v485 = vld [vmem:[%s1 + $0x718] sm:$0xff]
      %v486 = vld [vmem:[%s1 + $0x720] sm:$0xff]
      %v487 = vld [vmem:[%s1 + $0x728] sm:$0xff]
      %v488 = vld [vmem:[%s1 + $0x730] sm:$0xff]
      %v489 = vld [vmem:[%s1 + $0x738] sm:$0xff]
      %v490 = vld [vmem:[%s1 + $0x740] sm:$0xff]
      %v491 = vld [vmem:[%s1 + $0x748] sm:$0xff]
      %v492 = vld [vmem:[%s1 + $0x750] sm:$0xff]
      %v493 = vld [vmem:[%s1 + $0x758] sm:$0xff]
      %v494 = vld [vmem:[%s1 + $0x760] sm:$0xff]
      %v495 = vld [vmem:[%s1 + $0x768] sm:$0xff]
      %v496 = vld [vmem:[%s1 + $0x770] sm:$0xff]
      %v497 = vld [vmem:[%s1 + $0x778] sm:$0xff]
      %v498 = vld [vmem:[%s1 + $0x780] sm:$0xff]
      %v499 = vld [vmem:[%s1 + $0x788] sm:$0xff]
      %v500 = vld [vmem:[%s1 + $0x790] sm:$0xff]
      %v501 = vld [vmem:[%s1 + $0x798] sm:$0xff]
      %v502 = vld [vmem:[%s1 + $0x7a0] sm:$0xff]
      %v503 = vld [vmem:[%s1 + $0x7a8] sm:$0xff]
      %v504 = vld [vmem:[%s1 + $0x7b0] sm:$0xff]
      %v505 = vld [vmem:[%s1 + $0x7b8] sm:$0xff]
      %v506 = vld [vmem:[%s1 + $0x7c0] sm:$0xff]
      %v507 = vld [vmem:[%s1 + $0x7c8] sm:$0xff]
      %v508 = vld [vmem:[%s1 + $0x7d0] sm:$0xff]
      %v509 = vld [vmem:[%s1 + $0x7d8] sm:$0xff]
      %v510 = vld [vmem:[%s1 + $0x7e0] sm:$0xff]
      %v511 = vld [vmem:[%s1 + $0x7e8] sm:$0xff]
      %v512 = vld [vmem:[%s1 + $0x7f0] sm:$0xff]
      %v513 = vld [vmem:[%s1 + $0x7f8] sm:$0xff]
      %v514 = vld [vmem:[%s1 + $0x800] sm:$0xff]
      %v515 = vld [vmem:[%s1 + $0x808] sm:$0xff]
      %v516 = vld [vmem:[%s1 + $0x810] sm:$0xff]
      %v517 = vld [vmem:[%s1 + $0x818] sm:$0xff]
      %v518 = vld [vmem:[%s1 + $0x820] sm:$0xff]
      %v519 = vld [vmem:[%s1 + $0x828] sm:$0xff]
      %v520 = vld [vmem:[%s1 + $0x830] sm:$0xff]
      %v521 = vld [vmem:[%s1 + $0x838] sm:$0xff]
      %v522 = vld [vmem:[%s1 + $0x840] sm:$0xff]
      %v523 = vld [vmem:[%s1 + $0x848] sm:$0xff]
      %v524 = vld [vmem:[%s1 + $0x850] sm:$0xff]
      %v525 = vld [vmem:[%s1 + $0x858] sm:$0xff]
      %v526 = vld [vmem:[%s1 + $0x860] sm:$0xff]
      %v527 = vld [vmem:[%s1 + $0x868] sm:$0xff]
      %v528 = vld [vmem:[%s1 + $0x870] sm:$0xff]
      %v529 = vld [vmem:[%s1 + $0x878] sm:$0xff]
      %v530 = vld [vmem:[%s1 + $0x880] sm:$0xff]
      %v531 = vld [vmem:[%s1 + $0x888] sm:$0xff]
      %v532 = vld [vmem:[%s1 + $0x890] sm:$0xff]
      %v533 = vld [vmem:[%s1 + $0x898] sm:$0xff]
      %v534 = vld [vmem:[%s1 + $0x8a0] sm:$0xff]
      %v535 = vld [vmem:[%s1 + $0x8a8] sm:$0xff]
      %v536 = vld [vmem:[%s1 + $0x8b0] sm:$0xff]
      %v537 = vld [vmem:[%s1 + $0x8b8] sm:$0xff]
      %v538 = vld [vmem:[%s1 + $0x8c0] sm:$0xff]
      %v539 = vld [vmem:[%s1 + $0x8c8] sm:$0xff]
      %v540 = vld [vmem:[%s1 + $0x8d0] sm:$0xff]
      %v541 = vld [vmem:[%s1 + $0x8d8] sm:$0xff]
      %v542 = vld [vmem:[%s1 + $0x8e0] sm:$0xff]
      %v543 = vld [vmem:[%s1 + $0x8e8] sm:$0xff]
      %v544 = vld [vmem:[%s1 + $0x8f0] sm:$0xff]
      %v545 = vld [vmem:[%s1 + $0x8f8] sm:$0xff]
      %v546 = vld [vmem:[%s1 + $0x900] sm:$0xff]
      %v547 = vld [vmem:[%s1 + $0x908] sm:$0xff]
      %v548 = vld [vmem:[%s1 + $0x910] sm:$0xff]
      %v549 = vld [vmem:[%s1 + $0x918] sm:$0xff]
      %v550 = vld [vmem:[%s1 + $0x920] sm:$0xff]
      %v551 = vld [vmem:[%s1 + $0x928] sm:$0xff]
      %v552 = vld [vmem:[%s1 + $0x930] sm:$0xff]
      %v553 = vld [vmem:[%s1 + $0x938] sm:$0xff]
      %v554 = vld [vmem:[%s1 + $0x940] sm:$0xff]
      %v555 = vld [vmem:[%s1 + $0x948] sm:$0xff]
      %v556 = vld [vmem:[%s1 + $0x950] sm:$0xff]
      %v557 = vld [vmem:[%s1 + $0x958] sm:$0xff]
      %v558 = vld [vmem:[%s1 + $0x960] sm:$0xff]
      %v559 = vld [vmem:[%s1 + $0x968] sm:$0xff]
      %v560 = vld [vmem:[%s1 + $0x970] sm:$0xff]
      %v561 = vld [vmem:[%s1 + $0x978] sm:$0xff]
      %v562 = vld [vmem:[%s1 + $0x980] sm:$0xff]
      %v563 = vld [vmem:[%s1 + $0x988] sm:$0xff]
      %v564 = vld [vmem:[%s1 + $0x990] sm:$0xff]
      %v565 = vld [vmem:[%s1 + $0x998] sm:$0xff]
      %v566 = vld [vmem:[%s1 + $0x9a0] sm:$0xff]
      %v567 = vld [vmem:[%s1 + $0x9a8] sm:$0xff]
      %v568 = vld [vmem:[%s1 + $0x9b0] sm:$0xff]
      %v569 = vld [vmem:[%s1 + $0x9b8] sm:$0xff]
      %v570 = vld [vmem:[%s1 + $0x9c0] sm:$0xff]
      %v571 = vld [vmem:[%s1 + $0x9c8] sm:$0xff]
      %v572 = vld [vmem:[%s1 + $0x9d0] sm:$0xff]
      %v573 = vld [vmem:[%s1 + $0x9d8] sm:$0xff]
      %v574 = vld [vmem:[%s1 + $0x9e0] sm:$0xff]
      %v575 = vld [vmem:[%s1 + $0x9e8] sm:$0xff]
      %v576 = vld [vmem:[%s1 + $0x9f0] sm:$0xff]
      %v577 = vld [vmem:[%s1 + $0x9f8] sm:$0xff]
      %v578 = vld [vmem:[%s1 + $0xa00] sm:$0xff]
      %v579 = vld [vmem:[%s1 + $0xa08] sm:$0xff]
      %v580 = vld [vmem:[%s1 + $0xa10] sm:$0xff]
      %v581 = vld [vmem:[%s1 + $0xa18] sm:$0xff]
      %v582 = vld [vmem:[%s1 + $0xa20] sm:$0xff]
      %v583 = vld [vmem:[%s1 + $0xa28] sm:$0xff]
      %v584 = vld [vmem:[%s1 + $0xa30] sm:$0xff]
      %v585 = vld [vmem:[%s1 + $0xa38] sm:$0xff]
      %v586 = vld [vmem:[%s1 + $0xa40] sm:$0xff]
      %v587 = vld [vmem:[%s1 + $0xa48] sm:$0xff]
      %v588 = vld [vmem:[%s1 + $0xa50] sm:$0xff]
      %v589 = vld [vmem:[%s1 + $0xa58] sm:$0xff]
      %v590 = vld [vmem:[%s1 + $0xa60] sm:$0xff]
      %v591 = vld [vmem:[%s1 + $0xa68] sm:$0xff]
      %v592 = vld [vmem:[%s1 + $0xa70] sm:$0xff]
      %v593 = vld [vmem:[%s1 + $0xa78] sm:$0xff]
      %v594 = vld [vmem:[%s1 + $0xa80] sm:$0xff]
      %v595 = vld [vmem:[%s1 + $0xa88] sm:$0xff]
      %v596 = vld [vmem:[%s1 + $0xa90] sm:$0xff]
      %v597 = vld [vmem:[%s1 + $0xa98] sm:$0xff]
      %v598 = vld [vmem:[%s1 + $0xaa0] sm:$0xff]
      %v599 = vld [vmem:[%s1 + $0xaa8] sm:$0xff]
      %v600 = vld [vmem:[%s1 + $0xab0] sm:$0xff]
      %v601 = vld [vmem:[%s1 + $0xab8] sm:$0xff]
      %v602 = vld [vmem:[%s1 + $0xac0] sm:$0xff]
      %v603 = vld [vmem:[%s1 + $0xac8] sm:$0xff]
      %v604 = vld [vmem:[%s1 + $0xad0] sm:$0xff]
      %v605 = vld [vmem:[%s1 + $0xad8] sm:$0xff]
      %v606 = vld [vmem:[%s1 + $0xae0] sm:$0xff]
      %v607 = vld [vmem:[%s1 + $0xae8] sm:$0xff]
      %v608 = vld [vmem:[%s1 + $0xaf0] sm:$0xff]
      %v609 = vld [vmem:[%s1 + $0xaf8] sm:$0xff]
      %v610 = vld [vmem:[%s1 + $0xb00] sm:$0xff]
      %v611 = vld [vmem:[%s1 + $0xb08] sm:$0xff]
      %v612 = vld [vmem:[%s1 + $0xb10] sm:$0xff]
      %v613 = vld [vmem:[%s1 + $0xb18] sm:$0xff]
      %v614 = vld [vmem:[%s1 + $0xb20] sm:$0xff]
      %v615 = vld [vmem:[%s1 + $0xb28] sm:$0xff]
      %v616 = vld [vmem:[%s1 + $0xb30] sm:$0xff]
      %v617 = vld [vmem:[%s1 + $0xb38] sm:$0xff]
      %v618 = vld [vmem:[%s1 + $0xb40] sm:$0xff]
      %v619 = vld [vmem:[%s1 + $0xb48] sm:$0xff]
      %v620 = vld [vmem:[%s1 + $0xb50] sm:$0xff]
      %v621 = vld [vmem:[%s1 + $0xb58] sm:$0xff]
      %v622 = vld [vmem:[%s1 + $0xb60] sm:$0xff]
      %v623 = vld [vmem:[%s1 + $0xb68] sm:$0xff]
      %v624 = vld [vmem:[%s1 + $0xb70] sm:$0xff]
      %v625 = vld [vmem:[%s1 + $0xb78] sm:$0xff]
      %v626 = vld [vmem:[%s1 + $0xb80] sm:$0xff]
      %v627 = vld [vmem:[%s1 + $0xb88] sm:$0xff]
      %v628 = vld [vmem:[%s1 + $0xb90] sm:$0xff]
      %v629 = vld [vmem:[%s1 + $0xb98] sm:$0xff]
      %v630 = vld [vmem:[%s1 + $0xba0] sm:$0xff]
      %v631 = vld [vmem:[%s1 + $0xba8] sm:$0xff]
      %v632 = vld [vmem:[%s1 + $0xbb0] sm:$0xff]
      %v633 = vld [vmem:[%s1 + $0xbb8] sm:$0xff]
      %v634 = vld [vmem:[%s1 + $0xbc0] sm:$0xff]
      %v635 = vld [vmem:[%s1 + $0xbc8] sm:$0xff]
      %v636 = vld [vmem:[%s1 + $0xbd0] sm:$0xff]
      %v637 = vld [vmem:[%s1 + $0xbd8] sm:$0xff]
      %v638 = vld [vmem:[%s1 + $0xbe0] sm:$0xff]
      %v639 = vld [vmem:[%s1 + $0xbe8] sm:$0xff]
      %v640 = vld [vmem:[%s1 + $0xbf0] sm:$0xff]
      %v641 = vld [vmem:[%s1 + $0xbf8] sm:$0xff]
      %v642 = vld [vmem:[%s1 + $0xc00] sm:$0xff]
      %v643 = vld [vmem:[%s1 + $0xc08] sm:$0xff]
      %v644 = vld [vmem:[%s1 + $0xc10] sm:$0xff]
      %v645 = vld [vmem:[%s1 + $0xc18] sm:$0xff]
      %v646 = vld [vmem:[%s1 + $0xc20] sm:$0xff]
      %v647 = vld [vmem:[%s1 + $0xc28] sm:$0xff]
      %v648 = vld [vmem:[%s1 + $0xc30] sm:$0xff]
      %v649 = vld [vmem:[%s1 + $0xc38] sm:$0xff]
      %v650 = vld [vmem:[%s1 + $0xc40] sm:$0xff]
      %v651 = vld [vmem:[%s1 + $0xc48] sm:$0xff]
      %v652 = vld [vmem:[%s1 + $0xc50] sm:$0xff]
      %v653 = vld [vmem:[%s1 + $0xc58] sm:$0xff]
      %v654 = vld [vmem:[%s1 + $0xc60] sm:$0xff]
      %v655 = vld [vmem:[%s1 + $0xc68] sm:$0xff]
      %v656 = vld [vmem:[%s1 + $0xc70] sm:$0xff]
      %v657 = vld [vmem:[%s1 + $0xc78] sm:$0xff]
      %v658 = vld [vmem:[%s1 + $0xc80] sm:$0xff]
      %v659 = vld [vmem:[%s1 + $0xc88] sm:$0xff]
      %v660 = vld [vmem:[%s1 + $0xc90] sm:$0xff]
      %v661 = vld [vmem:[%s1 + $0xc98] sm:$0xff]
      %v662 = vld [vmem:[%s1 + $0xca0] sm:$0xff]
      %v663 = vld [vmem:[%s1 + $0xca8] sm:$0xff]
      %v664 = vld [vmem:[%s1 + $0xcb0] sm:$0xff]
      %v665 = vld [vmem:[%s1 + $0xcb8] sm:$0xff]
      %v666 = vld [vmem:[%s1 + $0xcc0] sm:$0xff]
      %v667 = vld [vmem:[%s1 + $0xcc8] sm:$0xff]
      %v668 = vld [vmem:[%s1 + $0xcd0] sm:$0xff]
      %v669 = vld [vmem:[%s1 + $0xcd8] sm:$0xff]
      %v670 = vld [vmem:[%s1 + $0xce0] sm:$0xff]
      %v671 = vld [vmem:[%s1 + $0xce8] sm:$0xff]
      %v672 = vld [vmem:[%s1 + $0xcf0] sm:$0xff]
      %v673 = vld [vmem:[%s1 + $0xcf8] sm:$0xff]
      %v674 = vld [vmem:[%s1 + $0xd00] sm:$0xff]
      %v675 = vld [vmem:[%s1 + $0xd08] sm:$0xff]
      %v676 = vld [vmem:[%s1 + $0xd10] sm:$0xff]
      %v677 = vld [vmem:[%s1 + $0xd18] sm:$0xff]
      %v678 = vld [vmem:[%s1 + $0xd20] sm:$0xff]
      %v679 = vld [vmem:[%s1 + $0xd28] sm:$0xff]
      %v680 = vld [vmem:[%s1 + $0xd30] sm:$0xff]
      %v681 = vld [vmem:[%s1 + $0xd38] sm:$0xff]
      %v682 = vld [vmem:[%s1 + $0xd40] sm:$0xff]
      %v683 = vld [vmem:[%s1 + $0xd48] sm:$0xff]
      %v684 = vld [vmem:[%s1 + $0xd50] sm:$0xff]
      %v685 = vld [vmem:[%s1 + $0xd58] sm:$0xff]
      %v686 = vld [vmem:[%s1 + $0xd60] sm:$0xff]
      %v687 = vld [vmem:[%s1 + $0xd68] sm:$0xff]
      %v688 = vld [vmem:[%s1 + $0xd70] sm:$0xff]
      %v689 = vld [vmem:[%s1 + $0xd78] sm:$0xff]
      %v690 = vld [vmem:[%s1 + $0xd80] sm:$0xff]
      %v691 = vld [vmem:[%s1 + $0xd88] sm:$0xff]
      %v692 = vld [vmem:[%s1 + $0xd90] sm:$0xff]
      %v693 = vld [vmem:[%s1 + $0xd98] sm:$0xff]
      %v694 = vld [vmem:[%s1 + $0xda0] sm:$0xff]
      %v695 = vld [vmem:[%s1 + $0xda8] sm:$0xff]
      %v696 = vld [vmem:[%s1 + $0xdb0] sm:$0xff]
      %v697 = vld [vmem:[%s1 + $0xdb8] sm:$0xff]
      %v698 = vld [vmem:[%s1 + $0xdc0] sm:$0xff]
      %v699 = vld [vmem:[%s1 + $0xdc8] sm:$0xff]
      %v700 = vld [vmem:[%s1 + $0xdd0] sm:$0xff]
      %v701 = vld [vmem:[%s1 + $0xdd8] sm:$0xff]
      %v702 = vld [vmem:[%s1 + $0xde0] sm:$0xff]
      %v703 = vld [vmem:[%s1 + $0xde8] sm:$0xff]
      %v704 = vld [vmem:[%s1 + $0xdf0] sm:$0xff]
      %v705 = vld [vmem:[%s1 + $0xdf8] sm:$0xff]
      %v706 = vld [vmem:[%s1 + $0xe00] sm:$0xff]
      %v707 = vld [vmem:[%s1 + $0xe08] sm:$0xff]
      %v708 = vld [vmem:[%s1 + $0xe10] sm:$0xff]
      %v709 = vld [vmem:[%s1 + $0xe18] sm:$0xff]
      %v710 = vld [vmem:[%s1 + $0xe20] sm:$0xff]
      %v711 = vld [vmem:[%s1 + $0xe28] sm:$0xff]
      %v712 = vld [vmem:[%s1 + $0xe30] sm:$0xff]
      %v713 = vld [vmem:[%s1 + $0xe38] sm:$0xff]
      %v714 = vld [vmem:[%s1 + $0xe40] sm:$0xff]
      %v715 = vld [vmem:[%s1 + $0xe48] sm:$0xff]
      %v716 = vld [vmem:[%s1 + $0xe50] sm:$0xff]
      %v717 = vld [vmem:[%s1 + $0xe58] sm:$0xff]
      %v718 = vld [vmem:[%s1 + $0xe60] sm:$0xff]
      %v719 = vld [vmem:[%s1 + $0xe68] sm:$0xff]
      %v720 = vld [vmem:[%s1 + $0xe70] sm:$0xff]
      %v721 = vld [vmem:[%s1 + $0xe78] sm:$0xff]
      %v722 = vld [vmem:[%s1 + $0xe80] sm:$0xff]
      %v723 = vld [vmem:[%s1 + $0xe88] sm:$0xff]
      %v724 = vld [vmem:[%s1 + $0xe90] sm:$0xff]
      %v725 = vld [vmem:[%s1 + $0xe98] sm:$0xff]
      %v726 = vld [vmem:[%s1 + $0xea0] sm:$0xff]
      %v727 = vld [vmem:[%s1 + $0xea8] sm:$0xff]
      %v728 = vld [vmem:[%s1 + $0xeb0] sm:$0xff]
      %v729 = vld [vmem:[%s1 + $0xeb8] sm:$0xff]
      %v730 = vld [vmem:[%s1 + $0xec0] sm:$0xff]
      %v731 = vld [vmem:[%s1 + $0xec8] sm:$0xff]
      %v732 = vld [vmem:[%s1 + $0xed0] sm:$0xff]
      %v733 = vld [vmem:[%s1 + $0xed8] sm:$0xff]
      %v734 = vld [vmem:[%s1 + $0xee0] sm:$0xff]
      %v735 = vld [vmem:[%s1 + $0xee8] sm:$0xff]
      %v736 = vld [vmem:[%s1 + $0xef0] sm:$0xff]
      %v737 = vld [vmem:[%s1 + $0xef8] sm:$0xff]
      %v738 = vld [vmem:[%s1 + $0xf00] sm:$0xff]
      %v739 = vld [vmem:[%s1 + $0xf08] sm:$0xff]
      %v740 = vld [vmem:[%s1 + $0xf10] sm:$0xff]
      %v741 = vld [vmem:[%s1 + $0xf18] sm:$0xff]
      %v742 = vld [vmem:[%s1 + $0xf20] sm:$0xff]
      %v743 = vld [vmem:[%s1 + $0xf28] sm:$0xff]
      %v744 = vld [vmem:[%s1 + $0xf30] sm:$0xff]
      %v745 = vld [vmem:[%s1 + $0xf38] sm:$0xff]
      %v746 = vld [vmem:[%s1 + $0xf40] sm:$0xff]
      %v747 = vld [vmem:[%s1 + $0xf48] sm:$0xff]
      %v748 = vld [vmem:[%s1 + $0xf50] sm:$0xff]
      %v749 = vld [vmem:[%s1 + $0xf58] sm:$0xff]
      %v750 = vld [vmem:[%s1 + $0xf60] sm:$0xff]
      %v751 = vld [vmem:[%s1 + $0xf68] sm:$0xff]
      %v752 = vld [vmem:[%s1 + $0xf70] sm:$0xff]
      %v753 = vld [vmem:[%s1 + $0xf78] sm:$0xff]
      %v754 = vld [vmem:[%s1 + $0xf80] sm:$0xff]
      %v755 = vld [vmem:[%s1 + $0xf88] sm:$0xff]
      %v756 = vld [vmem:[%s1 + $0xf90] sm:$0xff]
      %v757 = vld [vmem:[%s1 + $0xf98] sm:$0xff]
      %v758 = vld [vmem:[%s1 + $0xfa0] sm:$0xff]
      %v759 = vld [vmem:[%s1 + $0xfa8] sm:$0xff]
      %v760 = vld [vmem:[%s1 + $0xfb0] sm:$0xff]
      %v761 = vld [vmem:[%s1 + $0xfb8] sm:$0xff]
      %v762 = vld [vmem:[%s1 + $0xfc0] sm:$0xff]
      %v763 = vld [vmem:[%s1 + $0xfc8] sm:$0xff]
      %v764 = vld [vmem:[%s1 + $0xfd0] sm:$0xff]
      %v765 = vld [vmem:[%s1 + $0xfd8] sm:$0xff]
      %v766 = vld [vmem:[%s1 + $0xfe0] sm:$0xff]
      %v767 = vld [vmem:[%s1 + $0xfe8] sm:$0xff]
      %v768 = vld [vmem:[%s1 + $0xff0] sm:$0xff]
      %v769 = vld [vmem:[%s1 + $0xff8] sm:$0xff]
      %v778 = vunpack.c.l.b16 %v250
      %v779 = vunpack.c.h.b16 %v250
      %v780 = vunpack.c.l.b16 %v251
      %v781 = vunpack.c.h.b16 %v251
      %v782 = vunpack.c.l.b16 %v252
      %v783 = vunpack.c.h.b16 %v252
      %v784 = vunpack.c.l.b16 %v253
      %v785 = vunpack.c.h.b16 %v253
      %v786 = vunpack.c.l.b16 %v254
      %v787 = vunpack.c.h.b16 %v254
      %v788 = vunpack.c.l.b16 %v255
      %v789 = vunpack.c.h.b16 %v255
      %v790 = vunpack.c.l.b16 %v256
      %v791 = vunpack.c.h.b16 %v256
      %v792 = vunpack.c.l.b16 %v257
      %v793 = vunpack.c.h.b16 %v257
      %v794 = vpack.c.b16 %v786, %v778
      %v795 = vpack.c.b16 %v787, %v779
      %v796 = vpack.c.b16 %v788, %v780
      %v797 = vpack.c.b16 %v789, %v781
      %v798 = vpack.c.b16 %v790, %v782
      %v799 = vpack.c.b16 %v791, %v783
      %v800 = vpack.c.b16 %v792, %v784
      %v801 = vpack.c.b16 %v793, %v785
      %v1322 = vunpack.c.l.b16 %v258
      %v1323 = vunpack.c.h.b16 %v258
      %v1324 = vunpack.c.l.b16 %v259
      %v1325 = vunpack.c.h.b16 %v259
      %v1326 = vunpack.c.l.b16 %v260
      %v1327 = vunpack.c.h.b16 %v260
      %v1328 = vunpack.c.l.b16 %v261
      %v1329 = vunpack.c.h.b16 %v261
      %v1330 = vunpack.c.l.b16 %v262
      %v1331 = vunpack.c.h.b16 %v262
      %v1332 = vunpack.c.l.b16 %v263
      %v1333 = vunpack.c.h.b16 %v263
      %v1334 = vunpack.c.l.b16 %v264
      %v1335 = vunpack.c.h.b16 %v264
      %v1336 = vunpack.c.l.b16 %v265
      %v1337 = vunpack.c.h.b16 %v265
      %v1338 = vunpack.c.l.b16 %v266
      %v1339 = vunpack.c.h.b16 %v266
      %v1340 = vunpack.c.l.b16 %v267
      %v1341 = vunpack.c.h.b16 %v267
      %v1342 = vunpack.c.l.b16 %v268
      %v1343 = vunpack.c.h.b16 %v268
      %v1344 = vunpack.c.l.b16 %v269
      %v1345 = vunpack.c.h.b16 %v269
      %v1346 = vunpack.c.l.b16 %v270
      %v1347 = vunpack.c.h.b16 %v270
      %v1348 = vunpack.c.l.b16 %v271
      %v1349 = vunpack.c.h.b16 %v271
      %v1350 = vunpack.c.l.b16 %v272
      %v1351 = vunpack.c.h.b16 %v272
      %v1352 = vunpack.c.l.b16 %v273
      %v1353 = vunpack.c.h.b16 %v273
      %v1354 = vunpack.c.l.b16 %v274
      %v1355 = vunpack.c.h.b16 %v274
      %v1356 = vunpack.c.l.b16 %v275
      %v1357 = vunpack.c.h.b16 %v275
      %v1358 = vunpack.c.l.b16 %v276
      %v1359 = vunpack.c.h.b16 %v276
      %v1360 = vunpack.c.l.b16 %v277
      %v1361 = vunpack.c.h.b16 %v277
      %v1362 = vunpack.c.l.b16 %v278
      %v1363 = vunpack.c.h.b16 %v278
      %v1364 = vunpack.c.l.b16 %v279
      %v1365 = vunpack.c.h.b16 %v279
      %v1366 = vunpack.c.l.b16 %v280
      %v1367 = vunpack.c.h.b16 %v280
      %v1368 = vunpack.c.l.b16 %v281
      %v1369 = vunpack.c.h.b16 %v281
      %v1370 = vunpack.c.l.b16 %v282
      %v1371 = vunpack.c.h.b16 %v282
      %v1372 = vunpack.c.l.b16 %v283
      %v1373 = vunpack.c.h.b16 %v283
      %v1374 = vunpack.c.l.b16 %v284
      %v1375 = vunpack.c.h.b16 %v284
      %v1376 = vunpack.c.l.b16 %v285
      %v1377 = vunpack.c.h.b16 %v285
      %v1378 = vunpack.c.l.b16 %v286
      %v1379 = vunpack.c.h.b16 %v286
      %v1380 = vunpack.c.l.b16 %v287
      %v1381 = vunpack.c.h.b16 %v287
      %v1382 = vunpack.c.l.b16 %v288
      %v1383 = vunpack.c.h.b16 %v288
      %v1384 = vunpack.c.l.b16 %v289
      %v1385 = vunpack.c.h.b16 %v289
      %v1386 = vunpack.c.l.b16 %v290
      %v1387 = vunpack.c.h.b16 %v290
      %v1388 = vunpack.c.l.b16 %v291
      %v1389 = vunpack.c.h.b16 %v291
      %v1390 = vunpack.c.l.b16 %v292
      %v1391 = vunpack.c.h.b16 %v292
      %v1392 = vunpack.c.l.b16 %v293
      %v1393 = vunpack.c.h.b16 %v293
      %v1394 = vunpack.c.l.b16 %v294
      %v1395 = vunpack.c.h.b16 %v294
      %v1396 = vunpack.c.l.b16 %v295
      %v1397 = vunpack.c.h.b16 %v295
      %v1398 = vunpack.c.l.b16 %v296
      %v1399 = vunpack.c.h.b16 %v296
      %v1400 = vunpack.c.l.b16 %v297
      %v1401 = vunpack.c.h.b16 %v297
      %v1402 = vunpack.c.l.b16 %v298
      %v1403 = vunpack.c.h.b16 %v298
      %v1404 = vunpack.c.l.b16 %v299
      %v1405 = vunpack.c.h.b16 %v299
      %v1406 = vunpack.c.l.b16 %v300
      %v1407 = vunpack.c.h.b16 %v300
      %v1408 = vunpack.c.l.b16 %v301
      %v1409 = vunpack.c.h.b16 %v301
      %v1410 = vunpack.c.l.b16 %v302
      %v1411 = vunpack.c.h.b16 %v302
      %v1412 = vunpack.c.l.b16 %v303
      %v1413 = vunpack.c.h.b16 %v303
      %v1414 = vunpack.c.l.b16 %v304
      %v1415 = vunpack.c.h.b16 %v304
      %v1416 = vunpack.c.l.b16 %v305
      %v1417 = vunpack.c.h.b16 %v305
      %v1418 = vunpack.c.l.b16 %v306
      %v1419 = vunpack.c.h.b16 %v306
      %v1420 = vunpack.c.l.b16 %v307
      %v1421 = vunpack.c.h.b16 %v307
      %v1422 = vunpack.c.l.b16 %v308
      %v1423 = vunpack.c.h.b16 %v308
      %v1424 = vunpack.c.l.b16 %v309
      %v1425 = vunpack.c.h.b16 %v309
      %v1426 = vunpack.c.l.b16 %v310
      %v1427 = vunpack.c.h.b16 %v310
      %v1428 = vunpack.c.l.b16 %v311
      %v1429 = vunpack.c.h.b16 %v311
      %v1430 = vunpack.c.l.b16 %v312
      %v1431 = vunpack.c.h.b16 %v312
      %v1432 = vunpack.c.l.b16 %v313
      %v1433 = vunpack.c.h.b16 %v313
      %v1434 = vunpack.c.l.b16 %v314
      %v1435 = vunpack.c.h.b16 %v314
      %v1436 = vunpack.c.l.b16 %v315
      %v1437 = vunpack.c.h.b16 %v315
      %v1438 = vunpack.c.l.b16 %v316
      %v1439 = vunpack.c.h.b16 %v316
      %v1440 = vunpack.c.l.b16 %v317
      %v1441 = vunpack.c.h.b16 %v317
      %v1442 = vunpack.c.l.b16 %v318
      %v1443 = vunpack.c.h.b16 %v318
      %v1444 = vunpack.c.l.b16 %v319
      %v1445 = vunpack.c.h.b16 %v319
      %v1446 = vunpack.c.l.b16 %v320
      %v1447 = vunpack.c.h.b16 %v320
      %v1448 = vunpack.c.l.b16 %v321
      %v1449 = vunpack.c.h.b16 %v321
      %v1450 = vunpack.c.l.b16 %v322
      %v1451 = vunpack.c.h.b16 %v322
      %v1452 = vunpack.c.l.b16 %v323
      %v1453 = vunpack.c.h.b16 %v323
      %v1454 = vunpack.c.l.b16 %v324
      %v1455 = vunpack.c.h.b16 %v324
      %v1456 = vunpack.c.l.b16 %v325
      %v1457 = vunpack.c.h.b16 %v325
      %v1458 = vunpack.c.l.b16 %v326
      %v1459 = vunpack.c.h.b16 %v326
      %v1460 = vunpack.c.l.b16 %v327
      %v1461 = vunpack.c.h.b16 %v327
      %v1462 = vunpack.c.l.b16 %v328
      %v1463 = vunpack.c.h.b16 %v328
      %v1464 = vunpack.c.l.b16 %v329
      %v1465 = vunpack.c.h.b16 %v329
      %v1466 = vunpack.c.l.b16 %v330
      %v1467 = vunpack.c.h.b16 %v330
      %v1468 = vunpack.c.l.b16 %v331
      %v1469 = vunpack.c.h.b16 %v331
      %v1470 = vunpack.c.l.b16 %v332
      %v1471 = vunpack.c.h.b16 %v332
      %v1472 = vunpack.c.l.b16 %v333
      %v1473 = vunpack.c.h.b16 %v333
      %v1474 = vunpack.c.l.b16 %v334
      %v1475 = vunpack.c.h.b16 %v334
      %v1476 = vunpack.c.l.b16 %v335
      %v1477 = vunpack.c.h.b16 %v335
      %v1478 = vunpack.c.l.b16 %v336
      %v1479 = vunpack.c.h.b16 %v336
      %v1480 = vunpack.c.l.b16 %v337
      %v1481 = vunpack.c.h.b16 %v337
      %v1482 = vunpack.c.l.b16 %v338
      %v1483 = vunpack.c.h.b16 %v338
      %v1484 = vunpack.c.l.b16 %v339
      %v1485 = vunpack.c.h.b16 %v339
      %v1486 = vunpack.c.l.b16 %v340
      %v1487 = vunpack.c.h.b16 %v340
      %v1488 = vunpack.c.l.b16 %v341
      %v1489 = vunpack.c.h.b16 %v341
      %v1490 = vunpack.c.l.b16 %v342
      %v1491 = vunpack.c.h.b16 %v342
      %v1492 = vunpack.c.l.b16 %v343
      %v1493 = vunpack.c.h.b16 %v343
      %v1494 = vunpack.c.l.b16 %v344
      %v1495 = vunpack.c.h.b16 %v344
      %v1496 = vunpack.c.l.b16 %v345
      %v1497 = vunpack.c.h.b16 %v345
      %v1498 = vunpack.c.l.b16 %v346
      %v1499 = vunpack.c.h.b16 %v346
      %v1500 = vunpack.c.l.b16 %v347
      %v1501 = vunpack.c.h.b16 %v347
      %v1502 = vunpack.c.l.b16 %v348
      %v1503 = vunpack.c.h.b16 %v348
      %v1504 = vunpack.c.l.b16 %v349
      %v1505 = vunpack.c.h.b16 %v349
      %v1506 = vunpack.c.l.b16 %v350
      %v1507 = vunpack.c.h.b16 %v350
      %v1508 = vunpack.c.l.b16 %v351
      %v1509 = vunpack.c.h.b16 %v351
      %v1510 = vunpack.c.l.b16 %v352
      %v1511 = vunpack.c.h.b16 %v352
      %v1512 = vunpack.c.l.b16 %v353
      %v1513 = vunpack.c.h.b16 %v353
      %v1514 = vunpack.c.l.b16 %v354
      %v1515 = vunpack.c.h.b16 %v354
      %v1516 = vunpack.c.l.b16 %v355
      %v1517 = vunpack.c.h.b16 %v355
      %v1518 = vunpack.c.l.b16 %v356
      %v1519 = vunpack.c.h.b16 %v356
      %v1520 = vunpack.c.l.b16 %v357
      %v1521 = vunpack.c.h.b16 %v357
      %v1522 = vunpack.c.l.b16 %v358
      %v1523 = vunpack.c.h.b16 %v358
      %v1524 = vunpack.c.l.b16 %v359
      %v1525 = vunpack.c.h.b16 %v359
      %v1526 = vunpack.c.l.b16 %v360
      %v1527 = vunpack.c.h.b16 %v360
      %v1528 = vunpack.c.l.b16 %v361
      %v1529 = vunpack.c.h.b16 %v361
      %v1530 = vunpack.c.l.b16 %v362
      %v1531 = vunpack.c.h.b16 %v362
      %v1532 = vunpack.c.l.b16 %v363
      %v1533 = vunpack.c.h.b16 %v363
      %v1534 = vunpack.c.l.b16 %v364
      %v1535 = vunpack.c.h.b16 %v364
      %v1536 = vunpack.c.l.b16 %v365
      %v1537 = vunpack.c.h.b16 %v365
      %v1538 = vunpack.c.l.b16 %v366
      %v1539 = vunpack.c.h.b16 %v366
      %v1540 = vunpack.c.l.b16 %v367
      %v1541 = vunpack.c.h.b16 %v367
      %v1542 = vunpack.c.l.b16 %v368
      %v1543 = vunpack.c.h.b16 %v368
      %v1544 = vunpack.c.l.b16 %v369
      %v1545 = vunpack.c.h.b16 %v369
      %v1546 = vunpack.c.l.b16 %v370
      %v1547 = vunpack.c.h.b16 %v370
      %v1548 = vunpack.c.l.b16 %v371
      %v1549 = vunpack.c.h.b16 %v371
      %v1550 = vunpack.c.l.b16 %v372
      %v1551 = vunpack.c.h.b16 %v372
      %v1552 = vunpack.c.l.b16 %v373
      %v1553 = vunpack.c.h.b16 %v373
      %v1554 = vunpack.c.l.b16 %v374
      %v1555 = vunpack.c.h.b16 %v374
      %v1556 = vunpack.c.l.b16 %v375
      %v1557 = vunpack.c.h.b16 %v375
      %v1558 = vunpack.c.l.b16 %v376
      %v1559 = vunpack.c.h.b16 %v376
      %v1560 = vunpack.c.l.b16 %v377
      %v1561 = vunpack.c.h.b16 %v377
      %v1562 = vunpack.c.l.b16 %v378
      %v1563 = vunpack.c.h.b16 %v378
      %v1564 = vunpack.c.l.b16 %v379
      %v1565 = vunpack.c.h.b16 %v379
      %v1566 = vunpack.c.l.b16 %v380
      %v1567 = vunpack.c.h.b16 %v380
      %v1568 = vunpack.c.l.b16 %v381
      %v1569 = vunpack.c.h.b16 %v381
      %v1570 = vunpack.c.l.b16 %v382
      %v1571 = vunpack.c.h.b16 %v382
      %v1572 = vunpack.c.l.b16 %v383
      %v1573 = vunpack.c.h.b16 %v383
      %v1574 = vunpack.c.l.b16 %v384
      %v1575 = vunpack.c.h.b16 %v384
      %v1576 = vunpack.c.l.b16 %v385
      %v1577 = vunpack.c.h.b16 %v385
      %v1578 = vunpack.c.l.b16 %v386
      %v1579 = vunpack.c.h.b16 %v386
      %v1580 = vunpack.c.l.b16 %v387
      %v1581 = vunpack.c.h.b16 %v387
      %v1582 = vunpack.c.l.b16 %v388
      %v1583 = vunpack.c.h.b16 %v388
      %v1584 = vunpack.c.l.b16 %v389
      %v1585 = vunpack.c.h.b16 %v389
      %v1586 = vunpack.c.l.b16 %v390
      %v1587 = vunpack.c.h.b16 %v390
      %v1588 = vunpack.c.l.b16 %v391
      %v1589 = vunpack.c.h.b16 %v391
      %v1590 = vunpack.c.l.b16 %v392
      %v1591 = vunpack.c.h.b16 %v392
      %v1592 = vunpack.c.l.b16 %v393
      %v1593 = vunpack.c.h.b16 %v393
      %v1594 = vunpack.c.l.b16 %v394
      %v1595 = vunpack.c.h.b16 %v394
      %v1596 = vunpack.c.l.b16 %v395
      %v1597 = vunpack.c.h.b16 %v395
      %v1598 = vunpack.c.l.b16 %v396
      %v1599 = vunpack.c.h.b16 %v396
      %v1600 = vunpack.c.l.b16 %v397
      %v1601 = vunpack.c.h.b16 %v397
      %v1602 = vunpack.c.l.b16 %v398
      %v1603 = vunpack.c.h.b16 %v398
      %v1604 = vunpack.c.l.b16 %v399
      %v1605 = vunpack.c.h.b16 %v399
      %v1606 = vunpack.c.l.b16 %v400
      %v1607 = vunpack.c.h.b16 %v400
      %v1608 = vunpack.c.l.b16 %v401
      %v1609 = vunpack.c.h.b16 %v401
      %v1610 = vunpack.c.l.b16 %v402
      %v1611 = vunpack.c.h.b16 %v402
      %v1612 = vunpack.c.l.b16 %v403
      %v1613 = vunpack.c.h.b16 %v403
      %v1614 = vunpack.c.l.b16 %v404
      %v1615 = vunpack.c.h.b16 %v404
      %v1616 = vunpack.c.l.b16 %v405
      %v1617 = vunpack.c.h.b16 %v405
      %v1618 = vunpack.c.l.b16 %v406
      %v1619 = vunpack.c.h.b16 %v406
      %v1620 = vunpack.c.l.b16 %v407
      %v1621 = vunpack.c.h.b16 %v407
      %v1622 = vunpack.c.l.b16 %v408
      %v1623 = vunpack.c.h.b16 %v408
      %v1624 = vunpack.c.l.b16 %v409
      %v1625 = vunpack.c.h.b16 %v409
      %v1626 = vunpack.c.l.b16 %v410
      %v1627 = vunpack.c.h.b16 %v410
      %v1628 = vunpack.c.l.b16 %v411
      %v1629 = vunpack.c.h.b16 %v411
      %v1630 = vunpack.c.l.b16 %v412
      %v1631 = vunpack.c.h.b16 %v412
      %v1632 = vunpack.c.l.b16 %v413
      %v1633 = vunpack.c.h.b16 %v413
      %v1634 = vunpack.c.l.b16 %v414
      %v1635 = vunpack.c.h.b16 %v414
      %v1636 = vunpack.c.l.b16 %v415
      %v1637 = vunpack.c.h.b16 %v415
      %v1638 = vunpack.c.l.b16 %v416
      %v1639 = vunpack.c.h.b16 %v416
      %v1640 = vunpack.c.l.b16 %v417
      %v1641 = vunpack.c.h.b16 %v417
      %v1642 = vunpack.c.l.b16 %v418
      %v1643 = vunpack.c.h.b16 %v418
      %v1644 = vunpack.c.l.b16 %v419
      %v1645 = vunpack.c.h.b16 %v419
      %v1646 = vunpack.c.l.b16 %v420
      %v1647 = vunpack.c.h.b16 %v420
      %v1648 = vunpack.c.l.b16 %v421
      %v1649 = vunpack.c.h.b16 %v421
      %v1650 = vunpack.c.l.b16 %v422
      %v1651 = vunpack.c.h.b16 %v422
      %v1652 = vunpack.c.l.b16 %v423
      %v1653 = vunpack.c.h.b16 %v423
      %v1654 = vunpack.c.l.b16 %v424
      %v1655 = vunpack.c.h.b16 %v424
      %v1656 = vunpack.c.l.b16 %v425
      %v1657 = vunpack.c.h.b16 %v425
      %v1658 = vunpack.c.l.b16 %v426
      %v1659 = vunpack.c.h.b16 %v426
      %v1660 = vunpack.c.l.b16 %v427
      %v1661 = vunpack.c.h.b16 %v427
      %v1662 = vunpack.c.l.b16 %v428
      %v1663 = vunpack.c.h.b16 %v428
      %v1664 = vunpack.c.l.b16 %v429
      %v1665 = vunpack.c.h.b16 %v429
      %v1666 = vunpack.c.l.b16 %v430
      %v1667 = vunpack.c.h.b16 %v430
      %v1668 = vunpack.c.l.b16 %v431
      %v1669 = vunpack.c.h.b16 %v431
      %v1670 = vunpack.c.l.b16 %v432
      %v1671 = vunpack.c.h.b16 %v432
      %v1672 = vunpack.c.l.b16 %v433
      %v1673 = vunpack.c.h.b16 %v433
      %v1674 = vunpack.c.l.b16 %v434
      %v1675 = vunpack.c.h.b16 %v434
      %v1676 = vunpack.c.l.b16 %v435
      %v1677 = vunpack.c.h.b16 %v435
      %v1678 = vunpack.c.l.b16 %v436
      %v1679 = vunpack.c.h.b16 %v436
      %v1680 = vunpack.c.l.b16 %v437
      %v1681 = vunpack.c.h.b16 %v437
      %v1682 = vunpack.c.l.b16 %v438
      %v1683 = vunpack.c.h.b16 %v438
      %v1684 = vunpack.c.l.b16 %v439
      %v1685 = vunpack.c.h.b16 %v439
      %v1686 = vunpack.c.l.b16 %v440
      %v1687 = vunpack.c.h.b16 %v440
      %v1688 = vunpack.c.l.b16 %v441
      %v1689 = vunpack.c.h.b16 %v441
      %v1690 = vunpack.c.l.b16 %v442
      %v1691 = vunpack.c.h.b16 %v442
      %v1692 = vunpack.c.l.b16 %v443
      %v1693 = vunpack.c.h.b16 %v443
      %v1694 = vunpack.c.l.b16 %v444
      %v1695 = vunpack.c.h.b16 %v444
      %v1696 = vunpack.c.l.b16 %v445
      %v1697 = vunpack.c.h.b16 %v445
      %v1698 = vunpack.c.l.b16 %v446
      %v1699 = vunpack.c.h.b16 %v446
      %v1700 = vunpack.c.l.b16 %v447
      %v1701 = vunpack.c.h.b16 %v447
      %v1702 = vunpack.c.l.b16 %v448
      %v1703 = vunpack.c.h.b16 %v448
      %v1704 = vunpack.c.l.b16 %v449
      %v1705 = vunpack.c.h.b16 %v449
      %v1706 = vunpack.c.l.b16 %v450
      %v1707 = vunpack.c.h.b16 %v450
      %v1708 = vunpack.c.l.b16 %v451
      %v1709 = vunpack.c.h.b16 %v451
      %v1710 = vunpack.c.l.b16 %v452
      %v1711 = vunpack.c.h.b16 %v452
      %v1712 = vunpack.c.l.b16 %v453
      %v1713 = vunpack.c.h.b16 %v453
      %v1714 = vunpack.c.l.b16 %v454
      %v1715 = vunpack.c.h.b16 %v454
      %v1716 = vunpack.c.l.b16 %v455
      %v1717 = vunpack.c.h.b16 %v455
      %v1718 = vunpack.c.l.b16 %v456
      %v1719 = vunpack.c.h.b16 %v456
      %v1720 = vunpack.c.l.b16 %v457
      %v1721 = vunpack.c.h.b16 %v457
      %v1722 = vunpack.c.l.b16 %v458
      %v1723 = vunpack.c.h.b16 %v458
      %v1724 = vunpack.c.l.b16 %v459
      %v1725 = vunpack.c.h.b16 %v459
      %v1726 = vunpack.c.l.b16 %v460
      %v1727 = vunpack.c.h.b16 %v460
      %v1728 = vunpack.c.l.b16 %v461
      %v1729 = vunpack.c.h.b16 %v461
      %v1730 = vunpack.c.l.b16 %v462
      %v1731 = vunpack.c.h.b16 %v462
      %v1732 = vunpack.c.l.b16 %v463
      %v1733 = vunpack.c.h.b16 %v463
      %v1734 = vunpack.c.l.b16 %v464
      %v1735 = vunpack.c.h.b16 %v464
      %v1736 = vunpack.c.l.b16 %v465
      %v1737 = vunpack.c.h.b16 %v465
      %v1738 = vunpack.c.l.b16 %v466
      %v1739 = vunpack.c.h.b16 %v466
      %v1740 = vunpack.c.l.b16 %v467
      %v1741 = vunpack.c.h.b16 %v467
      %v1742 = vunpack.c.l.b16 %v468
      %v1743 = vunpack.c.h.b16 %v468
      %v1744 = vunpack.c.l.b16 %v469
      %v1745 = vunpack.c.h.b16 %v469
      %v1746 = vunpack.c.l.b16 %v470
      %v1747 = vunpack.c.h.b16 %v470
      %v1748 = vunpack.c.l.b16 %v471
      %v1749 = vunpack.c.h.b16 %v471
      %v1750 = vunpack.c.l.b16 %v472
      %v1751 = vunpack.c.h.b16 %v472
      %v1752 = vunpack.c.l.b16 %v473
      %v1753 = vunpack.c.h.b16 %v473
      %v1754 = vunpack.c.l.b16 %v474
      %v1755 = vunpack.c.h.b16 %v474
      %v1756 = vunpack.c.l.b16 %v475
      %v1757 = vunpack.c.h.b16 %v475
      %v1758 = vunpack.c.l.b16 %v476
      %v1759 = vunpack.c.h.b16 %v476
      %v1760 = vunpack.c.l.b16 %v477
      %v1761 = vunpack.c.h.b16 %v477
      %v1762 = vunpack.c.l.b16 %v478
      %v1763 = vunpack.c.h.b16 %v478
      %v1764 = vunpack.c.l.b16 %v479
      %v1765 = vunpack.c.h.b16 %v479
      %v1766 = vunpack.c.l.b16 %v480
      %v1767 = vunpack.c.h.b16 %v480
      %v1768 = vunpack.c.l.b16 %v481
      %v1769 = vunpack.c.h.b16 %v481
      %v1770 = vunpack.c.l.b16 %v482
      %v1771 = vunpack.c.h.b16 %v482
      %v1772 = vunpack.c.l.b16 %v483
      %v1773 = vunpack.c.h.b16 %v483
      %v1774 = vunpack.c.l.b16 %v484
      %v1775 = vunpack.c.h.b16 %v484
      %v1776 = vunpack.c.l.b16 %v485
      %v1777 = vunpack.c.h.b16 %v485
      %v1778 = vunpack.c.l.b16 %v486
      %v1779 = vunpack.c.h.b16 %v486
      %v1780 = vunpack.c.l.b16 %v487
      %v1781 = vunpack.c.h.b16 %v487
      %v1782 = vunpack.c.l.b16 %v488
      %v1783 = vunpack.c.h.b16 %v488
      %v1784 = vunpack.c.l.b16 %v489
      %v1785 = vunpack.c.h.b16 %v489
      %v1786 = vunpack.c.l.b16 %v490
      %v1787 = vunpack.c.h.b16 %v490
      %v1788 = vunpack.c.l.b16 %v491
      %v1789 = vunpack.c.h.b16 %v491
      %v1790 = vunpack.c.l.b16 %v492
      %v1791 = vunpack.c.h.b16 %v492
      %v1792 = vunpack.c.l.b16 %v493
      %v1793 = vunpack.c.h.b16 %v493
      %v1794 = vunpack.c.l.b16 %v494
      %v1795 = vunpack.c.h.b16 %v494
      %v1796 = vunpack.c.l.b16 %v495
      %v1797 = vunpack.c.h.b16 %v495
      %v1798 = vunpack.c.l.b16 %v496
      %v1799 = vunpack.c.h.b16 %v496
      %v1800 = vunpack.c.l.b16 %v497
      %v1801 = vunpack.c.h.b16 %v497
      %v1802 = vunpack.c.l.b16 %v498
      %v1803 = vunpack.c.h.b16 %v498
      %v1804 = vunpack.c.l.b16 %v499
      %v1805 = vunpack.c.h.b16 %v499
      %v1806 = vunpack.c.l.b16 %v500
      %v1807 = vunpack.c.h.b16 %v500
      %v1808 = vunpack.c.l.b16 %v501
      %v1809 = vunpack.c.h.b16 %v501
      %v1810 = vunpack.c.l.b16 %v502
      %v1811 = vunpack.c.h.b16 %v502
      %v1812 = vunpack.c.l.b16 %v503
      %v1813 = vunpack.c.h.b16 %v503
      %v1814 = vunpack.c.l.b16 %v504
      %v1815 = vunpack.c.h.b16 %v504
      %v1816 = vunpack.c.l.b16 %v505
      %v1817 = vunpack.c.h.b16 %v505
      %v1818 = vunpack.c.l.b16 %v506
      %v1819 = vunpack.c.h.b16 %v506
      %v1820 = vunpack.c.l.b16 %v507
      %v1821 = vunpack.c.h.b16 %v507
      %v1822 = vunpack.c.l.b16 %v508
      %v1823 = vunpack.c.h.b16 %v508
      %v1824 = vunpack.c.l.b16 %v509
      %v1825 = vunpack.c.h.b16 %v509
      %v1826 = vunpack.c.l.b16 %v510
      %v1827 = vunpack.c.h.b16 %v510
      %v1828 = vunpack.c.l.b16 %v511
      %v1829 = vunpack.c.h.b16 %v511
      %v1830 = vunpack.c.l.b16 %v512
      %v1831 = vunpack.c.h.b16 %v512
      %v1832 = vunpack.c.l.b16 %v513
      %v1833 = vunpack.c.h.b16 %v513
      %v1834 = vunpack.c.l.b16 %v514
      %v1835 = vunpack.c.h.b16 %v514
      %v1836 = vunpack.c.l.b16 %v515
      %v1837 = vunpack.c.h.b16 %v515
      %v1838 = vunpack.c.l.b16 %v516
      %v1839 = vunpack.c.h.b16 %v516
      %v1840 = vunpack.c.l.b16 %v517
      %v1841 = vunpack.c.h.b16 %v517
      %v1842 = vunpack.c.l.b16 %v518
      %v1843 = vunpack.c.h.b16 %v518
      %v1844 = vunpack.c.l.b16 %v519
      %v1845 = vunpack.c.h.b16 %v519
      %v1846 = vunpack.c.l.b16 %v520
      %v1847 = vunpack.c.h.b16 %v520
      %v1848 = vunpack.c.l.b16 %v521
      %v1849 = vunpack.c.h.b16 %v521
      %v1850 = vunpack.c.l.b16 %v522
      %v1851 = vunpack.c.h.b16 %v522
      %v1852 = vunpack.c.l.b16 %v523
      %v1853 = vunpack.c.h.b16 %v523
      %v1854 = vunpack.c.l.b16 %v524
      %v1855 = vunpack.c.h.b16 %v524
      %v1856 = vunpack.c.l.b16 %v525
      %v1857 = vunpack.c.h.b16 %v525
      %v1858 = vunpack.c.l.b16 %v526
      %v1859 = vunpack.c.h.b16 %v526
      %v1860 = vunpack.c.l.b16 %v527
      %v1861 = vunpack.c.h.b16 %v527
      %v1862 = vunpack.c.l.b16 %v528
      %v1863 = vunpack.c.h.b16 %v528
      %v1864 = vunpack.c.l.b16 %v529
      %v1865 = vunpack.c.h.b16 %v529
      %v1866 = vunpack.c.l.b16 %v530
      %v1867 = vunpack.c.h.b16 %v530
      %v1868 = vunpack.c.l.b16 %v531
      %v1869 = vunpack.c.h.b16 %v531
      %v1870 = vunpack.c.l.b16 %v532
      %v1871 = vunpack.c.h.b16 %v532
      %v1872 = vunpack.c.l.b16 %v533
      %v1873 = vunpack.c.h.b16 %v533
      %v1874 = vunpack.c.l.b16 %v534
      %v1875 = vunpack.c.h.b16 %v534
      %v1876 = vunpack.c.l.b16 %v535
      %v1877 = vunpack.c.h.b16 %v535
      %v1878 = vunpack.c.l.b16 %v536
      %v1879 = vunpack.c.h.b16 %v536
      %v1880 = vunpack.c.l.b16 %v537
      %v1881 = vunpack.c.h.b16 %v537
      %v1882 = vunpack.c.l.b16 %v538
      %v1883 = vunpack.c.h.b16 %v538
      %v1884 = vunpack.c.l.b16 %v539
      %v1885 = vunpack.c.h.b16 %v539
      %v1886 = vunpack.c.l.b16 %v540
      %v1887 = vunpack.c.h.b16 %v540
      %v1888 = vunpack.c.l.b16 %v541
      %v1889 = vunpack.c.h.b16 %v541
      %v1890 = vunpack.c.l.b16 %v542
      %v1891 = vunpack.c.h.b16 %v542
      %v1892 = vunpack.c.l.b16 %v543
      %v1893 = vunpack.c.h.b16 %v543
      %v1894 = vunpack.c.l.b16 %v544
      %v1895 = vunpack.c.h.b16 %v544
      %v1896 = vunpack.c.l.b16 %v545
      %v1897 = vunpack.c.h.b16 %v545
      %v1898 = vunpack.c.l.b16 %v546
      %v1899 = vunpack.c.h.b16 %v546
      %v1900 = vunpack.c.l.b16 %v547
      %v1901 = vunpack.c.h.b16 %v547
      %v1902 = vunpack.c.l.b16 %v548
      %v1903 = vunpack.c.h.b16 %v548
      %v1904 = vunpack.c.l.b16 %v549
      %v1905 = vunpack.c.h.b16 %v549
      %v1906 = vunpack.c.l.b16 %v550
      %v1907 = vunpack.c.h.b16 %v550
      %v1908 = vunpack.c.l.b16 %v551
      %v1909 = vunpack.c.h.b16 %v551
      %v1910 = vunpack.c.l.b16 %v552
      %v1911 = vunpack.c.h.b16 %v552
      %v1912 = vunpack.c.l.b16 %v553
      %v1913 = vunpack.c.h.b16 %v553
      %v1914 = vunpack.c.l.b16 %v554
      %v1915 = vunpack.c.h.b16 %v554
      %v1916 = vunpack.c.l.b16 %v555
      %v1917 = vunpack.c.h.b16 %v555
      %v1918 = vunpack.c.l.b16 %v556
      %v1919 = vunpack.c.h.b16 %v556
      %v1920 = vunpack.c.l.b16 %v557
      %v1921 = vunpack.c.h.b16 %v557
      %v1922 = vunpack.c.l.b16 %v558
      %v1923 = vunpack.c.h.b16 %v558
      %v1924 = vunpack.c.l.b16 %v559
      %v1925 = vunpack.c.h.b16 %v559
      %v1926 = vunpack.c.l.b16 %v560
      %v1927 = vunpack.c.h.b16 %v560
      %v1928 = vunpack.c.l.b16 %v561
      %v1929 = vunpack.c.h.b16 %v561
      %v1930 = vunpack.c.l.b16 %v562
      %v1931 = vunpack.c.h.b16 %v562
      %v1932 = vunpack.c.l.b16 %v563
      %v1933 = vunpack.c.h.b16 %v563
      %v1934 = vunpack.c.l.b16 %v564
      %v1935 = vunpack.c.h.b16 %v564
      %v1936 = vunpack.c.l.b16 %v565
      %v1937 = vunpack.c.h.b16 %v565
      %v1938 = vunpack.c.l.b16 %v566
      %v1939 = vunpack.c.h.b16 %v566
      %v1940 = vunpack.c.l.b16 %v567
      %v1941 = vunpack.c.h.b16 %v567
      %v1942 = vunpack.c.l.b16 %v568
      %v1943 = vunpack.c.h.b16 %v568
      %v1944 = vunpack.c.l.b16 %v569
      %v1945 = vunpack.c.h.b16 %v569
      %v1946 = vunpack.c.l.b16 %v570
      %v1947 = vunpack.c.h.b16 %v570
      %v1948 = vunpack.c.l.b16 %v571
      %v1949 = vunpack.c.h.b16 %v571
      %v1950 = vunpack.c.l.b16 %v572
      %v1951 = vunpack.c.h.b16 %v572
      %v1952 = vunpack.c.l.b16 %v573
      %v1953 = vunpack.c.h.b16 %v573
      %v1954 = vunpack.c.l.b16 %v574
      %v1955 = vunpack.c.h.b16 %v574
      %v1956 = vunpack.c.l.b16 %v575
      %v1957 = vunpack.c.h.b16 %v575
      %v1958 = vunpack.c.l.b16 %v576
      %v1959 = vunpack.c.h.b16 %v576
      %v1960 = vunpack.c.l.b16 %v577
      %v1961 = vunpack.c.h.b16 %v577
      %v1962 = vunpack.c.l.b16 %v578
      %v1963 = vunpack.c.h.b16 %v578
      %v1964 = vunpack.c.l.b16 %v579
      %v1965 = vunpack.c.h.b16 %v579
      %v1966 = vunpack.c.l.b16 %v580
      %v1967 = vunpack.c.h.b16 %v580
      %v1968 = vunpack.c.l.b16 %v581
      %v1969 = vunpack.c.h.b16 %v581
      %v1970 = vunpack.c.l.b16 %v582
      %v1971 = vunpack.c.h.b16 %v582
      %v1972 = vunpack.c.l.b16 %v583
      %v1973 = vunpack.c.h.b16 %v583
      %v1974 = vunpack.c.l.b16 %v584
      %v1975 = vunpack.c.h.b16 %v584
      %v1976 = vunpack.c.l.b16 %v585
      %v1977 = vunpack.c.h.b16 %v585
      %v1978 = vunpack.c.l.b16 %v586
      %v1979 = vunpack.c.h.b16 %v586
      %v1980 = vunpack.c.l.b16 %v587
      %v1981 = vunpack.c.h.b16 %v587
      %v1982 = vunpack.c.l.b16 %v588
      %v1983 = vunpack.c.h.b16 %v588
      %v1984 = vunpack.c.l.b16 %v589
      %v1985 = vunpack.c.h.b16 %v589
      %v1986 = vunpack.c.l.b16 %v590
      %v1987 = vunpack.c.h.b16 %v590
      %v1988 = vunpack.c.l.b16 %v591
      %v1989 = vunpack.c.h.b16 %v591
      %v1990 = vunpack.c.l.b16 %v592
      %v1991 = vunpack.c.h.b16 %v592
      %v1992 = vunpack.c.l.b16 %v593
      %v1993 = vunpack.c.h.b16 %v593
      %v1994 = vunpack.c.l.b16 %v594
      %v1995 = vunpack.c.h.b16 %v594
      %v1996 = vunpack.c.l.b16 %v595
      %v1997 = vunpack.c.h.b16 %v595
      %v1998 = vunpack.c.l.b16 %v596
      %v1999 = vunpack.c.h.b16 %v596
      %v2000 = vunpack.c.l.b16 %v597
      %v2001 = vunpack.c.h.b16 %v597
      %v2002 = vunpack.c.l.b16 %v598
      %v2003 = vunpack.c.h.b16 %v598
      %v2004 = vunpack.c.l.b16 %v599
      %v2005 = vunpack.c.h.b16 %v599
      %v2006 = vunpack.c.l.b16 %v600
      %v2007 = vunpack.c.h.b16 %v600
      %v2008 = vunpack.c.l.b16 %v601
      %v2009 = vunpack.c.h.b16 %v601
      %v2010 = vunpack.c.l.b16 %v602
      %v2011 = vunpack.c.h.b16 %v602
      %v2012 = vunpack.c.l.b16 %v603
      %v2013 = vunpack.c.h.b16 %v603
      %v2014 = vunpack.c.l.b16 %v604
      %v2015 = vunpack.c.h.b16 %v604
      %v2016 = vunpack.c.l.b16 %v605
      %v2017 = vunpack.c.h.b16 %v605
      %v2018 = vunpack.c.l.b16 %v606
      %v2019 = vunpack.c.h.b16 %v606
      %v2020 = vunpack.c.l.b16 %v607
      %v2021 = vunpack.c.h.b16 %v607
      %v2022 = vunpack.c.l.b16 %v608
      %v2023 = vunpack.c.h.b16 %v608
      %v2024 = vunpack.c.l.b16 %v609
      %v2025 = vunpack.c.h.b16 %v609
      %v2026 = vunpack.c.l.b16 %v610
      %v2027 = vunpack.c.h.b16 %v610
      %v2028 = vunpack.c.l.b16 %v611
      %v2029 = vunpack.c.h.b16 %v611
      %v2030 = vunpack.c.l.b16 %v612
      %v2031 = vunpack.c.h.b16 %v612
      %v2032 = vunpack.c.l.b16 %v613
      %v2033 = vunpack.c.h.b16 %v613
      %v2034 = vunpack.c.l.b16 %v614
      %v2035 = vunpack.c.h.b16 %v614
      %v2036 = vunpack.c.l.b16 %v615
      %v2037 = vunpack.c.h.b16 %v615
      %v2038 = vunpack.c.l.b16 %v616
      %v2039 = vunpack.c.h.b16 %v616
      %v2040 = vunpack.c.l.b16 %v617
      %v2041 = vunpack.c.h.b16 %v617
      %v2042 = vunpack.c.l.b16 %v618
      %v2043 = vunpack.c.h.b16 %v618
      %v2044 = vunpack.c.l.b16 %v619
      %v2045 = vunpack.c.h.b16 %v619
      %v2046 = vunpack.c.l.b16 %v620
      %v2047 = vunpack.c.h.b16 %v620
      %v2048 = vunpack.c.l.b16 %v621
      %v2049 = vunpack.c.h.b16 %v621
      %v2050 = vunpack.c.l.b16 %v622
      %v2051 = vunpack.c.h.b16 %v622
      %v2052 = vunpack.c.l.b16 %v623
      %v2053 = vunpack.c.h.b16 %v623
      %v2054 = vunpack.c.l.b16 %v624
      %v2055 = vunpack.c.h.b16 %v624
      %v2056 = vunpack.c.l.b16 %v625
      %v2057 = vunpack.c.h.b16 %v625
      %v2058 = vunpack.c.l.b16 %v626
      %v2059 = vunpack.c.h.b16 %v626
      %v2060 = vunpack.c.l.b16 %v627
      %v2061 = vunpack.c.h.b16 %v627
      %v2062 = vunpack.c.l.b16 %v628
      %v2063 = vunpack.c.h.b16 %v628
      %v2064 = vunpack.c.l.b16 %v629
      %v2065 = vunpack.c.h.b16 %v629
      %v2066 = vunpack.c.l.b16 %v630
      %v2067 = vunpack.c.h.b16 %v630
      %v2068 = vunpack.c.l.b16 %v631
      %v2069 = vunpack.c.h.b16 %v631
      %v2070 = vunpack.c.l.b16 %v632
      %v2071 = vunpack.c.h.b16 %v632
      %v2072 = vunpack.c.l.b16 %v633
      %v2073 = vunpack.c.h.b16 %v633
      %v2074 = vunpack.c.l.b16 %v634
      %v2075 = vunpack.c.h.b16 %v634
      %v2076 = vunpack.c.l.b16 %v635
      %v2077 = vunpack.c.h.b16 %v635
      %v2078 = vunpack.c.l.b16 %v636
      %v2079 = vunpack.c.h.b16 %v636
      %v2080 = vunpack.c.l.b16 %v637
      %v2081 = vunpack.c.h.b16 %v637
      %v2082 = vunpack.c.l.b16 %v638
      %v2083 = vunpack.c.h.b16 %v638
      %v2084 = vunpack.c.l.b16 %v639
      %v2085 = vunpack.c.h.b16 %v639
      %v2086 = vunpack.c.l.b16 %v640
      %v2087 = vunpack.c.h.b16 %v640
      %v2088 = vunpack.c.l.b16 %v641
      %v2089 = vunpack.c.h.b16 %v641
      %v2090 = vunpack.c.l.b16 %v642
      %v2091 = vunpack.c.h.b16 %v642
      %v2092 = vunpack.c.l.b16 %v643
      %v2093 = vunpack.c.h.b16 %v643
      %v2094 = vunpack.c.l.b16 %v644
      %v2095 = vunpack.c.h.b16 %v644
      %v2096 = vunpack.c.l.b16 %v645
      %v2097 = vunpack.c.h.b16 %v645
      %v2098 = vunpack.c.l.b16 %v646
      %v2099 = vunpack.c.h.b16 %v646
      %v2100 = vunpack.c.l.b16 %v647
      %v2101 = vunpack.c.h.b16 %v647
      %v2102 = vunpack.c.l.b16 %v648
      %v2103 = vunpack.c.h.b16 %v648
      %v2104 = vunpack.c.l.b16 %v649
      %v2105 = vunpack.c.h.b16 %v649
      %v2106 = vunpack.c.l.b16 %v650
      %v2107 = vunpack.c.h.b16 %v650
      %v2108 = vunpack.c.l.b16 %v651
      %v2109 = vunpack.c.h.b16 %v651
      %v2110 = vunpack.c.l.b16 %v652
      %v2111 = vunpack.c.h.b16 %v652
      %v2112 = vunpack.c.l.b16 %v653
      %v2113 = vunpack.c.h.b16 %v653
      %v2114 = vunpack.c.l.b16 %v654
      %v2115 = vunpack.c.h.b16 %v654
      %v2116 = vunpack.c.l.b16 %v655
      %v2117 = vunpack.c.h.b16 %v655
      %v2118 = vunpack.c.l.b16 %v656
      %v2119 = vunpack.c.h.b16 %v656
      %v2120 = vunpack.c.l.b16 %v657
      %v2121 = vunpack.c.h.b16 %v657
      %v2122 = vunpack.c.l.b16 %v658
      %v2123 = vunpack.c.h.b16 %v658
      %v2124 = vunpack.c.l.b16 %v659
      %v2125 = vunpack.c.h.b16 %v659
      %v2126 = vunpack.c.l.b16 %v660
      %v2127 = vunpack.c.h.b16 %v660
      %v2128 = vunpack.c.l.b16 %v661
      %v2129 = vunpack.c.h.b16 %v661
      %v2130 = vunpack.c.l.b16 %v662
      %v2131 = vunpack.c.h.b16 %v662
      %v2132 = vunpack.c.l.b16 %v663
      %v2133 = vunpack.c.h.b16 %v663
      %v2134 = vunpack.c.l.b16 %v664
      %v2135 = vunpack.c.h.b16 %v664
      %v2136 = vunpack.c.l.b16 %v665
      %v2137 = vunpack.c.h.b16 %v665
      %v2138 = vunpack.c.l.b16 %v666
      %v2139 = vunpack.c.h.b16 %v666
      %v2140 = vunpack.c.l.b16 %v667
      %v2141 = vunpack.c.h.b16 %v667
      %v2142 = vunpack.c.l.b16 %v668
      %v2143 = vunpack.c.h.b16 %v668
      %v2144 = vunpack.c.l.b16 %v669
      %v2145 = vunpack.c.h.b16 %v669
      %v2146 = vunpack.c.l.b16 %v670
      %v2147 = vunpack.c.h.b16 %v670
      %v2148 = vunpack.c.l.b16 %v671
      %v2149 = vunpack.c.h.b16 %v671
      %v2150 = vunpack.c.l.b16 %v672
      %v2151 = vunpack.c.h.b16 %v672
      %v2152 = vunpack.c.l.b16 %v673
      %v2153 = vunpack.c.h.b16 %v673
      %v2154 = vunpack.c.l.b16 %v674
      %v2155 = vunpack.c.h.b16 %v674
      %v2156 = vunpack.c.l.b16 %v675
      %v2157 = vunpack.c.h.b16 %v675
      %v2158 = vunpack.c.l.b16 %v676
      %v2159 = vunpack.c.h.b16 %v676
      %v2160 = vunpack.c.l.b16 %v677
      %v2161 = vunpack.c.h.b16 %v677
      %v2162 = vunpack.c.l.b16 %v678
      %v2163 = vunpack.c.h.b16 %v678
      %v2164 = vunpack.c.l.b16 %v679
      %v2165 = vunpack.c.h.b16 %v679
      %v2166 = vunpack.c.l.b16 %v680
      %v2167 = vunpack.c.h.b16 %v680
      %v2168 = vunpack.c.l.b16 %v681
      %v2169 = vunpack.c.h.b16 %v681
      %v2170 = vunpack.c.l.b16 %v682
      %v2171 = vunpack.c.h.b16 %v682
      %v2172 = vunpack.c.l.b16 %v683
      %v2173 = vunpack.c.h.b16 %v683
      %v2174 = vunpack.c.l.b16 %v684
      %v2175 = vunpack.c.h.b16 %v684
      %v2176 = vunpack.c.l.b16 %v685
      %v2177 = vunpack.c.h.b16 %v685
      %v2178 = vunpack.c.l.b16 %v686
      %v2179 = vunpack.c.h.b16 %v686
      %v2180 = vunpack.c.l.b16 %v687
      %v2181 = vunpack.c.h.b16 %v687
      %v2182 = vunpack.c.l.b16 %v688
      %v2183 = vunpack.c.h.b16 %v688
      %v2184 = vunpack.c.l.b16 %v689
      %v2185 = vunpack.c.h.b16 %v689
      %v2186 = vunpack.c.l.b16 %v690
      %v2187 = vunpack.c.h.b16 %v690
      %v2188 = vunpack.c.l.b16 %v691
      %v2189 = vunpack.c.h.b16 %v691
      %v2190 = vunpack.c.l.b16 %v692
      %v2191 = vunpack.c.h.b16 %v692
      %v2192 = vunpack.c.l.b16 %v693
      %v2193 = vunpack.c.h.b16 %v693
      %v2194 = vunpack.c.l.b16 %v694
      %v2195 = vunpack.c.h.b16 %v694
      %v2196 = vunpack.c.l.b16 %v695
      %v2197 = vunpack.c.h.b16 %v695
      %v2198 = vunpack.c.l.b16 %v696
      %v2199 = vunpack.c.h.b16 %v696
      %v2200 = vunpack.c.l.b16 %v697
      %v2201 = vunpack.c.h.b16 %v697
      %v2202 = vunpack.c.l.b16 %v698
      %v2203 = vunpack.c.h.b16 %v698
      %v2204 = vunpack.c.l.b16 %v699
      %v2205 = vunpack.c.h.b16 %v699
      %v2206 = vunpack.c.l.b16 %v700
      %v2207 = vunpack.c.h.b16 %v700
      %v2208 = vunpack.c.l.b16 %v701
      %v2209 = vunpack.c.h.b16 %v701
      %v2210 = vunpack.c.l.b16 %v702
      %v2211 = vunpack.c.h.b16 %v702
      %v2212 = vunpack.c.l.b16 %v703
      %v2213 = vunpack.c.h.b16 %v703
      %v2214 = vunpack.c.l.b16 %v704
      %v2215 = vunpack.c.h.b16 %v704
      %v2216 = vunpack.c.l.b16 %v705
      %v2217 = vunpack.c.h.b16 %v705
      %v2218 = vunpack.c.l.b16 %v706
      %v2219 = vunpack.c.h.b16 %v706
      %v2220 = vunpack.c.l.b16 %v707
      %v2221 = vunpack.c.h.b16 %v707
      %v2222 = vunpack.c.l.b16 %v708
      %v2223 = vunpack.c.h.b16 %v708
      %v2224 = vunpack.c.l.b16 %v709
      %v2225 = vunpack.c.h.b16 %v709
      %v2226 = vunpack.c.l.b16 %v710
      %v2227 = vunpack.c.h.b16 %v710
      %v2228 = vunpack.c.l.b16 %v711
      %v2229 = vunpack.c.h.b16 %v711
      %v2230 = vunpack.c.l.b16 %v712
      %v2231 = vunpack.c.h.b16 %v712
      %v2232 = vunpack.c.l.b16 %v713
      %v2233 = vunpack.c.h.b16 %v713
      %v2234 = vunpack.c.l.b16 %v714
      %v2235 = vunpack.c.h.b16 %v714
      %v2236 = vunpack.c.l.b16 %v715
      %v2237 = vunpack.c.h.b16 %v715
      %v2238 = vunpack.c.l.b16 %v716
      %v2239 = vunpack.c.h.b16 %v716
      %v2240 = vunpack.c.l.b16 %v717
      %v2241 = vunpack.c.h.b16 %v717
      %v2242 = vunpack.c.l.b16 %v718
      %v2243 = vunpack.c.h.b16 %v718
      %v2244 = vunpack.c.l.b16 %v719
      %v2245 = vunpack.c.h.b16 %v719
      %v2246 = vunpack.c.l.b16 %v720
      %v2247 = vunpack.c.h.b16 %v720
      %v2248 = vunpack.c.l.b16 %v721
      %v2249 = vunpack.c.h.b16 %v721
      %v2250 = vunpack.c.l.b16 %v722
      %v2251 = vunpack.c.h.b16 %v722
      %v2252 = vunpack.c.l.b16 %v723
      %v2253 = vunpack.c.h.b16 %v723
      %v2254 = vunpack.c.l.b16 %v724
      %v2255 = vunpack.c.h.b16 %v724
      %v2256 = vunpack.c.l.b16 %v725
      %v2257 = vunpack.c.h.b16 %v725
      %v2258 = vunpack.c.l.b16 %v726
      %v2259 = vunpack.c.h.b16 %v726
      %v2260 = vunpack.c.l.b16 %v727
      %v2261 = vunpack.c.h.b16 %v727
      %v2262 = vunpack.c.l.b16 %v728
      %v2263 = vunpack.c.h.b16 %v728
      %v2264 = vunpack.c.l.b16 %v729
      %v2265 = vunpack.c.h.b16 %v729
      %v2266 = vunpack.c.l.b16 %v730
      %v2267 = vunpack.c.h.b16 %v730
      %v2268 = vunpack.c.l.b16 %v731
      %v2269 = vunpack.c.h.b16 %v731
      %v2270 = vunpack.c.l.b16 %v732
      %v2271 = vunpack.c.h.b16 %v732
      %v2272 = vunpack.c.l.b16 %v733
      %v2273 = vunpack.c.h.b16 %v733
      %v2274 = vunpack.c.l.b16 %v734
      %v2275 = vunpack.c.h.b16 %v734
      %v2276 = vunpack.c.l.b16 %v735
      %v2277 = vunpack.c.h.b16 %v735
      %v2278 = vunpack.c.l.b16 %v736
      %v2279 = vunpack.c.h.b16 %v736
      %v2280 = vunpack.c.l.b16 %v737
      %v2281 = vunpack.c.h.b16 %v737
      %v2282 = vunpack.c.l.b16 %v738
      %v2283 = vunpack.c.h.b16 %v738
      %v2284 = vunpack.c.l.b16 %v739
      %v2285 = vunpack.c.h.b16 %v739
      %v2286 = vunpack.c.l.b16 %v740
      %v2287 = vunpack.c.h.b16 %v740
      %v2288 = vunpack.c.l.b16 %v741
      %v2289 = vunpack.c.h.b16 %v741
      %v2290 = vunpack.c.l.b16 %v742
      %v2291 = vunpack.c.h.b16 %v742
      %v2292 = vunpack.c.l.b16 %v743
      %v2293 = vunpack.c.h.b16 %v743
      %v2294 = vunpack.c.l.b16 %v744
      %v2295 = vunpack.c.h.b16 %v744
      %v2296 = vunpack.c.l.b16 %v745
      %v2297 = vunpack.c.h.b16 %v745
      %v2298 = vunpack.c.l.b16 %v746
      %v2299 = vunpack.c.h.b16 %v746
      %v2300 = vunpack.c.l.b16 %v747
      %v2301 = vunpack.c.h.b16 %v747
      %v2302 = vunpack.c.l.b16 %v748
      %v2303 = vunpack.c.h.b16 %v748
      %v2304 = vunpack.c.l.b16 %v749
      %v2305 = vunpack.c.h.b16 %v749
      %v2306 = vunpack.c.l.b16 %v750
      %v2307 = vunpack.c.h.b16 %v750
      %v2308 = vunpack.c.l.b16 %v751
      %v2309 = vunpack.c.h.b16 %v751
      %v2310 = vunpack.c.l.b16 %v752
      %v2311 = vunpack.c.h.b16 %v752
      %v2312 = vunpack.c.l.b16 %v753
      %v2313 = vunpack.c.h.b16 %v753
      %v2314 = vunpack.c.l.b16 %v754
      %v2315 = vunpack.c.h.b16 %v754
      %v2316 = vunpack.c.l.b16 %v755
      %v2317 = vunpack.c.h.b16 %v755
      %v2318 = vunpack.c.l.b16 %v756
      %v2319 = vunpack.c.h.b16 %v756
      %v2320 = vunpack.c.l.b16 %v757
      %v2321 = vunpack.c.h.b16 %v757
      %v2322 = vunpack.c.l.b16 %v758
      %v2323 = vunpack.c.h.b16 %v758
      %v2324 = vunpack.c.l.b16 %v759
      %v2325 = vunpack.c.h.b16 %v759
      %v2326 = vunpack.c.l.b16 %v760
      %v2327 = vunpack.c.h.b16 %v760
      %v2328 = vunpack.c.l.b16 %v761
      %v2329 = vunpack.c.h.b16 %v761
      %v2330 = vunpack.c.l.b16 %v762
      %v2331 = vunpack.c.h.b16 %v762
      %v2332 = vunpack.c.l.b16 %v763
      %v2333 = vunpack.c.h.b16 %v763
      %v2334 = vunpack.c.l.b16 %v764
      %v2335 = vunpack.c.h.b16 %v764
      %v2336 = vunpack.c.l.b16 %v765
      %v2337 = vunpack.c.h.b16 %v765
      %v2338 = vunpack.c.l.b16 %v766
      %v2339 = vunpack.c.h.b16 %v766
      %v2340 = vunpack.c.l.b16 %v767
      %v2341 = vunpack.c.h.b16 %v767
      %v2342 = vunpack.c.l.b16 %v768
      %v2343 = vunpack.c.h.b16 %v768
      %v2344 = vunpack.c.l.b16 %v769
      %v2345 = vunpack.c.h.b16 %v769
      %v2346 = vpack.c.b16 %v1330, %v1322
      %v2347 = vpack.c.b16 %v1331, %v1323
      %v2348 = vpack.c.b16 %v1332, %v1324
      %v2349 = vpack.c.b16 %v1333, %v1325
      %v2350 = vpack.c.b16 %v1334, %v1326
      %v2351 = vpack.c.b16 %v1335, %v1327
      %v2352 = vpack.c.b16 %v1336, %v1328
      %v2353 = vpack.c.b16 %v1337, %v1329
      %v2354 = vpack.c.b16 %v1346, %v1338
      %v2355 = vpack.c.b16 %v1347, %v1339
      %v2356 = vpack.c.b16 %v1348, %v1340
      %v2357 = vpack.c.b16 %v1349, %v1341
      %v2358 = vpack.c.b16 %v1350, %v1342
      %v2359 = vpack.c.b16 %v1351, %v1343
      %v2360 = vpack.c.b16 %v1352, %v1344
      %v2361 = vpack.c.b16 %v1353, %v1345
      %v2362 = vpack.c.b16 %v1362, %v1354
      %v2363 = vpack.c.b16 %v1363, %v1355
      %v2364 = vpack.c.b16 %v1364, %v1356
      %v2365 = vpack.c.b16 %v1365, %v1357
      %v2366 = vpack.c.b16 %v1366, %v1358
      %v2367 = vpack.c.b16 %v1367, %v1359
      %v2368 = vpack.c.b16 %v1368, %v1360
      %v2369 = vpack.c.b16 %v1369, %v1361
      %v2370 = vpack.c.b16 %v1378, %v1370
      %v2371 = vpack.c.b16 %v1379, %v1371
      %v2372 = vpack.c.b16 %v1380, %v1372
      %v2373 = vpack.c.b16 %v1381, %v1373
      %v2374 = vpack.c.b16 %v1382, %v1374
      %v2375 = vpack.c.b16 %v1383, %v1375
      %v2376 = vpack.c.b16 %v1384, %v1376
      %v2377 = vpack.c.b16 %v1385, %v1377
      %v2378 = vpack.c.b16 %v1394, %v1386
      %v2379 = vpack.c.b16 %v1395, %v1387
      %v2380 = vpack.c.b16 %v1396, %v1388
      %v2381 = vpack.c.b16 %v1397, %v1389
      %v2382 = vpack.c.b16 %v1398, %v1390
      %v2383 = vpack.c.b16 %v1399, %v1391
      %v2384 = vpack.c.b16 %v1400, %v1392
      %v2385 = vpack.c.b16 %v1401, %v1393
      %v2386 = vpack.c.b16 %v1410, %v1402
      %v2387 = vpack.c.b16 %v1411, %v1403
      %v2388 = vpack.c.b16 %v1412, %v1404
      %v2389 = vpack.c.b16 %v1413, %v1405
      %v2390 = vpack.c.b16 %v1414, %v1406
      %v2391 = vpack.c.b16 %v1415, %v1407
      %v2392 = vpack.c.b16 %v1416, %v1408
      %v2393 = vpack.c.b16 %v1417, %v1409
      %v2394 = vpack.c.b16 %v1426, %v1418
      %v2395 = vpack.c.b16 %v1427, %v1419
      %v2396 = vpack.c.b16 %v1428, %v1420
      %v2397 = vpack.c.b16 %v1429, %v1421
      %v2398 = vpack.c.b16 %v1430, %v1422
      %v2399 = vpack.c.b16 %v1431, %v1423
      %v2400 = vpack.c.b16 %v1432, %v1424
      %v2401 = vpack.c.b16 %v1433, %v1425
      %v2402 = vpack.c.b16 %v1442, %v1434
      %v2403 = vpack.c.b16 %v1443, %v1435
      %v2404 = vpack.c.b16 %v1444, %v1436
      %v2405 = vpack.c.b16 %v1445, %v1437
      %v2406 = vpack.c.b16 %v1446, %v1438
      %v2407 = vpack.c.b16 %v1447, %v1439
      %v2408 = vpack.c.b16 %v1448, %v1440
      %v2409 = vpack.c.b16 %v1449, %v1441
      %v2410 = vpack.c.b16 %v1458, %v1450
      %v2411 = vpack.c.b16 %v1459, %v1451
      %v2412 = vpack.c.b16 %v1460, %v1452
      %v2413 = vpack.c.b16 %v1461, %v1453
      %v2414 = vpack.c.b16 %v1462, %v1454
      %v2415 = vpack.c.b16 %v1463, %v1455
      %v2416 = vpack.c.b16 %v1464, %v1456
      %v2417 = vpack.c.b16 %v1465, %v1457
      %v2418 = vpack.c.b16 %v1474, %v1466
      %v2419 = vpack.c.b16 %v1475, %v1467
      %v2420 = vpack.c.b16 %v1476, %v1468
      %v2421 = vpack.c.b16 %v1477, %v1469
      %v2422 = vpack.c.b16 %v1478, %v1470
      %v2423 = vpack.c.b16 %v1479, %v1471
      %v2424 = vpack.c.b16 %v1480, %v1472
      %v2425 = vpack.c.b16 %v1481, %v1473
      %v2426 = vpack.c.b16 %v1490, %v1482
      %v2427 = vpack.c.b16 %v1491, %v1483
      %v2428 = vpack.c.b16 %v1492, %v1484
      %v2429 = vpack.c.b16 %v1493, %v1485
      %v2430 = vpack.c.b16 %v1494, %v1486
      %v2431 = vpack.c.b16 %v1495, %v1487
      %v2432 = vpack.c.b16 %v1496, %v1488
      %v2433 = vpack.c.b16 %v1497, %v1489
      %v2434 = vpack.c.b16 %v1506, %v1498
      %v2435 = vpack.c.b16 %v1507, %v1499
      %v2436 = vpack.c.b16 %v1508, %v1500
      %v2437 = vpack.c.b16 %v1509, %v1501
      %v2438 = vpack.c.b16 %v1510, %v1502
      %v2439 = vpack.c.b16 %v1511, %v1503
      %v2440 = vpack.c.b16 %v1512, %v1504
      %v2441 = vpack.c.b16 %v1513, %v1505
      %v2442 = vpack.c.b16 %v1522, %v1514
      %v2443 = vpack.c.b16 %v1523, %v1515
      %v2444 = vpack.c.b16 %v1524, %v1516
      %v2445 = vpack.c.b16 %v1525, %v1517
      %v2446 = vpack.c.b16 %v1526, %v1518
      %v2447 = vpack.c.b16 %v1527, %v1519
      %v2448 = vpack.c.b16 %v1528, %v1520
      %v2449 = vpack.c.b16 %v1529, %v1521
      %v2450 = vpack.c.b16 %v1538, %v1530
      %v2451 = vpack.c.b16 %v1539, %v1531
      %v2452 = vpack.c.b16 %v1540, %v1532
      %v2453 = vpack.c.b16 %v1541, %v1533
      %v2454 = vpack.c.b16 %v1542, %v1534
      %v2455 = vpack.c.b16 %v1543, %v1535
      %v2456 = vpack.c.b16 %v1544, %v1536
      %v2457 = vpack.c.b16 %v1545, %v1537
      %v2458 = vpack.c.b16 %v1554, %v1546
      %v2459 = vpack.c.b16 %v1555, %v1547
      %v2460 = vpack.c.b16 %v1556, %v1548
      %v2461 = vpack.c.b16 %v1557, %v1549
      %v2462 = vpack.c.b16 %v1558, %v1550
      %v2463 = vpack.c.b16 %v1559, %v1551
      %v2464 = vpack.c.b16 %v1560, %v1552
      %v2465 = vpack.c.b16 %v1561, %v1553
      %v2466 = vpack.c.b16 %v1570, %v1562
      %v2467 = vpack.c.b16 %v1571, %v1563
      %v2468 = vpack.c.b16 %v1572, %v1564
      %v2469 = vpack.c.b16 %v1573, %v1565
      %v2470 = vpack.c.b16 %v1574, %v1566
      %v2471 = vpack.c.b16 %v1575, %v1567
      %v2472 = vpack.c.b16 %v1576, %v1568
      %v2473 = vpack.c.b16 %v1577, %v1569
      %v2474 = vpack.c.b16 %v1586, %v1578
      %v2475 = vpack.c.b16 %v1587, %v1579
      %v2476 = vpack.c.b16 %v1588, %v1580
      %v2477 = vpack.c.b16 %v1589, %v1581
      %v2478 = vpack.c.b16 %v1590, %v1582
      %v2479 = vpack.c.b16 %v1591, %v1583
      %v2480 = vpack.c.b16 %v1592, %v1584
      %v2481 = vpack.c.b16 %v1593, %v1585
      %v2482 = vpack.c.b16 %v1602, %v1594
      %v2483 = vpack.c.b16 %v1603, %v1595
      %v2484 = vpack.c.b16 %v1604, %v1596
      %v2485 = vpack.c.b16 %v1605, %v1597
      %v2486 = vpack.c.b16 %v1606, %v1598
      %v2487 = vpack.c.b16 %v1607, %v1599
      %v2488 = vpack.c.b16 %v1608, %v1600
      %v2489 = vpack.c.b16 %v1609, %v1601
      %v2490 = vpack.c.b16 %v1618, %v1610
      %v2491 = vpack.c.b16 %v1619, %v1611
      %v2492 = vpack.c.b16 %v1620, %v1612
      %v2493 = vpack.c.b16 %v1621, %v1613
      %v2494 = vpack.c.b16 %v1622, %v1614
      %v2495 = vpack.c.b16 %v1623, %v1615
      %v2496 = vpack.c.b16 %v1624, %v1616
      %v2497 = vpack.c.b16 %v1625, %v1617
      %v2498 = vpack.c.b16 %v1634, %v1626
      %v2499 = vpack.c.b16 %v1635, %v1627
      %v2500 = vpack.c.b16 %v1636, %v1628
      %v2501 = vpack.c.b16 %v1637, %v1629
      %v2502 = vpack.c.b16 %v1638, %v1630
      %v2503 = vpack.c.b16 %v1639, %v1631
      %v2504 = vpack.c.b16 %v1640, %v1632
      %v2505 = vpack.c.b16 %v1641, %v1633
      %v2506 = vpack.c.b16 %v1650, %v1642
      %v2507 = vpack.c.b16 %v1651, %v1643
      %v2508 = vpack.c.b16 %v1652, %v1644
      %v2509 = vpack.c.b16 %v1653, %v1645
      %v2510 = vpack.c.b16 %v1654, %v1646
      %v2511 = vpack.c.b16 %v1655, %v1647
      %v2512 = vpack.c.b16 %v1656, %v1648
      %v2513 = vpack.c.b16 %v1657, %v1649
      %v2514 = vpack.c.b16 %v1666, %v1658
      %v2515 = vpack.c.b16 %v1667, %v1659
      %v2516 = vpack.c.b16 %v1668, %v1660
      %v2517 = vpack.c.b16 %v1669, %v1661
      %v2518 = vpack.c.b16 %v1670, %v1662
      %v2519 = vpack.c.b16 %v1671, %v1663
      %v2520 = vpack.c.b16 %v1672, %v1664
      %v2521 = vpack.c.b16 %v1673, %v1665
      %v2522 = vpack.c.b16 %v1682, %v1674
      %v2523 = vpack.c.b16 %v1683, %v1675
      %v2524 = vpack.c.b16 %v1684, %v1676
      %v2525 = vpack.c.b16 %v1685, %v1677
      %v2526 = vpack.c.b16 %v1686, %v1678
      %v2527 = vpack.c.b16 %v1687, %v1679
      %v2528 = vpack.c.b16 %v1688, %v1680
      %v2529 = vpack.c.b16 %v1689, %v1681
      %v2530 = vpack.c.b16 %v1698, %v1690
      %v2531 = vpack.c.b16 %v1699, %v1691
      %v2532 = vpack.c.b16 %v1700, %v1692
      %v2533 = vpack.c.b16 %v1701, %v1693
      %v2534 = vpack.c.b16 %v1702, %v1694
      %v2535 = vpack.c.b16 %v1703, %v1695
      %v2536 = vpack.c.b16 %v1704, %v1696
      %v2537 = vpack.c.b16 %v1705, %v1697
      %v2538 = vpack.c.b16 %v1714, %v1706
      %v2539 = vpack.c.b16 %v1715, %v1707
      %v2540 = vpack.c.b16 %v1716, %v1708
      %v2541 = vpack.c.b16 %v1717, %v1709
      %v2542 = vpack.c.b16 %v1718, %v1710
      %v2543 = vpack.c.b16 %v1719, %v1711
      %v2544 = vpack.c.b16 %v1720, %v1712
      %v2545 = vpack.c.b16 %v1721, %v1713
      %v2546 = vpack.c.b16 %v1730, %v1722
      %v2547 = vpack.c.b16 %v1731, %v1723
      %v2548 = vpack.c.b16 %v1732, %v1724
      %v2549 = vpack.c.b16 %v1733, %v1725
      %v2550 = vpack.c.b16 %v1734, %v1726
      %v2551 = vpack.c.b16 %v1735, %v1727
      %v2552 = vpack.c.b16 %v1736, %v1728
      %v2553 = vpack.c.b16 %v1737, %v1729
      %v2554 = vpack.c.b16 %v1746, %v1738
      %v2555 = vpack.c.b16 %v1747, %v1739
      %v2556 = vpack.c.b16 %v1748, %v1740
      %v2557 = vpack.c.b16 %v1749, %v1741
      %v2558 = vpack.c.b16 %v1750, %v1742
      %v2559 = vpack.c.b16 %v1751, %v1743
      %v2560 = vpack.c.b16 %v1752, %v1744
      %v2561 = vpack.c.b16 %v1753, %v1745
      %v2562 = vpack.c.b16 %v1762, %v1754
      %v2563 = vpack.c.b16 %v1763, %v1755
      %v2564 = vpack.c.b16 %v1764, %v1756
      %v2565 = vpack.c.b16 %v1765, %v1757
      %v2566 = vpack.c.b16 %v1766, %v1758
      %v2567 = vpack.c.b16 %v1767, %v1759
      %v2568 = vpack.c.b16 %v1768, %v1760
      %v2569 = vpack.c.b16 %v1769, %v1761
      %v2570 = vpack.c.b16 %v1778, %v1770
      %v2571 = vpack.c.b16 %v1779, %v1771
      %v2572 = vpack.c.b16 %v1780, %v1772
      %v2573 = vpack.c.b16 %v1781, %v1773
      %v2574 = vpack.c.b16 %v1782, %v1774
      %v2575 = vpack.c.b16 %v1783, %v1775
      %v2576 = vpack.c.b16 %v1784, %v1776
      %v2577 = vpack.c.b16 %v1785, %v1777
      %v2578 = vpack.c.b16 %v1794, %v1786
      %v2579 = vpack.c.b16 %v1795, %v1787
      %v2580 = vpack.c.b16 %v1796, %v1788
      %v2581 = vpack.c.b16 %v1797, %v1789
      %v2582 = vpack.c.b16 %v1798, %v1790
      %v2583 = vpack.c.b16 %v1799, %v1791
      %v2584 = vpack.c.b16 %v1800, %v1792
      %v2585 = vpack.c.b16 %v1801, %v1793
      %v2586 = vpack.c.b16 %v1810, %v1802
      %v2587 = vpack.c.b16 %v1811, %v1803
      %v2588 = vpack.c.b16 %v1812, %v1804
      %v2589 = vpack.c.b16 %v1813, %v1805
      %v2590 = vpack.c.b16 %v1814, %v1806
      %v2591 = vpack.c.b16 %v1815, %v1807
      %v2592 = vpack.c.b16 %v1816, %v1808
      %v2593 = vpack.c.b16 %v1817, %v1809
      %v2594 = vpack.c.b16 %v1826, %v1818
      %v2595 = vpack.c.b16 %v1827, %v1819
      %v2596 = vpack.c.b16 %v1828, %v1820
      %v2597 = vpack.c.b16 %v1829, %v1821
      %v2598 = vpack.c.b16 %v1830, %v1822
      %v2599 = vpack.c.b16 %v1831, %v1823
      %v2600 = vpack.c.b16 %v1832, %v1824
      %v2601 = vpack.c.b16 %v1833, %v1825
      %v2602 = vpack.c.b16 %v1842, %v1834
      %v2603 = vpack.c.b16 %v1843, %v1835
      %v2604 = vpack.c.b16 %v1844, %v1836
      %v2605 = vpack.c.b16 %v1845, %v1837
      %v2606 = vpack.c.b16 %v1846, %v1838
      %v2607 = vpack.c.b16 %v1847, %v1839
      %v2608 = vpack.c.b16 %v1848, %v1840
      %v2609 = vpack.c.b16 %v1849, %v1841
      %v2610 = vpack.c.b16 %v1858, %v1850
      %v2611 = vpack.c.b16 %v1859, %v1851
      %v2612 = vpack.c.b16 %v1860, %v1852
      %v2613 = vpack.c.b16 %v1861, %v1853
      %v2614 = vpack.c.b16 %v1862, %v1854
      %v2615 = vpack.c.b16 %v1863, %v1855
      %v2616 = vpack.c.b16 %v1864, %v1856
      %v2617 = vpack.c.b16 %v1865, %v1857
      %v2618 = vpack.c.b16 %v1874, %v1866
      %v2619 = vpack.c.b16 %v1875, %v1867
      %v2620 = vpack.c.b16 %v1876, %v1868
      %v2621 = vpack.c.b16 %v1877, %v1869
      %v2622 = vpack.c.b16 %v1878, %v1870
      %v2623 = vpack.c.b16 %v1879, %v1871
      %v2624 = vpack.c.b16 %v1880, %v1872
      %v2625 = vpack.c.b16 %v1881, %v1873
      %v2626 = vpack.c.b16 %v1890, %v1882
      %v2627 = vpack.c.b16 %v1891, %v1883
      %v2628 = vpack.c.b16 %v1892, %v1884
      %v2629 = vpack.c.b16 %v1893, %v1885
      %v2630 = vpack.c.b16 %v1894, %v1886
      %v2631 = vpack.c.b16 %v1895, %v1887
      %v2632 = vpack.c.b16 %v1896, %v1888
      %v2633 = vpack.c.b16 %v1897, %v1889
      %v2634 = vpack.c.b16 %v1906, %v1898
      %v2635 = vpack.c.b16 %v1907, %v1899
      %v2636 = vpack.c.b16 %v1908, %v1900
      %v2637 = vpack.c.b16 %v1909, %v1901
      %v2638 = vpack.c.b16 %v1910, %v1902
      %v2639 = vpack.c.b16 %v1911, %v1903
      %v2640 = vpack.c.b16 %v1912, %v1904
      %v2641 = vpack.c.b16 %v1913, %v1905
      %v2642 = vpack.c.b16 %v1922, %v1914
      %v2643 = vpack.c.b16 %v1923, %v1915
      %v2644 = vpack.c.b16 %v1924, %v1916
      %v2645 = vpack.c.b16 %v1925, %v1917
      %v2646 = vpack.c.b16 %v1926, %v1918
      %v2647 = vpack.c.b16 %v1927, %v1919
      %v2648 = vpack.c.b16 %v1928, %v1920
      %v2649 = vpack.c.b16 %v1929, %v1921
      %v2650 = vpack.c.b16 %v1938, %v1930
      %v2651 = vpack.c.b16 %v1939, %v1931
      %v2652 = vpack.c.b16 %v1940, %v1932
      %v2653 = vpack.c.b16 %v1941, %v1933
      %v2654 = vpack.c.b16 %v1942, %v1934
      %v2655 = vpack.c.b16 %v1943, %v1935
      %v2656 = vpack.c.b16 %v1944, %v1936
      %v2657 = vpack.c.b16 %v1945, %v1937
      %v2658 = vpack.c.b16 %v1954, %v1946
      %v2659 = vpack.c.b16 %v1955, %v1947
      %v2660 = vpack.c.b16 %v1956, %v1948
      %v2661 = vpack.c.b16 %v1957, %v1949
      %v2662 = vpack.c.b16 %v1958, %v1950
      %v2663 = vpack.c.b16 %v1959, %v1951
      %v2664 = vpack.c.b16 %v1960, %v1952
      %v2665 = vpack.c.b16 %v1961, %v1953
      %v2666 = vpack.c.b16 %v1970, %v1962
      %v2667 = vpack.c.b16 %v1971, %v1963
      %v2668 = vpack.c.b16 %v1972, %v1964
      %v2669 = vpack.c.b16 %v1973, %v1965
      %v2670 = vpack.c.b16 %v1974, %v1966
      %v2671 = vpack.c.b16 %v1975, %v1967
      %v2672 = vpack.c.b16 %v1976, %v1968
      %v2673 = vpack.c.b16 %v1977, %v1969
      %v2674 = vpack.c.b16 %v1986, %v1978
      %v2675 = vpack.c.b16 %v1987, %v1979
      %v2676 = vpack.c.b16 %v1988, %v1980
      %v2677 = vpack.c.b16 %v1989, %v1981
      %v2678 = vpack.c.b16 %v1990, %v1982
      %v2679 = vpack.c.b16 %v1991, %v1983
      %v2680 = vpack.c.b16 %v1992, %v1984
      %v2681 = vpack.c.b16 %v1993, %v1985
      %v2682 = vpack.c.b16 %v2002, %v1994
      %v2683 = vpack.c.b16 %v2003, %v1995
      %v2684 = vpack.c.b16 %v2004, %v1996
      %v2685 = vpack.c.b16 %v2005, %v1997
      %v2686 = vpack.c.b16 %v2006, %v1998
      %v2687 = vpack.c.b16 %v2007, %v1999
      %v2688 = vpack.c.b16 %v2008, %v2000
      %v2689 = vpack.c.b16 %v2009, %v2001
      %v2690 = vpack.c.b16 %v2018, %v2010
      %v2691 = vpack.c.b16 %v2019, %v2011
      %v2692 = vpack.c.b16 %v2020, %v2012
      %v2693 = vpack.c.b16 %v2021, %v2013
      %v2694 = vpack.c.b16 %v2022, %v2014
      %v2695 = vpack.c.b16 %v2023, %v2015
      %v2696 = vpack.c.b16 %v2024, %v2016
      %v2697 = vpack.c.b16 %v2025, %v2017
      %v2698 = vpack.c.b16 %v2034, %v2026
      %v2699 = vpack.c.b16 %v2035, %v2027
      %v2700 = vpack.c.b16 %v2036, %v2028
      %v2701 = vpack.c.b16 %v2037, %v2029
      %v2702 = vpack.c.b16 %v2038, %v2030
      %v2703 = vpack.c.b16 %v2039, %v2031
      %v2704 = vpack.c.b16 %v2040, %v2032
      %v2705 = vpack.c.b16 %v2041, %v2033
      %v2706 = vpack.c.b16 %v2050, %v2042
      %v2707 = vpack.c.b16 %v2051, %v2043
      %v2708 = vpack.c.b16 %v2052, %v2044
      %v2709 = vpack.c.b16 %v2053, %v2045
      %v2710 = vpack.c.b16 %v2054, %v2046
      %v2711 = vpack.c.b16 %v2055, %v2047
      %v2712 = vpack.c.b16 %v2056, %v2048
      %v2713 = vpack.c.b16 %v2057, %v2049
      %v2714 = vpack.c.b16 %v2066, %v2058
      %v2715 = vpack.c.b16 %v2067, %v2059
      %v2716 = vpack.c.b16 %v2068, %v2060
      %v2717 = vpack.c.b16 %v2069, %v2061
      %v2718 = vpack.c.b16 %v2070, %v2062
      %v2719 = vpack.c.b16 %v2071, %v2063
      %v2720 = vpack.c.b16 %v2072, %v2064
      %v2721 = vpack.c.b16 %v2073, %v2065
      %v2722 = vpack.c.b16 %v2082, %v2074
      %v2723 = vpack.c.b16 %v2083, %v2075
      %v2724 = vpack.c.b16 %v2084, %v2076
      %v2725 = vpack.c.b16 %v2085, %v2077
      %v2726 = vpack.c.b16 %v2086, %v2078
      %v2727 = vpack.c.b16 %v2087, %v2079
      %v2728 = vpack.c.b16 %v2088, %v2080
      %v2729 = vpack.c.b16 %v2089, %v2081
      %v2730 = vpack.c.b16 %v2098, %v2090
      %v2731 = vpack.c.b16 %v2099, %v2091
      %v2732 = vpack.c.b16 %v2100, %v2092
      %v2733 = vpack.c.b16 %v2101, %v2093
      %v2734 = vpack.c.b16 %v2102, %v2094
      %v2735 = vpack.c.b16 %v2103, %v2095
      %v2736 = vpack.c.b16 %v2104, %v2096
      %v2737 = vpack.c.b16 %v2105, %v2097
      %v2738 = vpack.c.b16 %v2114, %v2106
      %v2739 = vpack.c.b16 %v2115, %v2107
      %v2740 = vpack.c.b16 %v2116, %v2108
      %v2741 = vpack.c.b16 %v2117, %v2109
      %v2742 = vpack.c.b16 %v2118, %v2110
      %v2743 = vpack.c.b16 %v2119, %v2111
      %v2744 = vpack.c.b16 %v2120, %v2112
      %v2745 = vpack.c.b16 %v2121, %v2113
      %v2746 = vpack.c.b16 %v2130, %v2122
      %v2747 = vpack.c.b16 %v2131, %v2123
      %v2748 = vpack.c.b16 %v2132, %v2124
      %v2749 = vpack.c.b16 %v2133, %v2125
      %v2750 = vpack.c.b16 %v2134, %v2126
      %v2751 = vpack.c.b16 %v2135, %v2127
      %v2752 = vpack.c.b16 %v2136, %v2128
      %v2753 = vpack.c.b16 %v2137, %v2129
      %v2754 = vpack.c.b16 %v2146, %v2138
      %v2755 = vpack.c.b16 %v2147, %v2139
      %v2756 = vpack.c.b16 %v2148, %v2140
      %v2757 = vpack.c.b16 %v2149, %v2141
      %v2758 = vpack.c.b16 %v2150, %v2142
      %v2759 = vpack.c.b16 %v2151, %v2143
      %v2760 = vpack.c.b16 %v2152, %v2144
      %v2761 = vpack.c.b16 %v2153, %v2145
      %v2762 = vpack.c.b16 %v2162, %v2154
      %v2763 = vpack.c.b16 %v2163, %v2155
      %v2764 = vpack.c.b16 %v2164, %v2156
      %v2765 = vpack.c.b16 %v2165, %v2157
      %v2766 = vpack.c.b16 %v2166, %v2158
      %v2767 = vpack.c.b16 %v2167, %v2159
      %v2768 = vpack.c.b16 %v2168, %v2160
      %v2769 = vpack.c.b16 %v2169, %v2161
      %v2770 = vpack.c.b16 %v2178, %v2170
      %v2771 = vpack.c.b16 %v2179, %v2171
      %v2772 = vpack.c.b16 %v2180, %v2172
      %v2773 = vpack.c.b16 %v2181, %v2173
      %v2774 = vpack.c.b16 %v2182, %v2174
      %v2775 = vpack.c.b16 %v2183, %v2175
      %v2776 = vpack.c.b16 %v2184, %v2176
      %v2777 = vpack.c.b16 %v2185, %v2177
      %v2778 = vpack.c.b16 %v2194, %v2186
      %v2779 = vpack.c.b16 %v2195, %v2187
      %v2780 = vpack.c.b16 %v2196, %v2188
      %v2781 = vpack.c.b16 %v2197, %v2189
      %v2782 = vpack.c.b16 %v2198, %v2190
      %v2783 = vpack.c.b16 %v2199, %v2191
      %v2784 = vpack.c.b16 %v2200, %v2192
      %v2785 = vpack.c.b16 %v2201, %v2193
      %v2786 = vpack.c.b16 %v2210, %v2202
      %v2787 = vpack.c.b16 %v2211, %v2203
      %v2788 = vpack.c.b16 %v2212, %v2204
      %v2789 = vpack.c.b16 %v2213, %v2205
      %v2790 = vpack.c.b16 %v2214, %v2206
      %v2791 = vpack.c.b16 %v2215, %v2207
      %v2792 = vpack.c.b16 %v2216, %v2208
      %v2793 = vpack.c.b16 %v2217, %v2209
      %v2794 = vpack.c.b16 %v2226, %v2218
      %v2795 = vpack.c.b16 %v2227, %v2219
      %v2796 = vpack.c.b16 %v2228, %v2220
      %v2797 = vpack.c.b16 %v2229, %v2221
      %v2798 = vpack.c.b16 %v2230, %v2222
      %v2799 = vpack.c.b16 %v2231, %v2223
      %v2800 = vpack.c.b16 %v2232, %v2224
      %v2801 = vpack.c.b16 %v2233, %v2225
      %v2802 = vpack.c.b16 %v2242, %v2234
      %v2803 = vpack.c.b16 %v2243, %v2235
      %v2804 = vpack.c.b16 %v2244, %v2236
      %v2805 = vpack.c.b16 %v2245, %v2237
      %v2806 = vpack.c.b16 %v2246, %v2238
      %v2807 = vpack.c.b16 %v2247, %v2239
      %v2808 = vpack.c.b16 %v2248, %v2240
      %v2809 = vpack.c.b16 %v2249, %v2241
      %v2810 = vpack.c.b16 %v2258, %v2250
      %v2811 = vpack.c.b16 %v2259, %v2251
      %v2812 = vpack.c.b16 %v2260, %v2252
      %v2813 = vpack.c.b16 %v2261, %v2253
      %v2814 = vpack.c.b16 %v2262, %v2254
      %v2815 = vpack.c.b16 %v2263, %v2255
      %v2816 = vpack.c.b16 %v2264, %v2256
      %v2817 = vpack.c.b16 %v2265, %v2257
      %v2818 = vpack.c.b16 %v2274, %v2266
      %v2819 = vpack.c.b16 %v2275, %v2267
      %v2820 = vpack.c.b16 %v2276, %v2268
      %v2821 = vpack.c.b16 %v2277, %v2269
      %v2822 = vpack.c.b16 %v2278, %v2270
      %v2823 = vpack.c.b16 %v2279, %v2271
      %v2824 = vpack.c.b16 %v2280, %v2272
      %v2825 = vpack.c.b16 %v2281, %v2273
      %v2826 = vpack.c.b16 %v2290, %v2282
      %v2827 = vpack.c.b16 %v2291, %v2283
      %v2828 = vpack.c.b16 %v2292, %v2284
      %v2829 = vpack.c.b16 %v2293, %v2285
      %v2830 = vpack.c.b16 %v2294, %v2286
      %v2831 = vpack.c.b16 %v2295, %v2287
      %v2832 = vpack.c.b16 %v2296, %v2288
      %v2833 = vpack.c.b16 %v2297, %v2289
      %v2834 = vpack.c.b16 %v2306, %v2298
      %v2835 = vpack.c.b16 %v2307, %v2299
      %v2836 = vpack.c.b16 %v2308, %v2300
      %v2837 = vpack.c.b16 %v2309, %v2301
      %v2838 = vpack.c.b16 %v2310, %v2302
      %v2839 = vpack.c.b16 %v2311, %v2303
      %v2840 = vpack.c.b16 %v2312, %v2304
      %v2841 = vpack.c.b16 %v2313, %v2305
      %v2842 = vpack.c.b16 %v2322, %v2314
      %v2843 = vpack.c.b16 %v2323, %v2315
      %v2844 = vpack.c.b16 %v2324, %v2316
      %v2845 = vpack.c.b16 %v2325, %v2317
      %v2846 = vpack.c.b16 %v2326, %v2318
      %v2847 = vpack.c.b16 %v2327, %v2319
      %v2848 = vpack.c.b16 %v2328, %v2320
      %v2849 = vpack.c.b16 %v2329, %v2321
      %v2850 = vpack.c.b16 %v2338, %v2330
      %v2851 = vpack.c.b16 %v2339, %v2331
      %v2852 = vpack.c.b16 %v2340, %v2332
      %v2853 = vpack.c.b16 %v2341, %v2333
      %v2854 = vpack.c.b16 %v2342, %v2334
      %v2855 = vpack.c.b16 %v2343, %v2335
      %v2856 = vpack.c.b16 %v2344, %v2336
      %v2857 = vpack.c.b16 %v2345, %v2337
      %3370 = vmatpush.bf16.msra.mxu0 %v2402
      %3371 = vmatpush.bf16.msra.mxu0 %v2394
      %3372 = vmatpush.bf16.msra.mxu0 %v2386
      %3373 = vmatpush.bf16.msra.mxu0 %v2378
      %3374 = vmatpush.bf16.msra.mxu0 %v2370
      %3375 = vmatpush.bf16.msra.mxu0 %v2362
      %3376 = vmatpush.bf16.msra.mxu0 %v2354
      %3377 = vmatpush.bf16.msra.mxu0 %v2346
      %3378 = vmatmul.bf16.gmra.mxu0 %v794
      %v3379 = vpop.f32.mrf.mxu0
      %v3380 = vadd.f32 0.0, %v3379
      %v3381 = vpop.f32.mrf.mxu0
      %v3382 = vadd.f32 0.0, %v3381
      %3383 = vdwg.mxu0
      %3384 = vmatpush.bf16.msra.mxu0 %v2466
      %3385 = vmatpush.bf16.msra.mxu0 %v2458
      %3386 = vmatpush.bf16.msra.mxu0 %v2450
      %3387 = vmatpush.bf16.msra.mxu0 %v2442
      %3388 = vmatpush.bf16.msra.mxu0 %v2434
      %3389 = vmatpush.bf16.msra.mxu0 %v2426
      %3390 = vmatpush.bf16.msra.mxu0 %v2418
      %3391 = vmatpush.bf16.msra.mxu0 %v2410
      %3392 = vmatmul.bf16.gmra.mxu0 %v795
      %v3393 = vpop.f32.mrf.mxu0
      %v3394 = vadd.f32 %v3380, %v3393
      %v3395 = vpop.f32.mrf.mxu0
      %v3396 = vadd.f32 %v3382, %v3395
      %3397 = vdwg.mxu0
      %3398 = vmatpush.bf16.msra.mxu0 %v2530
      %3399 = vmatpush.bf16.msra.mxu0 %v2522
      %3400 = vmatpush.bf16.msra.mxu0 %v2514
      %3401 = vmatpush.bf16.msra.mxu0 %v2506
      %3402 = vmatpush.bf16.msra.mxu0 %v2498
      %3403 = vmatpush.bf16.msra.mxu0 %v2490
      %3404 = vmatpush.bf16.msra.mxu0 %v2482
      %3405 = vmatpush.bf16.msra.mxu0 %v2474
      %3406 = vmatmul.bf16.gmra.mxu0 %v796
      %v3407 = vpop.f32.mrf.mxu0
      %v3408 = vadd.f32 %v3394, %v3407
      %v3409 = vpop.f32.mrf.mxu0
      %v3410 = vadd.f32 %v3396, %v3409
      %3411 = vdwg.mxu0
      %3412 = vmatpush.bf16.msra.mxu0 %v2594
      %3413 = vmatpush.bf16.msra.mxu0 %v2586
      %3414 = vmatpush.bf16.msra.mxu0 %v2578
      %3415 = vmatpush.bf16.msra.mxu0 %v2570
      %3416 = vmatpush.bf16.msra.mxu0 %v2562
      %3417 = vmatpush.bf16.msra.mxu0 %v2554
      %3418 = vmatpush.bf16.msra.mxu0 %v2546
      %3419 = vmatpush.bf16.msra.mxu0 %v2538
      %3420 = vmatmul.bf16.gmra.mxu0 %v797
      %v3421 = vpop.f32.mrf.mxu0
      %v3422 = vadd.f32 %v3408, %v3421
      %v3423 = vpop.f32.mrf.mxu0
      %v3424 = vadd.f32 %v3410, %v3423
      %3425 = vdwg.mxu0
      %3426 = vmatpush.bf16.msra.mxu0 %v2658
      %3427 = vmatpush.bf16.msra.mxu0 %v2650
      %3428 = vmatpush.bf16.msra.mxu0 %v2642
      %3429 = vmatpush.bf16.msra.mxu0 %v2634
      %3430 = vmatpush.bf16.msra.mxu0 %v2626
      %3431 = vmatpush.bf16.msra.mxu0 %v2618
      %3432 = vmatpush.bf16.msra.mxu0 %v2610
      %3433 = vmatpush.bf16.msra.mxu0 %v2602
      %3434 = vmatmul.bf16.gmra.mxu0 %v798
      %v3435 = vpop.f32.mrf.mxu0
      %v3436 = vadd.f32 %v3422, %v3435
      %v3437 = vpop.f32.mrf.mxu0
      %v3438 = vadd.f32 %v3424, %v3437
      %3439 = vdwg.mxu0
      %3440 = vmatpush.bf16.msra.mxu0 %v2722
      %3441 = vmatpush.bf16.msra.mxu0 %v2714
      %3442 = vmatpush.bf16.msra.mxu0 %v2706
      %3443 = vmatpush.bf16.msra.mxu0 %v2698
      %3444 = vmatpush.bf16.msra.mxu0 %v2690
      %3445 = vmatpush.bf16.msra.mxu0 %v2682
      %3446 = vmatpush.bf16.msra.mxu0 %v2674
      %3447 = vmatpush.bf16.msra.mxu0 %v2666
      %3448 = vmatmul.bf16.gmra.mxu0 %v799
      %v3449 = vpop.f32.mrf.mxu0
      %v3450 = vadd.f32 %v3436, %v3449
      %v3451 = vpop.f32.mrf.mxu0
      %v3452 = vadd.f32 %v3438, %v3451
      %3453 = vdwg.mxu0
      %3454 = vmatpush.bf16.msra.mxu0 %v2786
      %3455 = vmatpush.bf16.msra.mxu0 %v2778
      %3456 = vmatpush.bf16.msra.mxu0 %v2770
      %3457 = vmatpush.bf16.msra.mxu0 %v2762
      %3458 = vmatpush.bf16.msra.mxu0 %v2754
      %3459 = vmatpush.bf16.msra.mxu0 %v2746
      %3460 = vmatpush.bf16.msra.mxu0 %v2738
      %3461 = vmatpush.bf16.msra.mxu0 %v2730
      %3462 = vmatmul.bf16.gmra.mxu0 %v800
      %v3463 = vpop.f32.mrf.mxu0
      %v3464 = vadd.f32 %v3450, %v3463
      %v3465 = vpop.f32.mrf.mxu0
      %v3466 = vadd.f32 %v3452, %v3465
      %3467 = vdwg.mxu0
      %3468 = vmatpush.bf16.msra.mxu0 %v2850
      %3469 = vmatpush.bf16.msra.mxu0 %v2842
      %3470 = vmatpush.bf16.msra.mxu0 %v2834
      %3471 = vmatpush.bf16.msra.mxu0 %v2826
      %3472 = vmatpush.bf16.msra.mxu0 %v2818
      %3473 = vmatpush.bf16.msra.mxu0 %v2810
      %3474 = vmatpush.bf16.msra.mxu0 %v2802
      %3475 = vmatpush.bf16.msra.mxu0 %v2794
      %3476 = vmatmul.bf16.gmra.mxu0 %v801
      %v3477 = vpop.f32.mrf.mxu0
      %v3478 = vadd.f32 %v3464, %v3477
      %v3479 = vpop.f32.mrf.mxu0
      %v3480 = vadd.f32 %v3466, %v3479
      %3481 = vdwg.mxu0
      %3482 = vmatpush.bf16.msra.mxu0 %v2403
      %3483 = vmatpush.bf16.msra.mxu0 %v2395
      %3484 = vmatpush.bf16.msra.mxu0 %v2387
      %3485 = vmatpush.bf16.msra.mxu0 %v2379
      %3486 = vmatpush.bf16.msra.mxu0 %v2371
      %3487 = vmatpush.bf16.msra.mxu0 %v2363
      %3488 = vmatpush.bf16.msra.mxu0 %v2355
      %3489 = vmatpush.bf16.msra.mxu0 %v2347
      %3490 = vmatmul.bf16.gmra.mxu0 %v794
      %v3491 = vpop.f32.mrf.mxu0
      %v3492 = vadd.f32 0.0, %v3491
      %v3493 = vpop.f32.mrf.mxu0
      %v3494 = vadd.f32 0.0, %v3493
      %3495 = vdwg.mxu0
      %3496 = vmatpush.bf16.msra.mxu0 %v2467
      %3497 = vmatpush.bf16.msra.mxu0 %v2459
      %3498 = vmatpush.bf16.msra.mxu0 %v2451
      %3499 = vmatpush.bf16.msra.mxu0 %v2443
      %3500 = vmatpush.bf16.msra.mxu0 %v2435
      %3501 = vmatpush.bf16.msra.mxu0 %v2427
      %3502 = vmatpush.bf16.msra.mxu0 %v2419
      %3503 = vmatpush.bf16.msra.mxu0 %v2411
      %3504 = vmatmul.bf16.gmra.mxu0 %v795
      %v3505 = vpop.f32.mrf.mxu0
      %v3506 = vadd.f32 %v3492, %v3505
      %v3507 = vpop.f32.mrf.mxu0
      %v3508 = vadd.f32 %v3494, %v3507
      %3509 = vdwg.mxu0
      %3510 = vmatpush.bf16.msra.mxu0 %v2531
      %3511 = vmatpush.bf16.msra.mxu0 %v2523
      %3512 = vmatpush.bf16.msra.mxu0 %v2515
      %3513 = vmatpush.bf16.msra.mxu0 %v2507
      %3514 = vmatpush.bf16.msra.mxu0 %v2499
      %3515 = vmatpush.bf16.msra.mxu0 %v2491
      %3516 = vmatpush.bf16.msra.mxu0 %v2483
      %3517 = vmatpush.bf16.msra.mxu0 %v2475
      %3518 = vmatmul.bf16.gmra.mxu0 %v796
      %v3519 = vpop.f32.mrf.mxu0
      %v3520 = vadd.f32 %v3506, %v3519
      %v3521 = vpop.f32.mrf.mxu0
      %v3522 = vadd.f32 %v3508, %v3521
      %3523 = vdwg.mxu0
      %3524 = vmatpush.bf16.msra.mxu0 %v2595
      %3525 = vmatpush.bf16.msra.mxu0 %v2587
      %3526 = vmatpush.bf16.msra.mxu0 %v2579
      %3527 = vmatpush.bf16.msra.mxu0 %v2571
      %3528 = vmatpush.bf16.msra.mxu0 %v2563
      %3529 = vmatpush.bf16.msra.mxu0 %v2555
      %3530 = vmatpush.bf16.msra.mxu0 %v2547
      %3531 = vmatpush.bf16.msra.mxu0 %v2539
      %3532 = vmatmul.bf16.gmra.mxu0 %v797
      %v3533 = vpop.f32.mrf.mxu0
      %v3534 = vadd.f32 %v3520, %v3533
      %v3535 = vpop.f32.mrf.mxu0
      %v3536 = vadd.f32 %v3522, %v3535
      %3537 = vdwg.mxu0
      %3538 = vmatpush.bf16.msra.mxu0 %v2659
      %3539 = vmatpush.bf16.msra.mxu0 %v2651
      %3540 = vmatpush.bf16.msra.mxu0 %v2643
      %3541 = vmatpush.bf16.msra.mxu0 %v2635
      %3542 = vmatpush.bf16.msra.mxu0 %v2627
      %3543 = vmatpush.bf16.msra.mxu0 %v2619
      %3544 = vmatpush.bf16.msra.mxu0 %v2611
      %3545 = vmatpush.bf16.msra.mxu0 %v2603
      %3546 = vmatmul.bf16.gmra.mxu0 %v798
      %v3547 = vpop.f32.mrf.mxu0
      %v3548 = vadd.f32 %v3534, %v3547
      %v3549 = vpop.f32.mrf.mxu0
      %v3550 = vadd.f32 %v3536, %v3549
      %3551 = vdwg.mxu0
      %3552 = vmatpush.bf16.msra.mxu0 %v2723
      %3553 = vmatpush.bf16.msra.mxu0 %v2715
      %3554 = vmatpush.bf16.msra.mxu0 %v2707
      %3555 = vmatpush.bf16.msra.mxu0 %v2699
      %3556 = vmatpush.bf16.msra.mxu0 %v2691
      %3557 = vmatpush.bf16.msra.mxu0 %v2683
      %3558 = vmatpush.bf16.msra.mxu0 %v2675
      %3559 = vmatpush.bf16.msra.mxu0 %v2667
      %3560 = vmatmul.bf16.gmra.mxu0 %v799
      %v3561 = vpop.f32.mrf.mxu0
      %v3562 = vadd.f32 %v3548, %v3561
      %v3563 = vpop.f32.mrf.mxu0
      %v3564 = vadd.f32 %v3550, %v3563
      %3565 = vdwg.mxu0
      %3566 = vmatpush.bf16.msra.mxu0 %v2787
      %3567 = vmatpush.bf16.msra.mxu0 %v2779
      %3568 = vmatpush.bf16.msra.mxu0 %v2771
      %3569 = vmatpush.bf16.msra.mxu0 %v2763
      %3570 = vmatpush.bf16.msra.mxu0 %v2755
      %3571 = vmatpush.bf16.msra.mxu0 %v2747
      %3572 = vmatpush.bf16.msra.mxu0 %v2739
      %3573 = vmatpush.bf16.msra.mxu0 %v2731
      %3574 = vmatmul.bf16.gmra.mxu0 %v800
      %v3575 = vpop.f32.mrf.mxu0
      %v3576 = vadd.f32 %v3562, %v3575
      %v3577 = vpop.f32.mrf.mxu0
      %v3578 = vadd.f32 %v3564, %v3577
      %3579 = vdwg.mxu0
      %3580 = vmatpush.bf16.msra.mxu0 %v2851
      %3581 = vmatpush.bf16.msra.mxu0 %v2843
      %3582 = vmatpush.bf16.msra.mxu0 %v2835
      %3583 = vmatpush.bf16.msra.mxu0 %v2827
      %3584 = vmatpush.bf16.msra.mxu0 %v2819
      %3585 = vmatpush.bf16.msra.mxu0 %v2811
      %3586 = vmatpush.bf16.msra.mxu0 %v2803
      %3587 = vmatpush.bf16.msra.mxu0 %v2795
      %3588 = vmatmul.bf16.gmra.mxu0 %v801
      %v3589 = vpop.f32.mrf.mxu0
      %v3590 = vadd.f32 %v3576, %v3589
      %v3591 = vpop.f32.mrf.mxu0
      %v3592 = vadd.f32 %v3578, %v3591
      %3593 = vdwg.mxu0
      %3594 = vmatpush.bf16.msra.mxu0 %v2404
      %3595 = vmatpush.bf16.msra.mxu0 %v2396
      %3596 = vmatpush.bf16.msra.mxu0 %v2388
      %3597 = vmatpush.bf16.msra.mxu0 %v2380
      %3598 = vmatpush.bf16.msra.mxu0 %v2372
      %3599 = vmatpush.bf16.msra.mxu0 %v2364
      %3600 = vmatpush.bf16.msra.mxu0 %v2356
      %3601 = vmatpush.bf16.msra.mxu0 %v2348
      %3602 = vmatmul.bf16.gmra.mxu0 %v794
      %v3603 = vpop.f32.mrf.mxu0
      %v3604 = vadd.f32 0.0, %v3603
      %v3605 = vpop.f32.mrf.mxu0
      %v3606 = vadd.f32 0.0, %v3605
      %3607 = vdwg.mxu0
      %3608 = vmatpush.bf16.msra.mxu0 %v2468
      %3609 = vmatpush.bf16.msra.mxu0 %v2460
      %3610 = vmatpush.bf16.msra.mxu0 %v2452
      %3611 = vmatpush.bf16.msra.mxu0 %v2444
      %3612 = vmatpush.bf16.msra.mxu0 %v2436
      %3613 = vmatpush.bf16.msra.mxu0 %v2428
      %3614 = vmatpush.bf16.msra.mxu0 %v2420
      %3615 = vmatpush.bf16.msra.mxu0 %v2412
      %3616 = vmatmul.bf16.gmra.mxu0 %v795
      %v3617 = vpop.f32.mrf.mxu0
      %v3618 = vadd.f32 %v3604, %v3617
      %v3619 = vpop.f32.mrf.mxu0
      %v3620 = vadd.f32 %v3606, %v3619
      %3621 = vdwg.mxu0
      %3622 = vmatpush.bf16.msra.mxu0 %v2532
      %3623 = vmatpush.bf16.msra.mxu0 %v2524
      %3624 = vmatpush.bf16.msra.mxu0 %v2516
      %3625 = vmatpush.bf16.msra.mxu0 %v2508
      %3626 = vmatpush.bf16.msra.mxu0 %v2500
      %3627 = vmatpush.bf16.msra.mxu0 %v2492
      %3628 = vmatpush.bf16.msra.mxu0 %v2484
      %3629 = vmatpush.bf16.msra.mxu0 %v2476
      %3630 = vmatmul.bf16.gmra.mxu0 %v796
      %v3631 = vpop.f32.mrf.mxu0
      %v3632 = vadd.f32 %v3618, %v3631
      %v3633 = vpop.f32.mrf.mxu0
      %v3634 = vadd.f32 %v3620, %v3633
      %3635 = vdwg.mxu0
      %3636 = vmatpush.bf16.msra.mxu0 %v2596
      %3637 = vmatpush.bf16.msra.mxu0 %v2588
      %3638 = vmatpush.bf16.msra.mxu0 %v2580
      %3639 = vmatpush.bf16.msra.mxu0 %v2572
      %3640 = vmatpush.bf16.msra.mxu0 %v2564
      %3641 = vmatpush.bf16.msra.mxu0 %v2556
      %3642 = vmatpush.bf16.msra.mxu0 %v2548
      %3643 = vmatpush.bf16.msra.mxu0 %v2540
      %3644 = vmatmul.bf16.gmra.mxu0 %v797
      %v3645 = vpop.f32.mrf.mxu0
      %v3646 = vadd.f32 %v3632, %v3645
      %v3647 = vpop.f32.mrf.mxu0
      %v3648 = vadd.f32 %v3634, %v3647
      %3649 = vdwg.mxu0
      %3650 = vmatpush.bf16.msra.mxu0 %v2660
      %3651 = vmatpush.bf16.msra.mxu0 %v2652
      %3652 = vmatpush.bf16.msra.mxu0 %v2644
      %3653 = vmatpush.bf16.msra.mxu0 %v2636
      %3654 = vmatpush.bf16.msra.mxu0 %v2628
      %3655 = vmatpush.bf16.msra.mxu0 %v2620
      %3656 = vmatpush.bf16.msra.mxu0 %v2612
      %3657 = vmatpush.bf16.msra.mxu0 %v2604
      %3658 = vmatmul.bf16.gmra.mxu0 %v798
      %v3659 = vpop.f32.mrf.mxu0
      %v3660 = vadd.f32 %v3646, %v3659
      %v3661 = vpop.f32.mrf.mxu0
      %v3662 = vadd.f32 %v3648, %v3661
      %3663 = vdwg.mxu0
      %3664 = vmatpush.bf16.msra.mxu0 %v2724
      %3665 = vmatpush.bf16.msra.mxu0 %v2716
      %3666 = vmatpush.bf16.msra.mxu0 %v2708
      %3667 = vmatpush.bf16.msra.mxu0 %v2700
      %3668 = vmatpush.bf16.msra.mxu0 %v2692
      %3669 = vmatpush.bf16.msra.mxu0 %v2684
      %3670 = vmatpush.bf16.msra.mxu0 %v2676
      %3671 = vmatpush.bf16.msra.mxu0 %v2668
      %3672 = vmatmul.bf16.gmra.mxu0 %v799
      %v3673 = vpop.f32.mrf.mxu0
      %v3674 = vadd.f32 %v3660, %v3673
      %v3675 = vpop.f32.mrf.mxu0
      %v3676 = vadd.f32 %v3662, %v3675
      %3677 = vdwg.mxu0
      %3678 = vmatpush.bf16.msra.mxu0 %v2788
      %3679 = vmatpush.bf16.msra.mxu0 %v2780
      %3680 = vmatpush.bf16.msra.mxu0 %v2772
      %3681 = vmatpush.bf16.msra.mxu0 %v2764
      %3682 = vmatpush.bf16.msra.mxu0 %v2756
      %3683 = vmatpush.bf16.msra.mxu0 %v2748
      %3684 = vmatpush.bf16.msra.mxu0 %v2740
      %3685 = vmatpush.bf16.msra.mxu0 %v2732
      %3686 = vmatmul.bf16.gmra.mxu0 %v800
      %v3687 = vpop.f32.mrf.mxu0
      %v3688 = vadd.f32 %v3674, %v3687
      %v3689 = vpop.f32.mrf.mxu0
      %v3690 = vadd.f32 %v3676, %v3689
      %3691 = vdwg.mxu0
      %3692 = vmatpush.bf16.msra.mxu0 %v2852
      %3693 = vmatpush.bf16.msra.mxu0 %v2844
      %3694 = vmatpush.bf16.msra.mxu0 %v2836
      %3695 = vmatpush.bf16.msra.mxu0 %v2828
      %3696 = vmatpush.bf16.msra.mxu0 %v2820
      %3697 = vmatpush.bf16.msra.mxu0 %v2812
      %3698 = vmatpush.bf16.msra.mxu0 %v2804
      %3699 = vmatpush.bf16.msra.mxu0 %v2796
      %3700 = vmatmul.bf16.gmra.mxu0 %v801
      %v3701 = vpop.f32.mrf.mxu0
      %v3702 = vadd.f32 %v3688, %v3701
      %v3703 = vpop.f32.mrf.mxu0
      %v3704 = vadd.f32 %v3690, %v3703
      %3705 = vdwg.mxu0
      %3706 = vmatpush.bf16.msra.mxu0 %v2405
      %3707 = vmatpush.bf16.msra.mxu0 %v2397
      %3708 = vmatpush.bf16.msra.mxu0 %v2389
      %3709 = vmatpush.bf16.msra.mxu0 %v2381
      %3710 = vmatpush.bf16.msra.mxu0 %v2373
      %3711 = vmatpush.bf16.msra.mxu0 %v2365
      %3712 = vmatpush.bf16.msra.mxu0 %v2357
      %3713 = vmatpush.bf16.msra.mxu0 %v2349
      %3714 = vmatmul.bf16.gmra.mxu0 %v794
      %v3715 = vpop.f32.mrf.mxu0
      %v3716 = vadd.f32 0.0, %v3715
      %v3717 = vpop.f32.mrf.mxu0
      %v3718 = vadd.f32 0.0, %v3717
      %3719 = vdwg.mxu0
      %3720 = vmatpush.bf16.msra.mxu0 %v2469
      %3721 = vmatpush.bf16.msra.mxu0 %v2461
      %3722 = vmatpush.bf16.msra.mxu0 %v2453
      %3723 = vmatpush.bf16.msra.mxu0 %v2445
      %3724 = vmatpush.bf16.msra.mxu0 %v2437
      %3725 = vmatpush.bf16.msra.mxu0 %v2429
      %3726 = vmatpush.bf16.msra.mxu0 %v2421
      %3727 = vmatpush.bf16.msra.mxu0 %v2413
      %3728 = vmatmul.bf16.gmra.mxu0 %v795
      %v3729 = vpop.f32.mrf.mxu0
      %v3730 = vadd.f32 %v3716, %v3729
      %v3731 = vpop.f32.mrf.mxu0
      %v3732 = vadd.f32 %v3718, %v3731
      %3733 = vdwg.mxu0
      %3734 = vmatpush.bf16.msra.mxu0 %v2533
      %3735 = vmatpush.bf16.msra.mxu0 %v2525
      %3736 = vmatpush.bf16.msra.mxu0 %v2517
      %3737 = vmatpush.bf16.msra.mxu0 %v2509
      %3738 = vmatpush.bf16.msra.mxu0 %v2501
      %3739 = vmatpush.bf16.msra.mxu0 %v2493
      %3740 = vmatpush.bf16.msra.mxu0 %v2485
      %3741 = vmatpush.bf16.msra.mxu0 %v2477
      %3742 = vmatmul.bf16.gmra.mxu0 %v796
      %v3743 = vpop.f32.mrf.mxu0
      %v3744 = vadd.f32 %v3730, %v3743
      %v3745 = vpop.f32.mrf.mxu0
      %v3746 = vadd.f32 %v3732, %v3745
      %3747 = vdwg.mxu0
      %3748 = vmatpush.bf16.msra.mxu0 %v2597
      %3749 = vmatpush.bf16.msra.mxu0 %v2589
      %3750 = vmatpush.bf16.msra.mxu0 %v2581
      %3751 = vmatpush.bf16.msra.mxu0 %v2573
      %3752 = vmatpush.bf16.msra.mxu0 %v2565
      %3753 = vmatpush.bf16.msra.mxu0 %v2557
      %3754 = vmatpush.bf16.msra.mxu0 %v2549
      %3755 = vmatpush.bf16.msra.mxu0 %v2541
      %3756 = vmatmul.bf16.gmra.mxu0 %v797
      %v3757 = vpop.f32.mrf.mxu0
      %v3758 = vadd.f32 %v3744, %v3757
      %v3759 = vpop.f32.mrf.mxu0
      %v3760 = vadd.f32 %v3746, %v3759
      %3761 = vdwg.mxu0
      %3762 = vmatpush.bf16.msra.mxu0 %v2661
      %3763 = vmatpush.bf16.msra.mxu0 %v2653
      %3764 = vmatpush.bf16.msra.mxu0 %v2645
      %3765 = vmatpush.bf16.msra.mxu0 %v2637
      %3766 = vmatpush.bf16.msra.mxu0 %v2629
      %3767 = vmatpush.bf16.msra.mxu0 %v2621
      %3768 = vmatpush.bf16.msra.mxu0 %v2613
      %3769 = vmatpush.bf16.msra.mxu0 %v2605
      %3770 = vmatmul.bf16.gmra.mxu0 %v798
      %v3771 = vpop.f32.mrf.mxu0
      %v3772 = vadd.f32 %v3758, %v3771
      %v3773 = vpop.f32.mrf.mxu0
      %v3774 = vadd.f32 %v3760, %v3773
      %3775 = vdwg.mxu0
      %3776 = vmatpush.bf16.msra.mxu0 %v2725
      %3777 = vmatpush.bf16.msra.mxu0 %v2717
      %3778 = vmatpush.bf16.msra.mxu0 %v2709
      %3779 = vmatpush.bf16.msra.mxu0 %v2701
      %3780 = vmatpush.bf16.msra.mxu0 %v2693
      %3781 = vmatpush.bf16.msra.mxu0 %v2685
      %3782 = vmatpush.bf16.msra.mxu0 %v2677
      %3783 = vmatpush.bf16.msra.mxu0 %v2669
      %3784 = vmatmul.bf16.gmra.mxu0 %v799
      %v3785 = vpop.f32.mrf.mxu0
      %v3786 = vadd.f32 %v3772, %v3785
      %v3787 = vpop.f32.mrf.mxu0
      %v3788 = vadd.f32 %v3774, %v3787
      %3789 = vdwg.mxu0
      %3790 = vmatpush.bf16.msra.mxu0 %v2789
      %3791 = vmatpush.bf16.msra.mxu0 %v2781
      %3792 = vmatpush.bf16.msra.mxu0 %v2773
      %3793 = vmatpush.bf16.msra.mxu0 %v2765
      %3794 = vmatpush.bf16.msra.mxu0 %v2757
      %3795 = vmatpush.bf16.msra.mxu0 %v2749
      %3796 = vmatpush.bf16.msra.mxu0 %v2741
      %3797 = vmatpush.bf16.msra.mxu0 %v2733
      %3798 = vmatmul.bf16.gmra.mxu0 %v800
      %v3799 = vpop.f32.mrf.mxu0
      %v3800 = vadd.f32 %v3786, %v3799
      %v3801 = vpop.f32.mrf.mxu0
      %v3802 = vadd.f32 %v3788, %v3801
      %3803 = vdwg.mxu0
      %3804 = vmatpush.bf16.msra.mxu0 %v2853
      %3805 = vmatpush.bf16.msra.mxu0 %v2845
      %3806 = vmatpush.bf16.msra.mxu0 %v2837
      %3807 = vmatpush.bf16.msra.mxu0 %v2829
      %3808 = vmatpush.bf16.msra.mxu0 %v2821
      %3809 = vmatpush.bf16.msra.mxu0 %v2813
      %3810 = vmatpush.bf16.msra.mxu0 %v2805
      %3811 = vmatpush.bf16.msra.mxu0 %v2797
      %3812 = vmatmul.bf16.gmra.mxu0 %v801
      %v3813 = vpop.f32.mrf.mxu0
      %v3814 = vadd.f32 %v3800, %v3813
      %v3815 = vpop.f32.mrf.mxu0
      %v3816 = vadd.f32 %v3802, %v3815
      %3817 = vdwg.mxu0
      %3818 = vmatpush.bf16.msra.mxu0 %v2406
      %3819 = vmatpush.bf16.msra.mxu0 %v2398
      %3820 = vmatpush.bf16.msra.mxu0 %v2390
      %3821 = vmatpush.bf16.msra.mxu0 %v2382
      %3822 = vmatpush.bf16.msra.mxu0 %v2374
      %3823 = vmatpush.bf16.msra.mxu0 %v2366
      %3824 = vmatpush.bf16.msra.mxu0 %v2358
      %3825 = vmatpush.bf16.msra.mxu0 %v2350
      %3826 = vmatmul.bf16.gmra.mxu0 %v794
      %v3827 = vpop.f32.mrf.mxu0
      %v3828 = vadd.f32 0.0, %v3827
      %v3829 = vpop.f32.mrf.mxu0
      %v3830 = vadd.f32 0.0, %v3829
      %3831 = vdwg.mxu0
      %3832 = vmatpush.bf16.msra.mxu0 %v2470
      %3833 = vmatpush.bf16.msra.mxu0 %v2462
      %3834 = vmatpush.bf16.msra.mxu0 %v2454
      %3835 = vmatpush.bf16.msra.mxu0 %v2446
      %3836 = vmatpush.bf16.msra.mxu0 %v2438
      %3837 = vmatpush.bf16.msra.mxu0 %v2430
      %3838 = vmatpush.bf16.msra.mxu0 %v2422
      %3839 = vmatpush.bf16.msra.mxu0 %v2414
      %3840 = vmatmul.bf16.gmra.mxu0 %v795
      %v3841 = vpop.f32.mrf.mxu0
      %v3842 = vadd.f32 %v3828, %v3841
      %v3843 = vpop.f32.mrf.mxu0
      %v3844 = vadd.f32 %v3830, %v3843
      %3845 = vdwg.mxu0
      %3846 = vmatpush.bf16.msra.mxu0 %v2534
      %3847 = vmatpush.bf16.msra.mxu0 %v2526
      %3848 = vmatpush.bf16.msra.mxu0 %v2518
      %3849 = vmatpush.bf16.msra.mxu0 %v2510
      %3850 = vmatpush.bf16.msra.mxu0 %v2502
      %3851 = vmatpush.bf16.msra.mxu0 %v2494
      %3852 = vmatpush.bf16.msra.mxu0 %v2486
      %3853 = vmatpush.bf16.msra.mxu0 %v2478
      %3854 = vmatmul.bf16.gmra.mxu0 %v796
      %v3855 = vpop.f32.mrf.mxu0
      %v3856 = vadd.f32 %v3842, %v3855
      %v3857 = vpop.f32.mrf.mxu0
      %v3858 = vadd.f32 %v3844, %v3857
      %3859 = vdwg.mxu0
      %3860 = vmatpush.bf16.msra.mxu0 %v2598
      %3861 = vmatpush.bf16.msra.mxu0 %v2590
      %3862 = vmatpush.bf16.msra.mxu0 %v2582
      %3863 = vmatpush.bf16.msra.mxu0 %v2574
      %3864 = vmatpush.bf16.msra.mxu0 %v2566
      %3865 = vmatpush.bf16.msra.mxu0 %v2558
      %3866 = vmatpush.bf16.msra.mxu0 %v2550
      %3867 = vmatpush.bf16.msra.mxu0 %v2542
      %3868 = vmatmul.bf16.gmra.mxu0 %v797
      %v3869 = vpop.f32.mrf.mxu0
      %v3870 = vadd.f32 %v3856, %v3869
      %v3871 = vpop.f32.mrf.mxu0
      %v3872 = vadd.f32 %v3858, %v3871
      %3873 = vdwg.mxu0
      %3874 = vmatpush.bf16.msra.mxu0 %v2662
      %3875 = vmatpush.bf16.msra.mxu0 %v2654
      %3876 = vmatpush.bf16.msra.mxu0 %v2646
      %3877 = vmatpush.bf16.msra.mxu0 %v2638
      %3878 = vmatpush.bf16.msra.mxu0 %v2630
      %3879 = vmatpush.bf16.msra.mxu0 %v2622
      %3880 = vmatpush.bf16.msra.mxu0 %v2614
      %3881 = vmatpush.bf16.msra.mxu0 %v2606
      %3882 = vmatmul.bf16.gmra.mxu0 %v798
      %v3883 = vpop.f32.mrf.mxu0
      %v3884 = vadd.f32 %v3870, %v3883
      %v3885 = vpop.f32.mrf.mxu0
      %v3886 = vadd.f32 %v3872, %v3885
      %3887 = vdwg.mxu0
      %3888 = vmatpush.bf16.msra.mxu0 %v2726
      %3889 = vmatpush.bf16.msra.mxu0 %v2718
      %3890 = vmatpush.bf16.msra.mxu0 %v2710
      %3891 = vmatpush.bf16.msra.mxu0 %v2702
      %3892 = vmatpush.bf16.msra.mxu0 %v2694
      %3893 = vmatpush.bf16.msra.mxu0 %v2686
      %3894 = vmatpush.bf16.msra.mxu0 %v2678
      %3895 = vmatpush.bf16.msra.mxu0 %v2670
      %3896 = vmatmul.bf16.gmra.mxu0 %v799
      %v3897 = vpop.f32.mrf.mxu0
      %v3898 = vadd.f32 %v3884, %v3897
      %v3899 = vpop.f32.mrf.mxu0
      %v3900 = vadd.f32 %v3886, %v3899
      %3901 = vdwg.mxu0
      %3902 = vmatpush.bf16.msra.mxu0 %v2790
      %3903 = vmatpush.bf16.msra.mxu0 %v2782
      %3904 = vmatpush.bf16.msra.mxu0 %v2774
      %3905 = vmatpush.bf16.msra.mxu0 %v2766
      %3906 = vmatpush.bf16.msra.mxu0 %v2758
      %3907 = vmatpush.bf16.msra.mxu0 %v2750
      %3908 = vmatpush.bf16.msra.mxu0 %v2742
      %3909 = vmatpush.bf16.msra.mxu0 %v2734
      %3910 = vmatmul.bf16.gmra.mxu0 %v800
      %v3911 = vpop.f32.mrf.mxu0
      %v3912 = vadd.f32 %v3898, %v3911
      %v3913 = vpop.f32.mrf.mxu0
      %v3914 = vadd.f32 %v3900, %v3913
      %3915 = vdwg.mxu0
      %3916 = vmatpush.bf16.msra.mxu0 %v2854
      %3917 = vmatpush.bf16.msra.mxu0 %v2846
      %3918 = vmatpush.bf16.msra.mxu0 %v2838
      %3919 = vmatpush.bf16.msra.mxu0 %v2830
      %3920 = vmatpush.bf16.msra.mxu0 %v2822
      %3921 = vmatpush.bf16.msra.mxu0 %v2814
      %3922 = vmatpush.bf16.msra.mxu0 %v2806
      %3923 = vmatpush.bf16.msra.mxu0 %v2798
      %3924 = vmatmul.bf16.gmra.mxu0 %v801
      %v3925 = vpop.f32.mrf.mxu0
      %v3926 = vadd.f32 %v3912, %v3925
      %v3927 = vpop.f32.mrf.mxu0
      %v3928 = vadd.f32 %v3914, %v3927
      %3929 = vdwg.mxu0
      %3930 = vmatpush.bf16.msra.mxu0 %v2407
      %3931 = vmatpush.bf16.msra.mxu0 %v2399
      %3932 = vmatpush.bf16.msra.mxu0 %v2391
      %3933 = vmatpush.bf16.msra.mxu0 %v2383
      %3934 = vmatpush.bf16.msra.mxu0 %v2375
      %3935 = vmatpush.bf16.msra.mxu0 %v2367
      %3936 = vmatpush.bf16.msra.mxu0 %v2359
      %3937 = vmatpush.bf16.msra.mxu0 %v2351
      %3938 = vmatmul.bf16.gmra.mxu0 %v794
      %v3939 = vpop.f32.mrf.mxu0
      %v3940 = vadd.f32 0.0, %v3939
      %v3941 = vpop.f32.mrf.mxu0
      %v3942 = vadd.f32 0.0, %v3941
      %3943 = vdwg.mxu0
      %3944 = vmatpush.bf16.msra.mxu0 %v2471
      %3945 = vmatpush.bf16.msra.mxu0 %v2463
      %3946 = vmatpush.bf16.msra.mxu0 %v2455
      %3947 = vmatpush.bf16.msra.mxu0 %v2447
      %3948 = vmatpush.bf16.msra.mxu0 %v2439
      %3949 = vmatpush.bf16.msra.mxu0 %v2431
      %3950 = vmatpush.bf16.msra.mxu0 %v2423
      %3951 = vmatpush.bf16.msra.mxu0 %v2415
      %3952 = vmatmul.bf16.gmra.mxu0 %v795
      %v3953 = vpop.f32.mrf.mxu0
      %v3954 = vadd.f32 %v3940, %v3953
      %v3955 = vpop.f32.mrf.mxu0
      %v3956 = vadd.f32 %v3942, %v3955
      %3957 = vdwg.mxu0
      %3958 = vmatpush.bf16.msra.mxu0 %v2535
      %3959 = vmatpush.bf16.msra.mxu0 %v2527
      %3960 = vmatpush.bf16.msra.mxu0 %v2519
      %3961 = vmatpush.bf16.msra.mxu0 %v2511
      %3962 = vmatpush.bf16.msra.mxu0 %v2503
      %3963 = vmatpush.bf16.msra.mxu0 %v2495
      %3964 = vmatpush.bf16.msra.mxu0 %v2487
      %3965 = vmatpush.bf16.msra.mxu0 %v2479
      %3966 = vmatmul.bf16.gmra.mxu0 %v796
      %v3967 = vpop.f32.mrf.mxu0
      %v3968 = vadd.f32 %v3954, %v3967
      %v3969 = vpop.f32.mrf.mxu0
      %v3970 = vadd.f32 %v3956, %v3969
      %3971 = vdwg.mxu0
      %3972 = vmatpush.bf16.msra.mxu0 %v2599
      %3973 = vmatpush.bf16.msra.mxu0 %v2591
      %3974 = vmatpush.bf16.msra.mxu0 %v2583
      %3975 = vmatpush.bf16.msra.mxu0 %v2575
      %3976 = vmatpush.bf16.msra.mxu0 %v2567
      %3977 = vmatpush.bf16.msra.mxu0 %v2559
      %3978 = vmatpush.bf16.msra.mxu0 %v2551
      %3979 = vmatpush.bf16.msra.mxu0 %v2543
      %3980 = vmatmul.bf16.gmra.mxu0 %v797
      %v3981 = vpop.f32.mrf.mxu0
      %v3982 = vadd.f32 %v3968, %v3981
      %v3983 = vpop.f32.mrf.mxu0
      %v3984 = vadd.f32 %v3970, %v3983
      %3985 = vdwg.mxu0
      %3986 = vmatpush.bf16.msra.mxu0 %v2663
      %3987 = vmatpush.bf16.msra.mxu0 %v2655
      %3988 = vmatpush.bf16.msra.mxu0 %v2647
      %3989 = vmatpush.bf16.msra.mxu0 %v2639
      %3990 = vmatpush.bf16.msra.mxu0 %v2631
      %3991 = vmatpush.bf16.msra.mxu0 %v2623
      %3992 = vmatpush.bf16.msra.mxu0 %v2615
      %3993 = vmatpush.bf16.msra.mxu0 %v2607
      %3994 = vmatmul.bf16.gmra.mxu0 %v798
      %v3995 = vpop.f32.mrf.mxu0
      %v3996 = vadd.f32 %v3982, %v3995
      %v3997 = vpop.f32.mrf.mxu0
      %v3998 = vadd.f32 %v3984, %v3997
      %3999 = vdwg.mxu0
      %4000 = vmatpush.bf16.msra.mxu0 %v2727
      %4001 = vmatpush.bf16.msra.mxu0 %v2719
      %4002 = vmatpush.bf16.msra.mxu0 %v2711
      %4003 = vmatpush.bf16.msra.mxu0 %v2703
      %4004 = vmatpush.bf16.msra.mxu0 %v2695
      %4005 = vmatpush.bf16.msra.mxu0 %v2687
      %4006 = vmatpush.bf16.msra.mxu0 %v2679
      %4007 = vmatpush.bf16.msra.mxu0 %v2671
      %4008 = vmatmul.bf16.gmra.mxu0 %v799
      %v4009 = vpop.f32.mrf.mxu0
      %v4010 = vadd.f32 %v3996, %v4009
      %v4011 = vpop.f32.mrf.mxu0
      %v4012 = vadd.f32 %v3998, %v4011
      %4013 = vdwg.mxu0
      %4014 = vmatpush.bf16.msra.mxu0 %v2791
      %4015 = vmatpush.bf16.msra.mxu0 %v2783
      %4016 = vmatpush.bf16.msra.mxu0 %v2775
      %4017 = vmatpush.bf16.msra.mxu0 %v2767
      %4018 = vmatpush.bf16.msra.mxu0 %v2759
      %4019 = vmatpush.bf16.msra.mxu0 %v2751
      %4020 = vmatpush.bf16.msra.mxu0 %v2743
      %4021 = vmatpush.bf16.msra.mxu0 %v2735
      %4022 = vmatmul.bf16.gmra.mxu0 %v800
      %v4023 = vpop.f32.mrf.mxu0
      %v4024 = vadd.f32 %v4010, %v4023
      %v4025 = vpop.f32.mrf.mxu0
      %v4026 = vadd.f32 %v4012, %v4025
      %4027 = vdwg.mxu0
      %4028 = vmatpush.bf16.msra.mxu0 %v2855
      %4029 = vmatpush.bf16.msra.mxu0 %v2847
      %4030 = vmatpush.bf16.msra.mxu0 %v2839
      %4031 = vmatpush.bf16.msra.mxu0 %v2831
      %4032 = vmatpush.bf16.msra.mxu0 %v2823
      %4033 = vmatpush.bf16.msra.mxu0 %v2815
      %4034 = vmatpush.bf16.msra.mxu0 %v2807
      %4035 = vmatpush.bf16.msra.mxu0 %v2799
      %4036 = vmatmul.bf16.gmra.mxu0 %v801
      %v4037 = vpop.f32.mrf.mxu0
      %v4038 = vadd.f32 %v4024, %v4037
      %v4039 = vpop.f32.mrf.mxu0
      %v4040 = vadd.f32 %v4026, %v4039
      %4041 = vdwg.mxu0
      %4042 = vmatpush.bf16.msra.mxu0 %v2408
      %4043 = vmatpush.bf16.msra.mxu0 %v2400
      %4044 = vmatpush.bf16.msra.mxu0 %v2392
      %4045 = vmatpush.bf16.msra.mxu0 %v2384
      %4046 = vmatpush.bf16.msra.mxu0 %v2376
      %4047 = vmatpush.bf16.msra.mxu0 %v2368
      %4048 = vmatpush.bf16.msra.mxu0 %v2360
      %4049 = vmatpush.bf16.msra.mxu0 %v2352
      %4050 = vmatmul.bf16.gmra.mxu0 %v794
      %v4051 = vpop.f32.mrf.mxu0
      %v4052 = vadd.f32 0.0, %v4051
      %v4053 = vpop.f32.mrf.mxu0
      %v4054 = vadd.f32 0.0, %v4053
      %4055 = vdwg.mxu0
      %4056 = vmatpush.bf16.msra.mxu0 %v2472
      %4057 = vmatpush.bf16.msra.mxu0 %v2464
      %4058 = vmatpush.bf16.msra.mxu0 %v2456
      %4059 = vmatpush.bf16.msra.mxu0 %v2448
      %4060 = vmatpush.bf16.msra.mxu0 %v2440
      %4061 = vmatpush.bf16.msra.mxu0 %v2432
      %4062 = vmatpush.bf16.msra.mxu0 %v2424
      %4063 = vmatpush.bf16.msra.mxu0 %v2416
      %4064 = vmatmul.bf16.gmra.mxu0 %v795
      %v4065 = vpop.f32.mrf.mxu0
      %v4066 = vadd.f32 %v4052, %v4065
      %v4067 = vpop.f32.mrf.mxu0
      %v4068 = vadd.f32 %v4054, %v4067
      %4069 = vdwg.mxu0
      %4070 = vmatpush.bf16.msra.mxu0 %v2536
      %4071 = vmatpush.bf16.msra.mxu0 %v2528
      %4072 = vmatpush.bf16.msra.mxu0 %v2520
      %4073 = vmatpush.bf16.msra.mxu0 %v2512
      %4074 = vmatpush.bf16.msra.mxu0 %v2504
      %4075 = vmatpush.bf16.msra.mxu0 %v2496
      %4076 = vmatpush.bf16.msra.mxu0 %v2488
      %4077 = vmatpush.bf16.msra.mxu0 %v2480
      %4078 = vmatmul.bf16.gmra.mxu0 %v796
      %v4079 = vpop.f32.mrf.mxu0
      %v4080 = vadd.f32 %v4066, %v4079
      %v4081 = vpop.f32.mrf.mxu0
      %v4082 = vadd.f32 %v4068, %v4081
      %4083 = vdwg.mxu0
      %4084 = vmatpush.bf16.msra.mxu0 %v2600
      %4085 = vmatpush.bf16.msra.mxu0 %v2592
      %4086 = vmatpush.bf16.msra.mxu0 %v2584
      %4087 = vmatpush.bf16.msra.mxu0 %v2576
      %4088 = vmatpush.bf16.msra.mxu0 %v2568
      %4089 = vmatpush.bf16.msra.mxu0 %v2560
      %4090 = vmatpush.bf16.msra.mxu0 %v2552
      %4091 = vmatpush.bf16.msra.mxu0 %v2544
      %4092 = vmatmul.bf16.gmra.mxu0 %v797
      %v4093 = vpop.f32.mrf.mxu0
      %v4094 = vadd.f32 %v4080, %v4093
      %v4095 = vpop.f32.mrf.mxu0
      %v4096 = vadd.f32 %v4082, %v4095
      %4097 = vdwg.mxu0
      %4098 = vmatpush.bf16.msra.mxu0 %v2664
      %4099 = vmatpush.bf16.msra.mxu0 %v2656
      %4100 = vmatpush.bf16.msra.mxu0 %v2648
      %4101 = vmatpush.bf16.msra.mxu0 %v2640
      %4102 = vmatpush.bf16.msra.mxu0 %v2632
      %4103 = vmatpush.bf16.msra.mxu0 %v2624
      %4104 = vmatpush.bf16.msra.mxu0 %v2616
      %4105 = vmatpush.bf16.msra.mxu0 %v2608
      %4106 = vmatmul.bf16.gmra.mxu0 %v798
      %v4107 = vpop.f32.mrf.mxu0
      %v4108 = vadd.f32 %v4094, %v4107
      %v4109 = vpop.f32.mrf.mxu0
      %v4110 = vadd.f32 %v4096, %v4109
      %4111 = vdwg.mxu0
      %4112 = vmatpush.bf16.msra.mxu0 %v2728
      %4113 = vmatpush.bf16.msra.mxu0 %v2720
      %4114 = vmatpush.bf16.msra.mxu0 %v2712
      %4115 = vmatpush.bf16.msra.mxu0 %v2704
      %4116 = vmatpush.bf16.msra.mxu0 %v2696
      %4117 = vmatpush.bf16.msra.mxu0 %v2688
      %4118 = vmatpush.bf16.msra.mxu0 %v2680
      %4119 = vmatpush.bf16.msra.mxu0 %v2672
      %4120 = vmatmul.bf16.gmra.mxu0 %v799
      %v4121 = vpop.f32.mrf.mxu0
      %v4122 = vadd.f32 %v4108, %v4121
      %v4123 = vpop.f32.mrf.mxu0
      %v4124 = vadd.f32 %v4110, %v4123
      %4125 = vdwg.mxu0
      %4126 = vmatpush.bf16.msra.mxu0 %v2792
      %4127 = vmatpush.bf16.msra.mxu0 %v2784
      %4128 = vmatpush.bf16.msra.mxu0 %v2776
      %4129 = vmatpush.bf16.msra.mxu0 %v2768
      %4130 = vmatpush.bf16.msra.mxu0 %v2760
      %4131 = vmatpush.bf16.msra.mxu0 %v2752
      %4132 = vmatpush.bf16.msra.mxu0 %v2744
      %4133 = vmatpush.bf16.msra.mxu0 %v2736
      %4134 = vmatmul.bf16.gmra.mxu0 %v800
      %v4135 = vpop.f32.mrf.mxu0
      %v4136 = vadd.f32 %v4122, %v4135
      %v4137 = vpop.f32.mrf.mxu0
      %v4138 = vadd.f32 %v4124, %v4137
      %4139 = vdwg.mxu0
      %4140 = vmatpush.bf16.msra.mxu0 %v2856
      %4141 = vmatpush.bf16.msra.mxu0 %v2848
      %4142 = vmatpush.bf16.msra.mxu0 %v2840
      %4143 = vmatpush.bf16.msra.mxu0 %v2832
      %4144 = vmatpush.bf16.msra.mxu0 %v2824
      %4145 = vmatpush.bf16.msra.mxu0 %v2816
      %4146 = vmatpush.bf16.msra.mxu0 %v2808
      %4147 = vmatpush.bf16.msra.mxu0 %v2800
      %4148 = vmatmul.bf16.gmra.mxu0 %v801
      %v4149 = vpop.f32.mrf.mxu0
      %v4150 = vadd.f32 %v4136, %v4149
      %v4151 = vpop.f32.mrf.mxu0
      %v4152 = vadd.f32 %v4138, %v4151
      %4153 = vdwg.mxu0
      %4154 = vmatpush.bf16.msra.mxu0 %v2409
      %4155 = vmatpush.bf16.msra.mxu0 %v2401
      %4156 = vmatpush.bf16.msra.mxu0 %v2393
      %4157 = vmatpush.bf16.msra.mxu0 %v2385
      %4158 = vmatpush.bf16.msra.mxu0 %v2377
      %4159 = vmatpush.bf16.msra.mxu0 %v2369
      %4160 = vmatpush.bf16.msra.mxu0 %v2361
      %4161 = vmatpush.bf16.msra.mxu0 %v2353
      %4162 = vmatmul.bf16.gmra.mxu0 %v794
      %v4163 = vpop.f32.mrf.mxu0
      %v4164 = vadd.f32 0.0, %v4163
      %v4165 = vpop.f32.mrf.mxu0
      %v4166 = vadd.f32 0.0, %v4165
      %4167 = vdwg.mxu0
      %4168 = vmatpush.bf16.msra.mxu0 %v2473
      %4169 = vmatpush.bf16.msra.mxu0 %v2465
      %4170 = vmatpush.bf16.msra.mxu0 %v2457
      %4171 = vmatpush.bf16.msra.mxu0 %v2449
      %4172 = vmatpush.bf16.msra.mxu0 %v2441
      %4173 = vmatpush.bf16.msra.mxu0 %v2433
      %4174 = vmatpush.bf16.msra.mxu0 %v2425
      %4175 = vmatpush.bf16.msra.mxu0 %v2417
      %4176 = vmatmul.bf16.gmra.mxu0 %v795
      %v4177 = vpop.f32.mrf.mxu0
      %v4178 = vadd.f32 %v4164, %v4177
      %v4179 = vpop.f32.mrf.mxu0
      %v4180 = vadd.f32 %v4166, %v4179
      %4181 = vdwg.mxu0
      %4182 = vmatpush.bf16.msra.mxu0 %v2537
      %4183 = vmatpush.bf16.msra.mxu0 %v2529
      %4184 = vmatpush.bf16.msra.mxu0 %v2521
      %4185 = vmatpush.bf16.msra.mxu0 %v2513
      %4186 = vmatpush.bf16.msra.mxu0 %v2505
      %4187 = vmatpush.bf16.msra.mxu0 %v2497
      %4188 = vmatpush.bf16.msra.mxu0 %v2489
      %4189 = vmatpush.bf16.msra.mxu0 %v2481
      %4190 = vmatmul.bf16.gmra.mxu0 %v796
      %v4191 = vpop.f32.mrf.mxu0
      %v4192 = vadd.f32 %v4178, %v4191
      %v4193 = vpop.f32.mrf.mxu0
      %v4194 = vadd.f32 %v4180, %v4193
      %4195 = vdwg.mxu0
      %4196 = vmatpush.bf16.msra.mxu0 %v2601
      %4197 = vmatpush.bf16.msra.mxu0 %v2593
      %4198 = vmatpush.bf16.msra.mxu0 %v2585
      %4199 = vmatpush.bf16.msra.mxu0 %v2577
      %4200 = vmatpush.bf16.msra.mxu0 %v2569
      %4201 = vmatpush.bf16.msra.mxu0 %v2561
      %4202 = vmatpush.bf16.msra.mxu0 %v2553
      %4203 = vmatpush.bf16.msra.mxu0 %v2545
      %4204 = vmatmul.bf16.gmra.mxu0 %v797
      %v4205 = vpop.f32.mrf.mxu0
      %v4206 = vadd.f32 %v4192, %v4205
      %v4207 = vpop.f32.mrf.mxu0
      %v4208 = vadd.f32 %v4194, %v4207
      %4209 = vdwg.mxu0
      %4210 = vmatpush.bf16.msra.mxu0 %v2665
      %4211 = vmatpush.bf16.msra.mxu0 %v2657
      %4212 = vmatpush.bf16.msra.mxu0 %v2649
      %4213 = vmatpush.bf16.msra.mxu0 %v2641
      %4214 = vmatpush.bf16.msra.mxu0 %v2633
      %4215 = vmatpush.bf16.msra.mxu0 %v2625
      %4216 = vmatpush.bf16.msra.mxu0 %v2617
      %4217 = vmatpush.bf16.msra.mxu0 %v2609
      %4218 = vmatmul.bf16.gmra.mxu0 %v798
      %v4219 = vpop.f32.mrf.mxu0
      %v4220 = vadd.f32 %v4206, %v4219
      %v4221 = vpop.f32.mrf.mxu0
      %v4222 = vadd.f32 %v4208, %v4221
      %4223 = vdwg.mxu0
      %4224 = vmatpush.bf16.msra.mxu0 %v2729
      %4225 = vmatpush.bf16.msra.mxu0 %v2721
      %4226 = vmatpush.bf16.msra.mxu0 %v2713
      %4227 = vmatpush.bf16.msra.mxu0 %v2705
      %4228 = vmatpush.bf16.msra.mxu0 %v2697
      %4229 = vmatpush.bf16.msra.mxu0 %v2689
      %4230 = vmatpush.bf16.msra.mxu0 %v2681
      %4231 = vmatpush.bf16.msra.mxu0 %v2673
      %4232 = vmatmul.bf16.gmra.mxu0 %v799
      %v4233 = vpop.f32.mrf.mxu0
      %v4234 = vadd.f32 %v4220, %v4233
      %v4235 = vpop.f32.mrf.mxu0
      %v4236 = vadd.f32 %v4222, %v4235
      %4237 = vdwg.mxu0
      %4238 = vmatpush.bf16.msra.mxu0 %v2793
      %4239 = vmatpush.bf16.msra.mxu0 %v2785
      %4240 = vmatpush.bf16.msra.mxu0 %v2777
      %4241 = vmatpush.bf16.msra.mxu0 %v2769
      %4242 = vmatpush.bf16.msra.mxu0 %v2761
      %4243 = vmatpush.bf16.msra.mxu0 %v2753
      %4244 = vmatpush.bf16.msra.mxu0 %v2745
      %4245 = vmatpush.bf16.msra.mxu0 %v2737
      %4246 = vmatmul.bf16.gmra.mxu0 %v800
      %v4247 = vpop.f32.mrf.mxu0
      %v4248 = vadd.f32 %v4234, %v4247
      %v4249 = vpop.f32.mrf.mxu0
      %v4250 = vadd.f32 %v4236, %v4249
      %4251 = vdwg.mxu0
      %4252 = vmatpush.bf16.msra.mxu0 %v2857
      %4253 = vmatpush.bf16.msra.mxu0 %v2849
      %4254 = vmatpush.bf16.msra.mxu0 %v2841
      %4255 = vmatpush.bf16.msra.mxu0 %v2833
      %4256 = vmatpush.bf16.msra.mxu0 %v2825
      %4257 = vmatpush.bf16.msra.mxu0 %v2817
      %4258 = vmatpush.bf16.msra.mxu0 %v2809
      %4259 = vmatpush.bf16.msra.mxu0 %v2801
      %4260 = vmatmul.bf16.gmra.mxu0 %v801
      %v4261 = vpop.f32.mrf.mxu0
      %v4262 = vadd.f32 %v4248, %v4261
      %v4263 = vpop.f32.mrf.mxu0
      %v4264 = vadd.f32 %v4250, %v4263
      %4265 = vdwg.mxu0
      %v4266 = vadd.f32 %v3478, %v3590
      %v4267 = vadd.f32 %v4266, %v3702
      %v4268 = vadd.f32 %v4267, %v3814
      %v4269 = vadd.f32 %v4268, %v3926
      %v4270 = vadd.f32 %v4269, %v4038
      %v4271 = vadd.f32 %v4270, %v4150
      %v4272 = vadd.f32 %v4271, %v4262
      %4273 = vadd.xlane.f32.xlu0 %v4272
      %v4274 = vpop.xlane.xlu0 %4273
      %v4275 = vadd.f32 %v3480, %v3592
      %v4276 = vadd.f32 %v4275, %v3704
      %v4277 = vadd.f32 %v4276, %v3816
      %v4278 = vadd.f32 %v4277, %v3928
      %v4279 = vadd.f32 %v4278, %v4040
      %v4280 = vadd.f32 %v4279, %v4152
      %v4281 = vadd.f32 %v4280, %v4264
      %4282 = vadd.xlane.f32.xlu0 %v4281
      %v4283 = vpop.xlane.xlu0 %4282
      %v4284 = vmul.f32 %v4274, 0.0009765625
      %v4285 = vmul.f32 %v4283, 0.0009765625
      %v4286 = vsub.f32 %v3478, %v4284
      %v4287 = vsub.f32 %v3590, %v4284
      %v4288 = vsub.f32 %v3702, %v4284
      %v4289 = vsub.f32 %v3814, %v4284
      %v4290 = vsub.f32 %v3926, %v4284
      %v4291 = vsub.f32 %v4038, %v4284
      %v4292 = vsub.f32 %v4150, %v4284
      %v4293 = vsub.f32 %v4262, %v4284
      %v4294 = vsub.f32 %v3480, %v4285
      %v4295 = vsub.f32 %v3592, %v4285
      %v4296 = vsub.f32 %v3704, %v4285
      %v4297 = vsub.f32 %v3816, %v4285
      %v4298 = vsub.f32 %v3928, %v4285
      %v4299 = vsub.f32 %v4040, %v4285
      %v4300 = vsub.f32 %v4152, %v4285
      %v4301 = vsub.f32 %v4264, %v4285
      %v4302 = vmul.f32 %v4286, %v4286
      %v4303 = vmul.f32 %v4287, %v4287
      %v4304 = vmul.f32 %v4288, %v4288
      %v4305 = vmul.f32 %v4289, %v4289
      %v4306 = vmul.f32 %v4290, %v4290
      %v4307 = vmul.f32 %v4291, %v4291
      %v4308 = vmul.f32 %v4292, %v4292
      %v4309 = vmul.f32 %v4293, %v4293
      %v4310 = vmul.f32 %v4294, %v4294
      %v4311 = vmul.f32 %v4295, %v4295
      %v4312 = vmul.f32 %v4296, %v4296
      %v4313 = vmul.f32 %v4297, %v4297
      %v4314 = vmul.f32 %v4298, %v4298
      %v4315 = vmul.f32 %v4299, %v4299
      %v4316 = vmul.f32 %v4300, %v4300
      %v4317 = vmul.f32 %v4301, %v4301
      %v4318 = vadd.f32 %v4302, %v4303
      %v4319 = vadd.f32 %v4318, %v4304
      %v4320 = vadd.f32 %v4319, %v4305
      %v4321 = vadd.f32 %v4320, %v4306
      %v4322 = vadd.f32 %v4321, %v4307
      %v4323 = vadd.f32 %v4322, %v4308
      %v4324 = vadd.f32 %v4323, %v4309
      %4325 = vadd.xlane.f32.xlu0 %v4324
      %v4326 = vpop.xlane.xlu0 %4325
      %v4327 = vadd.f32 %v4310, %v4311
      %v4328 = vadd.f32 %v4327, %v4312
      %v4329 = vadd.f32 %v4328, %v4313
      %v4330 = vadd.f32 %v4329, %v4314
      %v4331 = vadd.f32 %v4330, %v4315
      %v4332 = vadd.f32 %v4331, %v4316
      %v4333 = vadd.f32 %v4332, %v4317
      %4334 = vadd.xlane.f32.xlu0 %v4333
      %v4335 = vpop.xlane.xlu0 %4334
      %v4336 = vmul.f32 %v4326, 0.0009765625
      %v4337 = vmul.f32 %v4335, 0.0009765625
      %v4338 = vld [vmem:[%s235] sm:$0xff]
      %v4339 = vld [vmem:[%s235 + $0x8] sm:$0xff]
      %v4340 = vadd.f32 %v4336, 1e-05
      %v4341 = vadd.f32 %v4337, 1e-05
      %v4342 = vrsqrt.pop %v4340
      %v4343 = vmul.f32 %v4342, %v4340
      %v4344 = vmul.f32 %v4343, %v4342
      %v4345 = vmul.f32 0.5, %v4344
      %v4346 = vsub.f32 1.5, %v4345
      %v4347 = vmul.f32 %v4342, %v4346
      %vm4348 = vweird.f32 %v4340
      %vm4349 = vweird.f32 %v4342
      %vm4350 = vmor %vm4348, %vm4349
      %v4351 = vsel %vm4350, %v4342, %v4347
      %v4352 = vrsqrt.pop %v4341
      %v4353 = vmul.f32 %v4352, %v4341
      %v4354 = vmul.f32 %v4353, %v4352
      %v4355 = vmul.f32 0.5, %v4354
      %v4356 = vsub.f32 1.5, %v4355
      %v4357 = vmul.f32 %v4352, %v4356
      %vm4358 = vweird.f32 %v4341
      %vm4359 = vweird.f32 %v4352
      %vm4360 = vmor %vm4358, %vm4359
      %v4361 = vsel %vm4360, %v4352, %v4357
      %v4362 = vmul.f32 %v4338, %v4351
      %v4363 = vmul.f32 %v4339, %v4361
      %v4364 = vld [vmem:[%s241] sm:$0xff]
      %v4365 = vld [vmem:[%s241 + $0x8] sm:$0xff]
      %v4366 = vmul.f32 %v4284, %v4362
      %v4367 = vmul.f32 %v4285, %v4363
      %v4368 = vsub.f32 %v4364, %v4366
      %v4369 = vsub.f32 %v4365, %v4367
      %4371 = vset.pattern.permute.xlu0 0
      %4372 = vperm.xlu0 %4371, %v4362
      %v4373 = vpop.permute.xlu0 %4372
      %4376 = vset.pattern.permute.xlu0 0
      %4377 = vperm.xlu0 %4376, %v4363
      %v4378 = vpop.permute.xlu0 %4377
      %v4380 = vmul.f32 %v3478, %v4373
      %v4381 = vmul.f32 %v3590, %v4373
      %v4382 = vmul.f32 %v3702, %v4373
      %v4383 = vmul.f32 %v3814, %v4373
      %v4384 = vmul.f32 %v3926, %v4373
      %v4385 = vmul.f32 %v4038, %v4373
      %v4386 = vmul.f32 %v4150, %v4373
      %v4387 = vmul.f32 %v4262, %v4373
      %v4388 = vmul.f32 %v3480, %v4378
      %v4389 = vmul.f32 %v3592, %v4378
      %v4390 = vmul.f32 %v3704, %v4378
      %v4391 = vmul.f32 %v3816, %v4378
      %v4392 = vmul.f32 %v3928, %v4378
      %v4393 = vmul.f32 %v4040, %v4378
      %v4394 = vmul.f32 %v4152, %v4378
      %v4395 = vmul.f32 %v4264, %v4378
      %4397 = vset.pattern.permute.xlu0 0
      %4398 = vperm.xlu0 %4397, %v4368
      %v4399 = vpop.permute.xlu0 %4398
      %4402 = vset.pattern.permute.xlu0 0
      %4403 = vperm.xlu0 %4402, %v4369
      %v4404 = vpop.permute.xlu0 %4403
      %v4406 = vadd.f32 %v4380, %v4399
      %v4407 = vadd.f32 %v4381, %v4399
      %v4408 = vadd.f32 %v4382, %v4399
      %v4409 = vadd.f32 %v4383, %v4399
      %v4410 = vadd.f32 %v4384, %v4399
      %v4411 = vadd.f32 %v4385, %v4399
      %v4412 = vadd.f32 %v4386, %v4399
      %v4413 = vadd.f32 %v4387, %v4399
      %v4414 = vadd.f32 %v4388, %v4404
      %v4415 = vadd.f32 %v4389, %v4404
      %v4416 = vadd.f32 %v4390, %v4404
      %v4417 = vadd.f32 %v4391, %v4404
      %v4418 = vadd.f32 %v4392, %v4404
      %v4419 = vadd.f32 %v4393, %v4404
      %v4420 = vadd.f32 %v4394, %v4404
      %v4421 = vadd.f32 %v4395, %v4404
      %vm4422 = vcmp.ge.f32.partialorder %v4406, 0.0
      %vm4423 = vcmp.ge.f32.partialorder %v4407, 0.0
      %vm4424 = vcmp.ge.f32.partialorder %v4408, 0.0
      %vm4425 = vcmp.ge.f32.partialorder %v4409, 0.0
      %vm4426 = vcmp.ge.f32.partialorder %v4410, 0.0
      %vm4427 = vcmp.ge.f32.partialorder %v4411, 0.0
      %vm4428 = vcmp.ge.f32.partialorder %v4412, 0.0
      %vm4429 = vcmp.ge.f32.partialorder %v4413, 0.0
      %vm4430 = vcmp.ge.f32.partialorder %v4414, 0.0
      %vm4431 = vcmp.ge.f32.partialorder %v4415, 0.0
      %vm4432 = vcmp.ge.f32.partialorder %v4416, 0.0
      %vm4433 = vcmp.ge.f32.partialorder %v4417, 0.0
      %vm4434 = vcmp.ge.f32.partialorder %v4418, 0.0
      %vm4435 = vcmp.ge.f32.partialorder %v4419, 0.0
      %vm4436 = vcmp.ge.f32.partialorder %v4420, 0.0
      %vm4437 = vcmp.ge.f32.partialorder %v4421, 0.0
      %v4438 = vmul.f32 %v4406, 0.2
      %v4439 = vmul.f32 %v4407, 0.2
      %v4440 = vmul.f32 %v4408, 0.2
      %v4441 = vmul.f32 %v4409, 0.2
      %v4442 = vmul.f32 %v4410, 0.2
      %v4443 = vmul.f32 %v4411, 0.2
      %v4444 = vmul.f32 %v4412, 0.2
      %v4445 = vmul.f32 %v4413, 0.2
      %v4446 = vmul.f32 %v4414, 0.2
      %v4447 = vmul.f32 %v4415, 0.2
      %v4448 = vmul.f32 %v4416, 0.2
      %v4449 = vmul.f32 %v4417, 0.2
      %v4450 = vmul.f32 %v4418, 0.2
      %v4451 = vmul.f32 %v4419, 0.2
      %v4452 = vmul.f32 %v4420, 0.2
      %v4453 = vmul.f32 %v4421, 0.2
      %v4454 = vsel %vm4422, %v4406, %v4438
      %v4455 = vsel %vm4423, %v4407, %v4439
      %v4456 = vsel %vm4424, %v4408, %v4440
      %v4457 = vsel %vm4425, %v4409, %v4441
      %v4458 = vsel %vm4426, %v4410, %v4442
      %v4459 = vsel %vm4427, %v4411, %v4443
      %v4460 = vsel %vm4428, %v4412, %v4444
      %v4461 = vsel %vm4429, %v4413, %v4445
      %v4462 = vsel %vm4430, %v4414, %v4446
      %v4463 = vsel %vm4431, %v4415, %v4447
      %v4464 = vsel %vm4432, %v4416, %v4448
      %v4465 = vsel %vm4433, %v4417, %v4449
      %v4466 = vsel %vm4434, %v4418, %v4450
      %v4467 = vsel %vm4435, %v4419, %v4451
      %v4468 = vsel %vm4436, %v4420, %v4452
      %v4469 = vsel %vm4437, %v4421, %v4453
      %v4470 = vpack.c.bf16 %v4455, %v4454
      %v4471 = vpack.c.bf16 %v4457, %v4456
      %v4472 = vpack.c.bf16 %v4459, %v4458
      %v4473 = vpack.c.bf16 %v4461, %v4460
      %v4474 = vpack.c.bf16 %v4463, %v4462
      %v4475 = vpack.c.bf16 %v4465, %v4464
      %v4476 = vpack.c.bf16 %v4467, %v4466
      %v4477 = vpack.c.bf16 %v4469, %v4468
      %4478 = vst [vmem:[%s248] sm:$0xff] %v4470
      %4479 = vst [vmem:[%s248 + $0x8] sm:$0xff] %v4471
      %4480 = vst [vmem:[%s248 + $0x10] sm:$0xff] %v4472
      %4481 = vst [vmem:[%s248 + $0x18] sm:$0xff] %v4473
      %4482 = vst [vmem:[%s248 + $0x20] sm:$0xff] %v4474
      %4483 = vst [vmem:[%s248 + $0x28] sm:$0xff] %v4475
      %4484 = vst [vmem:[%s248 + $0x30] sm:$0xff] %v4476
      %4485 = vst [vmem:[%s248 + $0x38] sm:$0xff] %v4477
      %s4486 = smul.u32 2, %s15
      %p4487 = scmp.lt.s32.totalorder %s4486, 3
      %s4488 = scalar_select %p4487, %s4486, 3
      %s4489 = smul.addr %s4488, 8
      %s4490 = smul.addr %s4489, 4
      %s4491 = scalar_lea.vmem %s4, %s4490
      // Predicated region
      $region37: #{discriminator_forward.4} parent=35 // pred_check
        %p4492 = pneg %p132
      $region38: #{discriminator_forward.4} parent=35 // pred_check_branch
        %4494 = sbr.rel (%p4492) target = $region40
      $region39: #{discriminator_forward.4} parent=35 // pred_region
        %s4495 = smul.u32 2, %s15
      $region40: #{discriminator_forward.4} parent=35 // pred_fallthru
        _
    $region36: #{discriminator_forward.4} parent=5 // pred_fallthru
      _
    %p4496 = scmp.le.s32.totalorder 2, %s10
    // Predicated region
    $region41: #{discriminator_forward.4} parent=5 // pred_check
      %p4497 = pneg %p4496
    $region42: #{discriminator_forward.4} parent=5 // pred_check_branch
      %4499 = sbr.rel (%p4497) target = $region44
    $region43: #{discriminator_forward.4} parent=5 // pred_region
      %s4500 = ssub.s32 %s10, 2
      // Predicated region
      $region45: #{discriminator_forward.4} parent=43 // pred_check
        %p4501 = pneg %p138
      $region46: #{discriminator_forward.4} parent=43 // pred_check_branch
        %4503 = sbr.rel (%p4501) target = $region48
      $region47: #{discriminator_forward.4} parent=43 // pred_region
        %s4504 = smul.u32 2, %s16
        %p4505 = scmp.lt.s32.totalorder %s4504, 3
        %s4506 = scalar_select %p4505, %s4504, 3
        %s4507 = smul.addr %s4506, 8
        %s4508 = smul.addr %s4507, 4
        %s4509 = scalar_lea.vmem %s4, %s4508
      $region48: #{discriminator_forward.4} parent=43 // pred_fallthru
        _
    $region44: #{discriminator_forward.4} parent=5 // pred_fallthru
      _
  $region6: #{discriminator_forward.4} parent=0 // loop_footer
    %s14 = sadd.s32 1, %s10
  $region7: #{discriminator_forward.4} parent=0 // loop_footer_branch
    %9 = sbr.rel target = $region3
  $region8: #{discriminator_forward.4} parent=0 // loop_exit
    _

// kernel: discriminator_forward.5
$region0: #{discriminator_forward.5}
  #allocation0 [shape = 'u32[]', space=smem, size = 0x4, offset = 0x4, fixed_abs, tag = 'smem constant byte address 0x4 - core index']
  #allocation1 [shape = 'u32[72,128]{1,0:T(1,128)}', space=vmem, size = 0x9000, scoped, tag = 'internal scratch']
  %s0 = inlined_call_operand.vmem [shape: bf16[64,2048], index: 0, kind: input, shape index: {}]
  %s1 = inlined_call_operand.vmem [shape: bf16[2048,128], index: 1, kind: input, shape index: {}]
  %s2 = inlined_call_operand.vmem [shape: f32[64,1], index: 2, kind: input, shape index: {}]
  %s3 = inlined_call_operand.vmem [shape: f32[64,1], index: 3, kind: input, shape index: {}]
  %s4 = inlined_call_operand.vmem [shape: f32[64,64], index: 4, kind: input, shape index: {}]
  %s5 = inlined_call_operand.vmem [shape: f32[8,1], index: 5, kind: output, shape index: {}]
  %s6 = sld [smem:[#allocation0]]
  $region30: #{discriminator_forward.5} parent=0
    _
  %s8 = ssub.s32 1, %s6
  %s9 = scalar_select 0, %s8, %s6
  // Predicated region
  $region2: #{discriminator_forward.5} parent=0 // pred_check
    _
  $region3: #{discriminator_forward.5} parent=0 // pred_check_branch
    %11 = sbr.rel (0) target = $region5
  $region4: #{discriminator_forward.5} parent=0 // pred_region
    _
  $region5: #{discriminator_forward.5} parent=0 // pred_fallthru
    _
  // Predicated region
  $region6: #{discriminator_forward.5} parent=0 // pred_check
    _
  $region7: #{discriminator_forward.5} parent=0 // pred_check_branch
    %13 = sbr.rel (0) target = $region9
  $region8: #{discriminator_forward.5} parent=0 // pred_region
    _
  $region9: #{discriminator_forward.5} parent=0 // pred_fallthru
    _
  // Predicated region
  $region10: #{discriminator_forward.5} parent=0 // pred_check
    _
  $region11: #{discriminator_forward.5} parent=0 // pred_check_branch
    %15 = sbr.rel (0) target = $region13
  $region12: #{discriminator_forward.5} parent=0 // pred_region
    _
  $region13: #{discriminator_forward.5} parent=0 // pred_fallthru
    _
  // Predicated region
  $region14: #{discriminator_forward.5} parent=0 // pred_check
    _
  $region15: #{discriminator_forward.5} parent=0 // pred_check_branch
    %17 = sbr.rel (0) target = $region17
  $region16: #{discriminator_forward.5} parent=0 // pred_region
    _
  $region17: #{discriminator_forward.5} parent=0 // pred_fallthru
    _
  // Predicated region
  $region18: #{discriminator_forward.5} parent=0 // pred_check
    _
  $region19: #{discriminator_forward.5} parent=0 // pred_check_branch
    %19 = sbr.rel (0) target = $region21
  $region20: #{discriminator_forward.5} parent=0 // pred_region
    _
  $region21: #{discriminator_forward.5} parent=0 // pred_fallthru
    _
  %v20 = vld [vmem:[%s0] sm:$0xff]
  %v21 = vld [vmem:[%s0 + $0x8] sm:$0xff]
  %v22 = vld [vmem:[%s0 + $0x10] sm:$0xff]
  %v23 = vld [vmem:[%s0 + $0x18] sm:$0xff]
  %v24 = vld [vmem:[%s0 + $0x20] sm:$0xff]
  %v25 = vld [vmem:[%s0 + $0x28] sm:$0xff]
  %v26 = vld [vmem:[%s0 + $0x30] sm:$0xff]
  %v27 = vld [vmem:[%s0 + $0x38] sm:$0xff]
  %v28 = vld [vmem:[%s0 + $0x40] sm:$0xff]
  %v29 = vld [vmem:[%s0 + $0x48] sm:$0xff]
  %v30 = vld [vmem:[%s0 + $0x50] sm:$0xff]
  %v31 = vld [vmem:[%s0 + $0x58] sm:$0xff]
  %v32 = vld [vmem:[%s0 + $0x60] sm:$0xff]
  %v33 = vld [vmem:[%s0 + $0x68] sm:$0xff]
  %v34 = vld [vmem:[%s0 + $0x70] sm:$0xff]
  %v35 = vld [vmem:[%s0 + $0x78] sm:$0xff]
  %v36 = vld [vmem:[%s0 + $0x80] sm:$0xff]
  %v37 = vld [vmem:[%s0 + $0x88] sm:$0xff]
  %v38 = vld [vmem:[%s0 + $0x90] sm:$0xff]
  %v39 = vld [vmem:[%s0 + $0x98] sm:$0xff]
  %v40 = vld [vmem:[%s0 + $0xa0] sm:$0xff]
  %v41 = vld [vmem:[%s0 + $0xa8] sm:$0xff]
  %v42 = vld [vmem:[%s0 + $0xb0] sm:$0xff]
  %v43 = vld [vmem:[%s0 + $0xb8] sm:$0xff]
  %v44 = vld [vmem:[%s0 + $0xc0] sm:$0xff]
  %v45 = vld [vmem:[%s0 + $0xc8] sm:$0xff]
  %v46 = vld [vmem:[%s0 + $0xd0] sm:$0xff]
  %v47 = vld [vmem:[%s0 + $0xd8] sm:$0xff]
  %v48 = vld [vmem:[%s0 + $0xe0] sm:$0xff]
  %v49 = vld [vmem:[%s0 + $0xe8] sm:$0xff]
  %v50 = vld [vmem:[%s0 + $0xf0] sm:$0xff]
  %v51 = vld [vmem:[%s0 + $0xf8] sm:$0xff]
  %v52 = vld [vmem:[%s0 + $0x100] sm:$0xff]
  %v53 = vld [vmem:[%s0 + $0x108] sm:$0xff]
  %v54 = vld [vmem:[%s0 + $0x110] sm:$0xff]
  %v55 = vld [vmem:[%s0 + $0x118] sm:$0xff]
  %v56 = vld [vmem:[%s0 + $0x120] sm:$0xff]
  %v57 = vld [vmem:[%s0 + $0x128] sm:$0xff]
  %v58 = vld [vmem:[%s0 + $0x130] sm:$0xff]
  %v59 = vld [vmem:[%s0 + $0x138] sm:$0xff]
  %v60 = vld [vmem:[%s0 + $0x140] sm:$0xff]
  %v61 = vld [vmem:[%s0 + $0x148] sm:$0xff]
  %v62 = vld [vmem:[%s0 + $0x150] sm:$0xff]
  %v63 = vld [vmem:[%s0 + $0x158] sm:$0xff]
  %v64 = vld [vmem:[%s0 + $0x160] sm:$0xff]
  %v65 = vld [vmem:[%s0 + $0x168] sm:$0xff]
  %v66 = vld [vmem:[%s0 + $0x170] sm:$0xff]
  %v67 = vld [vmem:[%s0 + $0x178] sm:$0xff]
  %v68 = vld [vmem:[%s0 + $0x180] sm:$0xff]
  %v69 = vld [vmem:[%s0 + $0x188] sm:$0xff]
  %v70 = vld [vmem:[%s0 + $0x190] sm:$0xff]
  %v71 = vld [vmem:[%s0 + $0x198] sm:$0xff]
  %v72 = vld [vmem:[%s0 + $0x1a0] sm:$0xff]
  %v73 = vld [vmem:[%s0 + $0x1a8] sm:$0xff]
  %v74 = vld [vmem:[%s0 + $0x1b0] sm:$0xff]
  %v75 = vld [vmem:[%s0 + $0x1b8] sm:$0xff]
  %v76 = vld [vmem:[%s0 + $0x1c0] sm:$0xff]
  %v77 = vld [vmem:[%s0 + $0x1c8] sm:$0xff]
  %v78 = vld [vmem:[%s0 + $0x1d0] sm:$0xff]
  %v79 = vld [vmem:[%s0 + $0x1d8] sm:$0xff]
  %v80 = vld [vmem:[%s0 + $0x1e0] sm:$0xff]
  %v81 = vld [vmem:[%s0 + $0x1e8] sm:$0xff]
  %v82 = vld [vmem:[%s0 + $0x1f0] sm:$0xff]
  %v83 = vld [vmem:[%s0 + $0x1f8] sm:$0xff]
  %v84 = vld [vmem:[%s1] sm:$0xf]
  %v85 = vld [vmem:[%s1 + $0x4] sm:$0xf]
  %v86 = vld [vmem:[%s1 + $0x8] sm:$0xf]
  %v87 = vld [vmem:[%s1 + $0xc] sm:$0xf]
  %v88 = vld [vmem:[%s1 + $0x10] sm:$0xf]
  %v89 = vld [vmem:[%s1 + $0x14] sm:$0xf]
  %v90 = vld [vmem:[%s1 + $0x18] sm:$0xf]
  %v91 = vld [vmem:[%s1 + $0x1c] sm:$0xf]
  %v92 = vld [vmem:[%s1 + $0x20] sm:$0xf]
  %v93 = vld [vmem:[%s1 + $0x24] sm:$0xf]
  %v94 = vld [vmem:[%s1 + $0x28] sm:$0xf]
  %v95 = vld [vmem:[%s1 + $0x2c] sm:$0xf]
  %v96 = vld [vmem:[%s1 + $0x30] sm:$0xf]
  %v97 = vld [vmem:[%s1 + $0x34] sm:$0xf]
  %v98 = vld [vmem:[%s1 + $0x38] sm:$0xf]
  %v99 = vld [vmem:[%s1 + $0x3c] sm:$0xf]
  %v100 = vld [vmem:[%s1 + $0x40] sm:$0xf]
  %v101 = vld [vmem:[%s1 + $0x44] sm:$0xf]
  %v102 = vld [vmem:[%s1 + $0x48] sm:$0xf]
  %v103 = vld [vmem:[%s1 + $0x4c] sm:$0xf]
  %v104 = vld [vmem:[%s1 + $0x50] sm:$0xf]
  %v105 = vld [vmem:[%s1 + $0x54] sm:$0xf]
  %v106 = vld [vmem:[%s1 + $0x58] sm:$0xf]
  %v107 = vld [vmem:[%s1 + $0x5c] sm:$0xf]
  %v108 = vld [vmem:[%s1 + $0x60] sm:$0xf]
  %v109 = vld [vmem:[%s1 + $0x64] sm:$0xf]
  %v110 = vld [vmem:[%s1 + $0x68] sm:$0xf]
  %v111 = vld [vmem:[%s1 + $0x6c] sm:$0xf]
  %v112 = vld [vmem:[%s1 + $0x70] sm:$0xf]
  %v113 = vld [vmem:[%s1 + $0x74] sm:$0xf]
  %v114 = vld [vmem:[%s1 + $0x78] sm:$0xf]
  %v115 = vld [vmem:[%s1 + $0x7c] sm:$0xf]
  %v116 = vld [vmem:[%s1 + $0x80] sm:$0xf]
  %v117 = vld [vmem:[%s1 + $0x84] sm:$0xf]
  %v118 = vld [vmem:[%s1 + $0x88] sm:$0xf]
  %v119 = vld [vmem:[%s1 + $0x8c] sm:$0xf]
  %v120 = vld [vmem:[%s1 + $0x90] sm:$0xf]
  %v121 = vld [vmem:[%s1 + $0x94] sm:$0xf]
  %v122 = vld [vmem:[%s1 + $0x98] sm:$0xf]
  %v123 = vld [vmem:[%s1 + $0x9c] sm:$0xf]
  %v124 = vld [vmem:[%s1 + $0xa0] sm:$0xf]
  %v125 = vld [vmem:[%s1 + $0xa4] sm:$0xf]
  %v126 = vld [vmem:[%s1 + $0xa8] sm:$0xf]
  %v127 = vld [vmem:[%s1 + $0xac] sm:$0xf]
  %v128 = vld [vmem:[%s1 + $0xb0] sm:$0xf]
  %v129 = vld [vmem:[%s1 + $0xb4] sm:$0xf]
  %v130 = vld [vmem:[%s1 + $0xb8] sm:$0xf]
  %v131 = vld [vmem:[%s1 + $0xbc] sm:$0xf]
  %v132 = vld [vmem:[%s1 + $0xc0] sm:$0xf]
  %v133 = vld [vmem:[%s1 + $0xc4] sm:$0xf]
  %v134 = vld [vmem:[%s1 + $0xc8] sm:$0xf]
  %v135 = vld [vmem:[%s1 + $0xcc] sm:$0xf]
  %v136 = vld [vmem:[%s1 + $0xd0] sm:$0xf]
  %v137 = vld [vmem:[%s1 + $0xd4] sm:$0xf]
  %v138 = vld [vmem:[%s1 + $0xd8] sm:$0xf]
  %v139 = vld [vmem:[%s1 + $0xdc] sm:$0xf]
  %v140 = vld [vmem:[%s1 + $0xe0] sm:$0xf]
  %v141 = vld [vmem:[%s1 + $0xe4] sm:$0xf]
  %v142 = vld [vmem:[%s1 + $0xe8] sm:$0xf]
  %v143 = vld [vmem:[%s1 + $0xec] sm:$0xf]
  %v144 = vld [vmem:[%s1 + $0xf0] sm:$0xf]
  %v145 = vld [vmem:[%s1 + $0xf4] sm:$0xf]
  %v146 = vld [vmem:[%s1 + $0xf8] sm:$0xf]
  %v147 = vld [vmem:[%s1 + $0xfc] sm:$0xf]
  %v148 = vld [vmem:[%s1 + $0x100] sm:$0xf]
  %v149 = vld [vmem:[%s1 + $0x104] sm:$0xf]
  %v150 = vld [vmem:[%s1 + $0x108] sm:$0xf]
  %v151 = vld [vmem:[%s1 + $0x10c] sm:$0xf]
  %v152 = vld [vmem:[%s1 + $0x110] sm:$0xf]
  %v153 = vld [vmem:[%s1 + $0x114] sm:$0xf]
  %v154 = vld [vmem:[%s1 + $0x118] sm:$0xf]
  %v155 = vld [vmem:[%s1 + $0x11c] sm:$0xf]
  %v156 = vld [vmem:[%s1 + $0x120] sm:$0xf]
  %v157 = vld [vmem:[%s1 + $0x124] sm:$0xf]
  %v158 = vld [vmem:[%s1 + $0x128] sm:$0xf]
  %v159 = vld [vmem:[%s1 + $0x12c] sm:$0xf]
  %v160 = vld [vmem:[%s1 + $0x130] sm:$0xf]
  %v161 = vld [vmem:[%s1 + $0x134] sm:$0xf]
  %v162 = vld [vmem:[%s1 + $0x138] sm:$0xf]
  %v163 = vld [vmem:[%s1 + $0x13c] sm:$0xf]
  %v164 = vld [vmem:[%s1 + $0x140] sm:$0xf]
  %v165 = vld [vmem:[%s1 + $0x144] sm:$0xf]
  %v166 = vld [vmem:[%s1 + $0x148] sm:$0xf]
  %v167 = vld [vmem:[%s1 + $0x14c] sm:$0xf]
  %v168 = vld [vmem:[%s1 + $0x150] sm:$0xf]
  %v169 = vld [vmem:[%s1 + $0x154] sm:$0xf]
  %v170 = vld [vmem:[%s1 + $0x158] sm:$0xf]
  %v171 = vld [vmem:[%s1 + $0x15c] sm:$0xf]
  %v172 = vld [vmem:[%s1 + $0x160] sm:$0xf]
  %v173 = vld [vmem:[%s1 + $0x164] sm:$0xf]
  %v174 = vld [vmem:[%s1 + $0x168] sm:$0xf]
  %v175 = vld [vmem:[%s1 + $0x16c] sm:$0xf]
  %v176 = vld [vmem:[%s1 + $0x170] sm:$0xf]
  %v177 = vld [vmem:[%s1 + $0x174] sm:$0xf]
  %v178 = vld [vmem:[%s1 + $0x178] sm:$0xf]
  %v179 = vld [vmem:[%s1 + $0x17c] sm:$0xf]
  %v180 = vld [vmem:[%s1 + $0x180] sm:$0xf]
  %v181 = vld [vmem:[%s1 + $0x184] sm:$0xf]
  %v182 = vld [vmem:[%s1 + $0x188] sm:$0xf]
  %v183 = vld [vmem:[%s1 + $0x18c] sm:$0xf]
  %v184 = vld [vmem:[%s1 + $0x190] sm:$0xf]
  %v185 = vld [vmem:[%s1 + $0x194] sm:$0xf]
  %v186 = vld [vmem:[%s1 + $0x198] sm:$0xf]
  %v187 = vld [vmem:[%s1 + $0x19c] sm:$0xf]
  %v188 = vld [vmem:[%s1 + $0x1a0] sm:$0xf]
  %v189 = vld [vmem:[%s1 + $0x1a4] sm:$0xf]
  %v190 = vld [vmem:[%s1 + $0x1a8] sm:$0xf]
  %v191 = vld [vmem:[%s1 + $0x1ac] sm:$0xf]
  %v192 = vld [vmem:[%s1 + $0x1b0] sm:$0xf]
  %v193 = vld [vmem:[%s1 + $0x1b4] sm:$0xf]
  %v194 = vld [vmem:[%s1 + $0x1b8] sm:$0xf]
  %v195 = vld [vmem:[%s1 + $0x1bc] sm:$0xf]
  %v196 = vld [vmem:[%s1 + $0x1c0] sm:$0xf]
  %v197 = vld [vmem:[%s1 + $0x1c4] sm:$0xf]
  %v198 = vld [vmem:[%s1 + $0x1c8] sm:$0xf]
  %v199 = vld [vmem:[%s1 + $0x1cc] sm:$0xf]
  %v200 = vld [vmem:[%s1 + $0x1d0] sm:$0xf]
  %v201 = vld [vmem:[%s1 + $0x1d4] sm:$0xf]
  %v202 = vld [vmem:[%s1 + $0x1d8] sm:$0xf]
  %v203 = vld [vmem:[%s1 + $0x1dc] sm:$0xf]
  %v204 = vld [vmem:[%s1 + $0x1e0] sm:$0xf]
  %v205 = vld [vmem:[%s1 + $0x1e4] sm:$0xf]
  %v206 = vld [vmem:[%s1 + $0x1e8] sm:$0xf]
  %v207 = vld [vmem:[%s1 + $0x1ec] sm:$0xf]
  %v208 = vld [vmem:[%s1 + $0x1f0] sm:$0xf]
  %v209 = vld [vmem:[%s1 + $0x1f4] sm:$0xf]
  %v210 = vld [vmem:[%s1 + $0x1f8] sm:$0xf]
  %v211 = vld [vmem:[%s1 + $0x1fc] sm:$0xf]
  %v212 = vld [vmem:[%s1 + $0x200] sm:$0xf]
  %v213 = vld [vmem:[%s1 + $0x204] sm:$0xf]
  %v214 = vld [vmem:[%s1 + $0x208] sm:$0xf]
  %v215 = vld [vmem:[%s1 + $0x20c] sm:$0xf]
  %v216 = vld [vmem:[%s1 + $0x210] sm:$0xf]
  %v217 = vld [vmem:[%s1 + $0x214] sm:$0xf]
  %v218 = vld [vmem:[%s1 + $0x218] sm:$0xf]
  %v219 = vld [vmem:[%s1 + $0x21c] sm:$0xf]
  %v220 = vld [vmem:[%s1 + $0x220] sm:$0xf]
  %v221 = vld [vmem:[%s1 + $0x224] sm:$0xf]
  %v222 = vld [vmem:[%s1 + $0x228] sm:$0xf]
  %v223 = vld [vmem:[%s1 + $0x22c] sm:$0xf]
  %v224 = vld [vmem:[%s1 + $0x230] sm:$0xf]
  %v225 = vld [vmem:[%s1 + $0x234] sm:$0xf]
  %v226 = vld [vmem:[%s1 + $0x238] sm:$0xf]
  %v227 = vld [vmem:[%s1 + $0x23c] sm:$0xf]
  %v228 = vld [vmem:[%s1 + $0x240] sm:$0xf]
  %v229 = vld [vmem:[%s1 + $0x244] sm:$0xf]
  %v230 = vld [vmem:[%s1 + $0x248] sm:$0xf]
  %v231 = vld [vmem:[%s1 + $0x24c] sm:$0xf]
  %v232 = vld [vmem:[%s1 + $0x250] sm:$0xf]
  %v233 = vld [vmem:[%s1 + $0x254] sm:$0xf]
  %v234 = vld [vmem:[%s1 + $0x258] sm:$0xf]
  %v235 = vld [vmem:[%s1 + $0x25c] sm:$0xf]
  %v236 = vld [vmem:[%s1 + $0x260] sm:$0xf]
  %v237 = vld [vmem:[%s1 + $0x264] sm:$0xf]
  %v238 = vld [vmem:[%s1 + $0x268] sm:$0xf]
  %v239 = vld [vmem:[%s1 + $0x26c] sm:$0xf]
  %v240 = vld [vmem:[%s1 + $0x270] sm:$0xf]
  %v241 = vld [vmem:[%s1 + $0x274] sm:$0xf]
  %v242 = vld [vmem:[%s1 + $0x278] sm:$0xf]
  %v243 = vld [vmem:[%s1 + $0x27c] sm:$0xf]
  %v244 = vld [vmem:[%s1 + $0x280] sm:$0xf]
  %v245 = vld [vmem:[%s1 + $0x284] sm:$0xf]
  %v246 = vld [vmem:[%s1 + $0x288] sm:$0xf]
  %v247 = vld [vmem:[%s1 + $0x28c] sm:$0xf]
  %v248 = vld [vmem:[%s1 + $0x290] sm:$0xf]
  %v249 = vld [vmem:[%s1 + $0x294] sm:$0xf]
  %v250 = vld [vmem:[%s1 + $0x298] sm:$0xf]
  %v251 = vld [vmem:[%s1 + $0x29c] sm:$0xf]
  %v252 = vld [vmem:[%s1 + $0x2a0] sm:$0xf]
  %v253 = vld [vmem:[%s1 + $0x2a4] sm:$0xf]
  %v254 = vld [vmem:[%s1 + $0x2a8] sm:$0xf]
  %v255 = vld [vmem:[%s1 + $0x2ac] sm:$0xf]
  %v256 = vld [vmem:[%s1 + $0x2b0] sm:$0xf]
  %v257 = vld [vmem:[%s1 + $0x2b4] sm:$0xf]
  %v258 = vld [vmem:[%s1 + $0x2b8] sm:$0xf]
  %v259 = vld [vmem:[%s1 + $0x2bc] sm:$0xf]
  %v260 = vld [vmem:[%s1 + $0x2c0] sm:$0xf]
  %v261 = vld [vmem:[%s1 + $0x2c4] sm:$0xf]
  %v262 = vld [vmem:[%s1 + $0x2c8] sm:$0xf]
  %v263 = vld [vmem:[%s1 + $0x2cc] sm:$0xf]
  %v264 = vld [vmem:[%s1 + $0x2d0] sm:$0xf]
  %v265 = vld [vmem:[%s1 + $0x2d4] sm:$0xf]
  %v266 = vld [vmem:[%s1 + $0x2d8] sm:$0xf]
  %v267 = vld [vmem:[%s1 + $0x2dc] sm:$0xf]
  %v268 = vld [vmem:[%s1 + $0x2e0] sm:$0xf]
  %v269 = vld [vmem:[%s1 + $0x2e4] sm:$0xf]
  %v270 = vld [vmem:[%s1 + $0x2e8] sm:$0xf]
  %v271 = vld [vmem:[%s1 + $0x2ec] sm:$0xf]
  %v272 = vld [vmem:[%s1 + $0x2f0] sm:$0xf]
  %v273 = vld [vmem:[%s1 + $0x2f4] sm:$0xf]
  %v274 = vld [vmem:[%s1 + $0x2f8] sm:$0xf]
  %v275 = vld [vmem:[%s1 + $0x2fc] sm:$0xf]
  %v276 = vld [vmem:[%s1 + $0x300] sm:$0xf]
  %v277 = vld [vmem:[%s1 + $0x304] sm:$0xf]
  %v278 = vld [vmem:[%s1 + $0x308] sm:$0xf]
  %v279 = vld [vmem:[%s1 + $0x30c] sm:$0xf]
  %v280 = vld [vmem:[%s1 + $0x310] sm:$0xf]
  %v281 = vld [vmem:[%s1 + $0x314] sm:$0xf]
  %v282 = vld [vmem:[%s1 + $0x318] sm:$0xf]
  %v283 = vld [vmem:[%s1 + $0x31c] sm:$0xf]
  %v284 = vld [vmem:[%s1 + $0x320] sm:$0xf]
  %v285 = vld [vmem:[%s1 + $0x324] sm:$0xf]
  %v286 = vld [vmem:[%s1 + $0x328] sm:$0xf]
  %v287 = vld [vmem:[%s1 + $0x32c] sm:$0xf]
  %v288 = vld [vmem:[%s1 + $0x330] sm:$0xf]
  %v289 = vld [vmem:[%s1 + $0x334] sm:$0xf]
  %v290 = vld [vmem:[%s1 + $0x338] sm:$0xf]
  %v291 = vld [vmem:[%s1 + $0x33c] sm:$0xf]
  %v292 = vld [vmem:[%s1 + $0x340] sm:$0xf]
  %v293 = vld [vmem:[%s1 + $0x344] sm:$0xf]
  %v294 = vld [vmem:[%s1 + $0x348] sm:$0xf]
  %v295 = vld [vmem:[%s1 + $0x34c] sm:$0xf]
  %v296 = vld [vmem:[%s1 + $0x350] sm:$0xf]
  %v297 = vld [vmem:[%s1 + $0x354] sm:$0xf]
  %v298 = vld [vmem:[%s1 + $0x358] sm:$0xf]
  %v299 = vld [vmem:[%s1 + $0x35c] sm:$0xf]
  %v300 = vld [vmem:[%s1 + $0x360] sm:$0xf]
  %v301 = vld [vmem:[%s1 + $0x364] sm:$0xf]
  %v302 = vld [vmem:[%s1 + $0x368] sm:$0xf]
  %v303 = vld [vmem:[%s1 + $0x36c] sm:$0xf]
  %v304 = vld [vmem:[%s1 + $0x370] sm:$0xf]
  %v305 = vld [vmem:[%s1 + $0x374] sm:$0xf]
  %v306 = vld [vmem:[%s1 + $0x378] sm:$0xf]
  %v307 = vld [vmem:[%s1 + $0x37c] sm:$0xf]
  %v308 = vld [vmem:[%s1 + $0x380] sm:$0xf]
  %v309 = vld [vmem:[%s1 + $0x384] sm:$0xf]
  %v310 = vld [vmem:[%s1 + $0x388] sm:$0xf]
  %v311 = vld [vmem:[%s1 + $0x38c] sm:$0xf]
  %v312 = vld [vmem:[%s1 + $0x390] sm:$0xf]
  %v313 = vld [vmem:[%s1 + $0x394] sm:$0xf]
  %v314 = vld [vmem:[%s1 + $0x398] sm:$0xf]
  %v315 = vld [vmem:[%s1 + $0x39c] sm:$0xf]
  %v316 = vld [vmem:[%s1 + $0x3a0] sm:$0xf]
  %v317 = vld [vmem:[%s1 + $0x3a4] sm:$0xf]
  %v318 = vld [vmem:[%s1 + $0x3a8] sm:$0xf]
  %v319 = vld [vmem:[%s1 + $0x3ac] sm:$0xf]
  %v320 = vld [vmem:[%s1 + $0x3b0] sm:$0xf]
  %v321 = vld [vmem:[%s1 + $0x3b4] sm:$0xf]
  %v322 = vld [vmem:[%s1 + $0x3b8] sm:$0xf]
  %v323 = vld [vmem:[%s1 + $0x3bc] sm:$0xf]
  %v324 = vld [vmem:[%s1 + $0x3c0] sm:$0xf]
  %v325 = vld [vmem:[%s1 + $0x3c4] sm:$0xf]
  %v326 = vld [vmem:[%s1 + $0x3c8] sm:$0xf]
  %v327 = vld [vmem:[%s1 + $0x3cc] sm:$0xf]
  %v328 = vld [vmem:[%s1 + $0x3d0] sm:$0xf]
  %v329 = vld [vmem:[%s1 + $0x3d4] sm:$0xf]
  %v330 = vld [vmem:[%s1 + $0x3d8] sm:$0xf]
  %v331 = vld [vmem:[%s1 + $0x3dc] sm:$0xf]
  %v332 = vld [vmem:[%s1 + $0x3e0] sm:$0xf]
  %v333 = vld [vmem:[%s1 + $0x3e4] sm:$0xf]
  %v334 = vld [vmem:[%s1 + $0x3e8] sm:$0xf]
  %v335 = vld [vmem:[%s1 + $0x3ec] sm:$0xf]
  %v336 = vld [vmem:[%s1 + $0x3f0] sm:$0xf]
  %v337 = vld [vmem:[%s1 + $0x3f4] sm:$0xf]
  %v338 = vld [vmem:[%s1 + $0x3f8] sm:$0xf]
  %v339 = vld [vmem:[%s1 + $0x3fc] sm:$0xf]
  %v404 = vunpack.c.l.b16 %v20
  %v405 = vunpack.c.h.b16 %v20
  %v406 = vunpack.c.l.b16 %v21
  %v407 = vunpack.c.h.b16 %v21
  %v408 = vunpack.c.l.b16 %v22
  %v409 = vunpack.c.h.b16 %v22
  %v410 = vunpack.c.l.b16 %v23
  %v411 = vunpack.c.h.b16 %v23
  %v412 = vunpack.c.l.b16 %v24
  %v413 = vunpack.c.h.b16 %v24
  %v414 = vunpack.c.l.b16 %v25
  %v415 = vunpack.c.h.b16 %v25
  %v416 = vunpack.c.l.b16 %v26
  %v417 = vunpack.c.h.b16 %v26
  %v418 = vunpack.c.l.b16 %v27
  %v419 = vunpack.c.h.b16 %v27
  %v420 = vunpack.c.l.b16 %v28
  %v421 = vunpack.c.h.b16 %v28
  %v422 = vunpack.c.l.b16 %v29
  %v423 = vunpack.c.h.b16 %v29
  %v424 = vunpack.c.l.b16 %v30
  %v425 = vunpack.c.h.b16 %v30
  %v426 = vunpack.c.l.b16 %v31
  %v427 = vunpack.c.h.b16 %v31
  %v428 = vunpack.c.l.b16 %v32
  %v429 = vunpack.c.h.b16 %v32
  %v430 = vunpack.c.l.b16 %v33
  %v431 = vunpack.c.h.b16 %v33
  %v432 = vunpack.c.l.b16 %v34
  %v433 = vunpack.c.h.b16 %v34
  %v434 = vunpack.c.l.b16 %v35
  %v435 = vunpack.c.h.b16 %v35
  %v436 = vunpack.c.l.b16 %v36
  %v437 = vunpack.c.h.b16 %v36
  %v438 = vunpack.c.l.b16 %v37
  %v439 = vunpack.c.h.b16 %v37
  %v440 = vunpack.c.l.b16 %v38
  %v441 = vunpack.c.h.b16 %v38
  %v442 = vunpack.c.l.b16 %v39
  %v443 = vunpack.c.h.b16 %v39
  %v444 = vunpack.c.l.b16 %v40
  %v445 = vunpack.c.h.b16 %v40
  %v446 = vunpack.c.l.b16 %v41
  %v447 = vunpack.c.h.b16 %v41
  %v448 = vunpack.c.l.b16 %v42
  %v449 = vunpack.c.h.b16 %v42
  %v450 = vunpack.c.l.b16 %v43
  %v451 = vunpack.c.h.b16 %v43
  %v452 = vunpack.c.l.b16 %v44
  %v453 = vunpack.c.h.b16 %v44
  %v454 = vunpack.c.l.b16 %v45
  %v455 = vunpack.c.h.b16 %v45
  %v456 = vunpack.c.l.b16 %v46
  %v457 = vunpack.c.h.b16 %v46
  %v458 = vunpack.c.l.b16 %v47
  %v459 = vunpack.c.h.b16 %v47
  %v460 = vunpack.c.l.b16 %v48
  %v461 = vunpack.c.h.b16 %v48
  %v462 = vunpack.c.l.b16 %v49
  %v463 = vunpack.c.h.b16 %v49
  %v464 = vunpack.c.l.b16 %v50
  %v465 = vunpack.c.h.b16 %v50
  %v466 = vunpack.c.l.b16 %v51
  %v467 = vunpack.c.h.b16 %v51
  %v468 = vunpack.c.l.b16 %v52
  %v469 = vunpack.c.h.b16 %v52
  %v470 = vunpack.c.l.b16 %v53
  %v471 = vunpack.c.h.b16 %v53
  %v472 = vunpack.c.l.b16 %v54
  %v473 = vunpack.c.h.b16 %v54
  %v474 = vunpack.c.l.b16 %v55
  %v475 = vunpack.c.h.b16 %v55
  %v476 = vunpack.c.l.b16 %v56
  %v477 = vunpack.c.h.b16 %v56
  %v478 = vunpack.c.l.b16 %v57
  %v479 = vunpack.c.h.b16 %v57
  %v480 = vunpack.c.l.b16 %v58
  %v481 = vunpack.c.h.b16 %v58
  %v482 = vunpack.c.l.b16 %v59
  %v483 = vunpack.c.h.b16 %v59
  %v484 = vunpack.c.l.b16 %v60
  %v485 = vunpack.c.h.b16 %v60
  %v486 = vunpack.c.l.b16 %v61
  %v487 = vunpack.c.h.b16 %v61
  %v488 = vunpack.c.l.b16 %v62
  %v489 = vunpack.c.h.b16 %v62
  %v490 = vunpack.c.l.b16 %v63
  %v491 = vunpack.c.h.b16 %v63
  %v492 = vunpack.c.l.b16 %v64
  %v493 = vunpack.c.h.b16 %v64
  %v494 = vunpack.c.l.b16 %v65
  %v495 = vunpack.c.h.b16 %v65
  %v496 = vunpack.c.l.b16 %v66
  %v497 = vunpack.c.h.b16 %v66
  %v498 = vunpack.c.l.b16 %v67
  %v499 = vunpack.c.h.b16 %v67
  %v500 = vunpack.c.l.b16 %v68
  %v501 = vunpack.c.h.b16 %v68
  %v502 = vunpack.c.l.b16 %v69
  %v503 = vunpack.c.h.b16 %v69
  %v504 = vunpack.c.l.b16 %v70
  %v505 = vunpack.c.h.b16 %v70
  %v506 = vunpack.c.l.b16 %v71
  %v507 = vunpack.c.h.b16 %v71
  %v508 = vunpack.c.l.b16 %v72
  %v509 = vunpack.c.h.b16 %v72
  %v510 = vunpack.c.l.b16 %v73
  %v511 = vunpack.c.h.b16 %v73
  %v512 = vunpack.c.l.b16 %v74
  %v513 = vunpack.c.h.b16 %v74
  %v514 = vunpack.c.l.b16 %v75
  %v515 = vunpack.c.h.b16 %v75
  %v516 = vunpack.c.l.b16 %v76
  %v517 = vunpack.c.h.b16 %v76
  %v518 = vunpack.c.l.b16 %v77
  %v519 = vunpack.c.h.b16 %v77
  %v520 = vunpack.c.l.b16 %v78
  %v521 = vunpack.c.h.b16 %v78
  %v522 = vunpack.c.l.b16 %v79
  %v523 = vunpack.c.h.b16 %v79
  %v524 = vunpack.c.l.b16 %v80
  %v525 = vunpack.c.h.b16 %v80
  %v526 = vunpack.c.l.b16 %v81
  %v527 = vunpack.c.h.b16 %v81
  %v528 = vunpack.c.l.b16 %v82
  %v529 = vunpack.c.h.b16 %v82
  %v530 = vunpack.c.l.b16 %v83
  %v531 = vunpack.c.h.b16 %v83
  %v532 = vpack.c.b16 %v420, %v404
  %v533 = vpack.c.b16 %v421, %v405
  %v534 = vpack.c.b16 %v422, %v406
  %v535 = vpack.c.b16 %v423, %v407
  %v536 = vpack.c.b16 %v424, %v408
  %v537 = vpack.c.b16 %v425, %v409
  %v538 = vpack.c.b16 %v426, %v410
  %v539 = vpack.c.b16 %v427, %v411
  %v540 = vpack.c.b16 %v428, %v412
  %v541 = vpack.c.b16 %v429, %v413
  %v542 = vpack.c.b16 %v430, %v414
  %v543 = vpack.c.b16 %v431, %v415
  %v544 = vpack.c.b16 %v432, %v416
  %v545 = vpack.c.b16 %v433, %v417
  %v546 = vpack.c.b16 %v434, %v418
  %v547 = vpack.c.b16 %v435, %v419
  %v548 = vpack.c.b16 %v452, %v436
  %v549 = vpack.c.b16 %v453, %v437
  %v550 = vpack.c.b16 %v454, %v438
  %v551 = vpack.c.b16 %v455, %v439
  %v552 = vpack.c.b16 %v456, %v440
  %v553 = vpack.c.b16 %v457, %v441
  %v554 = vpack.c.b16 %v458, %v442
  %v555 = vpack.c.b16 %v459, %v443
  %v556 = vpack.c.b16 %v460, %v444
  %v557 = vpack.c.b16 %v461, %v445
  %v558 = vpack.c.b16 %v462, %v446
  %v559 = vpack.c.b16 %v463, %v447
  %v560 = vpack.c.b16 %v464, %v448
  %v561 = vpack.c.b16 %v465, %v449
  %v562 = vpack.c.b16 %v466, %v450
  %v563 = vpack.c.b16 %v467, %v451
  %v564 = vpack.c.b16 %v484, %v468
  %v565 = vpack.c.b16 %v485, %v469
  %v566 = vpack.c.b16 %v486, %v470
  %v567 = vpack.c.b16 %v487, %v471
  %v568 = vpack.c.b16 %v488, %v472
  %v569 = vpack.c.b16 %v489, %v473
  %v570 = vpack.c.b16 %v490, %v474
  %v571 = vpack.c.b16 %v491, %v475
  %v572 = vpack.c.b16 %v492, %v476
  %v573 = vpack.c.b16 %v493, %v477
  %v574 = vpack.c.b16 %v494, %v478
  %v575 = vpack.c.b16 %v495, %v479
  %v576 = vpack.c.b16 %v496, %v480
  %v577 = vpack.c.b16 %v497, %v481
  %v578 = vpack.c.b16 %v498, %v482
  %v579 = vpack.c.b16 %v499, %v483
  %v580 = vpack.c.b16 %v516, %v500
  %v581 = vpack.c.b16 %v517, %v501
  %v582 = vpack.c.b16 %v518, %v502
  %v583 = vpack.c.b16 %v519, %v503
  %v584 = vpack.c.b16 %v520, %v504
  %v585 = vpack.c.b16 %v521, %v505
  %v586 = vpack.c.b16 %v522, %v506
  %v587 = vpack.c.b16 %v523, %v507
  %v588 = vpack.c.b16 %v524, %v508
  %v589 = vpack.c.b16 %v525, %v509
  %v590 = vpack.c.b16 %v526, %v510
  %v591 = vpack.c.b16 %v527, %v511
  %v592 = vpack.c.b16 %v528, %v512
  %v593 = vpack.c.b16 %v529, %v513
  %v594 = vpack.c.b16 %v530, %v514
  %v595 = vpack.c.b16 %v531, %v515
  %v916 = vunpack.c.l.b16 %v84
  %v917 = vunpack.c.l.b16 %v85
  %v918 = vunpack.c.l.b16 %v86
  %v919 = vunpack.c.l.b16 %v87
  %v920 = vunpack.c.l.b16 %v88
  %v921 = vunpack.c.l.b16 %v89
  %v922 = vunpack.c.l.b16 %v90
  %v923 = vunpack.c.l.b16 %v91
  %v924 = vunpack.c.l.b16 %v92
  %v925 = vunpack.c.l.b16 %v93
  %v926 = vunpack.c.l.b16 %v94
  %v927 = vunpack.c.l.b16 %v95
  %v928 = vunpack.c.l.b16 %v96
  %v929 = vunpack.c.l.b16 %v97
  %v930 = vunpack.c.l.b16 %v98
  %v931 = vunpack.c.l.b16 %v99
  %v932 = vunpack.c.l.b16 %v100
  %v933 = vunpack.c.l.b16 %v101
  %v934 = vunpack.c.l.b16 %v102
  %v935 = vunpack.c.l.b16 %v103
  %v936 = vunpack.c.l.b16 %v104
  %v937 = vunpack.c.l.b16 %v105
  %v938 = vunpack.c.l.b16 %v106
  %v939 = vunpack.c.l.b16 %v107
  %v940 = vunpack.c.l.b16 %v108
  %v941 = vunpack.c.l.b16 %v109
  %v942 = vunpack.c.l.b16 %v110
  %v943 = vunpack.c.l.b16 %v111
  %v944 = vunpack.c.l.b16 %v112
  %v945 = vunpack.c.l.b16 %v113
  %v946 = vunpack.c.l.b16 %v114
  %v947 = vunpack.c.l.b16 %v115
  %v948 = vunpack.c.l.b16 %v116
  %v949 = vunpack.c.l.b16 %v117
  %v950 = vunpack.c.l.b16 %v118
  %v951 = vunpack.c.l.b16 %v119
  %v952 = vunpack.c.l.b16 %v120
  %v953 = vunpack.c.l.b16 %v121
  %v954 = vunpack.c.l.b16 %v122
  %v955 = vunpack.c.l.b16 %v123
  %v956 = vunpack.c.l.b16 %v124
  %v957 = vunpack.c.l.b16 %v125
  %v958 = vunpack.c.l.b16 %v126
  %v959 = vunpack.c.l.b16 %v127
  %v960 = vunpack.c.l.b16 %v128
  %v961 = vunpack.c.l.b16 %v129
  %v962 = vunpack.c.l.b16 %v130
  %v963 = vunpack.c.l.b16 %v131
  %v964 = vunpack.c.l.b16 %v132
  %v965 = vunpack.c.l.b16 %v133
  %v966 = vunpack.c.l.b16 %v134
  %v967 = vunpack.c.l.b16 %v135
  %v968 = vunpack.c.l.b16 %v136
  %v969 = vunpack.c.l.b16 %v137
  %v970 = vunpack.c.l.b16 %v138
  %v971 = vunpack.c.l.b16 %v139
  %v972 = vunpack.c.l.b16 %v140
  %v973 = vunpack.c.l.b16 %v141
  %v974 = vunpack.c.l.b16 %v142
  %v975 = vunpack.c.l.b16 %v143
  %v976 = vunpack.c.l.b16 %v144
  %v977 = vunpack.c.l.b16 %v145
  %v978 = vunpack.c.l.b16 %v146
  %v979 = vunpack.c.l.b16 %v147
  %v980 = vunpack.c.l.b16 %v148
  %v981 = vunpack.c.l.b16 %v149
  %v982 = vunpack.c.l.b16 %v150
  %v983 = vunpack.c.l.b16 %v151
  %v984 = vunpack.c.l.b16 %v152
  %v985 = vunpack.c.l.b16 %v153
  %v986 = vunpack.c.l.b16 %v154
  %v987 = vunpack.c.l.b16 %v155
  %v988 = vunpack.c.l.b16 %v156
  %v989 = vunpack.c.l.b16 %v157
  %v990 = vunpack.c.l.b16 %v158
  %v991 = vunpack.c.l.b16 %v159
  %v992 = vunpack.c.l.b16 %v160
  %v993 = vunpack.c.l.b16 %v161
  %v994 = vunpack.c.l.b16 %v162
  %v995 = vunpack.c.l.b16 %v163
  %v996 = vunpack.c.l.b16 %v164
  %v997 = vunpack.c.l.b16 %v165
  %v998 = vunpack.c.l.b16 %v166
  %v999 = vunpack.c.l.b16 %v167
  %v1000 = vunpack.c.l.b16 %v168
  %v1001 = vunpack.c.l.b16 %v169
  %v1002 = vunpack.c.l.b16 %v170
  %v1003 = vunpack.c.l.b16 %v171
  %v1004 = vunpack.c.l.b16 %v172
  %v1005 = vunpack.c.l.b16 %v173
  %v1006 = vunpack.c.l.b16 %v174
  %v1007 = vunpack.c.l.b16 %v175
  %v1008 = vunpack.c.l.b16 %v176
  %v1009 = vunpack.c.l.b16 %v177
  %v1010 = vunpack.c.l.b16 %v178
  %v1011 = vunpack.c.l.b16 %v179
  %v1012 = vunpack.c.l.b16 %v180
  %v1013 = vunpack.c.l.b16 %v181
  %v1014 = vunpack.c.l.b16 %v182
  %v1015 = vunpack.c.l.b16 %v183
  %v1016 = vunpack.c.l.b16 %v184
  %v1017 = vunpack.c.l.b16 %v185
  %v1018 = vunpack.c.l.b16 %v186
  %v1019 = vunpack.c.l.b16 %v187
  %v1020 = vunpack.c.l.b16 %v188
  %v1021 = vunpack.c.l.b16 %v189
  %v1022 = vunpack.c.l.b16 %v190
  %v1023 = vunpack.c.l.b16 %v191
  %v1024 = vunpack.c.l.b16 %v192
  %v1025 = vunpack.c.l.b16 %v193
  %v1026 = vunpack.c.l.b16 %v194
  %v1027 = vunpack.c.l.b16 %v195
  %v1028 = vunpack.c.l.b16 %v196
  %v1029 = vunpack.c.l.b16 %v197
  %v1030 = vunpack.c.l.b16 %v198
  %v1031 = vunpack.c.l.b16 %v199
  %v1032 = vunpack.c.l.b16 %v200
  %v1033 = vunpack.c.l.b16 %v201
  %v1034 = vunpack.c.l.b16 %v202
  %v1035 = vunpack.c.l.b16 %v203
  %v1036 = vunpack.c.l.b16 %v204
  %v1037 = vunpack.c.l.b16 %v205
  %v1038 = vunpack.c.l.b16 %v206
  %v1039 = vunpack.c.l.b16 %v207
  %v1040 = vunpack.c.l.b16 %v208
  %v1041 = vunpack.c.l.b16 %v209
  %v1042 = vunpack.c.l.b16 %v210
  %v1043 = vunpack.c.l.b16 %v211
  %v1044 = vunpack.c.l.b16 %v212
  %v1045 = vunpack.c.l.b16 %v213
  %v1046 = vunpack.c.l.b16 %v214
  %v1047 = vunpack.c.l.b16 %v215
  %v1048 = vunpack.c.l.b16 %v216
  %v1049 = vunpack.c.l.b16 %v217
  %v1050 = vunpack.c.l.b16 %v218
  %v1051 = vunpack.c.l.b16 %v219
  %v1052 = vunpack.c.l.b16 %v220
  %v1053 = vunpack.c.l.b16 %v221
  %v1054 = vunpack.c.l.b16 %v222
  %v1055 = vunpack.c.l.b16 %v223
  %v1056 = vunpack.c.l.b16 %v224
  %v1057 = vunpack.c.l.b16 %v225
  %v1058 = vunpack.c.l.b16 %v226
  %v1059 = vunpack.c.l.b16 %v227
  %v1060 = vunpack.c.l.b16 %v228
  %v1061 = vunpack.c.l.b16 %v229
  %v1062 = vunpack.c.l.b16 %v230
  %v1063 = vunpack.c.l.b16 %v231
  %v1064 = vunpack.c.l.b16 %v232
  %v1065 = vunpack.c.l.b16 %v233
  %v1066 = vunpack.c.l.b16 %v234
  %v1067 = vunpack.c.l.b16 %v235
  %v1068 = vunpack.c.l.b16 %v236
  %v1069 = vunpack.c.l.b16 %v237
  %v1070 = vunpack.c.l.b16 %v238
  %v1071 = vunpack.c.l.b16 %v239
  %v1072 = vunpack.c.l.b16 %v240
  %v1073 = vunpack.c.l.b16 %v241
  %v1074 = vunpack.c.l.b16 %v242
  %v1075 = vunpack.c.l.b16 %v243
  %v1076 = vunpack.c.l.b16 %v244
  %v1077 = vunpack.c.l.b16 %v245
  %v1078 = vunpack.c.l.b16 %v246
  %v1079 = vunpack.c.l.b16 %v247
  %v1080 = vunpack.c.l.b16 %v248
  %v1081 = vunpack.c.l.b16 %v249
  %v1082 = vunpack.c.l.b16 %v250
  %v1083 = vunpack.c.l.b16 %v251
  %v1084 = vunpack.c.l.b16 %v252
  %v1085 = vunpack.c.l.b16 %v253
  %v1086 = vunpack.c.l.b16 %v254
  %v1087 = vunpack.c.l.b16 %v255
  %v1088 = vunpack.c.l.b16 %v256
  %v1089 = vunpack.c.l.b16 %v257
  %v1090 = vunpack.c.l.b16 %v258
  %v1091 = vunpack.c.l.b16 %v259
  %v1092 = vunpack.c.l.b16 %v260
  %v1093 = vunpack.c.l.b16 %v261
  %v1094 = vunpack.c.l.b16 %v262
  %v1095 = vunpack.c.l.b16 %v263
  %v1096 = vunpack.c.l.b16 %v264
  %v1097 = vunpack.c.l.b16 %v265
  %v1098 = vunpack.c.l.b16 %v266
  %v1099 = vunpack.c.l.b16 %v267
  %v1100 = vunpack.c.l.b16 %v268
  %v1101 = vunpack.c.l.b16 %v269
  %v1102 = vunpack.c.l.b16 %v270
  %v1103 = vunpack.c.l.b16 %v271
  %v1104 = vunpack.c.l.b16 %v272
  %v1105 = vunpack.c.l.b16 %v273
  %v1106 = vunpack.c.l.b16 %v274
  %v1107 = vunpack.c.l.b16 %v275
  %v1108 = vunpack.c.l.b16 %v276
  %v1109 = vunpack.c.l.b16 %v277
  %v1110 = vunpack.c.l.b16 %v278
  %v1111 = vunpack.c.l.b16 %v279
  %v1112 = vunpack.c.l.b16 %v280
  %v1113 = vunpack.c.l.b16 %v281
  %v1114 = vunpack.c.l.b16 %v282
  %v1115 = vunpack.c.l.b16 %v283
  %v1116 = vunpack.c.l.b16 %v284
  %v1117 = vunpack.c.l.b16 %v285
  %v1118 = vunpack.c.l.b16 %v286
  %v1119 = vunpack.c.l.b16 %v287
  %v1120 = vunpack.c.l.b16 %v288
  %v1121 = vunpack.c.l.b16 %v289
  %v1122 = vunpack.c.l.b16 %v290
  %v1123 = vunpack.c.l.b16 %v291
  %v1124 = vunpack.c.l.b16 %v292
  %v1125 = vunpack.c.l.b16 %v293
  %v1126 = vunpack.c.l.b16 %v294
  %v1127 = vunpack.c.l.b16 %v295
  %v1128 = vunpack.c.l.b16 %v296
  %v1129 = vunpack.c.l.b16 %v297
  %v1130 = vunpack.c.l.b16 %v298
  %v1131 = vunpack.c.l.b16 %v299
  %v1132 = vunpack.c.l.b16 %v300
  %v1133 = vunpack.c.l.b16 %v301
  %v1134 = vunpack.c.l.b16 %v302
  %v1135 = vunpack.c.l.b16 %v303
  %v1136 = vunpack.c.l.b16 %v304
  %v1137 = vunpack.c.l.b16 %v305
  %v1138 = vunpack.c.l.b16 %v306
  %v1139 = vunpack.c.l.b16 %v307
  %v1140 = vunpack.c.l.b16 %v308
  %v1141 = vunpack.c.l.b16 %v309
  %v1142 = vunpack.c.l.b16 %v310
  %v1143 = vunpack.c.l.b16 %v311
  %v1144 = vunpack.c.l.b16 %v312
  %v1145 = vunpack.c.l.b16 %v313
  %v1146 = vunpack.c.l.b16 %v314
  %v1147 = vunpack.c.l.b16 %v315
  %v1148 = vunpack.c.l.b16 %v316
  %v1149 = vunpack.c.l.b16 %v317
  %v1150 = vunpack.c.l.b16 %v318
  %v1151 = vunpack.c.l.b16 %v319
  %v1152 = vunpack.c.l.b16 %v320
  %v1153 = vunpack.c.l.b16 %v321
  %v1154 = vunpack.c.l.b16 %v322
  %v1155 = vunpack.c.l.b16 %v323
  %v1156 = vunpack.c.l.b16 %v324
  %v1157 = vunpack.c.l.b16 %v325
  %v1158 = vunpack.c.l.b16 %v326
  %v1159 = vunpack.c.l.b16 %v327
  %v1160 = vunpack.c.l.b16 %v328
  %v1161 = vunpack.c.l.b16 %v329
  %v1162 = vunpack.c.l.b16 %v330
  %v1163 = vunpack.c.l.b16 %v331
  %v1164 = vunpack.c.l.b16 %v332
  %v1165 = vunpack.c.l.b16 %v333
  %v1166 = vunpack.c.l.b16 %v334
  %v1167 = vunpack.c.l.b16 %v335
  %v1168 = vunpack.c.l.b16 %v336
  %v1169 = vunpack.c.l.b16 %v337
  %v1170 = vunpack.c.l.b16 %v338
  %v1171 = vunpack.c.l.b16 %v339
  %v1172 = vpack.c.b16 %v917, %v916
  %v1173 = vpack.c.b16 %v919, %v918
  %v1174 = vpack.c.b16 %v921, %v920
  %v1175 = vpack.c.b16 %v923, %v922
  %v1176 = vpack.c.b16 %v925, %v924
  %v1177 = vpack.c.b16 %v927, %v926
  %v1178 = vpack.c.b16 %v929, %v928
  %v1179 = vpack.c.b16 %v931, %v930
  %v1180 = vpack.c.b16 %v933, %v932
  %v1181 = vpack.c.b16 %v935, %v934
  %v1182 = vpack.c.b16 %v937, %v936
  %v1183 = vpack.c.b16 %v939, %v938
  %v1184 = vpack.c.b16 %v941, %v940
  %v1185 = vpack.c.b16 %v943, %v942
  %v1186 = vpack.c.b16 %v945, %v944
  %v1187 = vpack.c.b16 %v947, %v946
  %v1188 = vpack.c.b16 %v949, %v948
  %v1189 = vpack.c.b16 %v951, %v950
  %v1190 = vpack.c.b16 %v953, %v952
  %v1191 = vpack.c.b16 %v955, %v954
  %v1192 = vpack.c.b16 %v957, %v956
  %v1193 = vpack.c.b16 %v959, %v958
  %v1194 = vpack.c.b16 %v961, %v960
  %v1195 = vpack.c.b16 %v963, %v962
  %v1196 = vpack.c.b16 %v965, %v964
  %v1197 = vpack.c.b16 %v967, %v966
  %v1198 = vpack.c.b16 %v969, %v968
  %v1199 = vpack.c.b16 %v971, %v970
  %v1200 = vpack.c.b16 %v973, %v972
  %v1201 = vpack.c.b16 %v975, %v974
  %v1202 = vpack.c.b16 %v977, %v976
  %v1203 = vpack.c.b16 %v979, %v978
  %v1204 = vpack.c.b16 %v981, %v980
  %v1205 = vpack.c.b16 %v983, %v982
  %v1206 = vpack.c.b16 %v985, %v984
  %v1207 = vpack.c.b16 %v987, %v986
  %v1208 = vpack.c.b16 %v989, %v988
  %v1209 = vpack.c.b16 %v991, %v990
  %v1210 = vpack.c.b16 %v993, %v992
  %v1211 = vpack.c.b16 %v995, %v994
  %v1212 = vpack.c.b16 %v997, %v996
  %v1213 = vpack.c.b16 %v999, %v998
  %v1214 = vpack.c.b16 %v1001, %v1000
  %v1215 = vpack.c.b16 %v1003, %v1002
  %v1216 = vpack.c.b16 %v1005, %v1004
  %v1217 = vpack.c.b16 %v1007, %v1006
  %v1218 = vpack.c.b16 %v1009, %v1008
  %v1219 = vpack.c.b16 %v1011, %v1010
  %v1220 = vpack.c.b16 %v1013, %v1012
  %v1221 = vpack.c.b16 %v1015, %v1014
  %v1222 = vpack.c.b16 %v1017, %v1016
  %v1223 = vpack.c.b16 %v1019, %v1018
  %v1224 = vpack.c.b16 %v1021, %v1020
  %v1225 = vpack.c.b16 %v1023, %v1022
  %v1226 = vpack.c.b16 %v1025, %v1024
  %v1227 = vpack.c.b16 %v1027, %v1026
  %v1228 = vpack.c.b16 %v1029, %v1028
  %v1229 = vpack.c.b16 %v1031, %v1030
  %v1230 = vpack.c.b16 %v1033, %v1032
  %v1231 = vpack.c.b16 %v1035, %v1034
  %v1232 = vpack.c.b16 %v1037, %v1036
  %v1233 = vpack.c.b16 %v1039, %v1038
  %v1234 = vpack.c.b16 %v1041, %v1040
  %v1235 = vpack.c.b16 %v1043, %v1042
  %v1236 = vpack.c.b16 %v1045, %v1044
  %v1237 = vpack.c.b16 %v1047, %v1046
  %v1238 = vpack.c.b16 %v1049, %v1048
  %v1239 = vpack.c.b16 %v1051, %v1050
  %v1240 = vpack.c.b16 %v1053, %v1052
  %v1241 = vpack.c.b16 %v1055, %v1054
  %v1242 = vpack.c.b16 %v1057, %v1056
  %v1243 = vpack.c.b16 %v1059, %v1058
  %v1244 = vpack.c.b16 %v1061, %v1060
  %v1245 = vpack.c.b16 %v1063, %v1062
  %v1246 = vpack.c.b16 %v1065, %v1064
  %v1247 = vpack.c.b16 %v1067, %v1066
  %v1248 = vpack.c.b16 %v1069, %v1068
  %v1249 = vpack.c.b16 %v1071, %v1070
  %v1250 = vpack.c.b16 %v1073, %v1072
  %v1251 = vpack.c.b16 %v1075, %v1074
  %v1252 = vpack.c.b16 %v1077, %v1076
  %v1253 = vpack.c.b16 %v1079, %v1078
  %v1254 = vpack.c.b16 %v1081, %v1080
  %v1255 = vpack.c.b16 %v1083, %v1082
  %v1256 = vpack.c.b16 %v1085, %v1084
  %v1257 = vpack.c.b16 %v1087, %v1086
  %v1258 = vpack.c.b16 %v1089, %v1088
  %v1259 = vpack.c.b16 %v1091, %v1090
  %v1260 = vpack.c.b16 %v1093, %v1092
  %v1261 = vpack.c.b16 %v1095, %v1094
  %v1262 = vpack.c.b16 %v1097, %v1096
  %v1263 = vpack.c.b16 %v1099, %v1098
  %v1264 = vpack.c.b16 %v1101, %v1100
  %v1265 = vpack.c.b16 %v1103, %v1102
  %v1266 = vpack.c.b16 %v1105, %v1104
  %v1267 = vpack.c.b16 %v1107, %v1106
  %v1268 = vpack.c.b16 %v1109, %v1108
  %v1269 = vpack.c.b16 %v1111, %v1110
  %v1270 = vpack.c.b16 %v1113, %v1112
  %v1271 = vpack.c.b16 %v1115, %v1114
  %v1272 = vpack.c.b16 %v1117, %v1116
  %v1273 = vpack.c.b16 %v1119, %v1118
  %v1274 = vpack.c.b16 %v1121, %v1120
  %v1275 = vpack.c.b16 %v1123, %v1122
  %v1276 = vpack.c.b16 %v1125, %v1124
  %v1277 = vpack.c.b16 %v1127, %v1126
  %v1278 = vpack.c.b16 %v1129, %v1128
  %v1279 = vpack.c.b16 %v1131, %v1130
  %v1280 = vpack.c.b16 %v1133, %v1132
  %v1281 = vpack.c.b16 %v1135, %v1134
  %v1282 = vpack.c.b16 %v1137, %v1136
  %v1283 = vpack.c.b16 %v1139, %v1138
  %v1284 = vpack.c.b16 %v1141, %v1140
  %v1285 = vpack.c.b16 %v1143, %v1142
  %v1286 = vpack.c.b16 %v1145, %v1144
  %v1287 = vpack.c.b16 %v1147, %v1146
  %v1288 = vpack.c.b16 %v1149, %v1148
  %v1289 = vpack.c.b16 %v1151, %v1150
  %v1290 = vpack.c.b16 %v1153, %v1152
  %v1291 = vpack.c.b16 %v1155, %v1154
  %v1292 = vpack.c.b16 %v1157, %v1156
  %v1293 = vpack.c.b16 %v1159, %v1158
  %v1294 = vpack.c.b16 %v1161, %v1160
  %v1295 = vpack.c.b16 %v1163, %v1162
  %v1296 = vpack.c.b16 %v1165, %v1164
  %v1297 = vpack.c.b16 %v1167, %v1166
  %v1298 = vpack.c.b16 %v1169, %v1168
  %v1299 = vpack.c.b16 %v1171, %v1170
  %1428 = vmatpush.bf16.msra.mxu0 %v1179
  %1429 = vmatpush.bf16.msra.mxu0 %v1178
  %1430 = vmatpush.bf16.msra.mxu0 %v1177
  %1431 = vmatpush.bf16.msra.mxu0 %v1176
  %1432 = vmatpush.bf16.msra.mxu0 %v1175
  %1433 = vmatpush.bf16.msra.mxu0 %v1174
  %1434 = vmatpush.bf16.msra.mxu0 %v1173
  %1435 = vmatpush.bf16.msra.mxu0 %v1172
  %1436 = vmatmul.bf16.gmra.mxu0 %v532
  %v1437 = vpop.f32.mrf.mxu0
  %v1438 = vadd.f32 0.0, %v1437
  %v1439 = vpop.f32.mrf.mxu0
  %v1440 = vadd.f32 0.0, %v1439
  %1441 = vmatmul.bf16.gmra.mxu0 %v548
  %v1442 = vpop.f32.mrf.mxu0
  %v1443 = vadd.f32 0.0, %v1442
  %v1444 = vpop.f32.mrf.mxu0
  %v1445 = vadd.f32 0.0, %v1444
  %1446 = vmatmul.bf16.gmra.mxu0 %v564
  %v1447 = vpop.f32.mrf.mxu0
  %v1448 = vadd.f32 0.0, %v1447
  %v1449 = vpop.f32.mrf.mxu0
  %v1450 = vadd.f32 0.0, %v1449
  %1451 = vmatmul.bf16.gmra.mxu0 %v580
  %v1452 = vpop.f32.mrf.mxu0
  %v1453 = vadd.f32 0.0, %v1452
  %v1454 = vpop.f32.mrf.mxu0
  %v1455 = vadd.f32 0.0, %v1454
  %1456 = vdwg.mxu0
  %1457 = vmatpush.bf16.msra.mxu0 %v1187
  %1458 = vmatpush.bf16.msra.mxu0 %v1186
  %1459 = vmatpush.bf16.msra.mxu0 %v1185
  %1460 = vmatpush.bf16.msra.mxu0 %v1184
  %1461 = vmatpush.bf16.msra.mxu0 %v1183
  %1462 = vmatpush.bf16.msra.mxu0 %v1182
  %1463 = vmatpush.bf16.msra.mxu0 %v1181
  %1464 = vmatpush.bf16.msra.mxu0 %v1180
  %1465 = vmatmul.bf16.gmra.mxu0 %v533
  %v1466 = vpop.f32.mrf.mxu0
  %v1467 = vadd.f32 %v1438, %v1466
  %v1468 = vpop.f32.mrf.mxu0
  %v1469 = vadd.f32 %v1440, %v1468
  %1470 = vmatmul.bf16.gmra.mxu0 %v549
  %v1471 = vpop.f32.mrf.mxu0
  %v1472 = vadd.f32 %v1443, %v1471
  %v1473 = vpop.f32.mrf.mxu0
  %v1474 = vadd.f32 %v1445, %v1473
  %1475 = vmatmul.bf16.gmra.mxu0 %v565
  %v1476 = vpop.f32.mrf.mxu0
  %v1477 = vadd.f32 %v1448, %v1476
  %v1478 = vpop.f32.mrf.mxu0
  %v1479 = vadd.f32 %v1450, %v1478
  %1480 = vmatmul.bf16.gmra.mxu0 %v581
  %v1481 = vpop.f32.mrf.mxu0
  %v1482 = vadd.f32 %v1453, %v1481
  %v1483 = vpop.f32.mrf.mxu0
  %v1484 = vadd.f32 %v1455, %v1483
  %1485 = vdwg.mxu0
  %1486 = vmatpush.bf16.msra.mxu0 %v1195
  %1487 = vmatpush.bf16.msra.mxu0 %v1194
  %1488 = vmatpush.bf16.msra.mxu0 %v1193
  %1489 = vmatpush.bf16.msra.mxu0 %v1192
  %1490 = vmatpush.bf16.msra.mxu0 %v1191
  %1491 = vmatpush.bf16.msra.mxu0 %v1190
  %1492 = vmatpush.bf16.msra.mxu0 %v1189
  %1493 = vmatpush.bf16.msra.mxu0 %v1188
  %1494 = vmatmul.bf16.gmra.mxu0 %v534
  %v1495 = vpop.f32.mrf.mxu0
  %v1496 = vadd.f32 %v1467, %v1495
  %v1497 = vpop.f32.mrf.mxu0
  %v1498 = vadd.f32 %v1469, %v1497
  %1499 = vmatmul.bf16.gmra.mxu0 %v550
  %v1500 = vpop.f32.mrf.mxu0
  %v1501 = vadd.f32 %v1472, %v1500
  %v1502 = vpop.f32.mrf.mxu0
  %v1503 = vadd.f32 %v1474, %v1502
  %1504 = vmatmul.bf16.gmra.mxu0 %v566
  %v1505 = vpop.f32.mrf.mxu0
  %v1506 = vadd.f32 %v1477, %v1505
  %v1507 = vpop.f32.mrf.mxu0
  %v1508 = vadd.f32 %v1479, %v1507
  %1509 = vmatmul.bf16.gmra.mxu0 %v582
  %v1510 = vpop.f32.mrf.mxu0
  %v1511 = vadd.f32 %v1482, %v1510
  %v1512 = vpop.f32.mrf.mxu0
  %v1513 = vadd.f32 %v1484, %v1512
  %1514 = vdwg.mxu0
  %1515 = vmatpush.bf16.msra.mxu0 %v1203
  %1516 = vmatpush.bf16.msra.mxu0 %v1202
  %1517 = vmatpush.bf16.msra.mxu0 %v1201
  %1518 = vmatpush.bf16.msra.mxu0 %v1200
  %1519 = vmatpush.bf16.msra.mxu0 %v1199
  %1520 = vmatpush.bf16.msra.mxu0 %v1198
  %1521 = vmatpush.bf16.msra.mxu0 %v1197
  %1522 = vmatpush.bf16.msra.mxu0 %v1196
  %1523 = vmatmul.bf16.gmra.mxu0 %v535
  %v1524 = vpop.f32.mrf.mxu0
  %v1525 = vadd.f32 %v1496, %v1524
  %v1526 = vpop.f32.mrf.mxu0
  %v1527 = vadd.f32 %v1498, %v1526
  %1528 = vmatmul.bf16.gmra.mxu0 %v551
  %v1529 = vpop.f32.mrf.mxu0
  %v1530 = vadd.f32 %v1501, %v1529
  %v1531 = vpop.f32.mrf.mxu0
  %v1532 = vadd.f32 %v1503, %v1531
  %1533 = vmatmul.bf16.gmra.mxu0 %v567
  %v1534 = vpop.f32.mrf.mxu0
  %v1535 = vadd.f32 %v1506, %v1534
  %v1536 = vpop.f32.mrf.mxu0
  %v1537 = vadd.f32 %v1508, %v1536
  %1538 = vmatmul.bf16.gmra.mxu0 %v583
  %v1539 = vpop.f32.mrf.mxu0
  %v1540 = vadd.f32 %v1511, %v1539
  %v1541 = vpop.f32.mrf.mxu0
  %v1542 = vadd.f32 %v1513, %v1541
  %1543 = vdwg.mxu0
  %1544 = vmatpush.bf16.msra.mxu0 %v1211
  %1545 = vmatpush.bf16.msra.mxu0 %v1210
  %1546 = vmatpush.bf16.msra.mxu0 %v1209
  %1547 = vmatpush.bf16.msra.mxu0 %v1208
  %1548 = vmatpush.bf16.msra.mxu0 %v1207
  %1549 = vmatpush.bf16.msra.mxu0 %v1206
  %1550 = vmatpush.bf16.msra.mxu0 %v1205
  %1551 = vmatpush.bf16.msra.mxu0 %v1204
  %1552 = vmatmul.bf16.gmra.mxu0 %v536
  %v1553 = vpop.f32.mrf.mxu0
  %v1554 = vadd.f32 %v1525, %v1553
  %v1555 = vpop.f32.mrf.mxu0
  %v1556 = vadd.f32 %v1527, %v1555
  %1557 = vmatmul.bf16.gmra.mxu0 %v552
  %v1558 = vpop.f32.mrf.mxu0
  %v1559 = vadd.f32 %v1530, %v1558
  %v1560 = vpop.f32.mrf.mxu0
  %v1561 = vadd.f32 %v1532, %v1560
  %1562 = vmatmul.bf16.gmra.mxu0 %v568
  %v1563 = vpop.f32.mrf.mxu0
  %v1564 = vadd.f32 %v1535, %v1563
  %v1565 = vpop.f32.mrf.mxu0
  %v1566 = vadd.f32 %v1537, %v1565
  %1567 = vmatmul.bf16.gmra.mxu0 %v584
  %v1568 = vpop.f32.mrf.mxu0
  %v1569 = vadd.f32 %v1540, %v1568
  %v1570 = vpop.f32.mrf.mxu0
  %v1571 = vadd.f32 %v1542, %v1570
  %1572 = vdwg.mxu0
  %1573 = vmatpush.bf16.msra.mxu0 %v1219
  %1574 = vmatpush.bf16.msra.mxu0 %v1218
  %1575 = vmatpush.bf16.msra.mxu0 %v1217
  %1576 = vmatpush.bf16.msra.mxu0 %v1216
  %1577 = vmatpush.bf16.msra.mxu0 %v1215
  %1578 = vmatpush.bf16.msra.mxu0 %v1214
  %1579 = vmatpush.bf16.msra.mxu0 %v1213
  %1580 = vmatpush.bf16.msra.mxu0 %v1212
  %1581 = vmatmul.bf16.gmra.mxu0 %v537
  %v1582 = vpop.f32.mrf.mxu0
  %v1583 = vadd.f32 %v1554, %v1582
  %v1584 = vpop.f32.mrf.mxu0
  %v1585 = vadd.f32 %v1556, %v1584
  %1586 = vmatmul.bf16.gmra.mxu0 %v553
  %v1587 = vpop.f32.mrf.mxu0
  %v1588 = vadd.f32 %v1559, %v1587
  %v1589 = vpop.f32.mrf.mxu0
  %v1590 = vadd.f32 %v1561, %v1589
  %1591 = vmatmul.bf16.gmra.mxu0 %v569
  %v1592 = vpop.f32.mrf.mxu0
  %v1593 = vadd.f32 %v1564, %v1592
  %v1594 = vpop.f32.mrf.mxu0
  %v1595 = vadd.f32 %v1566, %v1594
  %1596 = vmatmul.bf16.gmra.mxu0 %v585
  %v1597 = vpop.f32.mrf.mxu0
  %v1598 = vadd.f32 %v1569, %v1597
  %v1599 = vpop.f32.mrf.mxu0
  %v1600 = vadd.f32 %v1571, %v1599
  %1601 = vdwg.mxu0
  %1602 = vmatpush.bf16.msra.mxu0 %v1227
  %1603 = vmatpush.bf16.msra.mxu0 %v1226
  %1604 = vmatpush.bf16.msra.mxu0 %v1225
  %1605 = vmatpush.bf16.msra.mxu0 %v1224
  %1606 = vmatpush.bf16.msra.mxu0 %v1223
  %1607 = vmatpush.bf16.msra.mxu0 %v1222
  %1608 = vmatpush.bf16.msra.mxu0 %v1221
  %1609 = vmatpush.bf16.msra.mxu0 %v1220
  %1610 = vmatmul.bf16.gmra.mxu0 %v538
  %v1611 = vpop.f32.mrf.mxu0
  %v1612 = vadd.f32 %v1583, %v1611
  %v1613 = vpop.f32.mrf.mxu0
  %v1614 = vadd.f32 %v1585, %v1613
  %1615 = vmatmul.bf16.gmra.mxu0 %v554
  %v1616 = vpop.f32.mrf.mxu0
  %v1617 = vadd.f32 %v1588, %v1616
  %v1618 = vpop.f32.mrf.mxu0
  %v1619 = vadd.f32 %v1590, %v1618
  %1620 = vmatmul.bf16.gmra.mxu0 %v570
  %v1621 = vpop.f32.mrf.mxu0
  %v1622 = vadd.f32 %v1593, %v1621
  %v1623 = vpop.f32.mrf.mxu0
  %v1624 = vadd.f32 %v1595, %v1623
  %1625 = vmatmul.bf16.gmra.mxu0 %v586
  %v1626 = vpop.f32.mrf.mxu0
  %v1627 = vadd.f32 %v1598, %v1626
  %v1628 = vpop.f32.mrf.mxu0
  %v1629 = vadd.f32 %v1600, %v1628
  %1630 = vdwg.mxu0
  %1631 = vmatpush.bf16.msra.mxu0 %v1235
  %1632 = vmatpush.bf16.msra.mxu0 %v1234
  %1633 = vmatpush.bf16.msra.mxu0 %v1233
  %1634 = vmatpush.bf16.msra.mxu0 %v1232
  %1635 = vmatpush.bf16.msra.mxu0 %v1231
  %1636 = vmatpush.bf16.msra.mxu0 %v1230
  %1637 = vmatpush.bf16.msra.mxu0 %v1229
  %1638 = vmatpush.bf16.msra.mxu0 %v1228
  %1639 = vmatmul.bf16.gmra.mxu0 %v539
  %v1640 = vpop.f32.mrf.mxu0
  %v1641 = vadd.f32 %v1612, %v1640
  %v1642 = vpop.f32.mrf.mxu0
  %v1643 = vadd.f32 %v1614, %v1642
  %1644 = vmatmul.bf16.gmra.mxu0 %v555
  %v1645 = vpop.f32.mrf.mxu0
  %v1646 = vadd.f32 %v1617, %v1645
  %v1647 = vpop.f32.mrf.mxu0
  %v1648 = vadd.f32 %v1619, %v1647
  %1649 = vmatmul.bf16.gmra.mxu0 %v571
  %v1650 = vpop.f32.mrf.mxu0
  %v1651 = vadd.f32 %v1622, %v1650
  %v1652 = vpop.f32.mrf.mxu0
  %v1653 = vadd.f32 %v1624, %v1652
  %1654 = vmatmul.bf16.gmra.mxu0 %v587
  %v1655 = vpop.f32.mrf.mxu0
  %v1656 = vadd.f32 %v1627, %v1655
  %v1657 = vpop.f32.mrf.mxu0
  %v1658 = vadd.f32 %v1629, %v1657
  %1659 = vdwg.mxu0
  %1660 = vmatpush.bf16.msra.mxu0 %v1243
  %1661 = vmatpush.bf16.msra.mxu0 %v1242
  %1662 = vmatpush.bf16.msra.mxu0 %v1241
  %1663 = vmatpush.bf16.msra.mxu0 %v1240
  %1664 = vmatpush.bf16.msra.mxu0 %v1239
  %1665 = vmatpush.bf16.msra.mxu0 %v1238
  %1666 = vmatpush.bf16.msra.mxu0 %v1237
  %1667 = vmatpush.bf16.msra.mxu0 %v1236
  %1668 = vmatmul.bf16.gmra.mxu0 %v540
  %v1669 = vpop.f32.mrf.mxu0
  %v1670 = vadd.f32 %v1641, %v1669
  %v1671 = vpop.f32.mrf.mxu0
  %v1672 = vadd.f32 %v1643, %v1671
  %1673 = vmatmul.bf16.gmra.mxu0 %v556
  %v1674 = vpop.f32.mrf.mxu0
  %v1675 = vadd.f32 %v1646, %v1674
  %v1676 = vpop.f32.mrf.mxu0
  %v1677 = vadd.f32 %v1648, %v1676
  %1678 = vmatmul.bf16.gmra.mxu0 %v572
  %v1679 = vpop.f32.mrf.mxu0
  %v1680 = vadd.f32 %v1651, %v1679
  %v1681 = vpop.f32.mrf.mxu0
  %v1682 = vadd.f32 %v1653, %v1681
  %1683 = vmatmul.bf16.gmra.mxu0 %v588
  %v1684 = vpop.f32.mrf.mxu0
  %v1685 = vadd.f32 %v1656, %v1684
  %v1686 = vpop.f32.mrf.mxu0
  %v1687 = vadd.f32 %v1658, %v1686
  %1688 = vdwg.mxu0
  %1689 = vmatpush.bf16.msra.mxu0 %v1251
  %1690 = vmatpush.bf16.msra.mxu0 %v1250
  %1691 = vmatpush.bf16.msra.mxu0 %v1249
  %1692 = vmatpush.bf16.msra.mxu0 %v1248
  %1693 = vmatpush.bf16.msra.mxu0 %v1247
  %1694 = vmatpush.bf16.msra.mxu0 %v1246
  %1695 = vmatpush.bf16.msra.mxu0 %v1245
  %1696 = vmatpush.bf16.msra.mxu0 %v1244
  %1697 = vmatmul.bf16.gmra.mxu0 %v541
  %v1698 = vpop.f32.mrf.mxu0
  %v1699 = vadd.f32 %v1670, %v1698
  %v1700 = vpop.f32.mrf.mxu0
  %v1701 = vadd.f32 %v1672, %v1700
  %1702 = vmatmul.bf16.gmra.mxu0 %v557
  %v1703 = vpop.f32.mrf.mxu0
  %v1704 = vadd.f32 %v1675, %v1703
  %v1705 = vpop.f32.mrf.mxu0
  %v1706 = vadd.f32 %v1677, %v1705
  %1707 = vmatmul.bf16.gmra.mxu0 %v573
  %v1708 = vpop.f32.mrf.mxu0
  %v1709 = vadd.f32 %v1680, %v1708
  %v1710 = vpop.f32.mrf.mxu0
  %v1711 = vadd.f32 %v1682, %v1710
  %1712 = vmatmul.bf16.gmra.mxu0 %v589
  %v1713 = vpop.f32.mrf.mxu0
  %v1714 = vadd.f32 %v1685, %v1713
  %v1715 = vpop.f32.mrf.mxu0
  %v1716 = vadd.f32 %v1687, %v1715
  %1717 = vdwg.mxu0
  %1718 = vmatpush.bf16.msra.mxu0 %v1259
  %1719 = vmatpush.bf16.msra.mxu0 %v1258
  %1720 = vmatpush.bf16.msra.mxu0 %v1257
  %1721 = vmatpush.bf16.msra.mxu0 %v1256
  %1722 = vmatpush.bf16.msra.mxu0 %v1255
  %1723 = vmatpush.bf16.msra.mxu0 %v1254
  %1724 = vmatpush.bf16.msra.mxu0 %v1253
  %1725 = vmatpush.bf16.msra.mxu0 %v1252
  %1726 = vmatmul.bf16.gmra.mxu0 %v542
  %v1727 = vpop.f32.mrf.mxu0
  %v1728 = vadd.f32 %v1699, %v1727
  %v1729 = vpop.f32.mrf.mxu0
  %v1730 = vadd.f32 %v1701, %v1729
  %1731 = vmatmul.bf16.gmra.mxu0 %v558
  %v1732 = vpop.f32.mrf.mxu0
  %v1733 = vadd.f32 %v1704, %v1732
  %v1734 = vpop.f32.mrf.mxu0
  %v1735 = vadd.f32 %v1706, %v1734
  %1736 = vmatmul.bf16.gmra.mxu0 %v574
  %v1737 = vpop.f32.mrf.mxu0
  %v1738 = vadd.f32 %v1709, %v1737
  %v1739 = vpop.f32.mrf.mxu0
  %v1740 = vadd.f32 %v1711, %v1739
  %1741 = vmatmul.bf16.gmra.mxu0 %v590
  %v1742 = vpop.f32.mrf.mxu0
  %v1743 = vadd.f32 %v1714, %v1742
  %v1744 = vpop.f32.mrf.mxu0
  %v1745 = vadd.f32 %v1716, %v1744
  %1746 = vdwg.mxu0
  %1747 = vmatpush.bf16.msra.mxu0 %v1267
  %1748 = vmatpush.bf16.msra.mxu0 %v1266
  %1749 = vmatpush.bf16.msra.mxu0 %v1265
  %1750 = vmatpush.bf16.msra.mxu0 %v1264
  %1751 = vmatpush.bf16.msra.mxu0 %v1263
  %1752 = vmatpush.bf16.msra.mxu0 %v1262
  %1753 = vmatpush.bf16.msra.mxu0 %v1261
  %1754 = vmatpush.bf16.msra.mxu0 %v1260
  %1755 = vmatmul.bf16.gmra.mxu0 %v543
  %v1756 = vpop.f32.mrf.mxu0
  %v1757 = vadd.f32 %v1728, %v1756
  %v1758 = vpop.f32.mrf.mxu0
  %v1759 = vadd.f32 %v1730, %v1758
  %1760 = vmatmul.bf16.gmra.mxu0 %v559
  %v1761 = vpop.f32.mrf.mxu0
  %v1762 = vadd.f32 %v1733, %v1761
  %v1763 = vpop.f32.mrf.mxu0
  %v1764 = vadd.f32 %v1735, %v1763
  %1765 = vmatmul.bf16.gmra.mxu0 %v575
  %v1766 = vpop.f32.mrf.mxu0
  %v1767 = vadd.f32 %v1738, %v1766
  %v1768 = vpop.f32.mrf.mxu0
  %v1769 = vadd.f32 %v1740, %v1768
  %1770 = vmatmul.bf16.gmra.mxu0 %v591
  %v1771 = vpop.f32.mrf.mxu0
  %v1772 = vadd.f32 %v1743, %v1771
  %v1773 = vpop.f32.mrf.mxu0
  %v1774 = vadd.f32 %v1745, %v1773
  %1775 = vdwg.mxu0
  %1776 = vmatpush.bf16.msra.mxu0 %v1275
  %1777 = vmatpush.bf16.msra.mxu0 %v1274
  %1778 = vmatpush.bf16.msra.mxu0 %v1273
  %1779 = vmatpush.bf16.msra.mxu0 %v1272
  %1780 = vmatpush.bf16.msra.mxu0 %v1271
  %1781 = vmatpush.bf16.msra.mxu0 %v1270
  %1782 = vmatpush.bf16.msra.mxu0 %v1269
  %1783 = vmatpush.bf16.msra.mxu0 %v1268
  %1784 = vmatmul.bf16.gmra.mxu0 %v544
  %v1785 = vpop.f32.mrf.mxu0
  %v1786 = vadd.f32 %v1757, %v1785
  %v1787 = vpop.f32.mrf.mxu0
  %v1788 = vadd.f32 %v1759, %v1787
  %1789 = vmatmul.bf16.gmra.mxu0 %v560
  %v1790 = vpop.f32.mrf.mxu0
  %v1791 = vadd.f32 %v1762, %v1790
  %v1792 = vpop.f32.mrf.mxu0
  %v1793 = vadd.f32 %v1764, %v1792
  %1794 = vmatmul.bf16.gmra.mxu0 %v576
  %v1795 = vpop.f32.mrf.mxu0
  %v1796 = vadd.f32 %v1767, %v1795
  %v1797 = vpop.f32.mrf.mxu0
  %v1798 = vadd.f32 %v1769, %v1797
  %1799 = vmatmul.bf16.gmra.mxu0 %v592
  %v1800 = vpop.f32.mrf.mxu0
  %v1801 = vadd.f32 %v1772, %v1800
  %v1802 = vpop.f32.mrf.mxu0
  %v1803 = vadd.f32 %v1774, %v1802
  %1804 = vdwg.mxu0
  %1805 = vmatpush.bf16.msra.mxu0 %v1283
  %1806 = vmatpush.bf16.msra.mxu0 %v1282
  %1807 = vmatpush.bf16.msra.mxu0 %v1281
  %1808 = vmatpush.bf16.msra.mxu0 %v1280
  %1809 = vmatpush.bf16.msra.mxu0 %v1279
  %1810 = vmatpush.bf16.msra.mxu0 %v1278
  %1811 = vmatpush.bf16.msra.mxu0 %v1277
  %1812 = vmatpush.bf16.msra.mxu0 %v1276
  %1813 = vmatmul.bf16.gmra.mxu0 %v545
  %v1814 = vpop.f32.mrf.mxu0
  %v1815 = vadd.f32 %v1786, %v1814
  %v1816 = vpop.f32.mrf.mxu0
  %v1817 = vadd.f32 %v1788, %v1816
  %1818 = vmatmul.bf16.gmra.mxu0 %v561
  %v1819 = vpop.f32.mrf.mxu0
  %v1820 = vadd.f32 %v1791, %v1819
  %v1821 = vpop.f32.mrf.mxu0
  %v1822 = vadd.f32 %v1793, %v1821
  %1823 = vmatmul.bf16.gmra.mxu0 %v577
  %v1824 = vpop.f32.mrf.mxu0
  %v1825 = vadd.f32 %v1796, %v1824
  %v1826 = vpop.f32.mrf.mxu0
  %v1827 = vadd.f32 %v1798, %v1826
  %1828 = vmatmul.bf16.gmra.mxu0 %v593
  %v1829 = vpop.f32.mrf.mxu0
  %v1830 = vadd.f32 %v1801, %v1829
  %v1831 = vpop.f32.mrf.mxu0
  %v1832 = vadd.f32 %v1803, %v1831
  %1833 = vdwg.mxu0
  %1834 = vmatpush.bf16.msra.mxu0 %v1291
  %1835 = vmatpush.bf16.msra.mxu0 %v1290
  %1836 = vmatpush.bf16.msra.mxu0 %v1289
  %1837 = vmatpush.bf16.msra.mxu0 %v1288
  %1838 = vmatpush.bf16.msra.mxu0 %v1287
  %1839 = vmatpush.bf16.msra.mxu0 %v1286
  %1840 = vmatpush.bf16.msra.mxu0 %v1285
  %1841 = vmatpush.bf16.msra.mxu0 %v1284
  %1842 = vmatmul.bf16.gmra.mxu0 %v546
  %v1843 = vpop.f32.mrf.mxu0
  %v1844 = vadd.f32 %v1815, %v1843
  %v1845 = vpop.f32.mrf.mxu0
  %v1846 = vadd.f32 %v1817, %v1845
  %1847 = vmatmul.bf16.gmra.mxu0 %v562
  %v1848 = vpop.f32.mrf.mxu0
  %v1849 = vadd.f32 %v1820, %v1848
  %v1850 = vpop.f32.mrf.mxu0
  %v1851 = vadd.f32 %v1822, %v1850
  %1852 = vmatmul.bf16.gmra.mxu0 %v578
  %v1853 = vpop.f32.mrf.mxu0
  %v1854 = vadd.f32 %v1825, %v1853
  %v1855 = vpop.f32.mrf.mxu0
  %v1856 = vadd.f32 %v1827, %v1855
  %1857 = vmatmul.bf16.gmra.mxu0 %v594
  %v1858 = vpop.f32.mrf.mxu0
  %v1859 = vadd.f32 %v1830, %v1858
  %v1860 = vpop.f32.mrf.mxu0
  %v1861 = vadd.f32 %v1832, %v1860
  %1862 = vdwg.mxu0
  %1863 = vmatpush.bf16.msra.mxu0 %v1299
  %1864 = vmatpush.bf16.msra.mxu0 %v1298
  %1865 = vmatpush.bf16.msra.mxu0 %v1297
  %1866 = vmatpush.bf16.msra.mxu0 %v1296
  %1867 = vmatpush.bf16.msra.mxu0 %v1295
  %1868 = vmatpush.bf16.msra.mxu0 %v1294
  %1869 = vmatpush.bf16.msra.mxu0 %v1293
  %1870 = vmatpush.bf16.msra.mxu0 %v1292
  %1871 = vmatmul.bf16.gmra.mxu0 %v547
  %v1872 = vpop.f32.mrf.mxu0
  %v1873 = vadd.f32 %v1844, %v1872
  %v1874 = vpop.f32.mrf.mxu0
  %v1875 = vadd.f32 %v1846, %v1874
  %1876 = vmatmul.bf16.gmra.mxu0 %v563
  %v1877 = vpop.f32.mrf.mxu0
  %v1878 = vadd.f32 %v1849, %v1877
  %v1879 = vpop.f32.mrf.mxu0
  %v1880 = vadd.f32 %v1851, %v1879
  %1881 = vmatmul.bf16.gmra.mxu0 %v579
  %v1882 = vpop.f32.mrf.mxu0
  %v1883 = vadd.f32 %v1854, %v1882
  %v1884 = vpop.f32.mrf.mxu0
  %v1885 = vadd.f32 %v1856, %v1884
  %1886 = vmatmul.bf16.gmra.mxu0 %v595
  %v1887 = vpop.f32.mrf.mxu0
  %v1888 = vadd.f32 %v1859, %v1887
  %v1889 = vpop.f32.mrf.mxu0
  %v1890 = vadd.f32 %v1861, %v1889
  %1891 = vdwg.mxu0
  %1892 = vadd.xlane.f32.xlu0 %v1873
  %v1893 = vpop.xlane.xlu0 %1892
  %1894 = vadd.xlane.f32.xlu0 %v1875
  %v1895 = vpop.xlane.xlu0 %1894
  %1896 = vadd.xlane.f32.xlu0 %v1878
  %v1897 = vpop.xlane.xlu0 %1896
  %1898 = vadd.xlane.f32.xlu0 %v1880
  %v1899 = vpop.xlane.xlu0 %1898
  %1900 = vadd.xlane.f32.xlu0 %v1883
  %v1901 = vpop.xlane.xlu0 %1900
  %1902 = vadd.xlane.f32.xlu0 %v1885
  %v1903 = vpop.xlane.xlu0 %1902
  %1904 = vadd.xlane.f32.xlu0 %v1888
  %v1905 = vpop.xlane.xlu0 %1904
  %1906 = vadd.xlane.f32.xlu0 %v1890
  %v1907 = vpop.xlane.xlu0 %1906
  %v1908 = vmul.f32 %v1893, 0.0078125
  %v1909 = vmul.f32 %v1895, 0.0078125
  %v1910 = vmul.f32 %v1897, 0.0078125
  %v1911 = vmul.f32 %v1899, 0.0078125
  %v1912 = vmul.f32 %v1901, 0.0078125
  %v1913 = vmul.f32 %v1903, 0.0078125
  %v1914 = vmul.f32 %v1905, 0.0078125
  %v1915 = vmul.f32 %v1907, 0.0078125
  %v1916 = vsub.f32 %v1873, %v1908
  %v1917 = vsub.f32 %v1875, %v1909
  %v1918 = vsub.f32 %v1878, %v1910
  %v1919 = vsub.f32 %v1880, %v1911
  %v1920 = vsub.f32 %v1883, %v1912
  %v1921 = vsub.f32 %v1885, %v1913
  %v1922 = vsub.f32 %v1888, %v1914
  %v1923 = vsub.f32 %v1890, %v1915
  %v1924 = vmul.f32 %v1916, %v1916
  %v1925 = vmul.f32 %v1917, %v1917
  %v1926 = vmul.f32 %v1918, %v1918
  %v1927 = vmul.f32 %v1919, %v1919
  %v1928 = vmul.f32 %v1920, %v1920
  %v1929 = vmul.f32 %v1921, %v1921
  %v1930 = vmul.f32 %v1922, %v1922
  %v1931 = vmul.f32 %v1923, %v1923
  %1932 = vadd.xlane.f32.xlu0 %v1924
  %v1933 = vpop.xlane.xlu0 %1932
  %1934 = vadd.xlane.f32.xlu0 %v1925
  %v1935 = vpop.xlane.xlu0 %1934
  %1936 = vadd.xlane.f32.xlu0 %v1926
  %v1937 = vpop.xlane.xlu0 %1936
  %1938 = vadd.xlane.f32.xlu0 %v1927
  %v1939 = vpop.xlane.xlu0 %1938
  %1940 = vadd.xlane.f32.xlu0 %v1928
  %v1941 = vpop.xlane.xlu0 %1940
  %1942 = vadd.xlane.f32.xlu0 %v1929
  %v1943 = vpop.xlane.xlu0 %1942
  %1944 = vadd.xlane.f32.xlu0 %v1930
  %v1945 = vpop.xlane.xlu0 %1944
  %1946 = vadd.xlane.f32.xlu0 %v1931
  %v1947 = vpop.xlane.xlu0 %1946
  %v1948 = vmul.f32 %v1933, 0.0078125
  %v1949 = vmul.f32 %v1935, 0.0078125
  %v1950 = vmul.f32 %v1937, 0.0078125
  %v1951 = vmul.f32 %v1939, 0.0078125
  %v1952 = vmul.f32 %v1941, 0.0078125
  %v1953 = vmul.f32 %v1943, 0.0078125
  %v1954 = vmul.f32 %v1945, 0.0078125
  %v1955 = vmul.f32 %v1947, 0.0078125
  %v1956 = vld [vmem:[%s2] sm:$0xff]
  %v1957 = vld [vmem:[%s2 + $0x8] sm:$0xff]
  %v1958 = vld [vmem:[%s2 + $0x10] sm:$0xff]
  %v1959 = vld [vmem:[%s2 + $0x18] sm:$0xff]
  %v1960 = vld [vmem:[%s2 + $0x20] sm:$0xff]
  %v1961 = vld [vmem:[%s2 + $0x28] sm:$0xff]
  %v1962 = vld [vmem:[%s2 + $0x30] sm:$0xff]
  %v1963 = vld [vmem:[%s2 + $0x38] sm:$0xff]
  %v1964 = vadd.f32 %v1948, 1e-05
  %v1965 = vadd.f32 %v1949, 1e-05
  %v1966 = vadd.f32 %v1950, 1e-05
  %v1967 = vadd.f32 %v1951, 1e-05
  %v1968 = vadd.f32 %v1952, 1e-05
  %v1969 = vadd.f32 %v1953, 1e-05
  %v1970 = vadd.f32 %v1954, 1e-05
  %v1971 = vadd.f32 %v1955, 1e-05
  %v1972 = vrsqrt.pop %v1964
  %v1973 = vmul.f32 %v1972, %v1964
  %v1974 = vmul.f32 %v1973, %v1972
  %v1975 = vmul.f32 0.5, %v1974
  %v1976 = vsub.f32 1.5, %v1975
  %v1977 = vmul.f32 %v1972, %v1976
  %vm1978 = vweird.f32 %v1964
  %vm1979 = vweird.f32 %v1972
  %vm1980 = vmor %vm1978, %vm1979
  %v1981 = vsel %vm1980, %v1972, %v1977
  %v1982 = vrsqrt.pop %v1965
  %v1983 = vmul.f32 %v1982, %v1965
  %v1984 = vmul.f32 %v1983, %v1982
  %v1985 = vmul.f32 0.5, %v1984
  %v1986 = vsub.f32 1.5, %v1985
  %v1987 = vmul.f32 %v1982, %v1986
  %vm1988 = vweird.f32 %v1965
  %vm1989 = vweird.f32 %v1982
  %vm1990 = vmor %vm1988, %vm1989
  %v1991 = vsel %vm1990, %v1982, %v1987
  %v1992 = vrsqrt.pop %v1966
  %v1993 = vmul.f32 %v1992, %v1966
  %v1994 = vmul.f32 %v1993, %v1992
  %v1995 = vmul.f32 0.5, %v1994
  %v1996 = vsub.f32 1.5, %v1995
  %v1997 = vmul.f32 %v1992, %v1996
  %vm1998 = vweird.f32 %v1966
  %vm1999 = vweird.f32 %v1992
  %vm2000 = vmor %vm1998, %vm1999
  %v2001 = vsel %vm2000, %v1992, %v1997
  %v2002 = vrsqrt.pop %v1967
  %v2003 = vmul.f32 %v2002, %v1967
  %v2004 = vmul.f32 %v2003, %v2002
  %v2005 = vmul.f32 0.5, %v2004
  %v2006 = vsub.f32 1.5, %v2005
  %v2007 = vmul.f32 %v2002, %v2006
  %vm2008 = vweird.f32 %v1967
  %vm2009 = vweird.f32 %v2002
  %vm2010 = vmor %vm2008, %vm2009
  %v2011 = vsel %vm2010, %v2002, %v2007
  %v2012 = vrsqrt.pop %v1968
  %v2013 = vmul.f32 %v2012, %v1968
  %v2014 = vmul.f32 %v2013, %v2012
  %v2015 = vmul.f32 0.5, %v2014
  %v2016 = vsub.f32 1.5, %v2015
  %v2017 = vmul.f32 %v2012, %v2016
  %vm2018 = vweird.f32 %v1968
  %vm2019 = vweird.f32 %v2012
  %vm2020 = vmor %vm2018, %vm2019
  %v2021 = vsel %vm2020, %v2012, %v2017
  %v2022 = vrsqrt.pop %v1969
  %v2023 = vmul.f32 %v2022, %v1969
  %v2024 = vmul.f32 %v2023, %v2022
  %v2025 = vmul.f32 0.5, %v2024
  %v2026 = vsub.f32 1.5, %v2025
  %v2027 = vmul.f32 %v2022, %v2026
  %vm2028 = vweird.f32 %v1969
  %vm2029 = vweird.f32 %v2022
  %vm2030 = vmor %vm2028, %vm2029
  %v2031 = vsel %vm2030, %v2022, %v2027
  %v2032 = vrsqrt.pop %v1970
  %v2033 = vmul.f32 %v2032, %v1970
  %v2034 = vmul.f32 %v2033, %v2032
  %v2035 = vmul.f32 0.5, %v2034
  %v2036 = vsub.f32 1.5, %v2035
  %v2037 = vmul.f32 %v2032, %v2036
  %vm2038 = vweird.f32 %v1970
  %vm2039 = vweird.f32 %v2032
  %vm2040 = vmor %vm2038, %vm2039
  %v2041 = vsel %vm2040, %v2032, %v2037
  %v2042 = vrsqrt.pop %v1971
  %v2043 = vmul.f32 %v2042, %v1971
  %v2044 = vmul.f32 %v2043, %v2042
  %v2045 = vmul.f32 0.5, %v2044
  %v2046 = vsub.f32 1.5, %v2045
  %v2047 = vmul.f32 %v2042, %v2046
  %vm2048 = vweird.f32 %v1971
  %vm2049 = vweird.f32 %v2042
  %vm2050 = vmor %vm2048, %vm2049
  %v2051 = vsel %vm2050, %v2042, %v2047
  %v2052 = vmul.f32 %v1956, %v1981
  %v2053 = vmul.f32 %v1957, %v1991
  %v2054 = vmul.f32 %v1958, %v2001
  %v2055 = vmul.f32 %v1959, %v2011
  %v2056 = vmul.f32 %v1960, %v2021
  %v2057 = vmul.f32 %v1961, %v2031
  %v2058 = vmul.f32 %v1962, %v2041
  %v2059 = vmul.f32 %v1963, %v2051
  %v2060 = vld [vmem:[%s3] sm:$0xff]
  %v2061 = vld [vmem:[%s3 + $0x8] sm:$0xff]
  %v2062 = vld [vmem:[%s3 + $0x10] sm:$0xff]
  %v2063 = vld [vmem:[%s3 + $0x18] sm:$0xff]
  %v2064 = vld [vmem:[%s3 + $0x20] sm:$0xff]
  %v2065 = vld [vmem:[%s3 + $0x28] sm:$0xff]
  %v2066 = vld [vmem:[%s3 + $0x30] sm:$0xff]
  %v2067 = vld [vmem:[%s3 + $0x38] sm:$0xff]
  %v2068 = vmul.f32 %v1908, %v2052
  %v2069 = vmul.f32 %v1909, %v2053
  %v2070 = vmul.f32 %v1910, %v2054
  %v2071 = vmul.f32 %v1911, %v2055
  %v2072 = vmul.f32 %v1912, %v2056
  %v2073 = vmul.f32 %v1913, %v2057
  %v2074 = vmul.f32 %v1914, %v2058
  %v2075 = vmul.f32 %v1915, %v2059
  %v2076 = vsub.f32 %v2060, %v2068
  %v2077 = vsub.f32 %v2061, %v2069
  %v2078 = vsub.f32 %v2062, %v2070
  %v2079 = vsub.f32 %v2063, %v2071
  %v2080 = vsub.f32 %v2064, %v2072
  %v2081 = vsub.f32 %v2065, %v2073
  %v2082 = vsub.f32 %v2066, %v2074
  %v2083 = vsub.f32 %v2067, %v2075
  %2085 = vset.pattern.permute.xlu0 0
  %2086 = vperm.xlu0 %2085, %v2052
  %v2087 = vpop.permute.xlu0 %2086
  %2090 = vset.pattern.permute.xlu0 0
  %2091 = vperm.xlu0 %2090, %v2053
  %v2092 = vpop.permute.xlu0 %2091
  %2095 = vset.pattern.permute.xlu0 0
  %2096 = vperm.xlu0 %2095, %v2054
  %v2097 = vpop.permute.xlu0 %2096
  %2100 = vset.pattern.permute.xlu0 0
  %2101 = vperm.xlu0 %2100, %v2055
  %v2102 = vpop.permute.xlu0 %2101
  %2105 = vset.pattern.permute.xlu0 0
  %2106 = vperm.xlu0 %2105, %v2056
  %v2107 = vpop.permute.xlu0 %2106
  %2110 = vset.pattern.permute.xlu0 0
  %2111 = vperm.xlu0 %2110, %v2057
  %v2112 = vpop.permute.xlu0 %2111
  %2115 = vset.pattern.permute.xlu0 0
  %2116 = vperm.xlu0 %2115, %v2058
  %v2117 = vpop.permute.xlu0 %2116
  %2120 = vset.pattern.permute.xlu0 0
  %2121 = vperm.xlu0 %2120, %v2059
  %v2122 = vpop.permute.xlu0 %2121
  %v2124 = vmul.f32 %v1873, %v2087
  %v2125 = vmul.f32 %v1875, %v2092
  %v2126 = vmul.f32 %v1878, %v2097
  %v2127 = vmul.f32 %v1880, %v2102
  %v2128 = vmul.f32 %v1883, %v2107
  %v2129 = vmul.f32 %v1885, %v2112
  %v2130 = vmul.f32 %v1888, %v2117
  %v2131 = vmul.f32 %v1890, %v2122
  %2133 = vset.pattern.permute.xlu0 0
  %2134 = vperm.xlu0 %2133, %v2076
  %v2135 = vpop.permute.xlu0 %2134
  %2138 = vset.pattern.permute.xlu0 0
  %2139 = vperm.xlu0 %2138, %v2077
  %v2140 = vpop.permute.xlu0 %2139
  %2143 = vset.pattern.permute.xlu0 0
  %2144 = vperm.xlu0 %2143, %v2078
  %v2145 = vpop.permute.xlu0 %2144
  %2148 = vset.pattern.permute.xlu0 0
  %2149 = vperm.xlu0 %2148, %v2079
  %v2150 = vpop.permute.xlu0 %2149
  %2153 = vset.pattern.permute.xlu0 0
  %2154 = vperm.xlu0 %2153, %v2080
  %v2155 = vpop.permute.xlu0 %2154
  %2158 = vset.pattern.permute.xlu0 0
  %2159 = vperm.xlu0 %2158, %v2081
  %v2160 = vpop.permute.xlu0 %2159
  %2163 = vset.pattern.permute.xlu0 0
  %2164 = vperm.xlu0 %2163, %v2082
  %v2165 = vpop.permute.xlu0 %2164
  %2168 = vset.pattern.permute.xlu0 0
  %2169 = vperm.xlu0 %2168, %v2083
  %v2170 = vpop.permute.xlu0 %2169
  %v2172 = vadd.f32 %v2124, %v2135
  %v2173 = vadd.f32 %v2125, %v2140
  %v2174 = vadd.f32 %v2126, %v2145
  %v2175 = vadd.f32 %v2127, %v2150
  %v2176 = vadd.f32 %v2128, %v2155
  %v2177 = vadd.f32 %v2129, %v2160
  %v2178 = vadd.f32 %v2130, %v2165
  %v2179 = vadd.f32 %v2131, %v2170
  %vm2180 = vcmp.ge.f32.partialorder %v2172, 0.0
  %vm2181 = vcmp.ge.f32.partialorder %v2173, 0.0
  %vm2182 = vcmp.ge.f32.partialorder %v2174, 0.0
  %vm2183 = vcmp.ge.f32.partialorder %v2175, 0.0
  %vm2184 = vcmp.ge.f32.partialorder %v2176, 0.0
  %vm2185 = vcmp.ge.f32.partialorder %v2177, 0.0
  %vm2186 = vcmp.ge.f32.partialorder %v2178, 0.0
  %vm2187 = vcmp.ge.f32.partialorder %v2179, 0.0
  %v2188 = vmul.f32 %v2172, 0.2
  %v2189 = vmul.f32 %v2173, 0.2
  %v2190 = vmul.f32 %v2174, 0.2
  %v2191 = vmul.f32 %v2175, 0.2
  %v2192 = vmul.f32 %v2176, 0.2
  %v2193 = vmul.f32 %v2177, 0.2
  %v2194 = vmul.f32 %v2178, 0.2
  %v2195 = vmul.f32 %v2179, 0.2
  %v2196 = vsel %vm2180, %v2172, %v2188
  %v2197 = vsel %vm2181, %v2173, %v2189
  %v2198 = vsel %vm2182, %v2174, %v2190
  %v2199 = vsel %vm2183, %v2175, %v2191
  %v2200 = vsel %vm2184, %v2176, %v2192
  %v2201 = vsel %vm2185, %v2177, %v2193
  %v2202 = vsel %vm2186, %v2178, %v2194
  %v2203 = vsel %vm2187, %v2179, %v2195
  %v2204 = vld [vmem:[%s4] sm:$0xff]
  %v2205 = vld [vmem:[%s4 + $0x8] sm:$0xff]
  %v2206 = vld [vmem:[%s4 + $0x10] sm:$0xff]
  %v2207 = vld [vmem:[%s4 + $0x18] sm:$0xff]
  %v2208 = vld [vmem:[%s4 + $0x20] sm:$0xff]
  %v2209 = vld [vmem:[%s4 + $0x28] sm:$0xff]
  %v2210 = vld [vmem:[%s4 + $0x30] sm:$0xff]
  %v2211 = vld [vmem:[%s4 + $0x38] sm:$0xff]
  %v2212 = vlaneseq
  %v2213 = vshrl.u32 %v2212, 7
  %v2214 = vmul.f32 %v2196, %v2204
  %v2215 = vmul.f32 %v2197, %v2205
  %v2216 = vmul.f32 %v2198, %v2206
  %v2217 = vmul.f32 %v2199, %v2207
  %v2218 = vmul.f32 %v2200, %v2208
  %v2219 = vmul.f32 %v2201, %v2209
  %v2220 = vmul.f32 %v2202, %v2210
  %v2221 = vmul.f32 %v2203, %v2211
  %vm2222 = vcmask 523264
  %v2223 = vsel %vm2222, %v2214, 0.0
  %2224 = vadd.xlane.f32.xlu0 %v2223
  %v2225 = vpop.xlane.xlu0 %2224
  %v2226 = vsel %vm2222, %v2215, 0.0
  %2227 = vadd.xlane.f32.xlu0 %v2226
  %v2228 = vpop.xlane.xlu0 %2227
  %v2229 = vsel %vm2222, %v2216, 0.0
  %2230 = vadd.xlane.f32.xlu0 %v2229
  %v2231 = vpop.xlane.xlu0 %2230
  %v2232 = vsel %vm2222, %v2217, 0.0
  %2233 = vadd.xlane.f32.xlu0 %v2232
  %v2234 = vpop.xlane.xlu0 %2233
  %v2235 = vsel %vm2222, %v2218, 0.0
  %2236 = vadd.xlane.f32.xlu0 %v2235
  %v2237 = vpop.xlane.xlu0 %2236
  %v2238 = vsel %vm2222, %v2219, 0.0
  %2239 = vadd.xlane.f32.xlu0 %v2238
  %v2240 = vpop.xlane.xlu0 %2239
  %v2241 = vsel %vm2222, %v2220, 0.0
  %2242 = vadd.xlane.f32.xlu0 %v2241
  %v2243 = vpop.xlane.xlu0 %2242
  %v2244 = vsel %vm2222, %v2221, 0.0
  %2245 = vadd.xlane.f32.xlu0 %v2244
  %v2246 = vpop.xlane.xlu0 %2245
  %v2247 = vadd.f32 %v2225, %v2228
  %v2248 = vadd.f32 %v2247, %v2231
  %v2249 = vadd.f32 %v2248, %v2234
  %v2250 = vadd.f32 %v2249, %v2237
  %v2251 = vadd.f32 %v2250, %v2240
  %v2252 = vadd.f32 %v2251, %v2243
  %v2253 = vadd.f32 %v2252, %v2246
  %v2254 = vrot.slane %v2253, 4
  %v2255 = vadd.f32 %v2253, %v2254
  %v2256 = vrot.slane %v2255, 2
  %v2257 = vadd.f32 %v2255, %v2256
  %v2258 = vrot.slane %v2257, 1
  %v2259 = vadd.f32 %v2257, %v2258
  %vm2260 = vcmp.eq.s32.totalorder %v2213, 0
  %v2261 = vsel %vm2260, %v2259, 0.0
  %v2262 = vadd.f32 %v2261, 0.0
  %2271 = vrot.lane.b32.xlu0 %v2204, 64
  %v2272 = vpop.permute.xlu0 %2271
  %2273 = vrot.lane.b32.xlu0 %v2205, 64
  %v2274 = vpop.permute.xlu0 %2273
  %2275 = vrot.lane.b32.xlu0 %v2206, 64
  %v2276 = vpop.permute.xlu0 %2275
  %2277 = vrot.lane.b32.xlu0 %v2207, 64
  %v2278 = vpop.permute.xlu0 %2277
  %2279 = vrot.lane.b32.xlu0 %v2208, 64
  %v2280 = vpop.permute.xlu0 %2279
  %2281 = vrot.lane.b32.xlu0 %v2209, 64
  %v2282 = vpop.permute.xlu0 %2281
  %2283 = vrot.lane.b32.xlu0 %v2210, 64
  %v2284 = vpop.permute.xlu0 %2283
  %2285 = vrot.lane.b32.xlu0 %v2211, 64
  %v2286 = vpop.permute.xlu0 %2285
  %v2295 = vmul.f32 %v2196, %v2272
  %v2296 = vmul.f32 %v2197, %v2274
  %v2297 = vmul.f32 %v2198, %v2276
  %v2298 = vmul.f32 %v2199, %v2278
  %v2299 = vmul.f32 %v2200, %v2280
  %v2300 = vmul.f32 %v2201, %v2282
  %v2301 = vmul.f32 %v2202, %v2284
  %v2302 = vmul.f32 %v2203, %v2286
  %2311 = vrot.lane.b32.xlu0 %v2295, 64
  %v2312 = vpop.permute.xlu0 %2311
  %2313 = vrot.lane.b32.xlu0 %v2296, 64
  %v2314 = vpop.permute.xlu0 %2313
  %2315 = vrot.lane.b32.xlu0 %v2297, 64
  %v2316 = vpop.permute.xlu0 %2315
  %2317 = vrot.lane.b32.xlu0 %v2298, 64
  %v2318 = vpop.permute.xlu0 %2317
  %2319 = vrot.lane.b32.xlu0 %v2299, 64
  %v2320 = vpop.permute.xlu0 %2319
  %2321 = vrot.lane.b32.xlu0 %v2300, 64
  %v2322 = vpop.permute.xlu0 %2321
  %2323 = vrot.lane.b32.xlu0 %v2301, 64
  %v2324 = vpop.permute.xlu0 %2323
  %2325 = vrot.lane.b32.xlu0 %v2302, 64
  %v2326 = vpop.permute.xlu0 %2325
  %v2335 = vsel %vm2222, %v2312, 0.0
  %2336 = vadd.xlane.f32.xlu0 %v2335
  %v2337 = vpop.xlane.xlu0 %2336
  %v2338 = vsel %vm2222, %v2314, 0.0
  %2339 = vadd.xlane.f32.xlu0 %v2338
  %v2340 = vpop.xlane.xlu0 %2339
  %v2341 = vsel %vm2222, %v2316, 0.0
  %2342 = vadd.xlane.f32.xlu0 %v2341
  %v2343 = vpop.xlane.xlu0 %2342
  %v2344 = vsel %vm2222, %v2318, 0.0
  %2345 = vadd.xlane.f32.xlu0 %v2344
  %v2346 = vpop.xlane.xlu0 %2345
  %v2347 = vsel %vm2222, %v2320, 0.0
  %2348 = vadd.xlane.f32.xlu0 %v2347
  %v2349 = vpop.xlane.xlu0 %2348
  %v2350 = vsel %vm2222, %v2322, 0.0
  %2351 = vadd.xlane.f32.xlu0 %v2350
  %v2352 = vpop.xlane.xlu0 %2351
  %v2353 = vsel %vm2222, %v2324, 0.0
  %2354 = vadd.xlane.f32.xlu0 %v2353
  %v2355 = vpop.xlane.xlu0 %2354
  %v2356 = vsel %vm2222, %v2326, 0.0
  %2357 = vadd.xlane.f32.xlu0 %v2356
  %v2358 = vpop.xlane.xlu0 %2357
  %v2359 = vadd.f32 %v2337, %v2340
  %v2360 = vadd.f32 %v2359, %v2343
  %v2361 = vadd.f32 %v2360, %v2346
  %v2362 = vadd.f32 %v2361, %v2349
  %v2363 = vadd.f32 %v2362, %v2352
  %v2364 = vadd.f32 %v2363, %v2355
  %v2365 = vadd.f32 %v2364, %v2358
  %v2366 = vrot.slane %v2365, 4
  %v2367 = vadd.f32 %v2365, %v2366
  %v2368 = vrot.slane %v2367, 2
  %v2369 = vadd.f32 %v2367, %v2368
  %v2370 = vrot.slane %v2369, 1
  %v2371 = vadd.f32 %v2369, %v2370
  %vm2372 = vcmp.eq.s32.totalorder %v2213, 1
  %v2373 = vsel %vm2372, %v2371, 0.0
  %v2374 = vadd.f32 %v2262, %v2373
  %v2375 = vsub.f32 0.0, %v2374
  %v2376 = vmul.f32 %v2375, 1.442695
  %v2377 = vpow.pop %v2376
  %v2378 = vadd.f32 %v2377, 1.0
  %v2379 = vrcp.pop %v2378
  %v2380 = vmul.f32 %v2378, %v2379
  %v2381 = vsub.f32 1.0, %v2380
  %v2382 = vmul.f32 %v2379, %v2381
  %v2383 = vadd.f32 %v2379, %v2382
  %vm2384 = vweird.f32 %v2378
  %vm2385 = vweird.f32 %v2379
  %vm2386 = vmor %vm2384, %vm2385
  %v2387 = vsel %vm2386, %v2379, %v2383
  %v2388 = vand.u32 2147483647, %v2378
  %vm2389 = vcmp.eq.f32.partialorder %v2388, 8.507059e+37
  %v2390 = vand.u32 %v2378, 2147483648
  %v2391 = vor.u32 1.1754944e-38, %v2390
  %v2392 = vsel %vm2389, %v2391, %v2387
  %v2393 = vmul.f32 1.0, %v2392
  %vm2394 = vcmask 7168
  %2395 = vst.msk [vmem:[%s5] sm:$0xff] %vm2394, %v2393
  // Predicated region
  $region22: #{discriminator_forward.5} parent=0 // pred_check
    _
  $region23: #{discriminator_forward.5} parent=0 // pred_check_branch
    %2397 = sbr.rel (0) target = $region25
  $region24: #{discriminator_forward.5} parent=0 // pred_region
    _
  $region25: #{discriminator_forward.5} parent=0 // pred_fallthru
    _
  // Predicated region
  $region26: #{discriminator_forward.5} parent=0 // pred_check
    _
  $region27: #{discriminator_forward.5} parent=0 // pred_check_branch
    %2399 = sbr.rel (0) target = $region29
  $region28: #{discriminator_forward.5} parent=0 // pred_region
    _
  $region29: #{discriminator_forward.5} parent=0 // pred_fallthru
    _

</llo_original>
